<compile_context>
chip_gen: v5e
topology: v5e:2x2
jax: 0.10.0
libtpu: 0.0.40
codegen_flags: <defaults>
</compile_context>

<pallas_src>
import functools

import jax
import jax.numpy as jnp
from jax.experimental import pallas as pl
from jax.experimental.pallas import tpu as pltpu

MATMUL_DTYPE = jnp.bfloat16   # matmul operand dtype (accumulation stays f32)


def _round_up(x, m):
    return (x + m - 1) // m * m


# ---------------------------------------------------------------------------
# Kernel 1: fused 3x3 conv == 9 shifted matmuls over the flattened padded map
# ---------------------------------------------------------------------------
def _conv3x3_kernel(x_ref, w_ref, b_ref, o_ref, *, wp, tl, halo, act):
    """o[:, j*tl:(j+1)*tl] = act( sum_k W_k @ x[:, j*tl+off_k : +tl] + b ).

    x_ref : (Cin, Lx)       flattened zero-padded feature map (bf16), resident
    w_ref : (9, Cout, Cin)  one (Cout, Cin) matrix per kernel tap (ky*3+kx)
    b_ref : (Cout, 1)       f32 bias
    o_ref : (Cout, tl)      lane-dense output tile (f32)
    """
    j = pl.program_id(0)
    col0 = pl.multiple_of(j * tl, 128)
    # One 128-aligned dynamic load covering all 9 tap offsets (max 2*wp+2).
    xw = x_ref[:, pl.ds(col0, tl + halo)]                     # (Cin, tl+halo)
    cout = o_ref.shape[0]
    acc = jnp.zeros((cout, tl), jnp.float32)
    for ky in range(3):
        for kx in range(3):
            off = ky * wp + kx
            acc = acc + jnp.dot(w_ref[ky * 3 + kx], xw[:, off:off + tl],
                                preferred_element_type=jnp.float32)
    y = acc + b_ref[...]
    if act == "relu":
        y = jnp.maximum(y, 0.0)
    elif act == "tanh":
        y = jnp.tanh(y)
    o_ref[...] = y.astype(o_ref.dtype)


def conv3x3(x_cnhw, w_taps, bias, *, stride, act, num_blocks=4):
    """3x3 convolution, padding=1, given stride.  Also serves
    ConvTranspose2d(stride=1, padding=1) when w_taps comes from
    convT_weight_to_taps.

    x_cnhw : (Cin, N, H, W) f32  ->  (Cout, N, H//stride, W//stride) f32
    """
    cin, n, h, w = x_cnhw.shape
    ntap, cout, cin_w = w_taps.shape
    assert ntap == 9 and cin_w == cin
    hp, wp = h + 2, w + 2
    ho, wo = h // stride, w // stride
    l = n * hp * wp                               # lane-dense pixel axis
    tl = _round_up(pl.cdiv(l, num_blocks), 128)   # fixed 128-aligned tile
    grid = pl.cdiv(l, tl)
    halo = _round_up(2 * wp + 2, 128)             # covers all 9 tap offsets
    lx = grid * tl + halo

    xp = jnp.pad(x_cnhw, ((0, 0), (0, 0), (1, 1), (1, 1))).reshape(cin, l)
    xp = jnp.pad(xp, ((0, 0), (0, lx - l))).astype(MATMUL_DTYPE)

    y = pl.pallas_call(
        functools.partial(_conv3x3_kernel, wp=wp, tl=tl, halo=halo, act=act),
        out_shape=jax.ShapeDtypeStruct((cout, grid * tl), jnp.float32),
        grid=(grid,),
        in_specs=[
            pl.BlockSpec((cin, lx), lambda j: (0, 0)),         # VMEM-resident
            pl.BlockSpec((9, cout, cin), lambda j: (0, 0, 0)),
            pl.BlockSpec((cout, 1), lambda j: (0, 0)),
        ],
        out_specs=pl.BlockSpec((cout, tl), lambda j: (0, j)),
        compiler_params=pltpu.CompilerParams(dimension_semantics=("parallel",)),
    )(xp, w_taps.astype(MATMUL_DTYPE), bias.reshape(cout, 1).astype(jnp.float32))

    # Valid conv outputs live at flat positions (stride*oy)*Wp + stride*ox.
    y = y[:, :l].reshape(cout, n, hp, wp)
    return y[:, :, 0:stride * ho:stride, 0:stride * wo:stride]


def conv_weight_to_taps(w_conv):
    # PyTorch Conv2d weight (Cout, Cin, 3, 3) -> (9, Cout, Cin), tap = ky*3+kx
    co, ci, kh, kw = w_conv.shape
    return jnp.transpose(w_conv, (2, 3, 0, 1)).reshape(kh * kw, co, ci)


def convT_weight_to_taps(w_t):
    # ConvTranspose2d weight (Cin, Cout, 3, 3), stride=1, pad=1  ==  conv with
    # the spatially flipped kernel and swapped channel axes.
    ci, co, kh, kw = w_t.shape
    w_flip = jnp.flip(w_t, axis=(2, 3))
    return jnp.transpose(w_flip, (2, 3, 1, 0)).reshape(kh * kw, co, ci)


# ---------------------------------------------------------------------------
# Kernel 2: bilinear 2x upsample folded into a single lane-dense matmul
# ---------------------------------------------------------------------------
def _upsample_mm_kernel(x_ref, u_ref, o_ref):
    o_ref[...] = jnp.dot(x_ref[...], u_ref[...],
                         preferred_element_type=jnp.float32).astype(o_ref.dtype)


def _bilinear_matrix(in_size):
    """Interpolation matrix of nn.Upsample(2x, bilinear, align_corners=False)."""
    out_size = 2 * in_size
    j = jnp.arange(out_size, dtype=jnp.float32)
    src = jnp.clip((j + 0.5) / 2.0 - 0.5, 0.0, float(in_size - 1))
    lo = jnp.floor(src).astype(jnp.int32)
    hi = jnp.minimum(lo + 1, in_size - 1)
    frac = src - lo.astype(jnp.float32)
    a = jnp.zeros((out_size, in_size), jnp.float32)
    a = a.at[jnp.arange(out_size), lo].add(1.0 - frac)
    a = a.at[jnp.arange(out_size), hi].add(frac)
    return a


def upsample2x_bilinear(x_cnhw):
    """out_plane = Ah @ X @ Aw^T  <=>  vec(out) = vec(X) @ kron(Ah, Aw)^T."""
    # TODO(synk): could be fused further into the following deconv's tap matmuls
    # (fractional-stride conv), eliminating this call entirely.
    c, n, h, w = x_cnhw.shape
    u_t = jnp.kron(_bilinear_matrix(h), _bilinear_matrix(w)).T    # (H*W, 4*H*W)
    p = c * n
    gb = 2 if p % 16 == 0 else 1          # >= 2 parallel blocks (v7x dual TC)
    pb = p // gb
    out = pl.pallas_call(
        _upsample_mm_kernel,
        out_shape=jax.ShapeDtypeStruct((p, 4 * h * w), jnp.float32),
        grid=(gb,),
        in_specs=[
            pl.BlockSpec((pb, h * w), lambda i: (i, 0)),
            pl.BlockSpec((h * w, 4 * h * w), lambda i: (0, 0)),
        ],
        out_specs=pl.BlockSpec((pb, 4 * h * w), lambda i: (i, 0)),
        compiler_params=pltpu.CompilerParams(dimension_semantics=("parallel",)),
    )(x_cnhw.reshape(p, h * w).astype(MATMUL_DTYPE), u_t.astype(MATMUL_DTYPE))
    return out.reshape(c, n, 2 * h, 2 * w)


# ---------------------------------------------------------------------------
# Kernel 3: fused fc1(+ReLU) -> fc2 ; the hidden activation stays in VMEM
# ---------------------------------------------------------------------------
def _fc_fused_kernel(x_ref, w1_ref, b1_ref, w2_ref, b2_ref, h_ref, r_ref):
    h = jnp.dot(x_ref[...], w1_ref[...], preferred_element_type=jnp.float32)
    h = jnp.maximum(h + b1_ref[...], 0.0)
    h_ref[...] = h.astype(h_ref.dtype)
    r = jnp.dot(h.astype(w2_ref.dtype), w2_ref[...],
                preferred_element_type=jnp.float32) + b2_ref[...]
    r_ref[...] = r.astype(r_ref.dtype)


def fc_bottleneck(flat, w1t, b1, w2t, b2):
    """hidden = relu(flat @ w1t + b1); rev = hidden @ w2t + b2 (one call)."""
    n, k1 = flat.shape
    hid = w1t.shape[1]
    k2 = w2t.shape[1]
    return pl.pallas_call(
        _fc_fused_kernel,
        out_shape=(jax.ShapeDtypeStruct((n, hid), jnp.float32),
                   jax.ShapeDtypeStruct((n, k2), jnp.float32)),
        grid=(1,),
        in_specs=[
            pl.BlockSpec((n, k1), lambda i: (0, 0)),
            pl.BlockSpec((k1, hid), lambda i: (0, 0)),
            pl.BlockSpec((1, hid), lambda i: (0, 0)),
            pl.BlockSpec((hid, k2), lambda i: (0, 0)),
            pl.BlockSpec((1, k2), lambda i: (0, 0)),
        ],
        out_specs=(pl.BlockSpec((n, hid), lambda i: (0, 0)),
                   pl.BlockSpec((n, k2), lambda i: (0, 0))),
        compiler_params=pltpu.CompilerParams(dimension_semantics=("arbitrary",)),
    )(flat.astype(MATMUL_DTYPE), w1t.astype(MATMUL_DTYPE),
      b1.reshape(1, hid).astype(jnp.float32),
      w2t.astype(MATMUL_DTYPE), b2.reshape(1, k2).astype(jnp.float32))


# ---------------------------------------------------------------------------
# Model
# ---------------------------------------------------------------------------
def init_params(key, input_c, channel_1, channel_2, hidden_dim):
    ks = jax.random.split(key, 12)

    def u(k, shape, fan_in):
        bound = 1.0 / jnp.sqrt(float(fan_in))
        return jax.random.uniform(k, shape, jnp.float32, -bound, bound)

    p = {}
    p["w_conv1"] = u(ks[0], (channel_1, 3, 3, 3), 3 * 9)
    p["b_conv1"] = u(ks[1], (channel_1,), 3 * 9)
    p["w_conv2"] = u(ks[2], (channel_2, channel_1, 3, 3), channel_1 * 9)
    p["b_conv2"] = u(ks[3], (channel_2,), channel_1 * 9)
    p["w_fc1"] = u(ks[4], (hidden_dim, channel_2 * 64), channel_2 * 64)
    p["b_fc1"] = u(ks[5], (hidden_dim,), channel_2 * 64)
    p["w_fc2"] = u(ks[6], (channel_2 * 64, hidden_dim), hidden_dim)
    p["b_fc2"] = u(ks[7], (channel_2 * 64,), hidden_dim)
    p["w_deconv1"] = u(ks[8], (channel_2, channel_1, 3, 3), channel_2 * 9)
    p["b_deconv1"] = u(ks[9], (channel_1,), channel_2 * 9)
    p["w_deconv2"] = u(ks[10], (channel_1, input_c, 3, 3), channel_1 * 9)
    p["b_deconv2"] = u(ks[11], (input_c,), channel_1 * 9)
    return p


def conv_autoencoder_forward(x, params, input_c, channel_1, channel_2, hidden_dim):
    n = x.shape[0]
    x = x.astype(jnp.float32)

    # ---- encoder ----
    xc = jnp.transpose(x, (1, 0, 2, 3))                               # (3,N,32,32)
    y1 = conv3x3(xc, conv_weight_to_taps(params["w_conv1"]),
                 params["b_conv1"], stride=2, act="relu")             # (c1,N,16,16)
    y2 = conv3x3(y1, conv_weight_to_taps(params["w_conv2"]),
                 params["b_conv2"], stride=2, act="relu")             # (c2,N,8,8)

    # Flatten in PyTorch NCHW order, then fused fc1(+ReLU) -> fc2.
    flat = jnp.transpose(y2, (1, 0, 2, 3)).reshape(n, channel_2 * 64)
    hidden_rep, rev = fc_bottleneck(flat, params["w_fc1"].T, params["b_fc1"],
                                    params["w_fc2"].T, params["b_fc2"])

    # ---- decoder ----
    z = jnp.transpose(rev.reshape(n, channel_2, 8, 8), (1, 0, 2, 3))  # (c2,N,8,8)
    z_up = upsample2x_bilinear(z)                                     # (c2,N,16,16)
    d1 = conv3x3(z_up, convT_weight_to_taps(params["w_deconv1"]),
                 params["b_deconv1"], stride=1, act="relu")           # (c1,N,16,16)
    d1_up = upsample2x_bilinear(d1)                                   # (c1,N,32,32)
    out = conv3x3(d1_up, convT_weight_to_taps(params["w_deconv2"]),
                  params["b_deconv2"], stride=1, act="tanh")          # (ic,N,32,32)
    return jnp.transpose(out, (1, 0, 2, 3)), hidden_rep               # NCHW


conv_autoencoder_forward_jit = jax.jit(
    conv_autoencoder_forward, static_argnums=(2, 3, 4, 5))


if __name__ == "__main__":
    input_c, channel_1, channel_2, hidden_dim = 3, 8, 16, 32
    batch = 2

    key = jax.random.PRNGKey(0)
    k_x, k_p = jax.random.split(key)
    # Encoder's first conv is hard-coded to 3 input channels; spatial 32x32 so
    # that two stride-2 convs give the 8x8 map the Linear layer expects.
    x = jax.random.normal(k_x, (batch, 3, 32, 32), dtype=jnp.float32)
    params = init_params(k_p, input_c, channel_1, channel_2, hidden_dim)

    recon, hidden = conv_autoencoder_forward_jit(
        x, params, input_c, channel_1, channel_2, hidden_dim)
    recon = jax.block_until_ready(recon)
    hidden = jax.block_until_ready(hidden)

    assert recon.shape == (batch, input_c, 32, 32), recon.shape
    assert hidden.shape == (batch, hidden_dim), hidden.shape
    assert bool(jnp.all(jnp.isfinite(recon))) and bool(jnp.all(jnp.isfinite(hidden)))
    print("KERNEL_OK")
</pallas_src>

<mosaic_0001>
module attributes {stable_mosaic.version = 11 : i64} {
  func.func @_conv3x3_kernel(%arg0: i32, %arg1: memref<3x2688xbf16, #tpu.memory_space<vmem>>, %arg2: memref<9x8x3xbf16, #tpu.memory_space<vmem>>, %arg3: memref<8x1xf32, #tpu.memory_space<vmem>>, %arg4: memref<8x640xf32, #tpu.memory_space<vmem>>) attributes {dimension_semantics = [#tpu.dimension_semantics<parallel>], iteration_bounds = array<i64: 4>, scalar_prefetch = 0 : i64, scratch_operands = 0 : i64, tpu.core_type = #tpu.core_type<tc>, window_params = [{pipeline_mode = #tpu.pipeline_mode<synchronous>, transform_indices = @transform_0, window_bounds = array<i64: 3, 2688>}, {pipeline_mode = #tpu.pipeline_mode<synchronous>, transform_indices = @transform_1, window_bounds = array<i64: 9, 8, 3>}, {pipeline_mode = #tpu.pipeline_mode<synchronous>, transform_indices = @transform_2, window_bounds = array<i64: 8, 1>}, {transform_indices = @transform_3, window_bounds = array<i64: 8, 640>}]} {
    %c640_i32 = arith.constant 640 : i32
    %0 = arith.muli %arg0, %c640_i32 : i32
    %1 = tpu.assume_multiple %0, 128 : i32
    %c0 = arith.constant 0 : index
    %2 = arith.index_cast %1 : i32 to index
    %3 = vector.load %arg1[%c0, %2] : memref<3x2688xbf16, #tpu.memory_space<vmem>>, vector<3x768xbf16>
    %cst = arith.constant 0.000000e+00 : f32
    %4 = vector.broadcast %cst : f32 to vector<8x640xf32>
    %c0_0 = arith.constant 0 : index
    %c0_1 = arith.constant 0 : index
    %c0_2 = arith.constant 0 : index
    %5 = vector.load %arg2[%c0_0, %c0_1, %c0_2] : memref<9x8x3xbf16, #tpu.memory_space<vmem>>, vector<1x8x3xbf16>
    %6 = vector.shape_cast %5 : vector<1x8x3xbf16> to vector<8x3xbf16>
    %7 = vector.extract_strided_slice %3 {offsets = [0, 0], sizes = [3, 640], strides = [1, 1]} : vector<3x768xbf16> to vector<3x640xbf16>
    %cst_3 = arith.constant dense<0.000000e+00> : vector<8x640xf32>
    %8 = tpu.matmul %6, %7, %cst_3 {dimension_numbers = #tpu.dot_dimension_numbers<[1], [0], [0], [1], [0, 0, 1, 1], [], []>} : vector<8x3xbf16>, vector<3x640xbf16>, vector<8x640xf32> -> vector<8x640xf32>
    %9 = arith.addf %4, %8 : vector<8x640xf32>
    %c1 = arith.constant 1 : index
    %c0_4 = arith.constant 0 : index
    %c0_5 = arith.constant 0 : index
    %10 = vector.load %arg2[%c1, %c0_4, %c0_5] : memref<9x8x3xbf16, #tpu.memory_space<vmem>>, vector<1x8x3xbf16>
    %11 = vector.shape_cast %10 : vector<1x8x3xbf16> to vector<8x3xbf16>
    %12 = vector.extract_strided_slice %3 {offsets = [0, 1], sizes = [3, 640], strides = [1, 1]} : vector<3x768xbf16> to vector<3x640xbf16>
    %cst_6 = arith.constant dense<0.000000e+00> : vector<8x640xf32>
    %13 = tpu.matmul %11, %12, %cst_6 {dimension_numbers = #tpu.dot_dimension_numbers<[1], [0], [0], [1], [0, 0, 1, 1], [], []>} : vector<8x3xbf16>, vector<3x640xbf16>, vector<8x640xf32> -> vector<8x640xf32>
    %14 = arith.addf %9, %13 : vector<8x640xf32>
    %c2 = arith.constant 2 : index
    %c0_7 = arith.constant 0 : index
    %c0_8 = arith.constant 0 : index
    %15 = vector.load %arg2[%c2, %c0_7, %c0_8] : memref<9x8x3xbf16, #tpu.memory_space<vmem>>, vector<1x8x3xbf16>
    %16 = vector.shape_cast %15 : vector<1x8x3xbf16> to vector<8x3xbf16>
    %17 = vector.extract_strided_slice %3 {offsets = [0, 2], sizes = [3, 640], strides = [1, 1]} : vector<3x768xbf16> to vector<3x640xbf16>
    %cst_9 = arith.constant dense<0.000000e+00> : vector<8x640xf32>
    %18 = tpu.matmul %16, %17, %cst_9 {dimension_numbers = #tpu.dot_dimension_numbers<[1], [0], [0], [1], [0, 0, 1, 1], [], []>} : vector<8x3xbf16>, vector<3x640xbf16>, vector<8x640xf32> -> vector<8x640xf32>
    %19 = arith.addf %14, %18 : vector<8x640xf32>
    %c3 = arith.constant 3 : index
    %c0_10 = arith.constant 0 : index
    %c0_11 = arith.constant 0 : index
    %20 = vector.load %arg2[%c3, %c0_10, %c0_11] : memref<9x8x3xbf16, #tpu.memory_space<vmem>>, vector<1x8x3xbf16>
    %21 = vector.shape_cast %20 : vector<1x8x3xbf16> to vector<8x3xbf16>
    %22 = vector.extract_strided_slice %3 {offsets = [0, 34], sizes = [3, 640], strides = [1, 1]} : vector<3x768xbf16> to vector<3x640xbf16>
    %cst_12 = arith.constant dense<0.000000e+00> : vector<8x640xf32>
    %23 = tpu.matmul %21, %22, %cst_12 {dimension_numbers = #tpu.dot_dimension_numbers<[1], [0], [0], [1], [0, 0, 1, 1], [], []>} : vector<8x3xbf16>, vector<3x640xbf16>, vector<8x640xf32> -> vector<8x640xf32>
    %24 = arith.addf %19, %23 : vector<8x640xf32>
    %c4 = arith.constant 4 : index
    %c0_13 = arith.constant 0 : index
    %c0_14 = arith.constant 0 : index
    %25 = vector.load %arg2[%c4, %c0_13, %c0_14] : memref<9x8x3xbf16, #tpu.memory_space<vmem>>, vector<1x8x3xbf16>
    %26 = vector.shape_cast %25 : vector<1x8x3xbf16> to vector<8x3xbf16>
    %27 = vector.extract_strided_slice %3 {offsets = [0, 35], sizes = [3, 640], strides = [1, 1]} : vector<3x768xbf16> to vector<3x640xbf16>
    %cst_15 = arith.constant dense<0.000000e+00> : vector<8x640xf32>
    %28 = tpu.matmul %26, %27, %cst_15 {dimension_numbers = #tpu.dot_dimension_numbers<[1], [0], [0], [1], [0, 0, 1, 1], [], []>} : vector<8x3xbf16>, vector<3x640xbf16>, vector<8x640xf32> -> vector<8x640xf32>
    %29 = arith.addf %24, %28 : vector<8x640xf32>
    %c5 = arith.constant 5 : index
    %c0_16 = arith.constant 0 : index
    %c0_17 = arith.constant 0 : index
    %30 = vector.load %arg2[%c5, %c0_16, %c0_17] : memref<9x8x3xbf16, #tpu.memory_space<vmem>>, vector<1x8x3xbf16>
    %31 = vector.shape_cast %30 : vector<1x8x3xbf16> to vector<8x3xbf16>
    %32 = vector.extract_strided_slice %3 {offsets = [0, 36], sizes = [3, 640], strides = [1, 1]} : vector<3x768xbf16> to vector<3x640xbf16>
    %cst_18 = arith.constant dense<0.000000e+00> : vector<8x640xf32>
    %33 = tpu.matmul %31, %32, %cst_18 {dimension_numbers = #tpu.dot_dimension_numbers<[1], [0], [0], [1], [0, 0, 1, 1], [], []>} : vector<8x3xbf16>, vector<3x640xbf16>, vector<8x640xf32> -> vector<8x640xf32>
    %34 = arith.addf %29, %33 : vector<8x640xf32>
    %c6 = arith.constant 6 : index
    %c0_19 = arith.constant 0 : index
    %c0_20 = arith.constant 0 : index
    %35 = vector.load %arg2[%c6, %c0_19, %c0_20] : memref<9x8x3xbf16, #tpu.memory_space<vmem>>, vector<1x8x3xbf16>
    %36 = vector.shape_cast %35 : vector<1x8x3xbf16> to vector<8x3xbf16>
    %37 = vector.extract_strided_slice %3 {offsets = [0, 68], sizes = [3, 640], strides = [1, 1]} : vector<3x768xbf16> to vector<3x640xbf16>
    %cst_21 = arith.constant dense<0.000000e+00> : vector<8x640xf32>
    %38 = tpu.matmul %36, %37, %cst_21 {dimension_numbers = #tpu.dot_dimension_numbers<[1], [0], [0], [1], [0, 0, 1, 1], [], []>} : vector<8x3xbf16>, vector<3x640xbf16>, vector<8x640xf32> -> vector<8x640xf32>
    %39 = arith.addf %34, %38 : vector<8x640xf32>
    %c7 = arith.constant 7 : index
    %c0_22 = arith.constant 0 : index
    %c0_23 = arith.constant 0 : index
    %40 = vector.load %arg2[%c7, %c0_22, %c0_23] : memref<9x8x3xbf16, #tpu.memory_space<vmem>>, vector<1x8x3xbf16>
    %41 = vector.shape_cast %40 : vector<1x8x3xbf16> to vector<8x3xbf16>
    %42 = vector.extract_strided_slice %3 {offsets = [0, 69], sizes = [3, 640], strides = [1, 1]} : vector<3x768xbf16> to vector<3x640xbf16>
    %cst_24 = arith.constant dense<0.000000e+00> : vector<8x640xf32>
    %43 = tpu.matmul %41, %42, %cst_24 {dimension_numbers = #tpu.dot_dimension_numbers<[1], [0], [0], [1], [0, 0, 1, 1], [], []>} : vector<8x3xbf16>, vector<3x640xbf16>, vector<8x640xf32> -> vector<8x640xf32>
    %44 = arith.addf %39, %43 : vector<8x640xf32>
    %c8 = arith.constant 8 : index
    %c0_25 = arith.constant 0 : index
    %c0_26 = arith.constant 0 : index
    %45 = vector.load %arg2[%c8, %c0_25, %c0_26] : memref<9x8x3xbf16, #tpu.memory_space<vmem>>, vector<1x8x3xbf16>
    %46 = vector.shape_cast %45 : vector<1x8x3xbf16> to vector<8x3xbf16>
    %47 = vector.extract_strided_slice %3 {offsets = [0, 70], sizes = [3, 640], strides = [1, 1]} : vector<3x768xbf16> to vector<3x640xbf16>
    %cst_27 = arith.constant dense<0.000000e+00> : vector<8x640xf32>
    %48 = tpu.matmul %46, %47, %cst_27 {dimension_numbers = #tpu.dot_dimension_numbers<[1], [0], [0], [1], [0, 0, 1, 1], [], []>} : vector<8x3xbf16>, vector<3x640xbf16>, vector<8x640xf32> -> vector<8x640xf32>
    %49 = arith.addf %44, %48 : vector<8x640xf32>
    %c0_28 = arith.constant 0 : index
    %c0_29 = arith.constant 0 : index
    %50 = vector.load %arg3[%c0_28, %c0_29] : memref<8x1xf32, #tpu.memory_space<vmem>>, vector<8x1xf32>
    %51 = vector.broadcast %50 : vector<8x1xf32> to vector<8x640xf32>
    %52 = arith.addf %49, %51 : vector<8x640xf32>
    %cst_30 = arith.constant 0.000000e+00 : f32
    %53 = vector.broadcast %cst_30 : f32 to vector<8x640xf32>
    %54 = arith.maximumf %52, %53 : vector<8x640xf32>
    %c0_31 = arith.constant 0 : index
    %c0_32 = arith.constant 0 : index
    %55 = vector.load %arg4[%c0_31, %c0_32] : memref<8x640xf32, #tpu.memory_space<vmem>>, vector<8x640xf32>
    tpu.vector_store %arg4[%c0_31, %c0_32], %54 {strides = array<i32>} : memref<8x640xf32, #tpu.memory_space<vmem>>, vector<8x640xf32>,
    return
  }
  func.func @transform_0(%arg0: i32) -> (i32, i32) {
    %c0_i32 = arith.constant 0 : i32
    %c0_i32_0 = arith.constant 0 : i32
    %c0_i32_1 = arith.constant 0 : i32
    return %c0_i32, %c0_i32_0 : i32, i32
  }
  func.func @transform_1(%arg0: i32) -> (i32, i32, i32) {
    %c0_i32 = arith.constant 0 : i32
    %c0_i32_0 = arith.constant 0 : i32
    %c0_i32_1 = arith.constant 0 : i32
    %c0_i32_2 = arith.constant 0 : i32
    return %c0_i32, %c0_i32_0, %c0_i32_1 : i32, i32, i32
  }
  func.func @transform_2(%arg0: i32) -> (i32, i32) {
    %c0_i32 = arith.constant 0 : i32
    %c0_i32_0 = arith.constant 0 : i32
    %c0_i32_1 = arith.constant 0 : i32
    return %c0_i32, %c0_i32_0 : i32, i32
  }
  func.func @transform_3(%arg0: i32) -> (i32, i32) {
    %c0_i32 = arith.constant 0 : i32
    %c0_i32_0 = arith.constant 0 : i32
    return %c0_i32, %arg0 : i32, i32
  }
}

module attributes {stable_mosaic.version = 11 : i64} {
  func.func @_conv3x3_kernel(%arg0: i32, %arg1: memref<8x896xbf16, #tpu.memory_space<vmem>>, %arg2: memref<9x16x8xbf16, #tpu.memory_space<vmem>>, %arg3: memref<16x1xf32, #tpu.memory_space<vmem>>, %arg4: memref<16x256xf32, #tpu.memory_space<vmem>>) attributes {dimension_semantics = [#tpu.dimension_semantics<parallel>], iteration_bounds = array<i64: 3>, scalar_prefetch = 0 : i64, scratch_operands = 0 : i64, tpu.core_type = #tpu.core_type<tc>, window_params = [{pipeline_mode = #tpu.pipeline_mode<synchronous>, transform_indices = @transform_0, window_bounds = array<i64: 8, 896>}, {pipeline_mode = #tpu.pipeline_mode<synchronous>, transform_indices = @transform_1, window_bounds = array<i64: 9, 16, 8>}, {pipeline_mode = #tpu.pipeline_mode<synchronous>, transform_indices = @transform_2, window_bounds = array<i64: 16, 1>}, {transform_indices = @transform_3, window_bounds = array<i64: 16, 256>}]} {
    %c256_i32 = arith.constant 256 : i32
    %0 = arith.muli %arg0, %c256_i32 : i32
    %1 = tpu.assume_multiple %0, 128 : i32
    %c0 = arith.constant 0 : index
    %2 = arith.index_cast %1 : i32 to index
    %3 = vector.load %arg1[%c0, %2] : memref<8x896xbf16, #tpu.memory_space<vmem>>, vector<8x384xbf16>
    %cst = arith.constant 0.000000e+00 : f32
    %4 = vector.broadcast %cst : f32 to vector<16x256xf32>
    %c0_0 = arith.constant 0 : index
    %c0_1 = arith.constant 0 : index
    %c0_2 = arith.constant 0 : index
    %5 = vector.load %arg2[%c0_0, %c0_1, %c0_2] : memref<9x16x8xbf16, #tpu.memory_space<vmem>>, vector<1x16x8xbf16>
    %6 = vector.shape_cast %5 : vector<1x16x8xbf16> to vector<16x8xbf16>
    %7 = vector.extract_strided_slice %3 {offsets = [0, 0], sizes = [8, 256], strides = [1, 1]} : vector<8x384xbf16> to vector<8x256xbf16>
    %cst_3 = arith.constant dense<0.000000e+00> : vector<16x256xf32>
    %8 = tpu.matmul %6, %7, %cst_3 {dimension_numbers = #tpu.dot_dimension_numbers<[1], [0], [0], [1], [0, 0, 1, 1], [], []>} : vector<16x8xbf16>, vector<8x256xbf16>, vector<16x256xf32> -> vector<16x256xf32>
    %9 = arith.addf %4, %8 : vector<16x256xf32>
    %c1 = arith.constant 1 : index
    %c0_4 = arith.constant 0 : index
    %c0_5 = arith.constant 0 : index
    %10 = vector.load %arg2[%c1, %c0_4, %c0_5] : memref<9x16x8xbf16, #tpu.memory_space<vmem>>, vector<1x16x8xbf16>
    %11 = vector.shape_cast %10 : vector<1x16x8xbf16> to vector<16x8xbf16>
    %12 = vector.extract_strided_slice %3 {offsets = [0, 1], sizes = [8, 256], strides = [1, 1]} : vector<8x384xbf16> to vector<8x256xbf16>
    %cst_6 = arith.constant dense<0.000000e+00> : vector<16x256xf32>
    %13 = tpu.matmul %11, %12, %cst_6 {dimension_numbers = #tpu.dot_dimension_numbers<[1], [0], [0], [1], [0, 0, 1, 1], [], []>} : vector<16x8xbf16>, vector<8x256xbf16>, vector<16x256xf32> -> vector<16x256xf32>
    %14 = arith.addf %9, %13 : vector<16x256xf32>
    %c2 = arith.constant 2 : index
    %c0_7 = arith.constant 0 : index
    %c0_8 = arith.constant 0 : index
    %15 = vector.load %arg2[%c2, %c0_7, %c0_8] : memref<9x16x8xbf16, #tpu.memory_space<vmem>>, vector<1x16x8xbf16>
    %16 = vector.shape_cast %15 : vector<1x16x8xbf16> to vector<16x8xbf16>
    %17 = vector.extract_strided_slice %3 {offsets = [0, 2], sizes = [8, 256], strides = [1, 1]} : vector<8x384xbf16> to vector<8x256xbf16>
    %cst_9 = arith.constant dense<0.000000e+00> : vector<16x256xf32>
    %18 = tpu.matmul %16, %17, %cst_9 {dimension_numbers = #tpu.dot_dimension_numbers<[1], [0], [0], [1], [0, 0, 1, 1], [], []>} : vector<16x8xbf16>, vector<8x256xbf16>, vector<16x256xf32> -> vector<16x256xf32>
    %19 = arith.addf %14, %18 : vector<16x256xf32>
    %c3 = arith.constant 3 : index
    %c0_10 = arith.constant 0 : index
    %c0_11 = arith.constant 0 : index
    %20 = vector.load %arg2[%c3, %c0_10, %c0_11] : memref<9x16x8xbf16, #tpu.memory_space<vmem>>, vector<1x16x8xbf16>
    %21 = vector.shape_cast %20 : vector<1x16x8xbf16> to vector<16x8xbf16>
    %22 = vector.extract_strided_slice %3 {offsets = [0, 18], sizes = [8, 256], strides = [1, 1]} : vector<8x384xbf16> to vector<8x256xbf16>
    %cst_12 = arith.constant dense<0.000000e+00> : vector<16x256xf32>
    %23 = tpu.matmul %21, %22, %cst_12 {dimension_numbers = #tpu.dot_dimension_numbers<[1], [0], [0], [1], [0, 0, 1, 1], [], []>} : vector<16x8xbf16>, vector<8x256xbf16>, vector<16x256xf32> -> vector<16x256xf32>
    %24 = arith.addf %19, %23 : vector<16x256xf32>
    %c4 = arith.constant 4 : index
    %c0_13 = arith.constant 0 : index
    %c0_14 = arith.constant 0 : index
    %25 = vector.load %arg2[%c4, %c0_13, %c0_14] : memref<9x16x8xbf16, #tpu.memory_space<vmem>>, vector<1x16x8xbf16>
    %26 = vector.shape_cast %25 : vector<1x16x8xbf16> to vector<16x8xbf16>
    %27 = vector.extract_strided_slice %3 {offsets = [0, 19], sizes = [8, 256], strides = [1, 1]} : vector<8x384xbf16> to vector<8x256xbf16>
    %cst_15 = arith.constant dense<0.000000e+00> : vector<16x256xf32>
    %28 = tpu.matmul %26, %27, %cst_15 {dimension_numbers = #tpu.dot_dimension_numbers<[1], [0], [0], [1], [0, 0, 1, 1], [], []>} : vector<16x8xbf16>, vector<8x256xbf16>, vector<16x256xf32> -> vector<16x256xf32>
    %29 = arith.addf %24, %28 : vector<16x256xf32>
    %c5 = arith.constant 5 : index
    %c0_16 = arith.constant 0 : index
    %c0_17 = arith.constant 0 : index
    %30 = vector.load %arg2[%c5, %c0_16, %c0_17] : memref<9x16x8xbf16, #tpu.memory_space<vmem>>, vector<1x16x8xbf16>
    %31 = vector.shape_cast %30 : vector<1x16x8xbf16> to vector<16x8xbf16>
    %32 = vector.extract_strided_slice %3 {offsets = [0, 20], sizes = [8, 256], strides = [1, 1]} : vector<8x384xbf16> to vector<8x256xbf16>
    %cst_18 = arith.constant dense<0.000000e+00> : vector<16x256xf32>
    %33 = tpu.matmul %31, %32, %cst_18 {dimension_numbers = #tpu.dot_dimension_numbers<[1], [0], [0], [1], [0, 0, 1, 1], [], []>} : vector<16x8xbf16>, vector<8x256xbf16>, vector<16x256xf32> -> vector<16x256xf32>
    %34 = arith.addf %29, %33 : vector<16x256xf32>
    %c6 = arith.constant 6 : index
    %c0_19 = arith.constant 0 : index
    %c0_20 = arith.constant 0 : index
    %35 = vector.load %arg2[%c6, %c0_19, %c0_20] : memref<9x16x8xbf16, #tpu.memory_space<vmem>>, vector<1x16x8xbf16>
    %36 = vector.shape_cast %35 : vector<1x16x8xbf16> to vector<16x8xbf16>
    %37 = vector.extract_strided_slice %3 {offsets = [0, 36], sizes = [8, 256], strides = [1, 1]} : vector<8x384xbf16> to vector<8x256xbf16>
    %cst_21 = arith.constant dense<0.000000e+00> : vector<16x256xf32>
    %38 = tpu.matmul %36, %37, %cst_21 {dimension_numbers = #tpu.dot_dimension_numbers<[1], [0], [0], [1], [0, 0, 1, 1], [], []>} : vector<16x8xbf16>, vector<8x256xbf16>, vector<16x256xf32> -> vector<16x256xf32>
    %39 = arith.addf %34, %38 : vector<16x256xf32>
    %c7 = arith.constant 7 : index
    %c0_22 = arith.constant 0 : index
    %c0_23 = arith.constant 0 : index
    %40 = vector.load %arg2[%c7, %c0_22, %c0_23] : memref<9x16x8xbf16, #tpu.memory_space<vmem>>, vector<1x16x8xbf16>
    %41 = vector.shape_cast %40 : vector<1x16x8xbf16> to vector<16x8xbf16>
    %42 = vector.extract_strided_slice %3 {offsets = [0, 37], sizes = [8, 256], strides = [1, 1]} : vector<8x384xbf16> to vector<8x256xbf16>
    %cst_24 = arith.constant dense<0.000000e+00> : vector<16x256xf32>
    %43 = tpu.matmul %41, %42, %cst_24 {dimension_numbers = #tpu.dot_dimension_numbers<[1], [0], [0], [1], [0, 0, 1, 1], [], []>} : vector<16x8xbf16>, vector<8x256xbf16>, vector<16x256xf32> -> vector<16x256xf32>
    %44 = arith.addf %39, %43 : vector<16x256xf32>
    %c8 = arith.constant 8 : index
    %c0_25 = arith.constant 0 : index
    %c0_26 = arith.constant 0 : index
    %45 = vector.load %arg2[%c8, %c0_25, %c0_26] : memref<9x16x8xbf16, #tpu.memory_space<vmem>>, vector<1x16x8xbf16>
    %46 = vector.shape_cast %45 : vector<1x16x8xbf16> to vector<16x8xbf16>
    %47 = vector.extract_strided_slice %3 {offsets = [0, 38], sizes = [8, 256], strides = [1, 1]} : vector<8x384xbf16> to vector<8x256xbf16>
    %cst_27 = arith.constant dense<0.000000e+00> : vector<16x256xf32>
    %48 = tpu.matmul %46, %47, %cst_27 {dimension_numbers = #tpu.dot_dimension_numbers<[1], [0], [0], [1], [0, 0, 1, 1], [], []>} : vector<16x8xbf16>, vector<8x256xbf16>, vector<16x256xf32> -> vector<16x256xf32>
    %49 = arith.addf %44, %48 : vector<16x256xf32>
    %c0_28 = arith.constant 0 : index
    %c0_29 = arith.constant 0 : index
    %50 = vector.load %arg3[%c0_28, %c0_29] : memref<16x1xf32, #tpu.memory_space<vmem>>, vector<16x1xf32>
    %51 = vector.broadcast %50 : vector<16x1xf32> to vector<16x256xf32>
    %52 = arith.addf %49, %51 : vector<16x256xf32>
    %cst_30 = arith.constant 0.000000e+00 : f32
    %53 = vector.broadcast %cst_30 : f32 to vector<16x256xf32>
    %54 = arith.maximumf %52, %53 : vector<16x256xf32>
    %c0_31 = arith.constant 0 : index
    %c0_32 = arith.constant 0 : index
    %55 = vector.load %arg4[%c0_31, %c0_32] : memref<16x256xf32, #tpu.memory_space<vmem>>, vector<16x256xf32>
    tpu.vector_store %arg4[%c0_31, %c0_32], %54 {strides = array<i32>} : memref<16x256xf32, #tpu.memory_space<vmem>>, vector<16x256xf32>,
    return
  }
  func.func @transform_0(%arg0: i32) -> (i32, i32) {
    %c0_i32 = arith.constant 0 : i32
    %c0_i32_0 = arith.constant 0 : i32
    %c0_i32_1 = arith.constant 0 : i32
    return %c0_i32, %c0_i32_0 : i32, i32
  }
  func.func @transform_1(%arg0: i32) -> (i32, i32, i32) {
    %c0_i32 = arith.constant 0 : i32
    %c0_i32_0 = arith.constant 0 : i32
    %c0_i32_1 = arith.constant 0 : i32
    %c0_i32_2 = arith.constant 0 : i32
    return %c0_i32, %c0_i32_0, %c0_i32_1 : i32, i32, i32
  }
  func.func @transform_2(%arg0: i32) -> (i32, i32) {
    %c0_i32 = arith.constant 0 : i32
    %c0_i32_0 = arith.constant 0 : i32
    %c0_i32_1 = arith.constant 0 : i32
    return %c0_i32, %c0_i32_0 : i32, i32
  }
  func.func @transform_3(%arg0: i32) -> (i32, i32) {
    %c0_i32 = arith.constant 0 : i32
    %c0_i32_0 = arith.constant 0 : i32
    return %c0_i32, %arg0 : i32, i32
  }
}

module attributes {stable_mosaic.version = 11 : i64} {
  func.func @_fc_fused_kernel(%arg0: i32, %arg1: memref<2x1024xbf16, #tpu.memory_space<vmem>>, %arg2: memref<1024x32xbf16, #tpu.memory_space<vmem>>, %arg3: memref<1x32xf32, #tpu.memory_space<vmem>>, %arg4: memref<32x1024xbf16, #tpu.memory_space<vmem>>, %arg5: memref<1x1024xf32, #tpu.memory_space<vmem>>, %arg6: memref<2x32xf32, #tpu.memory_space<vmem>>, %arg7: memref<2x1024xf32, #tpu.memory_space<vmem>>) attributes {dimension_semantics = [#tpu.dimension_semantics<arbitrary>], iteration_bounds = array<i64: 1>, scalar_prefetch = 0 : i64, scratch_operands = 0 : i64, tpu.core_type = #tpu.core_type<tc>, window_params = [{pipeline_mode = #tpu.pipeline_mode<synchronous>, transform_indices = @transform_0, window_bounds = array<i64: 2, 1024>}, {pipeline_mode = #tpu.pipeline_mode<synchronous>, transform_indices = @transform_1, window_bounds = array<i64: 1024, 32>}, {pipeline_mode = #tpu.pipeline_mode<synchronous>, transform_indices = @transform_2, window_bounds = array<i64: 1, 32>}, {pipeline_mode = #tpu.pipeline_mode<synchronous>, transform_indices = @transform_3, window_bounds = array<i64: 32, 1024>}, {pipeline_mode = #tpu.pipeline_mode<synchronous>, transform_indices = @transform_4, window_bounds = array<i64: 1, 1024>}, {pipeline_mode = #tpu.pipeline_mode<synchronous>, transform_indices = @transform_5, window_bounds = array<i64: 2, 32>}, {pipeline_mode = #tpu.pipeline_mode<synchronous>, transform_indices = @transform_6, window_bounds = array<i64: 2, 1024>}]} {
    %c0 = arith.constant 0 : index
    %c0_0 = arith.constant 0 : index
    %0 = vector.load %arg1[%c0, %c0_0] : memref<2x1024xbf16, #tpu.memory_space<vmem>>, vector<2x1024xbf16>
    %c0_1 = arith.constant 0 : index
    %c0_2 = arith.constant 0 : index
    %1 = vector.load %arg2[%c0_1, %c0_2] : memref<1024x32xbf16, #tpu.memory_space<vmem>>, vector<1024x32xbf16>
    %cst = arith.constant dense<0.000000e+00> : vector<2x32xf32>
    %2 = tpu.matmul %0, %1, %cst {dimension_numbers = #tpu.dot_dimension_numbers<[1], [0], [0], [1], [0, 0, 1, 1], [], []>} : vector<2x1024xbf16>, vector<1024x32xbf16>, vector<2x32xf32> -> vector<2x32xf32>
    %c0_3 = arith.constant 0 : index
    %c0_4 = arith.constant 0 : index
    %3 = vector.load %arg3[%c0_3, %c0_4] : memref<1x32xf32, #tpu.memory_space<vmem>>, vector<1x32xf32>
    %4 = vector.broadcast %3 : vector<1x32xf32> to vector<2x32xf32>
    %5 = arith.addf %2, %4 : vector<2x32xf32>
    %cst_5 = arith.constant 0.000000e+00 : f32
    %6 = vector.broadcast %cst_5 : f32 to vector<2x32xf32>
    %7 = arith.maximumf %5, %6 : vector<2x32xf32>
    %c0_6 = arith.constant 0 : index
    %c0_7 = arith.constant 0 : index
    %8 = vector.load %arg6[%c0_6, %c0_7] : memref<2x32xf32, #tpu.memory_space<vmem>>, vector<2x32xf32>
    tpu.vector_store %arg6[%c0_6, %c0_7], %7 {strides = array<i32>} : memref<2x32xf32, #tpu.memory_space<vmem>>, vector<2x32xf32>,
    %9 = arith.truncf %7 : vector<2x32xf32> to vector<2x32xbf16>
    %c0_8 = arith.constant 0 : index
    %c0_9 = arith.constant 0 : index
    %10 = vector.load %arg4[%c0_8, %c0_9] : memref<32x1024xbf16, #tpu.memory_space<vmem>>, vector<32x1024xbf16>
    %cst_10 = arith.constant dense<0.000000e+00> : vector<2x1024xf32>
    %11 = tpu.matmul %9, %10, %cst_10 {dimension_numbers = #tpu.dot_dimension_numbers<[1], [0], [0], [1], [0, 0, 1, 1], [], []>} : vector<2x32xbf16>, vector<32x1024xbf16>, vector<2x1024xf32> -> vector<2x1024xf32>
    %c0_11 = arith.constant 0 : index
    %c0_12 = arith.constant 0 : index
    %12 = vector.load %arg5[%c0_11, %c0_12] : memref<1x1024xf32, #tpu.memory_space<vmem>>, vector<1x1024xf32>
    %13 = vector.broadcast %12 : vector<1x1024xf32> to vector<2x1024xf32>
    %14 = arith.addf %11, %13 : vector<2x1024xf32>
    %c0_13 = arith.constant 0 : index
    %c0_14 = arith.constant 0 : index
    %15 = vector.load %arg7[%c0_13, %c0_14] : memref<2x1024xf32, #tpu.memory_space<vmem>>, vector<2x1024xf32>
    tpu.vector_store %arg7[%c0_13, %c0_14], %14 {strides = array<i32>} : memref<2x1024xf32, #tpu.memory_space<vmem>>, vector<2x1024xf32>,
    return
  }
  func.func @transform_0(%arg0: i32) -> (i32, i32) {
    %c0_i32 = arith.constant 0 : i32
    %c0_i32_0 = arith.constant 0 : i32
    %c0_i32_1 = arith.constant 0 : i32
    return %c0_i32, %c0_i32_0 : i32, i32
  }
  func.func @transform_1(%arg0: i32) -> (i32, i32) {
    %c0_i32 = arith.constant 0 : i32
    %c0_i32_0 = arith.constant 0 : i32
    %c0_i32_1 = arith.constant 0 : i32
    return %c0_i32, %c0_i32_0 : i32, i32
  }
  func.func @transform_2(%arg0: i32) -> (i32, i32) {
    %c0_i32 = arith.constant 0 : i32
    %c0_i32_0 = arith.constant 0 : i32
    %c0_i32_1 = arith.constant 0 : i32
    return %c0_i32, %c0_i32_0 : i32, i32
  }
  func.func @transform_3(%arg0: i32) -> (i32, i32) {
    %c0_i32 = arith.constant 0 : i32
    %c0_i32_0 = arith.constant 0 : i32
    %c0_i32_1 = arith.constant 0 : i32
    return %c0_i32, %c0_i32_0 : i32, i32
  }
  func.func @transform_4(%arg0: i32) -> (i32, i32) {
    %c0_i32 = arith.constant 0 : i32
    %c0_i32_0 = arith.constant 0 : i32
    %c0_i32_1 = arith.constant 0 : i32
    return %c0_i32, %c0_i32_0 : i32, i32
  }
  func.func @transform_5(%arg0: i32) -> (i32, i32) {
    %c0_i32 = arith.constant 0 : i32
    %c0_i32_0 = arith.constant 0 : i32
    %c0_i32_1 = arith.constant 0 : i32
    return %c0_i32, %c0_i32_0 : i32, i32
  }
  func.func @transform_6(%arg0: i32) -> (i32, i32) {
    %c0_i32 = arith.constant 0 : i32
    %c0_i32_0 = arith.constant 0 : i32
    %c0_i32_1 = arith.constant 0 : i32
    return %c0_i32, %c0_i32_0 : i32, i32
  }
}

module attributes {stable_mosaic.version = 11 : i64} {
  func.func @_upsample_mm_kernel(%arg0: i32, %arg1: memref<16x64xbf16, #tpu.memory_space<vmem>>, %arg2: memref<64x256xbf16, #tpu.memory_space<vmem>>, %arg3: memref<16x256xf32, #tpu.memory_space<vmem>>) attributes {dimension_semantics = [#tpu.dimension_semantics<parallel>], iteration_bounds = array<i64: 2>, scalar_prefetch = 0 : i64, scratch_operands = 0 : i64, tpu.core_type = #tpu.core_type<tc>, window_params = [{transform_indices = @transform_0, window_bounds = array<i64: 16, 64>}, {pipeline_mode = #tpu.pipeline_mode<synchronous>, transform_indices = @transform_1, window_bounds = array<i64: 64, 256>}, {transform_indices = @transform_2, window_bounds = array<i64: 16, 256>}]} {
    %c0 = arith.constant 0 : index
    %c0_0 = arith.constant 0 : index
    %0 = vector.load %arg1[%c0, %c0_0] : memref<16x64xbf16, #tpu.memory_space<vmem>>, vector<16x64xbf16>
    %c0_1 = arith.constant 0 : index
    %c0_2 = arith.constant 0 : index
    %1 = vector.load %arg2[%c0_1, %c0_2] : memref<64x256xbf16, #tpu.memory_space<vmem>>, vector<64x256xbf16>
    %cst = arith.constant dense<0.000000e+00> : vector<16x256xf32>
    %2 = tpu.matmul %0, %1, %cst {dimension_numbers = #tpu.dot_dimension_numbers<[1], [0], [0], [1], [0, 0, 1, 1], [], []>} : vector<16x64xbf16>, vector<64x256xbf16>, vector<16x256xf32> -> vector<16x256xf32>
    %c0_3 = arith.constant 0 : index
    %c0_4 = arith.constant 0 : index
    %3 = vector.load %arg3[%c0_3, %c0_4] : memref<16x256xf32, #tpu.memory_space<vmem>>, vector<16x256xf32>
    tpu.vector_store %arg3[%c0_3, %c0_4], %2 {strides = array<i32>} : memref<16x256xf32, #tpu.memory_space<vmem>>, vector<16x256xf32>,
    return
  }
  func.func @transform_0(%arg0: i32) -> (i32, i32) {
    %c0_i32 = arith.constant 0 : i32
    %c0_i32_0 = arith.constant 0 : i32
    return %arg0, %c0_i32 : i32, i32
  }
  func.func @transform_1(%arg0: i32) -> (i32, i32) {
    %c0_i32 = arith.constant 0 : i32
    %c0_i32_0 = arith.constant 0 : i32
    %c0_i32_1 = arith.constant 0 : i32
    return %c0_i32, %c0_i32_0 : i32, i32
  }
  func.func @transform_2(%arg0: i32) -> (i32, i32) {
    %c0_i32 = arith.constant 0 : i32
    %c0_i32_0 = arith.constant 0 : i32
    return %arg0, %c0_i32 : i32, i32
  }
}

module attributes {stable_mosaic.version = 11 : i64} {
  func.func @_conv3x3_kernel(%arg0: i32, %arg1: memref<16x896xbf16, #tpu.memory_space<vmem>>, %arg2: memref<9x8x16xbf16, #tpu.memory_space<vmem>>, %arg3: memref<8x1xf32, #tpu.memory_space<vmem>>, %arg4: memref<8x256xf32, #tpu.memory_space<vmem>>) attributes {dimension_semantics = [#tpu.dimension_semantics<parallel>], iteration_bounds = array<i64: 3>, scalar_prefetch = 0 : i64, scratch_operands = 0 : i64, tpu.core_type = #tpu.core_type<tc>, window_params = [{pipeline_mode = #tpu.pipeline_mode<synchronous>, transform_indices = @transform_0, window_bounds = array<i64: 16, 896>}, {pipeline_mode = #tpu.pipeline_mode<synchronous>, transform_indices = @transform_1, window_bounds = array<i64: 9, 8, 16>}, {pipeline_mode = #tpu.pipeline_mode<synchronous>, transform_indices = @transform_2, window_bounds = array<i64: 8, 1>}, {transform_indices = @transform_3, window_bounds = array<i64: 8, 256>}]} {
    %c256_i32 = arith.constant 256 : i32
    %0 = arith.muli %arg0, %c256_i32 : i32
    %1 = tpu.assume_multiple %0, 128 : i32
    %c0 = arith.constant 0 : index
    %2 = arith.index_cast %1 : i32 to index
    %3 = vector.load %arg1[%c0, %2] : memref<16x896xbf16, #tpu.memory_space<vmem>>, vector<16x384xbf16>
    %cst = arith.constant 0.000000e+00 : f32
    %4 = vector.broadcast %cst : f32 to vector<8x256xf32>
    %c0_0 = arith.constant 0 : index
    %c0_1 = arith.constant 0 : index
    %c0_2 = arith.constant 0 : index
    %5 = vector.load %arg2[%c0_0, %c0_1, %c0_2] : memref<9x8x16xbf16, #tpu.memory_space<vmem>>, vector<1x8x16xbf16>
    %6 = vector.shape_cast %5 : vector<1x8x16xbf16> to vector<8x16xbf16>
    %7 = vector.extract_strided_slice %3 {offsets = [0, 0], sizes = [16, 256], strides = [1, 1]} : vector<16x384xbf16> to vector<16x256xbf16>
    %cst_3 = arith.constant dense<0.000000e+00> : vector<8x256xf32>
    %8 = tpu.matmul %6, %7, %cst_3 {dimension_numbers = #tpu.dot_dimension_numbers<[1], [0], [0], [1], [0, 0, 1, 1], [], []>} : vector<8x16xbf16>, vector<16x256xbf16>, vector<8x256xf32> -> vector<8x256xf32>
    %9 = arith.addf %4, %8 : vector<8x256xf32>
    %c1 = arith.constant 1 : index
    %c0_4 = arith.constant 0 : index
    %c0_5 = arith.constant 0 : index
    %10 = vector.load %arg2[%c1, %c0_4, %c0_5] : memref<9x8x16xbf16, #tpu.memory_space<vmem>>, vector<1x8x16xbf16>
    %11 = vector.shape_cast %10 : vector<1x8x16xbf16> to vector<8x16xbf16>
    %12 = vector.extract_strided_slice %3 {offsets = [0, 1], sizes = [16, 256], strides = [1, 1]} : vector<16x384xbf16> to vector<16x256xbf16>
    %cst_6 = arith.constant dense<0.000000e+00> : vector<8x256xf32>
    %13 = tpu.matmul %11, %12, %cst_6 {dimension_numbers = #tpu.dot_dimension_numbers<[1], [0], [0], [1], [0, 0, 1, 1], [], []>} : vector<8x16xbf16>, vector<16x256xbf16>, vector<8x256xf32> -> vector<8x256xf32>
    %14 = arith.addf %9, %13 : vector<8x256xf32>
    %c2 = arith.constant 2 : index
    %c0_7 = arith.constant 0 : index
    %c0_8 = arith.constant 0 : index
    %15 = vector.load %arg2[%c2, %c0_7, %c0_8] : memref<9x8x16xbf16, #tpu.memory_space<vmem>>, vector<1x8x16xbf16>
    %16 = vector.shape_cast %15 : vector<1x8x16xbf16> to vector<8x16xbf16>
    %17 = vector.extract_strided_slice %3 {offsets = [0, 2], sizes = [16, 256], strides = [1, 1]} : vector<16x384xbf16> to vector<16x256xbf16>
    %cst_9 = arith.constant dense<0.000000e+00> : vector<8x256xf32>
    %18 = tpu.matmul %16, %17, %cst_9 {dimension_numbers = #tpu.dot_dimension_numbers<[1], [0], [0], [1], [0, 0, 1, 1], [], []>} : vector<8x16xbf16>, vector<16x256xbf16>, vector<8x256xf32> -> vector<8x256xf32>
    %19 = arith.addf %14, %18 : vector<8x256xf32>
    %c3 = arith.constant 3 : index
    %c0_10 = arith.constant 0 : index
    %c0_11 = arith.constant 0 : index
    %20 = vector.load %arg2[%c3, %c0_10, %c0_11] : memref<9x8x16xbf16, #tpu.memory_space<vmem>>, vector<1x8x16xbf16>
    %21 = vector.shape_cast %20 : vector<1x8x16xbf16> to vector<8x16xbf16>
    %22 = vector.extract_strided_slice %3 {offsets = [0, 18], sizes = [16, 256], strides = [1, 1]} : vector<16x384xbf16> to vector<16x256xbf16>
    %cst_12 = arith.constant dense<0.000000e+00> : vector<8x256xf32>
    %23 = tpu.matmul %21, %22, %cst_12 {dimension_numbers = #tpu.dot_dimension_numbers<[1], [0], [0], [1], [0, 0, 1, 1], [], []>} : vector<8x16xbf16>, vector<16x256xbf16>, vector<8x256xf32> -> vector<8x256xf32>
    %24 = arith.addf %19, %23 : vector<8x256xf32>
    %c4 = arith.constant 4 : index
    %c0_13 = arith.constant 0 : index
    %c0_14 = arith.constant 0 : index
    %25 = vector.load %arg2[%c4, %c0_13, %c0_14] : memref<9x8x16xbf16, #tpu.memory_space<vmem>>, vector<1x8x16xbf16>
    %26 = vector.shape_cast %25 : vector<1x8x16xbf16> to vector<8x16xbf16>
    %27 = vector.extract_strided_slice %3 {offsets = [0, 19], sizes = [16, 256], strides = [1, 1]} : vector<16x384xbf16> to vector<16x256xbf16>
    %cst_15 = arith.constant dense<0.000000e+00> : vector<8x256xf32>
    %28 = tpu.matmul %26, %27, %cst_15 {dimension_numbers = #tpu.dot_dimension_numbers<[1], [0], [0], [1], [0, 0, 1, 1], [], []>} : vector<8x16xbf16>, vector<16x256xbf16>, vector<8x256xf32> -> vector<8x256xf32>
    %29 = arith.addf %24, %28 : vector<8x256xf32>
    %c5 = arith.constant 5 : index
    %c0_16 = arith.constant 0 : index
    %c0_17 = arith.constant 0 : index
    %30 = vector.load %arg2[%c5, %c0_16, %c0_17] : memref<9x8x16xbf16, #tpu.memory_space<vmem>>, vector<1x8x16xbf16>
    %31 = vector.shape_cast %30 : vector<1x8x16xbf16> to vector<8x16xbf16>
    %32 = vector.extract_strided_slice %3 {offsets = [0, 20], sizes = [16, 256], strides = [1, 1]} : vector<16x384xbf16> to vector<16x256xbf16>
    %cst_18 = arith.constant dense<0.000000e+00> : vector<8x256xf32>
    %33 = tpu.matmul %31, %32, %cst_18 {dimension_numbers = #tpu.dot_dimension_numbers<[1], [0], [0], [1], [0, 0, 1, 1], [], []>} : vector<8x16xbf16>, vector<16x256xbf16>, vector<8x256xf32> -> vector<8x256xf32>
    %34 = arith.addf %29, %33 : vector<8x256xf32>
    %c6 = arith.constant 6 : index
    %c0_19 = arith.constant 0 : index
    %c0_20 = arith.constant 0 : index
    %35 = vector.load %arg2[%c6, %c0_19, %c0_20] : memref<9x8x16xbf16, #tpu.memory_space<vmem>>, vector<1x8x16xbf16>
    %36 = vector.shape_cast %35 : vector<1x8x16xbf16> to vector<8x16xbf16>
    %37 = vector.extract_strided_slice %3 {offsets = [0, 36], sizes = [16, 256], strides = [1, 1]} : vector<16x384xbf16> to vector<16x256xbf16>
    %cst_21 = arith.constant dense<0.000000e+00> : vector<8x256xf32>
    %38 = tpu.matmul %36, %37, %cst_21 {dimension_numbers = #tpu.dot_dimension_numbers<[1], [0], [0], [1], [0, 0, 1, 1], [], []>} : vector<8x16xbf16>, vector<16x256xbf16>, vector<8x256xf32> -> vector<8x256xf32>
    %39 = arith.addf %34, %38 : vector<8x256xf32>
    %c7 = arith.constant 7 : index
    %c0_22 = arith.constant 0 : index
    %c0_23 = arith.constant 0 : index
    %40 = vector.load %arg2[%c7, %c0_22, %c0_23] : memref<9x8x16xbf16, #tpu.memory_space<vmem>>, vector<1x8x16xbf16>
    %41 = vector.shape_cast %40 : vector<1x8x16xbf16> to vector<8x16xbf16>
    %42 = vector.extract_strided_slice %3 {offsets = [0, 37], sizes = [16, 256], strides = [1, 1]} : vector<16x384xbf16> to vector<16x256xbf16>
    %cst_24 = arith.constant dense<0.000000e+00> : vector<8x256xf32>
    %43 = tpu.matmul %41, %42, %cst_24 {dimension_numbers = #tpu.dot_dimension_numbers<[1], [0], [0], [1], [0, 0, 1, 1], [], []>} : vector<8x16xbf16>, vector<16x256xbf16>, vector<8x256xf32> -> vector<8x256xf32>
    %44 = arith.addf %39, %43 : vector<8x256xf32>
    %c8 = arith.constant 8 : index
    %c0_25 = arith.constant 0 : index
    %c0_26 = arith.constant 0 : index
    %45 = vector.load %arg2[%c8, %c0_25, %c0_26] : memref<9x8x16xbf16, #tpu.memory_space<vmem>>, vector<1x8x16xbf16>
    %46 = vector.shape_cast %45 : vector<1x8x16xbf16> to vector<8x16xbf16>
    %47 = vector.extract_strided_slice %3 {offsets = [0, 38], sizes = [16, 256], strides = [1, 1]} : vector<16x384xbf16> to vector<16x256xbf16>
    %cst_27 = arith.constant dense<0.000000e+00> : vector<8x256xf32>
    %48 = tpu.matmul %46, %47, %cst_27 {dimension_numbers = #tpu.dot_dimension_numbers<[1], [0], [0], [1], [0, 0, 1, 1], [], []>} : vector<8x16xbf16>, vector<16x256xbf16>, vector<8x256xf32> -> vector<8x256xf32>
    %49 = arith.addf %44, %48 : vector<8x256xf32>
    %c0_28 = arith.constant 0 : index
    %c0_29 = arith.constant 0 : index
    %50 = vector.load %arg3[%c0_28, %c0_29] : memref<8x1xf32, #tpu.memory_space<vmem>>, vector<8x1xf32>
    %51 = vector.broadcast %50 : vector<8x1xf32> to vector<8x256xf32>
    %52 = arith.addf %49, %51 : vector<8x256xf32>
    %cst_30 = arith.constant 0.000000e+00 : f32
    %53 = vector.broadcast %cst_30 : f32 to vector<8x256xf32>
    %54 = arith.maximumf %52, %53 : vector<8x256xf32>
    %c0_31 = arith.constant 0 : index
    %c0_32 = arith.constant 0 : index
    %55 = vector.load %arg4[%c0_31, %c0_32] : memref<8x256xf32, #tpu.memory_space<vmem>>, vector<8x256xf32>
    tpu.vector_store %arg4[%c0_31, %c0_32], %54 {strides = array<i32>} : memref<8x256xf32, #tpu.memory_space<vmem>>, vector<8x256xf32>,
    return
  }
  func.func @transform_0(%arg0: i32) -> (i32, i32) {
    %c0_i32 = arith.constant 0 : i32
    %c0_i32_0 = arith.constant 0 : i32
    %c0_i32_1 = arith.constant 0 : i32
    return %c0_i32, %c0_i32_0 : i32, i32
  }
  func.func @transform_1(%arg0: i32) -> (i32, i32, i32) {
    %c0_i32 = arith.constant 0 : i32
    %c0_i32_0 = arith.constant 0 : i32
    %c0_i32_1 = arith.constant 0 : i32
    %c0_i32_2 = arith.constant 0 : i32
    return %c0_i32, %c0_i32_0, %c0_i32_1 : i32, i32, i32
  }
  func.func @transform_2(%arg0: i32) -> (i32, i32) {
    %c0_i32 = arith.constant 0 : i32
    %c0_i32_0 = arith.constant 0 : i32
    %c0_i32_1 = arith.constant 0 : i32
    return %c0_i32, %c0_i32_0 : i32, i32
  }
  func.func @transform_3(%arg0: i32) -> (i32, i32) {
    %c0_i32 = arith.constant 0 : i32
    %c0_i32_0 = arith.constant 0 : i32
    return %c0_i32, %arg0 : i32, i32
  }
}

module attributes {stable_mosaic.version = 11 : i64} {
  func.func @_upsample_mm_kernel(%arg0: i32, %arg1: memref<8x256xbf16, #tpu.memory_space<vmem>>, %arg2: memref<256x1024xbf16, #tpu.memory_space<vmem>>, %arg3: memref<8x1024xf32, #tpu.memory_space<vmem>>) attributes {dimension_semantics = [#tpu.dimension_semantics<parallel>], iteration_bounds = array<i64: 2>, scalar_prefetch = 0 : i64, scratch_operands = 0 : i64, tpu.core_type = #tpu.core_type<tc>, window_params = [{transform_indices = @transform_0, window_bounds = array<i64: 8, 256>}, {pipeline_mode = #tpu.pipeline_mode<synchronous>, transform_indices = @transform_1, window_bounds = array<i64: 256, 1024>}, {transform_indices = @transform_2, window_bounds = array<i64: 8, 1024>}]} {
    %c0 = arith.constant 0 : index
    %c0_0 = arith.constant 0 : index
    %0 = vector.load %arg1[%c0, %c0_0] : memref<8x256xbf16, #tpu.memory_space<vmem>>, vector<8x256xbf16>
    %c0_1 = arith.constant 0 : index
    %c0_2 = arith.constant 0 : index
    %1 = vector.load %arg2[%c0_1, %c0_2] : memref<256x1024xbf16, #tpu.memory_space<vmem>>, vector<256x1024xbf16>
    %cst = arith.constant dense<0.000000e+00> : vector<8x1024xf32>
    %2 = tpu.matmul %0, %1, %cst {dimension_numbers = #tpu.dot_dimension_numbers<[1], [0], [0], [1], [0, 0, 1, 1], [], []>} : vector<8x256xbf16>, vector<256x1024xbf16>, vector<8x1024xf32> -> vector<8x1024xf32>
    %c0_3 = arith.constant 0 : index
    %c0_4 = arith.constant 0 : index
    %3 = vector.load %arg3[%c0_3, %c0_4] : memref<8x1024xf32, #tpu.memory_space<vmem>>, vector<8x1024xf32>
    tpu.vector_store %arg3[%c0_3, %c0_4], %2 {strides = array<i32>} : memref<8x1024xf32, #tpu.memory_space<vmem>>, vector<8x1024xf32>,
    return
  }
  func.func @transform_0(%arg0: i32) -> (i32, i32) {
    %c0_i32 = arith.constant 0 : i32
    %c0_i32_0 = arith.constant 0 : i32
    return %arg0, %c0_i32 : i32, i32
  }
  func.func @transform_1(%arg0: i32) -> (i32, i32) {
    %c0_i32 = arith.constant 0 : i32
    %c0_i32_0 = arith.constant 0 : i32
    %c0_i32_1 = arith.constant 0 : i32
    return %c0_i32, %c0_i32_0 : i32, i32
  }
  func.func @transform_2(%arg0: i32) -> (i32, i32) {
    %c0_i32 = arith.constant 0 : i32
    %c0_i32_0 = arith.constant 0 : i32
    return %arg0, %c0_i32 : i32, i32
  }
}

module attributes {stable_mosaic.version = 11 : i64} {
  func.func @_conv3x3_kernel(%arg0: i32, %arg1: memref<8x2688xbf16, #tpu.memory_space<vmem>>, %arg2: memref<9x3x8xbf16, #tpu.memory_space<vmem>>, %arg3: memref<3x1xf32, #tpu.memory_space<vmem>>, %arg4: memref<3x640xf32, #tpu.memory_space<vmem>>) attributes {dimension_semantics = [#tpu.dimension_semantics<parallel>], iteration_bounds = array<i64: 4>, scalar_prefetch = 0 : i64, scratch_operands = 0 : i64, tpu.core_type = #tpu.core_type<tc>, window_params = [{pipeline_mode = #tpu.pipeline_mode<synchronous>, transform_indices = @transform_0, window_bounds = array<i64: 8, 2688>}, {pipeline_mode = #tpu.pipeline_mode<synchronous>, transform_indices = @transform_1, window_bounds = array<i64: 9, 3, 8>}, {pipeline_mode = #tpu.pipeline_mode<synchronous>, transform_indices = @transform_2, window_bounds = array<i64: 3, 1>}, {transform_indices = @transform_3, window_bounds = array<i64: 3, 640>}]} {
    %c640_i32 = arith.constant 640 : i32
    %0 = arith.muli %arg0, %c640_i32 : i32
    %1 = tpu.assume_multiple %0, 128 : i32
    %c0 = arith.constant 0 : index
    %2 = arith.index_cast %1 : i32 to index
    %3 = vector.load %arg1[%c0, %2] : memref<8x2688xbf16, #tpu.memory_space<vmem>>, vector<8x768xbf16>
    %cst = arith.constant 0.000000e+00 : f32
    %4 = vector.broadcast %cst : f32 to vector<3x640xf32>
    %c0_0 = arith.constant 0 : index
    %c0_1 = arith.constant 0 : index
    %c0_2 = arith.constant 0 : index
    %5 = vector.load %arg2[%c0_0, %c0_1, %c0_2] : memref<9x3x8xbf16, #tpu.memory_space<vmem>>, vector<1x3x8xbf16>
    %6 = vector.shape_cast %5 : vector<1x3x8xbf16> to vector<3x8xbf16>
    %7 = vector.extract_strided_slice %3 {offsets = [0, 0], sizes = [8, 640], strides = [1, 1]} : vector<8x768xbf16> to vector<8x640xbf16>
    %cst_3 = arith.constant dense<0.000000e+00> : vector<3x640xf32>
    %8 = tpu.matmul %6, %7, %cst_3 {dimension_numbers = #tpu.dot_dimension_numbers<[1], [0], [0], [1], [0, 0, 1, 1], [], []>} : vector<3x8xbf16>, vector<8x640xbf16>, vector<3x640xf32> -> vector<3x640xf32>
    %9 = arith.addf %4, %8 : vector<3x640xf32>
    %c1 = arith.constant 1 : index
    %c0_4 = arith.constant 0 : index
    %c0_5 = arith.constant 0 : index
    %10 = vector.load %arg2[%c1, %c0_4, %c0_5] : memref<9x3x8xbf16, #tpu.memory_space<vmem>>, vector<1x3x8xbf16>
    %11 = vector.shape_cast %10 : vector<1x3x8xbf16> to vector<3x8xbf16>
    %12 = vector.extract_strided_slice %3 {offsets = [0, 1], sizes = [8, 640], strides = [1, 1]} : vector<8x768xbf16> to vector<8x640xbf16>
    %cst_6 = arith.constant dense<0.000000e+00> : vector<3x640xf32>
    %13 = tpu.matmul %11, %12, %cst_6 {dimension_numbers = #tpu.dot_dimension_numbers<[1], [0], [0], [1], [0, 0, 1, 1], [], []>} : vector<3x8xbf16>, vector<8x640xbf16>, vector<3x640xf32> -> vector<3x640xf32>
    %14 = arith.addf %9, %13 : vector<3x640xf32>
    %c2 = arith.constant 2 : index
    %c0_7 = arith.constant 0 : index
    %c0_8 = arith.constant 0 : index
    %15 = vector.load %arg2[%c2, %c0_7, %c0_8] : memref<9x3x8xbf16, #tpu.memory_space<vmem>>, vector<1x3x8xbf16>
    %16 = vector.shape_cast %15 : vector<1x3x8xbf16> to vector<3x8xbf16>
    %17 = vector.extract_strided_slice %3 {offsets = [0, 2], sizes = [8, 640], strides = [1, 1]} : vector<8x768xbf16> to vector<8x640xbf16>
    %cst_9 = arith.constant dense<0.000000e+00> : vector<3x640xf32>
    %18 = tpu.matmul %16, %17, %cst_9 {dimension_numbers = #tpu.dot_dimension_numbers<[1], [0], [0], [1], [0, 0, 1, 1], [], []>} : vector<3x8xbf16>, vector<8x640xbf16>, vector<3x640xf32> -> vector<3x640xf32>
    %19 = arith.addf %14, %18 : vector<3x640xf32>
    %c3 = arith.constant 3 : index
    %c0_10 = arith.constant 0 : index
    %c0_11 = arith.constant 0 : index
    %20 = vector.load %arg2[%c3, %c0_10, %c0_11] : memref<9x3x8xbf16, #tpu.memory_space<vmem>>, vector<1x3x8xbf16>
    %21 = vector.shape_cast %20 : vector<1x3x8xbf16> to vector<3x8xbf16>
    %22 = vector.extract_strided_slice %3 {offsets = [0, 34], sizes = [8, 640], strides = [1, 1]} : vector<8x768xbf16> to vector<8x640xbf16>
    %cst_12 = arith.constant dense<0.000000e+00> : vector<3x640xf32>
    %23 = tpu.matmul %21, %22, %cst_12 {dimension_numbers = #tpu.dot_dimension_numbers<[1], [0], [0], [1], [0, 0, 1, 1], [], []>} : vector<3x8xbf16>, vector<8x640xbf16>, vector<3x640xf32> -> vector<3x640xf32>
    %24 = arith.addf %19, %23 : vector<3x640xf32>
    %c4 = arith.constant 4 : index
    %c0_13 = arith.constant 0 : index
    %c0_14 = arith.constant 0 : index
    %25 = vector.load %arg2[%c4, %c0_13, %c0_14] : memref<9x3x8xbf16, #tpu.memory_space<vmem>>, vector<1x3x8xbf16>
    %26 = vector.shape_cast %25 : vector<1x3x8xbf16> to vector<3x8xbf16>
    %27 = vector.extract_strided_slice %3 {offsets = [0, 35], sizes = [8, 640], strides = [1, 1]} : vector<8x768xbf16> to vector<8x640xbf16>
    %cst_15 = arith.constant dense<0.000000e+00> : vector<3x640xf32>
    %28 = tpu.matmul %26, %27, %cst_15 {dimension_numbers = #tpu.dot_dimension_numbers<[1], [0], [0], [1], [0, 0, 1, 1], [], []>} : vector<3x8xbf16>, vector<8x640xbf16>, vector<3x640xf32> -> vector<3x640xf32>
    %29 = arith.addf %24, %28 : vector<3x640xf32>
    %c5 = arith.constant 5 : index
    %c0_16 = arith.constant 0 : index
    %c0_17 = arith.constant 0 : index
    %30 = vector.load %arg2[%c5, %c0_16, %c0_17] : memref<9x3x8xbf16, #tpu.memory_space<vmem>>, vector<1x3x8xbf16>
    %31 = vector.shape_cast %30 : vector<1x3x8xbf16> to vector<3x8xbf16>
    %32 = vector.extract_strided_slice %3 {offsets = [0, 36], sizes = [8, 640], strides = [1, 1]} : vector<8x768xbf16> to vector<8x640xbf16>
    %cst_18 = arith.constant dense<0.000000e+00> : vector<3x640xf32>
    %33 = tpu.matmul %31, %32, %cst_18 {dimension_numbers = #tpu.dot_dimension_numbers<[1], [0], [0], [1], [0, 0, 1, 1], [], []>} : vector<3x8xbf16>, vector<8x640xbf16>, vector<3x640xf32> -> vector<3x640xf32>
    %34 = arith.addf %29, %33 : vector<3x640xf32>
    %c6 = arith.constant 6 : index
    %c0_19 = arith.constant 0 : index
    %c0_20 = arith.constant 0 : index
    %35 = vector.load %arg2[%c6, %c0_19, %c0_20] : memref<9x3x8xbf16, #tpu.memory_space<vmem>>, vector<1x3x8xbf16>
    %36 = vector.shape_cast %35 : vector<1x3x8xbf16> to vector<3x8xbf16>
    %37 = vector.extract_strided_slice %3 {offsets = [0, 68], sizes = [8, 640], strides = [1, 1]} : vector<8x768xbf16> to vector<8x640xbf16>
    %cst_21 = arith.constant dense<0.000000e+00> : vector<3x640xf32>
    %38 = tpu.matmul %36, %37, %cst_21 {dimension_numbers = #tpu.dot_dimension_numbers<[1], [0], [0], [1], [0, 0, 1, 1], [], []>} : vector<3x8xbf16>, vector<8x640xbf16>, vector<3x640xf32> -> vector<3x640xf32>
    %39 = arith.addf %34, %38 : vector<3x640xf32>
    %c7 = arith.constant 7 : index
    %c0_22 = arith.constant 0 : index
    %c0_23 = arith.constant 0 : index
    %40 = vector.load %arg2[%c7, %c0_22, %c0_23] : memref<9x3x8xbf16, #tpu.memory_space<vmem>>, vector<1x3x8xbf16>
    %41 = vector.shape_cast %40 : vector<1x3x8xbf16> to vector<3x8xbf16>
    %42 = vector.extract_strided_slice %3 {offsets = [0, 69], sizes = [8, 640], strides = [1, 1]} : vector<8x768xbf16> to vector<8x640xbf16>
    %cst_24 = arith.constant dense<0.000000e+00> : vector<3x640xf32>
    %43 = tpu.matmul %41, %42, %cst_24 {dimension_numbers = #tpu.dot_dimension_numbers<[1], [0], [0], [1], [0, 0, 1, 1], [], []>} : vector<3x8xbf16>, vector<8x640xbf16>, vector<3x640xf32> -> vector<3x640xf32>
    %44 = arith.addf %39, %43 : vector<3x640xf32>
    %c8 = arith.constant 8 : index
    %c0_25 = arith.constant 0 : index
    %c0_26 = arith.constant 0 : index
    %45 = vector.load %arg2[%c8, %c0_25, %c0_26] : memref<9x3x8xbf16, #tpu.memory_space<vmem>>, vector<1x3x8xbf16>
    %46 = vector.shape_cast %45 : vector<1x3x8xbf16> to vector<3x8xbf16>
    %47 = vector.extract_strided_slice %3 {offsets = [0, 70], sizes = [8, 640], strides = [1, 1]} : vector<8x768xbf16> to vector<8x640xbf16>
    %cst_27 = arith.constant dense<0.000000e+00> : vector<3x640xf32>
    %48 = tpu.matmul %46, %47, %cst_27 {dimension_numbers = #tpu.dot_dimension_numbers<[1], [0], [0], [1], [0, 0, 1, 1], [], []>} : vector<3x8xbf16>, vector<8x640xbf16>, vector<3x640xf32> -> vector<3x640xf32>
    %49 = arith.addf %44, %48 : vector<3x640xf32>
    %c0_28 = arith.constant 0 : index
    %c0_29 = arith.constant 0 : index
    %50 = vector.load %arg3[%c0_28, %c0_29] : memref<3x1xf32, #tpu.memory_space<vmem>>, vector<3x1xf32>
    %51 = vector.broadcast %50 : vector<3x1xf32> to vector<3x640xf32>
    %52 = arith.addf %49, %51 : vector<3x640xf32>
    %53 = math.tanh %52 : vector<3x640xf32>
    %c0_30 = arith.constant 0 : index
    %c0_31 = arith.constant 0 : index
    %54 = vector.load %arg4[%c0_30, %c0_31] : memref<3x640xf32, #tpu.memory_space<vmem>>, vector<3x640xf32>
    tpu.vector_store %arg4[%c0_30, %c0_31], %53 {strides = array<i32>} : memref<3x640xf32, #tpu.memory_space<vmem>>, vector<3x640xf32>,
    return
  }
  func.func @transform_0(%arg0: i32) -> (i32, i32) {
    %c0_i32 = arith.constant 0 : i32
    %c0_i32_0 = arith.constant 0 : i32
    %c0_i32_1 = arith.constant 0 : i32
    return %c0_i32, %c0_i32_0 : i32, i32
  }
  func.func @transform_1(%arg0: i32) -> (i32, i32, i32) {
    %c0_i32 = arith.constant 0 : i32
    %c0_i32_0 = arith.constant 0 : i32
    %c0_i32_1 = arith.constant 0 : i32
    %c0_i32_2 = arith.constant 0 : i32
    return %c0_i32, %c0_i32_0, %c0_i32_1 : i32, i32, i32
  }
  func.func @transform_2(%arg0: i32) -> (i32, i32) {
    %c0_i32 = arith.constant 0 : i32
    %c0_i32_0 = arith.constant 0 : i32
    %c0_i32_1 = arith.constant 0 : i32
    return %c0_i32, %c0_i32_0 : i32, i32
  }
  func.func @transform_3(%arg0: i32) -> (i32, i32) {
    %c0_i32 = arith.constant 0 : i32
    %c0_i32_0 = arith.constant 0 : i32
    return %c0_i32, %arg0 : i32, i32
  }
}

</mosaic_0001>

<llo_original>
// kernel: conv_autoencoder_forward.7
$region0: #{conv_autoencoder_forward.7}
  #allocation0 [shape = 'u32[]', space=smem, size = 0x4, offset = 0x4, fixed_abs, tag = 'smem constant byte address 0x4 - core index']
  #allocation1 [shape = 'u32[72,128]{1,0:T(1,128)}', space=vmem, size = 0x9000, scoped, tag = 'internal scratch']
  %s0 = inlined_call_operand.vmem [shape: bf16[3,2688], index: 0, kind: input, shape index: {}]
  %s1 = inlined_call_operand.vmem [shape: bf16[9,8,3], index: 1, kind: input, shape index: {}]
  %s2 = inlined_call_operand.vmem [shape: f32[8,1], index: 2, kind: input, shape index: {}]
  %s3 = inlined_call_operand.vmem [shape: f32[8,2560], index: 3, kind: output, shape index: {}]
  %s4 = sld [smem:[#allocation0]]
  $region45: #{conv_autoencoder_forward.7} parent=0
    _
  %s6 = ssub.s32 1, %s4
  %s7 = scalar_select 0, %s6, %s4
  loop: start=0, step=1, limit=6
  $region2: #{conv_autoencoder_forward.7} parent=0 // loop_pre_header
    _
  $region3: #{conv_autoencoder_forward.7} parent=0 // loop_header
    %s9 = sphi 0, %s13
    %p10 = scmp.ge.s32.totalorder %s9, 6
    %s17 = sphi 0, %s17
    %s19 = sphi 0, %s17
    %s20 = sphi 0, %s19
    %s34 = sphi 0, %s20
    %s38 = sphi 0, %s38
    %s40 = sphi 0, %s38
    %s41 = sphi 0, %s40
    %s55 = sphi 0, %s41
    %s59 = sphi 0, %s59
    %s61 = sphi 0, %s59
    %s62 = sphi 0, %s61
    %s76 = sphi 0, %s62
    %s82 = sphi 0, %s84
    %s85 = sphi 0, %s82
    %s86 = sphi 0, %s85
    %s102 = sphi 0, %s86
  $region4: #{conv_autoencoder_forward.7} parent=0 // loop_header_branch
    %12 = sbr.rel (%p10) target = $region8
  $region5: #{conv_autoencoder_forward.7} parent=0 // loop_body
    %s14 = ssub.s32 %s9, 1
    %s15 = ssub.s32 %s9, 2
    %s16 = sadd.s32 %s9, 1
    %s18 = sadd.s32 %s17, 1
    %p21 = scmp.eq.s32.totalorder %s9, 3
    %p22 = scmp.ne.s32.totalorder %s17, %s19
    %p23 = scmp.eq.s32.totalorder %s9, 0
    %p24 = por %p22, %p23
    %p25 = scmp.ne.s32.totalorder %s17, %s19
    %p26 = scmp.eq.s32.totalorder %s14, 3
    %p27 = por %p25, %p26
    %p28 = scmp.ne.s32.totalorder %s19, %s20
    %p29 = scmp.eq.s32.totalorder %s14, 0
    %p30 = por %p28, %p29
    %p31 = scmp.ne.s32.totalorder %s19, %s20
    %p32 = scmp.eq.s32.totalorder %s15, 3
    %p33 = por %p31, %p32
    %p35 = scmp.ne.s32.totalorder %s20, %s34
    %p36 = scmp.eq.s32.totalorder %s15, 0
    %p37 = por %p35, %p36
    %s39 = sadd.s32 %s38, 1
    %p42 = scmp.eq.s32.totalorder %s9, 3
    %p43 = scmp.ne.s32.totalorder %s38, %s40
    %p44 = scmp.eq.s32.totalorder %s9, 0
    %p45 = por %p43, %p44
    %p46 = scmp.ne.s32.totalorder %s38, %s40
    %p47 = scmp.eq.s32.totalorder %s14, 3
    %p48 = por %p46, %p47
    %p49 = scmp.ne.s32.totalorder %s40, %s41
    %p50 = scmp.eq.s32.totalorder %s14, 0
    %p51 = por %p49, %p50
    %p52 = scmp.ne.s32.totalorder %s40, %s41
    %p53 = scmp.eq.s32.totalorder %s15, 3
    %p54 = por %p52, %p53
    %p56 = scmp.ne.s32.totalorder %s41, %s55
    %p57 = scmp.eq.s32.totalorder %s15, 0
    %p58 = por %p56, %p57
    %s60 = sadd.s32 %s59, 1
    %p63 = scmp.eq.s32.totalorder %s9, 3
    %p64 = scmp.ne.s32.totalorder %s59, %s61
    %p65 = scmp.eq.s32.totalorder %s9, 0
    %p66 = por %p64, %p65
    %p67 = scmp.ne.s32.totalorder %s59, %s61
    %p68 = scmp.eq.s32.totalorder %s14, 3
    %p69 = por %p67, %p68
    %p70 = scmp.ne.s32.totalorder %s61, %s62
    %p71 = scmp.eq.s32.totalorder %s14, 0
    %p72 = por %p70, %p71
    %p73 = scmp.ne.s32.totalorder %s61, %s62
    %p74 = scmp.eq.s32.totalorder %s15, 3
    %p75 = por %p73, %p74
    %p77 = scmp.ne.s32.totalorder %s62, %s76
    %p78 = scmp.eq.s32.totalorder %s15, 0
    %p79 = por %p77, %p78
    %s80 = ssub.s32 %s9, %s16
    %p81 = scmp.eq.s32.totalorder %s80, 0
    %s83 = sadd.s32 %s82, 1
    %s84 = scalar_select %p81, %s82, %s83
    %p87 = pneg %p81
    %p88 = scmp.eq.s32.totalorder %s9, 3
    %p89 = por %p87, %p88
    %p90 = scmp.ne.s32.totalorder %s82, %s85
    %p91 = scmp.eq.s32.totalorder %s9, 0
    %p92 = por %p90, %p91
    %p93 = scmp.ne.s32.totalorder %s82, %s85
    %p94 = scmp.eq.s32.totalorder %s14, 3
    %p95 = por %p93, %p94
    %p96 = scmp.ne.s32.totalorder %s85, %s86
    %p97 = scmp.eq.s32.totalorder %s14, 0
    %p98 = por %p96, %p97
    %p99 = scmp.ne.s32.totalorder %s85, %s86
    %p100 = scmp.eq.s32.totalorder %s15, 3
    %p101 = por %p99, %p100
    %p103 = scmp.ne.s32.totalorder %s86, %s102
    %p104 = scmp.eq.s32.totalorder %s15, 0
    %p105 = por %p103, %p104
    %p106 = scmp.le.s32.totalorder 1, %s9
    %p107 = scmp.lt.s32.totalorder %s9, 5
    %p108 = pnand %p106, %p107
    %p109 = pneg %p108
    // Predicated region
    $region9: #{conv_autoencoder_forward.7} parent=5 // pred_check
      _
    $region10: #{conv_autoencoder_forward.7} parent=5 // pred_check_branch
      %111 = sbr.rel (%p108) target = $region12
    $region11: #{conv_autoencoder_forward.7} parent=5 // pred_region
      %s112 = ssub.s32 %s9, 1
      // Predicated region
      $region13: #{conv_autoencoder_forward.7} parent=11 // pred_check
        %p113 = pneg %p30
      $region14: #{conv_autoencoder_forward.7} parent=11 // pred_check_branch
        %115 = sbr.rel (%p113) target = $region16
      $region15: #{conv_autoencoder_forward.7} parent=11 // pred_region
        _
      $region16: #{conv_autoencoder_forward.7} parent=11 // pred_fallthru
        _
      // Predicated region
      $region17: #{conv_autoencoder_forward.7} parent=11 // pred_check
        %p116 = pneg %p51
      $region18: #{conv_autoencoder_forward.7} parent=11 // pred_check_branch
        %118 = sbr.rel (%p116) target = $region20
      $region19: #{conv_autoencoder_forward.7} parent=11 // pred_region
        _
      $region20: #{conv_autoencoder_forward.7} parent=11 // pred_fallthru
        _
      // Predicated region
      $region21: #{conv_autoencoder_forward.7} parent=11 // pred_check
        %p119 = pneg %p72
      $region22: #{conv_autoencoder_forward.7} parent=11 // pred_check_branch
        %121 = sbr.rel (%p119) target = $region24
      $region23: #{conv_autoencoder_forward.7} parent=11 // pred_region
        _
      $region24: #{conv_autoencoder_forward.7} parent=11 // pred_fallthru
        _
    $region12: #{conv_autoencoder_forward.7} parent=5 // pred_fallthru
      _
    %p122 = scmp.lt.s32.totalorder %s9, 4
    // Predicated region
    $region25: #{conv_autoencoder_forward.7} parent=5 // pred_check
      %p123 = pneg %p122
    $region26: #{conv_autoencoder_forward.7} parent=5 // pred_check_branch
      %125 = sbr.rel (%p123) target = $region28
    $region27: #{conv_autoencoder_forward.7} parent=5 // pred_region
      _
    $region28: #{conv_autoencoder_forward.7} parent=5 // pred_fallthru
      _
    %p126 = scmp.le.s32.totalorder 1, %s9
    %p127 = scmp.lt.s32.totalorder %s9, 5
    %p128 = pnand %p126, %p127
    %p129 = pneg %p128
    // Predicated region
    $region29: #{conv_autoencoder_forward.7} parent=5 // pred_check
      _
    $region30: #{conv_autoencoder_forward.7} parent=5 // pred_check_branch
      %131 = sbr.rel (%p128) target = $region32
    $region31: #{conv_autoencoder_forward.7} parent=5 // pred_region
      %s132 = ssub.s32 %s9, 1
      %p133 = pneg %p30
      %p134 = pneg %p27
      %p135 = pneg %p51
      %p136 = pneg %p48
      %p137 = pneg %p72
      %p138 = pneg %p69
      %p139 = pneg %p98
      %p140 = pneg %p95
      %s141 = smul.u32 5, %s14
      %p142 = scmp.lt.s32.totalorder %s141, 19
      %s143 = scalar_select %p142, %s141, 19
      %s144 = smul.addr %s143, 8
      %s145 = scalar_lea.vmem %s3, %s144
      %s146 = smul.u32 5, %s14
      %p147 = scmp.lt.s32.totalorder %s146, 19
      %s148 = scalar_select %p147, %s146, 19
      %s149 = smul.addr %s148, 8
      %s150 = scalar_lea.vmem %s3, %s149
      %s151 = smul.u32 5, %s14
      %s153 = smul.u32 %s14, 640
      %s154 = sshra.s32 %s153, 7
      %s155 = sand.u32 %s153, 127
      %s156 = smul.addr %s154, 2
      %s157 = scalar_lea.vmem %s0, %s156
      %v158 = vld [vmem:[%s157] sm:$0xff]
      %v159 = vld [vmem:[%s157 + $0x8] sm:$0xf]
      %v160 = vld [vmem:[%s1] sm:$0xf]
      %s161 = scalar_lea.vmem %s1, 4
      %v162 = vld [vmem:[%s161] sm:$0xf]
      %164 = vst [vmem:[#allocation1] ss:$4 sm:$0xff] %v158
      %s166 = scalar_lea.vmem [#allocation1], 32
      %167 = vst [vmem:[%s166] ss:$4 sm:$0xff] %v159
      %v168 = vld.sshfl [vmem:[#allocation1] sm:$0xff pattern:$0x73625140]
      %v170 = vld.sshfl [vmem:[#allocation1 + $0x8] sm:$0xff pattern:$0x73625140]
      %v172 = vld.sshfl [vmem:[#allocation1 + $0x10] sm:$0xff pattern:$0x73625140]
      %v174 = vld.sshfl [vmem:[#allocation1 + $0x18] sm:$0xff pattern:$0x73625140]
      %v176 = vld.sshfl [vmem:[#allocation1 + $0x20] sm:$0xff pattern:$0x73625140]
      %v178 = vld.sshfl [vmem:[#allocation1 + $0x28] sm:$0xff pattern:$0x73625140]
      %180 = vrot.lane.b32.xlu0 %v168, 127
      %v181 = vpop.permute.xlu0 %180
      %182 = vrot.lane.b32.xlu0 %v170, 127
      %v183 = vpop.permute.xlu0 %182
      %184 = vrot.lane.b32.xlu0 %v172, 127
      %v185 = vpop.permute.xlu0 %184
      %186 = vrot.lane.b32.xlu0 %v174, 127
      %v187 = vpop.permute.xlu0 %186
      %188 = vrot.lane.b32.xlu0 %v176, 127
      %v189 = vpop.permute.xlu0 %188
      %190 = vrot.lane.b32.xlu0 %v178, 127
      %v191 = vpop.permute.xlu0 %190
      %vm192 = vcmask 1039360
      %v193 = vsel %vm192, %v181, %v183
      %v194 = vsel %vm192, %v183, %v185
      %v195 = vsel %vm192, %v185, %v187
      %v196 = vsel %vm192, %v187, %v189
      %v197 = vsel %vm192, %v189, %v191
      %vm198 = vcmask 23552
      %v200 = vsel %vm198, %v162, 0
      %vm202 = vcmask 1040384
      %vm203 = vcmask 1041408
      %v204 = vsel %vm202, 4294967295, 65535
      %v205 = vsel %vm203, %v204, 0
      %v207 = vand.u32 %v193, %v205
      %v210 = vand.u32 %v194, %v205
      %v213 = vand.u32 %v195, %v205
      %v216 = vand.u32 %v196, %v205
      %v219 = vand.u32 %v197, %v205
      %221 = vmatpush.bf16.msra.mxu0 0
      %222 = vmatpush.bf16.msra.mxu0 0
      %223 = vmatpush.bf16.msra.mxu0 0
      %224 = vmatpush.bf16.msra.mxu0 0
      %225 = vmatpush.bf16.msra.mxu0 0
      %226 = vmatpush.bf16.msra.mxu0 0
      %227 = vmatpush.bf16.msra.mxu0 0
      %228 = vmatpush.bf16.msra.mxu0 %v207
      %229 = vmatmul.bf16.gmra.mxu0 %v200
      %v230 = vpop.f32.mrf.mxu0
      %v231 = vadd.f32 0.0, %v230
      %v232 = vpop.f32.mrf.mxu0
      %233 = vdwg.mxu0
      %234 = vmatpush.bf16.msra.mxu0 0
      %235 = vmatpush.bf16.msra.mxu0 0
      %236 = vmatpush.bf16.msra.mxu0 0
      %237 = vmatpush.bf16.msra.mxu0 0
      %238 = vmatpush.bf16.msra.mxu0 0
      %239 = vmatpush.bf16.msra.mxu0 0
      %240 = vmatpush.bf16.msra.mxu0 0
      %241 = vmatpush.bf16.msra.mxu0 %v210
      %242 = vmatmul.bf16.gmra.mxu0 %v200
      %v243 = vpop.f32.mrf.mxu0
      %v244 = vadd.f32 0.0, %v243
      %v245 = vpop.f32.mrf.mxu0
      %246 = vdwg.mxu0
      %247 = vmatpush.bf16.msra.mxu0 0
      %248 = vmatpush.bf16.msra.mxu0 0
      %249 = vmatpush.bf16.msra.mxu0 0
      %250 = vmatpush.bf16.msra.mxu0 0
      %251 = vmatpush.bf16.msra.mxu0 0
      %252 = vmatpush.bf16.msra.mxu0 0
      %253 = vmatpush.bf16.msra.mxu0 0
      %254 = vmatpush.bf16.msra.mxu0 %v213
      %255 = vmatmul.bf16.gmra.mxu0 %v200
      %v256 = vpop.f32.mrf.mxu0
      %v257 = vadd.f32 0.0, %v256
      %v258 = vpop.f32.mrf.mxu0
      %259 = vdwg.mxu0
      %260 = vmatpush.bf16.msra.mxu0 0
      %261 = vmatpush.bf16.msra.mxu0 0
      %262 = vmatpush.bf16.msra.mxu0 0
      %263 = vmatpush.bf16.msra.mxu0 0
      %264 = vmatpush.bf16.msra.mxu0 0
      %265 = vmatpush.bf16.msra.mxu0 0
      %266 = vmatpush.bf16.msra.mxu0 0
      %267 = vmatpush.bf16.msra.mxu0 %v216
      %268 = vmatmul.bf16.gmra.mxu0 %v200
      %v269 = vpop.f32.mrf.mxu0
      %v270 = vadd.f32 0.0, %v269
      %v271 = vpop.f32.mrf.mxu0
      %272 = vdwg.mxu0
      %273 = vmatpush.bf16.msra.mxu0 0
      %274 = vmatpush.bf16.msra.mxu0 0
      %275 = vmatpush.bf16.msra.mxu0 0
      %276 = vmatpush.bf16.msra.mxu0 0
      %277 = vmatpush.bf16.msra.mxu0 0
      %278 = vmatpush.bf16.msra.mxu0 0
      %279 = vmatpush.bf16.msra.mxu0 0
      %280 = vmatpush.bf16.msra.mxu0 %v219
      %281 = vmatmul.bf16.gmra.mxu0 %v200
      %v282 = vpop.f32.mrf.mxu0
      %v283 = vadd.f32 0.0, %v282
      %v284 = vpop.f32.mrf.mxu0
      %285 = vdwg.mxu0
      %286 = vst [vmem:[#allocation1] ss:$4 sm:$0xff] %v158
      %s287 = scalar_lea.vmem [#allocation1], 32
      %288 = vst [vmem:[%s287] ss:$4 sm:$0xff] %v159
      %v289 = vld.sshfl [vmem:[#allocation1] sm:$0xff pattern:$0x73625140]
      %v290 = vld.sshfl [vmem:[#allocation1 + $0x8] sm:$0xff pattern:$0x73625140]
      %v291 = vld.sshfl [vmem:[#allocation1 + $0x10] sm:$0xff pattern:$0x73625140]
      %v292 = vld.sshfl [vmem:[#allocation1 + $0x18] sm:$0xff pattern:$0x73625140]
      %v293 = vld.sshfl [vmem:[#allocation1 + $0x20] sm:$0xff pattern:$0x73625140]
      %v295 = vsel %vm198, %v160, 0
      %v297 = vand.u32 %v289, %v205
      %v299 = vand.u32 %v290, %v205
      %v301 = vand.u32 %v291, %v205
      %v303 = vand.u32 %v292, %v205
      %v305 = vand.u32 %v293, %v205
      %307 = vmatpush.bf16.msra.mxu0 0
      %308 = vmatpush.bf16.msra.mxu0 0
      %309 = vmatpush.bf16.msra.mxu0 0
      %310 = vmatpush.bf16.msra.mxu0 0
      %311 = vmatpush.bf16.msra.mxu0 0
      %312 = vmatpush.bf16.msra.mxu0 0
      %313 = vmatpush.bf16.msra.mxu0 0
      %314 = vmatpush.bf16.msra.mxu0 %v297
      %315 = vmatmul.bf16.gmra.mxu0 %v295
      %v316 = vpop.f32.mrf.mxu0
      %v317 = vadd.f32 %v231, %v316
      %v318 = vpop.f32.mrf.mxu0
      %319 = vdwg.mxu0
      %320 = vmatpush.bf16.msra.mxu0 0
      %321 = vmatpush.bf16.msra.mxu0 0
      %322 = vmatpush.bf16.msra.mxu0 0
      %323 = vmatpush.bf16.msra.mxu0 0
      %324 = vmatpush.bf16.msra.mxu0 0
      %325 = vmatpush.bf16.msra.mxu0 0
      %326 = vmatpush.bf16.msra.mxu0 0
      %327 = vmatpush.bf16.msra.mxu0 %v299
      %328 = vmatmul.bf16.gmra.mxu0 %v295
      %v329 = vpop.f32.mrf.mxu0
      %v330 = vadd.f32 %v244, %v329
      %v331 = vpop.f32.mrf.mxu0
      %332 = vdwg.mxu0
      %333 = vmatpush.bf16.msra.mxu0 0
      %334 = vmatpush.bf16.msra.mxu0 0
      %335 = vmatpush.bf16.msra.mxu0 0
      %336 = vmatpush.bf16.msra.mxu0 0
      %337 = vmatpush.bf16.msra.mxu0 0
      %338 = vmatpush.bf16.msra.mxu0 0
      %339 = vmatpush.bf16.msra.mxu0 0
      %340 = vmatpush.bf16.msra.mxu0 %v301
      %341 = vmatmul.bf16.gmra.mxu0 %v295
      %v342 = vpop.f32.mrf.mxu0
      %v343 = vadd.f32 %v257, %v342
      %v344 = vpop.f32.mrf.mxu0
      %345 = vdwg.mxu0
      %346 = vmatpush.bf16.msra.mxu0 0
      %347 = vmatpush.bf16.msra.mxu0 0
      %348 = vmatpush.bf16.msra.mxu0 0
      %349 = vmatpush.bf16.msra.mxu0 0
      %350 = vmatpush.bf16.msra.mxu0 0
      %351 = vmatpush.bf16.msra.mxu0 0
      %352 = vmatpush.bf16.msra.mxu0 0
      %353 = vmatpush.bf16.msra.mxu0 %v303
      %354 = vmatmul.bf16.gmra.mxu0 %v295
      %v355 = vpop.f32.mrf.mxu0
      %v356 = vadd.f32 %v270, %v355
      %v357 = vpop.f32.mrf.mxu0
      %358 = vdwg.mxu0
      %359 = vmatpush.bf16.msra.mxu0 0
      %360 = vmatpush.bf16.msra.mxu0 0
      %361 = vmatpush.bf16.msra.mxu0 0
      %362 = vmatpush.bf16.msra.mxu0 0
      %363 = vmatpush.bf16.msra.mxu0 0
      %364 = vmatpush.bf16.msra.mxu0 0
      %365 = vmatpush.bf16.msra.mxu0 0
      %366 = vmatpush.bf16.msra.mxu0 %v305
      %367 = vmatmul.bf16.gmra.mxu0 %v295
      %v368 = vpop.f32.mrf.mxu0
      %v369 = vadd.f32 %v283, %v368
      %v370 = vpop.f32.mrf.mxu0
      %371 = vdwg.mxu0
      %s372 = scalar_lea.vmem %s1, 8
      %v373 = vld [vmem:[%s372] sm:$0xf]
      %374 = vst [vmem:[#allocation1] ss:$4 sm:$0xff] %v158
      %s375 = scalar_lea.vmem [#allocation1], 32
      %376 = vst [vmem:[%s375] ss:$4 sm:$0xff] %v159
      %v377 = vld.sshfl [vmem:[#allocation1] sm:$0xff pattern:$0x73625140]
      %v379 = vld.sshfl [vmem:[#allocation1 + $0x8] sm:$0xff pattern:$0x73625140]
      %v381 = vld.sshfl [vmem:[#allocation1 + $0x10] sm:$0xff pattern:$0x73625140]
      %v383 = vld.sshfl [vmem:[#allocation1 + $0x18] sm:$0xff pattern:$0x73625140]
      %v385 = vld.sshfl [vmem:[#allocation1 + $0x20] sm:$0xff pattern:$0x73625140]
      %v387 = vld.sshfl [vmem:[#allocation1 + $0x28] sm:$0xff pattern:$0x73625140]
      %389 = vrot.lane.b32.xlu0 %v377, 126
      %v390 = vpop.permute.xlu0 %389
      %391 = vrot.lane.b32.xlu0 %v379, 126
      %v392 = vpop.permute.xlu0 %391
      %393 = vrot.lane.b32.xlu0 %v381, 126
      %v394 = vpop.permute.xlu0 %393
      %395 = vrot.lane.b32.xlu0 %v383, 126
      %v396 = vpop.permute.xlu0 %395
      %397 = vrot.lane.b32.xlu0 %v385, 126
      %v398 = vpop.permute.xlu0 %397
      %399 = vrot.lane.b32.xlu0 %v387, 126
      %v400 = vpop.permute.xlu0 %399
      %vm401 = vcmask 1031168
      %v402 = vsel %vm401, %v390, %v392
      %v403 = vsel %vm401, %v392, %v394
      %v404 = vsel %vm401, %v394, %v396
      %v405 = vsel %vm401, %v396, %v398
      %v406 = vsel %vm401, %v398, %v400
      %v408 = vsel %vm198, %v373, 0
      %v411 = vand.u32 %v402, %v205
      %v414 = vand.u32 %v403, %v205
      %v417 = vand.u32 %v404, %v205
      %v420 = vand.u32 %v405, %v205
      %v423 = vand.u32 %v406, %v205
      %425 = vmatpush.bf16.msra.mxu0 0
      %426 = vmatpush.bf16.msra.mxu0 0
      %427 = vmatpush.bf16.msra.mxu0 0
      %428 = vmatpush.bf16.msra.mxu0 0
      %429 = vmatpush.bf16.msra.mxu0 0
      %430 = vmatpush.bf16.msra.mxu0 0
      %431 = vmatpush.bf16.msra.mxu0 0
      %432 = vmatpush.bf16.msra.mxu0 %v411
      %433 = vmatmul.bf16.gmra.mxu0 %v408
      %v434 = vpop.f32.mrf.mxu0
      %v435 = vadd.f32 0.0, %v434
      %v436 = vpop.f32.mrf.mxu0
      %437 = vdwg.mxu0
      %438 = vmatpush.bf16.msra.mxu0 0
      %439 = vmatpush.bf16.msra.mxu0 0
      %440 = vmatpush.bf16.msra.mxu0 0
      %441 = vmatpush.bf16.msra.mxu0 0
      %442 = vmatpush.bf16.msra.mxu0 0
      %443 = vmatpush.bf16.msra.mxu0 0
      %444 = vmatpush.bf16.msra.mxu0 0
      %445 = vmatpush.bf16.msra.mxu0 %v414
      %446 = vmatmul.bf16.gmra.mxu0 %v408
      %v447 = vpop.f32.mrf.mxu0
      %v448 = vadd.f32 0.0, %v447
      %v449 = vpop.f32.mrf.mxu0
      %450 = vdwg.mxu0
      %451 = vmatpush.bf16.msra.mxu0 0
      %452 = vmatpush.bf16.msra.mxu0 0
      %453 = vmatpush.bf16.msra.mxu0 0
      %454 = vmatpush.bf16.msra.mxu0 0
      %455 = vmatpush.bf16.msra.mxu0 0
      %456 = vmatpush.bf16.msra.mxu0 0
      %457 = vmatpush.bf16.msra.mxu0 0
      %458 = vmatpush.bf16.msra.mxu0 %v417
      %459 = vmatmul.bf16.gmra.mxu0 %v408
      %v460 = vpop.f32.mrf.mxu0
      %v461 = vadd.f32 0.0, %v460
      %v462 = vpop.f32.mrf.mxu0
      %463 = vdwg.mxu0
      %464 = vmatpush.bf16.msra.mxu0 0
      %465 = vmatpush.bf16.msra.mxu0 0
      %466 = vmatpush.bf16.msra.mxu0 0
      %467 = vmatpush.bf16.msra.mxu0 0
      %468 = vmatpush.bf16.msra.mxu0 0
      %469 = vmatpush.bf16.msra.mxu0 0
      %470 = vmatpush.bf16.msra.mxu0 0
      %471 = vmatpush.bf16.msra.mxu0 %v420
      %472 = vmatmul.bf16.gmra.mxu0 %v408
      %v473 = vpop.f32.mrf.mxu0
      %v474 = vadd.f32 0.0, %v473
      %v475 = vpop.f32.mrf.mxu0
      %476 = vdwg.mxu0
      %477 = vmatpush.bf16.msra.mxu0 0
      %478 = vmatpush.bf16.msra.mxu0 0
      %479 = vmatpush.bf16.msra.mxu0 0
      %480 = vmatpush.bf16.msra.mxu0 0
      %481 = vmatpush.bf16.msra.mxu0 0
      %482 = vmatpush.bf16.msra.mxu0 0
      %483 = vmatpush.bf16.msra.mxu0 0
      %484 = vmatpush.bf16.msra.mxu0 %v423
      %485 = vmatmul.bf16.gmra.mxu0 %v408
      %v486 = vpop.f32.mrf.mxu0
      %v487 = vadd.f32 0.0, %v486
      %v488 = vpop.f32.mrf.mxu0
      %489 = vdwg.mxu0
      %v490 = vadd.f32 %v317, %v435
      %v491 = vadd.f32 %v330, %v448
      %v492 = vadd.f32 %v343, %v461
      %v493 = vadd.f32 %v356, %v474
      %v494 = vadd.f32 %v369, %v487
      %s495 = scalar_lea.vmem %s1, 12
      %v496 = vld [vmem:[%s495] sm:$0xf]
      %497 = vst [vmem:[#allocation1] ss:$4 sm:$0xff] %v158
      %s498 = scalar_lea.vmem [#allocation1], 32
      %499 = vst [vmem:[%s498] ss:$4 sm:$0xff] %v159
      %v500 = vld.sshfl [vmem:[#allocation1] sm:$0xff pattern:$0x73625140]
      %v502 = vld.sshfl [vmem:[#allocation1 + $0x8] sm:$0xff pattern:$0x73625140]
      %v504 = vld.sshfl [vmem:[#allocation1 + $0x10] sm:$0xff pattern:$0x73625140]
      %v506 = vld.sshfl [vmem:[#allocation1 + $0x18] sm:$0xff pattern:$0x73625140]
      %v508 = vld.sshfl [vmem:[#allocation1 + $0x20] sm:$0xff pattern:$0x73625140]
      %v510 = vld.sshfl [vmem:[#allocation1 + $0x28] sm:$0xff pattern:$0x73625140]
      %512 = vrot.lane.b32.xlu0 %v500, 94
      %v513 = vpop.permute.xlu0 %512
      %514 = vrot.lane.b32.xlu0 %v502, 94
      %v515 = vpop.permute.xlu0 %514
      %516 = vrot.lane.b32.xlu0 %v504, 94
      %v517 = vpop.permute.xlu0 %516
      %518 = vrot.lane.b32.xlu0 %v506, 94
      %v519 = vpop.permute.xlu0 %518
      %520 = vrot.lane.b32.xlu0 %v508, 94
      %v521 = vpop.permute.xlu0 %520
      %522 = vrot.lane.b32.xlu0 %v510, 94
      %v523 = vpop.permute.xlu0 %522
      %vm524 = vcmask 769024
      %v525 = vsel %vm524, %v513, %v515
      %v526 = vsel %vm524, %v515, %v517
      %v527 = vsel %vm524, %v517, %v519
      %v528 = vsel %vm524, %v519, %v521
      %v529 = vsel %vm524, %v521, %v523
      %v531 = vsel %vm198, %v496, 0
      %v534 = vand.u32 %v525, %v205
      %v537 = vand.u32 %v526, %v205
      %v540 = vand.u32 %v527, %v205
      %v543 = vand.u32 %v528, %v205
      %v546 = vand.u32 %v529, %v205
      %548 = vmatpush.bf16.msra.mxu0 0
      %549 = vmatpush.bf16.msra.mxu0 0
      %550 = vmatpush.bf16.msra.mxu0 0
      %551 = vmatpush.bf16.msra.mxu0 0
      %552 = vmatpush.bf16.msra.mxu0 0
      %553 = vmatpush.bf16.msra.mxu0 0
      %554 = vmatpush.bf16.msra.mxu0 0
      %555 = vmatpush.bf16.msra.mxu0 %v534
      %556 = vmatmul.bf16.gmra.mxu0 %v531
      %v557 = vpop.f32.mrf.mxu0
      %v558 = vadd.f32 0.0, %v557
      %v559 = vpop.f32.mrf.mxu0
      %560 = vdwg.mxu0
      %561 = vmatpush.bf16.msra.mxu0 0
      %562 = vmatpush.bf16.msra.mxu0 0
      %563 = vmatpush.bf16.msra.mxu0 0
      %564 = vmatpush.bf16.msra.mxu0 0
      %565 = vmatpush.bf16.msra.mxu0 0
      %566 = vmatpush.bf16.msra.mxu0 0
      %567 = vmatpush.bf16.msra.mxu0 0
      %568 = vmatpush.bf16.msra.mxu0 %v537
      %569 = vmatmul.bf16.gmra.mxu0 %v531
      %v570 = vpop.f32.mrf.mxu0
      %v571 = vadd.f32 0.0, %v570
      %v572 = vpop.f32.mrf.mxu0
      %573 = vdwg.mxu0
      %574 = vmatpush.bf16.msra.mxu0 0
      %575 = vmatpush.bf16.msra.mxu0 0
      %576 = vmatpush.bf16.msra.mxu0 0
      %577 = vmatpush.bf16.msra.mxu0 0
      %578 = vmatpush.bf16.msra.mxu0 0
      %579 = vmatpush.bf16.msra.mxu0 0
      %580 = vmatpush.bf16.msra.mxu0 0
      %581 = vmatpush.bf16.msra.mxu0 %v540
      %582 = vmatmul.bf16.gmra.mxu0 %v531
      %v583 = vpop.f32.mrf.mxu0
      %v584 = vadd.f32 0.0, %v583
      %v585 = vpop.f32.mrf.mxu0
      %586 = vdwg.mxu0
      %587 = vmatpush.bf16.msra.mxu0 0
      %588 = vmatpush.bf16.msra.mxu0 0
      %589 = vmatpush.bf16.msra.mxu0 0
      %590 = vmatpush.bf16.msra.mxu0 0
      %591 = vmatpush.bf16.msra.mxu0 0
      %592 = vmatpush.bf16.msra.mxu0 0
      %593 = vmatpush.bf16.msra.mxu0 0
      %594 = vmatpush.bf16.msra.mxu0 %v543
      %595 = vmatmul.bf16.gmra.mxu0 %v531
      %v596 = vpop.f32.mrf.mxu0
      %v597 = vadd.f32 0.0, %v596
      %v598 = vpop.f32.mrf.mxu0
      %599 = vdwg.mxu0
      %600 = vmatpush.bf16.msra.mxu0 0
      %601 = vmatpush.bf16.msra.mxu0 0
      %602 = vmatpush.bf16.msra.mxu0 0
      %603 = vmatpush.bf16.msra.mxu0 0
      %604 = vmatpush.bf16.msra.mxu0 0
      %605 = vmatpush.bf16.msra.mxu0 0
      %606 = vmatpush.bf16.msra.mxu0 0
      %607 = vmatpush.bf16.msra.mxu0 %v546
      %608 = vmatmul.bf16.gmra.mxu0 %v531
      %v609 = vpop.f32.mrf.mxu0
      %v610 = vadd.f32 0.0, %v609
      %v611 = vpop.f32.mrf.mxu0
      %612 = vdwg.mxu0
      %v613 = vadd.f32 %v490, %v558
      %v614 = vadd.f32 %v491, %v571
      %v615 = vadd.f32 %v492, %v584
      %v616 = vadd.f32 %v493, %v597
      %v617 = vadd.f32 %v494, %v610
      %s618 = scalar_lea.vmem %s1, 16
      %v619 = vld [vmem:[%s618] sm:$0xf]
      %620 = vst [vmem:[#allocation1] ss:$4 sm:$0xff] %v158
      %s621 = scalar_lea.vmem [#allocation1], 32
      %622 = vst [vmem:[%s621] ss:$4 sm:$0xff] %v159
      %v623 = vld.sshfl [vmem:[#allocation1] sm:$0xff pattern:$0x73625140]
      %v625 = vld.sshfl [vmem:[#allocation1 + $0x8] sm:$0xff pattern:$0x73625140]
      %v627 = vld.sshfl [vmem:[#allocation1 + $0x10] sm:$0xff pattern:$0x73625140]
      %v629 = vld.sshfl [vmem:[#allocation1 + $0x18] sm:$0xff pattern:$0x73625140]
      %v631 = vld.sshfl [vmem:[#allocation1 + $0x20] sm:$0xff pattern:$0x73625140]
      %v633 = vld.sshfl [vmem:[#allocation1 + $0x28] sm:$0xff pattern:$0x73625140]
      %635 = vrot.lane.b32.xlu0 %v623, 93
      %v636 = vpop.permute.xlu0 %635
      %637 = vrot.lane.b32.xlu0 %v625, 93
      %v638 = vpop.permute.xlu0 %637
      %639 = vrot.lane.b32.xlu0 %v627, 93
      %v640 = vpop.permute.xlu0 %639
      %641 = vrot.lane.b32.xlu0 %v629, 93
      %v642 = vpop.permute.xlu0 %641
      %643 = vrot.lane.b32.xlu0 %v631, 93
      %v644 = vpop.permute.xlu0 %643
      %645 = vrot.lane.b32.xlu0 %v633, 93
      %v646 = vpop.permute.xlu0 %645
      %vm647 = vcmask 760832
      %v648 = vsel %vm647, %v636, %v638
      %v649 = vsel %vm647, %v638, %v640
      %v650 = vsel %vm647, %v640, %v642
      %v651 = vsel %vm647, %v642, %v644
      %v652 = vsel %vm647, %v644, %v646
      %v654 = vsel %vm198, %v619, 0
      %v657 = vand.u32 %v648, %v205
      %v660 = vand.u32 %v649, %v205
      %v663 = vand.u32 %v650, %v205
      %v666 = vand.u32 %v651, %v205
      %v669 = vand.u32 %v652, %v205
      %671 = vmatpush.bf16.msra.mxu0 0
      %672 = vmatpush.bf16.msra.mxu0 0
      %673 = vmatpush.bf16.msra.mxu0 0
      %674 = vmatpush.bf16.msra.mxu0 0
      %675 = vmatpush.bf16.msra.mxu0 0
      %676 = vmatpush.bf16.msra.mxu0 0
      %677 = vmatpush.bf16.msra.mxu0 0
      %678 = vmatpush.bf16.msra.mxu0 %v657
      %679 = vmatmul.bf16.gmra.mxu0 %v654
      %v680 = vpop.f32.mrf.mxu0
      %v681 = vadd.f32 0.0, %v680
      %v682 = vpop.f32.mrf.mxu0
      %683 = vdwg.mxu0
      %684 = vmatpush.bf16.msra.mxu0 0
      %685 = vmatpush.bf16.msra.mxu0 0
      %686 = vmatpush.bf16.msra.mxu0 0
      %687 = vmatpush.bf16.msra.mxu0 0
      %688 = vmatpush.bf16.msra.mxu0 0
      %689 = vmatpush.bf16.msra.mxu0 0
      %690 = vmatpush.bf16.msra.mxu0 0
      %691 = vmatpush.bf16.msra.mxu0 %v660
      %692 = vmatmul.bf16.gmra.mxu0 %v654
      %v693 = vpop.f32.mrf.mxu0
      %v694 = vadd.f32 0.0, %v693
      %v695 = vpop.f32.mrf.mxu0
      %696 = vdwg.mxu0
      %697 = vmatpush.bf16.msra.mxu0 0
      %698 = vmatpush.bf16.msra.mxu0 0
      %699 = vmatpush.bf16.msra.mxu0 0
      %700 = vmatpush.bf16.msra.mxu0 0
      %701 = vmatpush.bf16.msra.mxu0 0
      %702 = vmatpush.bf16.msra.mxu0 0
      %703 = vmatpush.bf16.msra.mxu0 0
      %704 = vmatpush.bf16.msra.mxu0 %v663
      %705 = vmatmul.bf16.gmra.mxu0 %v654
      %v706 = vpop.f32.mrf.mxu0
      %v707 = vadd.f32 0.0, %v706
      %v708 = vpop.f32.mrf.mxu0
      %709 = vdwg.mxu0
      %710 = vmatpush.bf16.msra.mxu0 0
      %711 = vmatpush.bf16.msra.mxu0 0
      %712 = vmatpush.bf16.msra.mxu0 0
      %713 = vmatpush.bf16.msra.mxu0 0
      %714 = vmatpush.bf16.msra.mxu0 0
      %715 = vmatpush.bf16.msra.mxu0 0
      %716 = vmatpush.bf16.msra.mxu0 0
      %717 = vmatpush.bf16.msra.mxu0 %v666
      %718 = vmatmul.bf16.gmra.mxu0 %v654
      %v719 = vpop.f32.mrf.mxu0
      %v720 = vadd.f32 0.0, %v719
      %v721 = vpop.f32.mrf.mxu0
      %722 = vdwg.mxu0
      %723 = vmatpush.bf16.msra.mxu0 0
      %724 = vmatpush.bf16.msra.mxu0 0
      %725 = vmatpush.bf16.msra.mxu0 0
      %726 = vmatpush.bf16.msra.mxu0 0
      %727 = vmatpush.bf16.msra.mxu0 0
      %728 = vmatpush.bf16.msra.mxu0 0
      %729 = vmatpush.bf16.msra.mxu0 0
      %730 = vmatpush.bf16.msra.mxu0 %v669
      %731 = vmatmul.bf16.gmra.mxu0 %v654
      %v732 = vpop.f32.mrf.mxu0
      %v733 = vadd.f32 0.0, %v732
      %v734 = vpop.f32.mrf.mxu0
      %735 = vdwg.mxu0
      %v736 = vadd.f32 %v613, %v681
      %v737 = vadd.f32 %v614, %v694
      %v738 = vadd.f32 %v615, %v707
      %v739 = vadd.f32 %v616, %v720
      %v740 = vadd.f32 %v617, %v733
      %s741 = scalar_lea.vmem %s1, 20
      %v742 = vld [vmem:[%s741] sm:$0xf]
      %743 = vst [vmem:[#allocation1] ss:$4 sm:$0xff] %v158
      %s744 = scalar_lea.vmem [#allocation1], 32
      %745 = vst [vmem:[%s744] ss:$4 sm:$0xff] %v159
      %v746 = vld.sshfl [vmem:[#allocation1] sm:$0xff pattern:$0x73625140]
      %v748 = vld.sshfl [vmem:[#allocation1 + $0x8] sm:$0xff pattern:$0x73625140]
      %v750 = vld.sshfl [vmem:[#allocation1 + $0x10] sm:$0xff pattern:$0x73625140]
      %v752 = vld.sshfl [vmem:[#allocation1 + $0x18] sm:$0xff pattern:$0x73625140]
      %v754 = vld.sshfl [vmem:[#allocation1 + $0x20] sm:$0xff pattern:$0x73625140]
      %v756 = vld.sshfl [vmem:[#allocation1 + $0x28] sm:$0xff pattern:$0x73625140]
      %758 = vrot.lane.b32.xlu0 %v746, 92
      %v759 = vpop.permute.xlu0 %758
      %760 = vrot.lane.b32.xlu0 %v748, 92
      %v761 = vpop.permute.xlu0 %760
      %762 = vrot.lane.b32.xlu0 %v750, 92
      %v763 = vpop.permute.xlu0 %762
      %764 = vrot.lane.b32.xlu0 %v752, 92
      %v765 = vpop.permute.xlu0 %764
      %766 = vrot.lane.b32.xlu0 %v754, 92
      %v767 = vpop.permute.xlu0 %766
      %768 = vrot.lane.b32.xlu0 %v756, 92
      %v769 = vpop.permute.xlu0 %768
      %vm770 = vcmask 752640
      %v771 = vsel %vm770, %v759, %v761
      %v772 = vsel %vm770, %v761, %v763
      %v773 = vsel %vm770, %v763, %v765
      %v774 = vsel %vm770, %v765, %v767
      %v775 = vsel %vm770, %v767, %v769
      %v777 = vsel %vm198, %v742, 0
      %v780 = vand.u32 %v771, %v205
      %v783 = vand.u32 %v772, %v205
      %v786 = vand.u32 %v773, %v205
      %v789 = vand.u32 %v774, %v205
      %v792 = vand.u32 %v775, %v205
      %794 = vmatpush.bf16.msra.mxu0 0
      %795 = vmatpush.bf16.msra.mxu0 0
      %796 = vmatpush.bf16.msra.mxu0 0
      %797 = vmatpush.bf16.msra.mxu0 0
      %798 = vmatpush.bf16.msra.mxu0 0
      %799 = vmatpush.bf16.msra.mxu0 0
      %800 = vmatpush.bf16.msra.mxu0 0
      %801 = vmatpush.bf16.msra.mxu0 %v780
      %802 = vmatmul.bf16.gmra.mxu0 %v777
      %v803 = vpop.f32.mrf.mxu0
      %v804 = vadd.f32 0.0, %v803
      %v805 = vpop.f32.mrf.mxu0
      %806 = vdwg.mxu0
      %807 = vmatpush.bf16.msra.mxu0 0
      %808 = vmatpush.bf16.msra.mxu0 0
      %809 = vmatpush.bf16.msra.mxu0 0
      %810 = vmatpush.bf16.msra.mxu0 0
      %811 = vmatpush.bf16.msra.mxu0 0
      %812 = vmatpush.bf16.msra.mxu0 0
      %813 = vmatpush.bf16.msra.mxu0 0
      %814 = vmatpush.bf16.msra.mxu0 %v783
      %815 = vmatmul.bf16.gmra.mxu0 %v777
      %v816 = vpop.f32.mrf.mxu0
      %v817 = vadd.f32 0.0, %v816
      %v818 = vpop.f32.mrf.mxu0
      %819 = vdwg.mxu0
      %820 = vmatpush.bf16.msra.mxu0 0
      %821 = vmatpush.bf16.msra.mxu0 0
      %822 = vmatpush.bf16.msra.mxu0 0
      %823 = vmatpush.bf16.msra.mxu0 0
      %824 = vmatpush.bf16.msra.mxu0 0
      %825 = vmatpush.bf16.msra.mxu0 0
      %826 = vmatpush.bf16.msra.mxu0 0
      %827 = vmatpush.bf16.msra.mxu0 %v786
      %828 = vmatmul.bf16.gmra.mxu0 %v777
      %v829 = vpop.f32.mrf.mxu0
      %v830 = vadd.f32 0.0, %v829
      %v831 = vpop.f32.mrf.mxu0
      %832 = vdwg.mxu0
      %833 = vmatpush.bf16.msra.mxu0 0
      %834 = vmatpush.bf16.msra.mxu0 0
      %835 = vmatpush.bf16.msra.mxu0 0
      %836 = vmatpush.bf16.msra.mxu0 0
      %837 = vmatpush.bf16.msra.mxu0 0
      %838 = vmatpush.bf16.msra.mxu0 0
      %839 = vmatpush.bf16.msra.mxu0 0
      %840 = vmatpush.bf16.msra.mxu0 %v789
      %841 = vmatmul.bf16.gmra.mxu0 %v777
      %v842 = vpop.f32.mrf.mxu0
      %v843 = vadd.f32 0.0, %v842
      %v844 = vpop.f32.mrf.mxu0
      %845 = vdwg.mxu0
      %846 = vmatpush.bf16.msra.mxu0 0
      %847 = vmatpush.bf16.msra.mxu0 0
      %848 = vmatpush.bf16.msra.mxu0 0
      %849 = vmatpush.bf16.msra.mxu0 0
      %850 = vmatpush.bf16.msra.mxu0 0
      %851 = vmatpush.bf16.msra.mxu0 0
      %852 = vmatpush.bf16.msra.mxu0 0
      %853 = vmatpush.bf16.msra.mxu0 %v792
      %854 = vmatmul.bf16.gmra.mxu0 %v777
      %v855 = vpop.f32.mrf.mxu0
      %v856 = vadd.f32 0.0, %v855
      %v857 = vpop.f32.mrf.mxu0
      %858 = vdwg.mxu0
      %v859 = vadd.f32 %v736, %v804
      %v860 = vadd.f32 %v737, %v817
      %v861 = vadd.f32 %v738, %v830
      %v862 = vadd.f32 %v739, %v843
      %v863 = vadd.f32 %v740, %v856
      %s864 = scalar_lea.vmem %s1, 24
      %v865 = vld [vmem:[%s864] sm:$0xf]
      %866 = vst [vmem:[#allocation1] ss:$4 sm:$0xff] %v158
      %s867 = scalar_lea.vmem [#allocation1], 32
      %868 = vst [vmem:[%s867] ss:$4 sm:$0xff] %v159
      %v869 = vld.sshfl [vmem:[#allocation1] sm:$0xff pattern:$0x73625140]
      %v871 = vld.sshfl [vmem:[#allocation1 + $0x8] sm:$0xff pattern:$0x73625140]
      %v873 = vld.sshfl [vmem:[#allocation1 + $0x10] sm:$0xff pattern:$0x73625140]
      %v875 = vld.sshfl [vmem:[#allocation1 + $0x18] sm:$0xff pattern:$0x73625140]
      %v877 = vld.sshfl [vmem:[#allocation1 + $0x20] sm:$0xff pattern:$0x73625140]
      %v879 = vld.sshfl [vmem:[#allocation1 + $0x28] sm:$0xff pattern:$0x73625140]
      %881 = vrot.lane.b32.xlu0 %v869, 60
      %v882 = vpop.permute.xlu0 %881
      %883 = vrot.lane.b32.xlu0 %v871, 60
      %v884 = vpop.permute.xlu0 %883
      %885 = vrot.lane.b32.xlu0 %v873, 60
      %v886 = vpop.permute.xlu0 %885
      %887 = vrot.lane.b32.xlu0 %v875, 60
      %v888 = vpop.permute.xlu0 %887
      %889 = vrot.lane.b32.xlu0 %v877, 60
      %v890 = vpop.permute.xlu0 %889
      %891 = vrot.lane.b32.xlu0 %v879, 60
      %v892 = vpop.permute.xlu0 %891
      %vm893 = vcmask 490496
      %v894 = vsel %vm893, %v882, %v884
      %v895 = vsel %vm893, %v884, %v886
      %v896 = vsel %vm893, %v886, %v888
      %v897 = vsel %vm893, %v888, %v890
      %v898 = vsel %vm893, %v890, %v892
      %v900 = vsel %vm198, %v865, 0
      %v903 = vand.u32 %v894, %v205
      %v906 = vand.u32 %v895, %v205
      %v909 = vand.u32 %v896, %v205
      %v912 = vand.u32 %v897, %v205
      %v915 = vand.u32 %v898, %v205
      %917 = vmatpush.bf16.msra.mxu0 0
      %918 = vmatpush.bf16.msra.mxu0 0
      %919 = vmatpush.bf16.msra.mxu0 0
      %920 = vmatpush.bf16.msra.mxu0 0
      %921 = vmatpush.bf16.msra.mxu0 0
      %922 = vmatpush.bf16.msra.mxu0 0
      %923 = vmatpush.bf16.msra.mxu0 0
      %924 = vmatpush.bf16.msra.mxu0 %v903
      %925 = vmatmul.bf16.gmra.mxu0 %v900
      %v926 = vpop.f32.mrf.mxu0
      %v927 = vadd.f32 0.0, %v926
      %v928 = vpop.f32.mrf.mxu0
      %929 = vdwg.mxu0
      %930 = vmatpush.bf16.msra.mxu0 0
      %931 = vmatpush.bf16.msra.mxu0 0
      %932 = vmatpush.bf16.msra.mxu0 0
      %933 = vmatpush.bf16.msra.mxu0 0
      %934 = vmatpush.bf16.msra.mxu0 0
      %935 = vmatpush.bf16.msra.mxu0 0
      %936 = vmatpush.bf16.msra.mxu0 0
      %937 = vmatpush.bf16.msra.mxu0 %v906
      %938 = vmatmul.bf16.gmra.mxu0 %v900
      %v939 = vpop.f32.mrf.mxu0
      %v940 = vadd.f32 0.0, %v939
      %v941 = vpop.f32.mrf.mxu0
      %942 = vdwg.mxu0
      %943 = vmatpush.bf16.msra.mxu0 0
      %944 = vmatpush.bf16.msra.mxu0 0
      %945 = vmatpush.bf16.msra.mxu0 0
      %946 = vmatpush.bf16.msra.mxu0 0
      %947 = vmatpush.bf16.msra.mxu0 0
      %948 = vmatpush.bf16.msra.mxu0 0
      %949 = vmatpush.bf16.msra.mxu0 0
      %950 = vmatpush.bf16.msra.mxu0 %v909
      %951 = vmatmul.bf16.gmra.mxu0 %v900
      %v952 = vpop.f32.mrf.mxu0
      %v953 = vadd.f32 0.0, %v952
      %v954 = vpop.f32.mrf.mxu0
      %955 = vdwg.mxu0
      %956 = vmatpush.bf16.msra.mxu0 0
      %957 = vmatpush.bf16.msra.mxu0 0
      %958 = vmatpush.bf16.msra.mxu0 0
      %959 = vmatpush.bf16.msra.mxu0 0
      %960 = vmatpush.bf16.msra.mxu0 0
      %961 = vmatpush.bf16.msra.mxu0 0
      %962 = vmatpush.bf16.msra.mxu0 0
      %963 = vmatpush.bf16.msra.mxu0 %v912
      %964 = vmatmul.bf16.gmra.mxu0 %v900
      %v965 = vpop.f32.mrf.mxu0
      %v966 = vadd.f32 0.0, %v965
      %v967 = vpop.f32.mrf.mxu0
      %968 = vdwg.mxu0
      %969 = vmatpush.bf16.msra.mxu0 0
      %970 = vmatpush.bf16.msra.mxu0 0
      %971 = vmatpush.bf16.msra.mxu0 0
      %972 = vmatpush.bf16.msra.mxu0 0
      %973 = vmatpush.bf16.msra.mxu0 0
      %974 = vmatpush.bf16.msra.mxu0 0
      %975 = vmatpush.bf16.msra.mxu0 0
      %976 = vmatpush.bf16.msra.mxu0 %v915
      %977 = vmatmul.bf16.gmra.mxu0 %v900
      %v978 = vpop.f32.mrf.mxu0
      %v979 = vadd.f32 0.0, %v978
      %v980 = vpop.f32.mrf.mxu0
      %981 = vdwg.mxu0
      %v982 = vadd.f32 %v859, %v927
      %v983 = vadd.f32 %v860, %v940
      %v984 = vadd.f32 %v861, %v953
      %v985 = vadd.f32 %v862, %v966
      %v986 = vadd.f32 %v863, %v979
      %s987 = scalar_lea.vmem %s1, 28
      %v988 = vld [vmem:[%s987] sm:$0xf]
      %989 = vst [vmem:[#allocation1] ss:$4 sm:$0xff] %v158
      %s990 = scalar_lea.vmem [#allocation1], 32
      %991 = vst [vmem:[%s990] ss:$4 sm:$0xff] %v159
      %v992 = vld.sshfl [vmem:[#allocation1] sm:$0xff pattern:$0x73625140]
      %v994 = vld.sshfl [vmem:[#allocation1 + $0x8] sm:$0xff pattern:$0x73625140]
      %v996 = vld.sshfl [vmem:[#allocation1 + $0x10] sm:$0xff pattern:$0x73625140]
      %v998 = vld.sshfl [vmem:[#allocation1 + $0x18] sm:$0xff pattern:$0x73625140]
      %v1000 = vld.sshfl [vmem:[#allocation1 + $0x20] sm:$0xff pattern:$0x73625140]
      %v1002 = vld.sshfl [vmem:[#allocation1 + $0x28] sm:$0xff pattern:$0x73625140]
      %1004 = vrot.lane.b32.xlu0 %v992, 59
      %v1005 = vpop.permute.xlu0 %1004
      %1006 = vrot.lane.b32.xlu0 %v994, 59
      %v1007 = vpop.permute.xlu0 %1006
      %1008 = vrot.lane.b32.xlu0 %v996, 59
      %v1009 = vpop.permute.xlu0 %1008
      %1010 = vrot.lane.b32.xlu0 %v998, 59
      %v1011 = vpop.permute.xlu0 %1010
      %1012 = vrot.lane.b32.xlu0 %v1000, 59
      %v1013 = vpop.permute.xlu0 %1012
      %1014 = vrot.lane.b32.xlu0 %v1002, 59
      %v1015 = vpop.permute.xlu0 %1014
      %vm1016 = vcmask 482304
      %v1017 = vsel %vm1016, %v1005, %v1007
      %v1018 = vsel %vm1016, %v1007, %v1009
      %v1019 = vsel %vm1016, %v1009, %v1011
      %v1020 = vsel %vm1016, %v1011, %v1013
      %v1021 = vsel %vm1016, %v1013, %v1015
      %v1023 = vsel %vm198, %v988, 0
      %v1026 = vand.u32 %v1017, %v205
      %v1029 = vand.u32 %v1018, %v205
      %v1032 = vand.u32 %v1019, %v205
      %v1035 = vand.u32 %v1020, %v205
      %v1038 = vand.u32 %v1021, %v205
      %1040 = vmatpush.bf16.msra.mxu0 0
      %1041 = vmatpush.bf16.msra.mxu0 0
      %1042 = vmatpush.bf16.msra.mxu0 0
      %1043 = vmatpush.bf16.msra.mxu0 0
      %1044 = vmatpush.bf16.msra.mxu0 0
      %1045 = vmatpush.bf16.msra.mxu0 0
      %1046 = vmatpush.bf16.msra.mxu0 0
      %1047 = vmatpush.bf16.msra.mxu0 %v1026
      %1048 = vmatmul.bf16.gmra.mxu0 %v1023
      %v1049 = vpop.f32.mrf.mxu0
      %v1050 = vadd.f32 0.0, %v1049
      %v1051 = vpop.f32.mrf.mxu0
      %1052 = vdwg.mxu0
      %1053 = vmatpush.bf16.msra.mxu0 0
      %1054 = vmatpush.bf16.msra.mxu0 0
      %1055 = vmatpush.bf16.msra.mxu0 0
      %1056 = vmatpush.bf16.msra.mxu0 0
      %1057 = vmatpush.bf16.msra.mxu0 0
      %1058 = vmatpush.bf16.msra.mxu0 0
      %1059 = vmatpush.bf16.msra.mxu0 0
      %1060 = vmatpush.bf16.msra.mxu0 %v1029
      %1061 = vmatmul.bf16.gmra.mxu0 %v1023
      %v1062 = vpop.f32.mrf.mxu0
      %v1063 = vadd.f32 0.0, %v1062
      %v1064 = vpop.f32.mrf.mxu0
      %1065 = vdwg.mxu0
      %1066 = vmatpush.bf16.msra.mxu0 0
      %1067 = vmatpush.bf16.msra.mxu0 0
      %1068 = vmatpush.bf16.msra.mxu0 0
      %1069 = vmatpush.bf16.msra.mxu0 0
      %1070 = vmatpush.bf16.msra.mxu0 0
      %1071 = vmatpush.bf16.msra.mxu0 0
      %1072 = vmatpush.bf16.msra.mxu0 0
      %1073 = vmatpush.bf16.msra.mxu0 %v1032
      %1074 = vmatmul.bf16.gmra.mxu0 %v1023
      %v1075 = vpop.f32.mrf.mxu0
      %v1076 = vadd.f32 0.0, %v1075
      %v1077 = vpop.f32.mrf.mxu0
      %1078 = vdwg.mxu0
      %1079 = vmatpush.bf16.msra.mxu0 0
      %1080 = vmatpush.bf16.msra.mxu0 0
      %1081 = vmatpush.bf16.msra.mxu0 0
      %1082 = vmatpush.bf16.msra.mxu0 0
      %1083 = vmatpush.bf16.msra.mxu0 0
      %1084 = vmatpush.bf16.msra.mxu0 0
      %1085 = vmatpush.bf16.msra.mxu0 0
      %1086 = vmatpush.bf16.msra.mxu0 %v1035
      %1087 = vmatmul.bf16.gmra.mxu0 %v1023
      %v1088 = vpop.f32.mrf.mxu0
      %v1089 = vadd.f32 0.0, %v1088
      %v1090 = vpop.f32.mrf.mxu0
      %1091 = vdwg.mxu0
      %1092 = vmatpush.bf16.msra.mxu0 0
      %1093 = vmatpush.bf16.msra.mxu0 0
      %1094 = vmatpush.bf16.msra.mxu0 0
      %1095 = vmatpush.bf16.msra.mxu0 0
      %1096 = vmatpush.bf16.msra.mxu0 0
      %1097 = vmatpush.bf16.msra.mxu0 0
      %1098 = vmatpush.bf16.msra.mxu0 0
      %1099 = vmatpush.bf16.msra.mxu0 %v1038
      %1100 = vmatmul.bf16.gmra.mxu0 %v1023
      %v1101 = vpop.f32.mrf.mxu0
      %v1102 = vadd.f32 0.0, %v1101
      %v1103 = vpop.f32.mrf.mxu0
      %1104 = vdwg.mxu0
      %v1105 = vadd.f32 %v982, %v1050
      %v1106 = vadd.f32 %v983, %v1063
      %v1107 = vadd.f32 %v984, %v1076
      %v1108 = vadd.f32 %v985, %v1089
      %v1109 = vadd.f32 %v986, %v1102
      %s1110 = scalar_lea.vmem %s1, 32
      %v1111 = vld [vmem:[%s1110] sm:$0xf]
      %1112 = vst [vmem:[#allocation1] ss:$4 sm:$0xff] %v158
      %s1113 = scalar_lea.vmem [#allocation1], 32
      %1114 = vst [vmem:[%s1113] ss:$4 sm:$0xff] %v159
      %v1115 = vld.sshfl [vmem:[#allocation1] sm:$0xff pattern:$0x73625140]
      %v1117 = vld.sshfl [vmem:[#allocation1 + $0x8] sm:$0xff pattern:$0x73625140]
      %v1119 = vld.sshfl [vmem:[#allocation1 + $0x10] sm:$0xff pattern:$0x73625140]
      %v1121 = vld.sshfl [vmem:[#allocation1 + $0x18] sm:$0xff pattern:$0x73625140]
      %v1123 = vld.sshfl [vmem:[#allocation1 + $0x20] sm:$0xff pattern:$0x73625140]
      %v1125 = vld.sshfl [vmem:[#allocation1 + $0x28] sm:$0xff pattern:$0x73625140]
      %1127 = vrot.lane.b32.xlu0 %v1115, 58
      %v1128 = vpop.permute.xlu0 %1127
      %1129 = vrot.lane.b32.xlu0 %v1117, 58
      %v1130 = vpop.permute.xlu0 %1129
      %1131 = vrot.lane.b32.xlu0 %v1119, 58
      %v1132 = vpop.permute.xlu0 %1131
      %1133 = vrot.lane.b32.xlu0 %v1121, 58
      %v1134 = vpop.permute.xlu0 %1133
      %1135 = vrot.lane.b32.xlu0 %v1123, 58
      %v1136 = vpop.permute.xlu0 %1135
      %1137 = vrot.lane.b32.xlu0 %v1125, 58
      %v1138 = vpop.permute.xlu0 %1137
      %vm1139 = vcmask 474112
      %v1140 = vsel %vm1139, %v1128, %v1130
      %v1141 = vsel %vm1139, %v1130, %v1132
      %v1142 = vsel %vm1139, %v1132, %v1134
      %v1143 = vsel %vm1139, %v1134, %v1136
      %v1144 = vsel %vm1139, %v1136, %v1138
      %v1146 = vsel %vm198, %v1111, 0
      %v1149 = vand.u32 %v1140, %v205
      %v1152 = vand.u32 %v1141, %v205
      %v1155 = vand.u32 %v1142, %v205
      %v1158 = vand.u32 %v1143, %v205
      %v1161 = vand.u32 %v1144, %v205
      %1163 = vmatpush.bf16.msra.mxu0 0
      %1164 = vmatpush.bf16.msra.mxu0 0
      %1165 = vmatpush.bf16.msra.mxu0 0
      %1166 = vmatpush.bf16.msra.mxu0 0
      %1167 = vmatpush.bf16.msra.mxu0 0
      %1168 = vmatpush.bf16.msra.mxu0 0
      %1169 = vmatpush.bf16.msra.mxu0 0
      %1170 = vmatpush.bf16.msra.mxu0 %v1149
      %1171 = vmatmul.bf16.gmra.mxu0 %v1146
      %v1172 = vpop.f32.mrf.mxu0
      %v1173 = vadd.f32 0.0, %v1172
      %v1174 = vpop.f32.mrf.mxu0
      %1175 = vdwg.mxu0
      %1176 = vmatpush.bf16.msra.mxu0 0
      %1177 = vmatpush.bf16.msra.mxu0 0
      %1178 = vmatpush.bf16.msra.mxu0 0
      %1179 = vmatpush.bf16.msra.mxu0 0
      %1180 = vmatpush.bf16.msra.mxu0 0
      %1181 = vmatpush.bf16.msra.mxu0 0
      %1182 = vmatpush.bf16.msra.mxu0 0
      %1183 = vmatpush.bf16.msra.mxu0 %v1152
      %1184 = vmatmul.bf16.gmra.mxu0 %v1146
      %v1185 = vpop.f32.mrf.mxu0
      %v1186 = vadd.f32 0.0, %v1185
      %v1187 = vpop.f32.mrf.mxu0
      %1188 = vdwg.mxu0
      %1189 = vmatpush.bf16.msra.mxu0 0
      %1190 = vmatpush.bf16.msra.mxu0 0
      %1191 = vmatpush.bf16.msra.mxu0 0
      %1192 = vmatpush.bf16.msra.mxu0 0
      %1193 = vmatpush.bf16.msra.mxu0 0
      %1194 = vmatpush.bf16.msra.mxu0 0
      %1195 = vmatpush.bf16.msra.mxu0 0
      %1196 = vmatpush.bf16.msra.mxu0 %v1155
      %1197 = vmatmul.bf16.gmra.mxu0 %v1146
      %v1198 = vpop.f32.mrf.mxu0
      %v1199 = vadd.f32 0.0, %v1198
      %v1200 = vpop.f32.mrf.mxu0
      %1201 = vdwg.mxu0
      %1202 = vmatpush.bf16.msra.mxu0 0
      %1203 = vmatpush.bf16.msra.mxu0 0
      %1204 = vmatpush.bf16.msra.mxu0 0
      %1205 = vmatpush.bf16.msra.mxu0 0
      %1206 = vmatpush.bf16.msra.mxu0 0
      %1207 = vmatpush.bf16.msra.mxu0 0
      %1208 = vmatpush.bf16.msra.mxu0 0
      %1209 = vmatpush.bf16.msra.mxu0 %v1158
      %1210 = vmatmul.bf16.gmra.mxu0 %v1146
      %v1211 = vpop.f32.mrf.mxu0
      %v1212 = vadd.f32 0.0, %v1211
      %v1213 = vpop.f32.mrf.mxu0
      %1214 = vdwg.mxu0
      %1215 = vmatpush.bf16.msra.mxu0 0
      %1216 = vmatpush.bf16.msra.mxu0 0
      %1217 = vmatpush.bf16.msra.mxu0 0
      %1218 = vmatpush.bf16.msra.mxu0 0
      %1219 = vmatpush.bf16.msra.mxu0 0
      %1220 = vmatpush.bf16.msra.mxu0 0
      %1221 = vmatpush.bf16.msra.mxu0 0
      %1222 = vmatpush.bf16.msra.mxu0 %v1161
      %1223 = vmatmul.bf16.gmra.mxu0 %v1146
      %v1224 = vpop.f32.mrf.mxu0
      %v1225 = vadd.f32 0.0, %v1224
      %v1226 = vpop.f32.mrf.mxu0
      %1227 = vdwg.mxu0
      %v1228 = vadd.f32 %v1105, %v1173
      %v1229 = vadd.f32 %v1106, %v1186
      %v1230 = vadd.f32 %v1107, %v1199
      %v1231 = vadd.f32 %v1108, %v1212
      %v1232 = vadd.f32 %v1109, %v1225
      %v1233 = vld [vmem:[%s2] sm:$0xff]
      %1235 = vset.pattern.permute.xlu0 0
      %1236 = vperm.xlu0 %1235, %v1233
      %v1237 = vpop.permute.xlu0 %1236
      %v1239 = vadd.f32 %v1228, %v1237
      %v1240 = vadd.f32 %v1229, %v1237
      %v1241 = vadd.f32 %v1230, %v1237
      %v1242 = vadd.f32 %v1231, %v1237
      %v1243 = vadd.f32 %v1232, %v1237
      %v1244 = vmax.f32 %v1239, 0.0
      %v1245 = vmax.f32 %v1240, 0.0
      %v1246 = vmax.f32 %v1241, 0.0
      %v1247 = vmax.f32 %v1242, 0.0
      %v1248 = vmax.f32 %v1243, 0.0
      %1249 = vst [vmem:[%s150] sm:$0xff] %v1244
      %1250 = vst [vmem:[%s150 + $0x8] sm:$0xff] %v1245
      %1251 = vst [vmem:[%s150 + $0x10] sm:$0xff] %v1246
      %1252 = vst [vmem:[%s150 + $0x18] sm:$0xff] %v1247
      %1253 = vst [vmem:[%s150 + $0x20] sm:$0xff] %v1248
      %s1254 = smul.u32 5, %s14
      %p1255 = scmp.lt.s32.totalorder %s1254, 19
      %s1256 = scalar_select %p1255, %s1254, 19
      %s1257 = smul.addr %s1256, 8
      %s1258 = scalar_lea.vmem %s3, %s1257
      // Predicated region
      $region33: #{conv_autoencoder_forward.7} parent=31 // pred_check
        %p1259 = pneg %p95
      $region34: #{conv_autoencoder_forward.7} parent=31 // pred_check_branch
        %1261 = sbr.rel (%p1259) target = $region36
      $region35: #{conv_autoencoder_forward.7} parent=31 // pred_region
        %s1262 = smul.u32 5, %s14
      $region36: #{conv_autoencoder_forward.7} parent=31 // pred_fallthru
        _
    $region32: #{conv_autoencoder_forward.7} parent=5 // pred_fallthru
      _
    %p1263 = scmp.le.s32.totalorder 2, %s9
    // Predicated region
    $region37: #{conv_autoencoder_forward.7} parent=5 // pred_check
      %p1264 = pneg %p1263
    $region38: #{conv_autoencoder_forward.7} parent=5 // pred_check_branch
      %1266 = sbr.rel (%p1264) target = $region40
    $region39: #{conv_autoencoder_forward.7} parent=5 // pred_region
      %s1267 = ssub.s32 %s9, 2
      // Predicated region
      $region41: #{conv_autoencoder_forward.7} parent=39 // pred_check
        %p1268 = pneg %p101
      $region42: #{conv_autoencoder_forward.7} parent=39 // pred_check_branch
        %1270 = sbr.rel (%p1268) target = $region44
      $region43: #{conv_autoencoder_forward.7} parent=39 // pred_region
        %s1271 = smul.u32 5, %s15
        %p1272 = scmp.lt.s32.totalorder %s1271, 19
        %s1273 = scalar_select %p1272, %s1271, 19
        %s1274 = smul.addr %s1273, 8
        %s1275 = scalar_lea.vmem %s3, %s1274
      $region44: #{conv_autoencoder_forward.7} parent=39 // pred_fallthru
        _
    $region40: #{conv_autoencoder_forward.7} parent=5 // pred_fallthru
      _
  $region6: #{conv_autoencoder_forward.7} parent=0 // loop_footer
    %s13 = sadd.s32 1, %s9
  $region7: #{conv_autoencoder_forward.7} parent=0 // loop_footer_branch
    %8 = sbr.rel target = $region3
  $region8: #{conv_autoencoder_forward.7} parent=0 // loop_exit
    _

// kernel: conv_autoencoder_forward.8
$region0: #{conv_autoencoder_forward.8}
  #allocation0 [shape = 'u32[]', space=smem, size = 0x4, offset = 0x4, fixed_abs, tag = 'smem constant byte address 0x4 - core index']
  #allocation1 [shape = 'u32[72,128]{1,0:T(1,128)}', space=vmem, size = 0x9000, scoped, tag = 'internal scratch']
  %s0 = inlined_call_operand.vmem [shape: bf16[8,896], index: 0, kind: input, shape index: {}]
  %s1 = inlined_call_operand.vmem [shape: bf16[9,16,8], index: 1, kind: input, shape index: {}]
  %s2 = inlined_call_operand.vmem [shape: f32[16,1], index: 2, kind: input, shape index: {}]
  %s3 = inlined_call_operand.vmem [shape: f32[16,768], index: 3, kind: output, shape index: {}]
  %s4 = sld [smem:[#allocation0]]
  $region64: #{conv_autoencoder_forward.8} parent=0
    _
  %s6 = ssub.s32 1, %s4
  %s7 = scalar_select 0, %s6, %s4
  $region1: #{conv_autoencoder_forward.8} parent=0
    #allocation2 [shape = 'u8[32768]{0}', space=vmem, size = 0x8000, scoped, tag = 'output window, operand 0']
    loop: start=0, step=1, limit=5
    $region2: #{conv_autoencoder_forward.8} parent=1 // loop_pre_header
      _
    $region3: #{conv_autoencoder_forward.8} parent=1 // loop_header
      %s9 = sphi 0, %s13
      %p10 = scmp.ge.s32.totalorder %s9, 5
      %s17 = sphi 0, %s17
      %s19 = sphi 0, %s17
      %s20 = sphi 0, %s19
      %s34 = sphi 0, %s20
      %s38 = sphi 0, %s38
      %s40 = sphi 0, %s38
      %s41 = sphi 0, %s40
      %s55 = sphi 0, %s41
      %s59 = sphi 0, %s59
      %s61 = sphi 0, %s59
      %s62 = sphi 0, %s61
      %s76 = sphi 0, %s62
      %s82 = sphi 0, %s84
      %s85 = sphi 0, %s82
      %s86 = sphi 0, %s85
      %s102 = sphi 0, %s86
    $region4: #{conv_autoencoder_forward.8} parent=1 // loop_header_branch
      %12 = sbr.rel (%p10) target = $region8
    $region5: #{conv_autoencoder_forward.8} parent=1 // loop_body
      %s14 = ssub.s32 %s9, 1
      %s15 = ssub.s32 %s9, 2
      %s16 = sadd.s32 %s9, 1
      %s18 = sadd.s32 %s17, 1
      %p21 = scmp.eq.s32.totalorder %s9, 2
      %p22 = scmp.ne.s32.totalorder %s17, %s19
      %p23 = scmp.eq.s32.totalorder %s9, 0
      %p24 = por %p22, %p23
      %p25 = scmp.ne.s32.totalorder %s17, %s19
      %p26 = scmp.eq.s32.totalorder %s14, 2
      %p27 = por %p25, %p26
      %p28 = scmp.ne.s32.totalorder %s19, %s20
      %p29 = scmp.eq.s32.totalorder %s14, 0
      %p30 = por %p28, %p29
      %p31 = scmp.ne.s32.totalorder %s19, %s20
      %p32 = scmp.eq.s32.totalorder %s15, 2
      %p33 = por %p31, %p32
      %p35 = scmp.ne.s32.totalorder %s20, %s34
      %p36 = scmp.eq.s32.totalorder %s15, 0
      %p37 = por %p35, %p36
      %s39 = sadd.s32 %s38, 1
      %p42 = scmp.eq.s32.totalorder %s9, 2
      %p43 = scmp.ne.s32.totalorder %s38, %s40
      %p44 = scmp.eq.s32.totalorder %s9, 0
      %p45 = por %p43, %p44
      %p46 = scmp.ne.s32.totalorder %s38, %s40
      %p47 = scmp.eq.s32.totalorder %s14, 2
      %p48 = por %p46, %p47
      %p49 = scmp.ne.s32.totalorder %s40, %s41
      %p50 = scmp.eq.s32.totalorder %s14, 0
      %p51 = por %p49, %p50
      %p52 = scmp.ne.s32.totalorder %s40, %s41
      %p53 = scmp.eq.s32.totalorder %s15, 2
      %p54 = por %p52, %p53
      %p56 = scmp.ne.s32.totalorder %s41, %s55
      %p57 = scmp.eq.s32.totalorder %s15, 0
      %p58 = por %p56, %p57
      %s60 = sadd.s32 %s59, 1
      %p63 = scmp.eq.s32.totalorder %s9, 2
      %p64 = scmp.ne.s32.totalorder %s59, %s61
      %p65 = scmp.eq.s32.totalorder %s9, 0
      %p66 = por %p64, %p65
      %p67 = scmp.ne.s32.totalorder %s59, %s61
      %p68 = scmp.eq.s32.totalorder %s14, 2
      %p69 = por %p67, %p68
      %p70 = scmp.ne.s32.totalorder %s61, %s62
      %p71 = scmp.eq.s32.totalorder %s14, 0
      %p72 = por %p70, %p71
      %p73 = scmp.ne.s32.totalorder %s61, %s62
      %p74 = scmp.eq.s32.totalorder %s15, 2
      %p75 = por %p73, %p74
      %p77 = scmp.ne.s32.totalorder %s62, %s76
      %p78 = scmp.eq.s32.totalorder %s15, 0
      %p79 = por %p77, %p78
      %s80 = ssub.s32 %s9, %s16
      %p81 = scmp.eq.s32.totalorder %s80, 0
      %s83 = sadd.s32 %s82, 1
      %s84 = scalar_select %p81, %s82, %s83
      %p87 = pneg %p81
      %p88 = scmp.eq.s32.totalorder %s9, 2
      %p89 = por %p87, %p88
      %p90 = scmp.ne.s32.totalorder %s82, %s85
      %p91 = scmp.eq.s32.totalorder %s9, 0
      %p92 = por %p90, %p91
      %p93 = scmp.ne.s32.totalorder %s82, %s85
      %p94 = scmp.eq.s32.totalorder %s14, 2
      %p95 = por %p93, %p94
      %p96 = scmp.ne.s32.totalorder %s85, %s86
      %p97 = scmp.eq.s32.totalorder %s14, 0
      %p98 = por %p96, %p97
      %p99 = scmp.ne.s32.totalorder %s85, %s86
      %p100 = scmp.eq.s32.totalorder %s15, 2
      %p101 = por %p99, %p100
      %p103 = scmp.ne.s32.totalorder %s86, %s102
      %p104 = scmp.eq.s32.totalorder %s15, 0
      %p105 = por %p103, %p104
      %p106 = scmp.le.s32.totalorder 1, %s9
      %p107 = scmp.lt.s32.totalorder %s9, 4
      %p108 = pnand %p106, %p107
      %p109 = pneg %p108
      // Predicated region
      $region9: #{conv_autoencoder_forward.8} parent=5 // pred_check
        _
      $region10: #{conv_autoencoder_forward.8} parent=5 // pred_check_branch
        %111 = sbr.rel (%p108) target = $region12
      $region11: #{conv_autoencoder_forward.8} parent=5 // pred_region
        %s112 = ssub.s32 %s9, 1
        // Predicated region
        $region13: #{conv_autoencoder_forward.8} parent=11 // pred_check
          %p113 = pneg %p30
        $region14: #{conv_autoencoder_forward.8} parent=11 // pred_check_branch
          %115 = sbr.rel (%p113) target = $region16
        $region15: #{conv_autoencoder_forward.8} parent=11 // pred_region
          _
        $region16: #{conv_autoencoder_forward.8} parent=11 // pred_fallthru
          _
        // Predicated region
        $region17: #{conv_autoencoder_forward.8} parent=11 // pred_check
          %p116 = pneg %p51
        $region18: #{conv_autoencoder_forward.8} parent=11 // pred_check_branch
          %118 = sbr.rel (%p116) target = $region20
        $region19: #{conv_autoencoder_forward.8} parent=11 // pred_region
          _
        $region20: #{conv_autoencoder_forward.8} parent=11 // pred_fallthru
          _
        // Predicated region
        $region21: #{conv_autoencoder_forward.8} parent=11 // pred_check
          %p119 = pneg %p72
        $region22: #{conv_autoencoder_forward.8} parent=11 // pred_check_branch
          %121 = sbr.rel (%p119) target = $region24
        $region23: #{conv_autoencoder_forward.8} parent=11 // pred_region
          _
        $region24: #{conv_autoencoder_forward.8} parent=11 // pred_fallthru
          _
      $region12: #{conv_autoencoder_forward.8} parent=5 // pred_fallthru
        _
      %p122 = scmp.lt.s32.totalorder %s9, 3
      // Predicated region
      $region25: #{conv_autoencoder_forward.8} parent=5 // pred_check
        %p123 = pneg %p122
      $region26: #{conv_autoencoder_forward.8} parent=5 // pred_check_branch
        %125 = sbr.rel (%p123) target = $region28
      $region27: #{conv_autoencoder_forward.8} parent=5 // pred_region
        _
      $region28: #{conv_autoencoder_forward.8} parent=5 // pred_fallthru
        _
      %p126 = scmp.le.s32.totalorder 1, %s9
      %p127 = scmp.lt.s32.totalorder %s9, 4
      %p128 = pnand %p126, %p127
      %p129 = pneg %p128
      // Predicated region
      $region29: #{conv_autoencoder_forward.8} parent=5 // pred_check
        _
      $region30: #{conv_autoencoder_forward.8} parent=5 // pred_check_branch
        %131 = sbr.rel (%p128) target = $region32
      $region31: #{conv_autoencoder_forward.8} parent=5 // pred_region
        %s132 = ssub.s32 %s9, 1
        %p133 = pneg %p30
        %p134 = pneg %p27
        %p135 = pneg %p51
        %p136 = pneg %p48
        %p137 = pneg %p72
        %p138 = pneg %p69
        %p139 = pneg %p98
        %p140 = pneg %p95
        %s141 = sand.u32 %s85, 1
        %s142 = sand.u32 %s85, 1
        %s143 = smul.addr %s142, 32
        %s144 = scalar_lea.vmem [#allocation2], %s143
        %s145 = smul.u32 2, %s14
        %s147 = smul.u32 %s14, 256
        %s148 = sshra.s32 %s147, 7
        %s149 = sand.u32 %s147, 127
        %s150 = smul.addr %s148, 4
        %s151 = scalar_lea.vmem %s0, %s150
        %v152 = vld [vmem:[%s151] sm:$0xff]
        %v153 = vld [vmem:[%s151 + $0x8] sm:$0xf]
        %v154 = vld [vmem:[%s1] sm:$0xf]
        %v155 = vld [vmem:[%s1 + $0x4] sm:$0xf]
        %s156 = scalar_lea.vmem %s1, 8
        %v157 = vld [vmem:[%s156] sm:$0xf]
        %v158 = vld [vmem:[%s156 + $0x4] sm:$0xf]
        %v161 = vunpack.c.l.b16 %v157
        %v162 = vunpack.c.l.b16 %v158
        %v163 = vpack.c.b16 %v162, %v161
        %v166 = vunpack.c.l.b16 %v152
        %v167 = vunpack.c.h.b16 %v152
        %v168 = vunpack.c.l.b16 %v153
        %v169 = vpack.c.b16 %v166, %v166
        %v170 = vpack.c.b16 %v167, %v167
        %v171 = vpack.c.b16 %v168, %v168
        %172 = vrot.lane.b32.xlu0 %v169, 127
        %v173 = vpop.permute.xlu0 %172
        %174 = vrot.lane.b32.xlu0 %v170, 127
        %v175 = vpop.permute.xlu0 %174
        %176 = vrot.lane.b32.xlu0 %v171, 127
        %v177 = vpop.permute.xlu0 %176
        %vm178 = vcmask 1039360
        %v179 = vsel %vm178, %v173, %v175
        %v180 = vsel %vm178, %v175, %v177
        %vm181 = vcmask 64512
        %v183 = vsel %vm181, %v163, 0
        %vm185 = vcmask 1043456
        %v187 = vsel %vm185, %v179, 0
        %v190 = vsel %vm185, %v180, 0
        %192 = vmatpush.bf16.msra.mxu0 0
        %193 = vmatpush.bf16.msra.mxu0 0
        %194 = vmatpush.bf16.msra.mxu0 0
        %195 = vmatpush.bf16.msra.mxu0 0
        %196 = vmatpush.bf16.msra.mxu0 0
        %197 = vmatpush.bf16.msra.mxu0 0
        %198 = vmatpush.bf16.msra.mxu0 0
        %199 = vmatpush.bf16.msra.mxu0 %v187
        %200 = vmatmul.bf16.gmra.mxu0 %v183
        %v201 = vpop.f32.mrf.mxu0
        %v202 = vadd.f32 0.0, %v201
        %v203 = vpop.f32.mrf.mxu0
        %v204 = vadd.f32 0.0, %v203
        %205 = vdwg.mxu0
        %206 = vmatpush.bf16.msra.mxu0 0
        %207 = vmatpush.bf16.msra.mxu0 0
        %208 = vmatpush.bf16.msra.mxu0 0
        %209 = vmatpush.bf16.msra.mxu0 0
        %210 = vmatpush.bf16.msra.mxu0 0
        %211 = vmatpush.bf16.msra.mxu0 0
        %212 = vmatpush.bf16.msra.mxu0 0
        %213 = vmatpush.bf16.msra.mxu0 %v190
        %214 = vmatmul.bf16.gmra.mxu0 %v183
        %v215 = vpop.f32.mrf.mxu0
        %v216 = vadd.f32 0.0, %v215
        %v217 = vpop.f32.mrf.mxu0
        %v218 = vadd.f32 0.0, %v217
        %219 = vdwg.mxu0
        %v222 = vunpack.c.l.b16 %v154
        %v223 = vunpack.c.l.b16 %v155
        %v224 = vpack.c.b16 %v223, %v222
        %v226 = vsel %vm181, %v224, 0
        %v229 = vsel %vm185, %v169, 0
        %v232 = vsel %vm185, %v170, 0
        %234 = vmatpush.bf16.msra.mxu0 0
        %235 = vmatpush.bf16.msra.mxu0 0
        %236 = vmatpush.bf16.msra.mxu0 0
        %237 = vmatpush.bf16.msra.mxu0 0
        %238 = vmatpush.bf16.msra.mxu0 0
        %239 = vmatpush.bf16.msra.mxu0 0
        %240 = vmatpush.bf16.msra.mxu0 0
        %241 = vmatpush.bf16.msra.mxu0 %v229
        %242 = vmatmul.bf16.gmra.mxu0 %v226
        %v243 = vpop.f32.mrf.mxu0
        %v244 = vadd.f32 %v202, %v243
        %v245 = vpop.f32.mrf.mxu0
        %v246 = vadd.f32 %v204, %v245
        %247 = vdwg.mxu0
        %248 = vmatpush.bf16.msra.mxu0 0
        %249 = vmatpush.bf16.msra.mxu0 0
        %250 = vmatpush.bf16.msra.mxu0 0
        %251 = vmatpush.bf16.msra.mxu0 0
        %252 = vmatpush.bf16.msra.mxu0 0
        %253 = vmatpush.bf16.msra.mxu0 0
        %254 = vmatpush.bf16.msra.mxu0 0
        %255 = vmatpush.bf16.msra.mxu0 %v232
        %256 = vmatmul.bf16.gmra.mxu0 %v226
        %v257 = vpop.f32.mrf.mxu0
        %v258 = vadd.f32 %v216, %v257
        %v259 = vpop.f32.mrf.mxu0
        %v260 = vadd.f32 %v218, %v259
        %261 = vdwg.mxu0
        %s262 = scalar_lea.vmem %s1, 16
        %v263 = vld [vmem:[%s262] sm:$0xf]
        %v264 = vld [vmem:[%s262 + $0x4] sm:$0xf]
        %v267 = vunpack.c.l.b16 %v263
        %v268 = vunpack.c.l.b16 %v264
        %v269 = vpack.c.b16 %v268, %v267
        %270 = vrot.lane.b32.xlu0 %v169, 126
        %v271 = vpop.permute.xlu0 %270
        %272 = vrot.lane.b32.xlu0 %v170, 126
        %v273 = vpop.permute.xlu0 %272
        %274 = vrot.lane.b32.xlu0 %v171, 126
        %v275 = vpop.permute.xlu0 %274
        %vm276 = vcmask 1031168
        %v277 = vsel %vm276, %v271, %v273
        %v278 = vsel %vm276, %v273, %v275
        %v280 = vsel %vm181, %v269, 0
        %v283 = vsel %vm185, %v277, 0
        %v286 = vsel %vm185, %v278, 0
        %288 = vmatpush.bf16.msra.mxu0 0
        %289 = vmatpush.bf16.msra.mxu0 0
        %290 = vmatpush.bf16.msra.mxu0 0
        %291 = vmatpush.bf16.msra.mxu0 0
        %292 = vmatpush.bf16.msra.mxu0 0
        %293 = vmatpush.bf16.msra.mxu0 0
        %294 = vmatpush.bf16.msra.mxu0 0
        %295 = vmatpush.bf16.msra.mxu0 %v283
        %296 = vmatmul.bf16.gmra.mxu0 %v280
        %v297 = vpop.f32.mrf.mxu0
        %v298 = vadd.f32 0.0, %v297
        %v299 = vpop.f32.mrf.mxu0
        %v300 = vadd.f32 0.0, %v299
        %301 = vdwg.mxu0
        %302 = vmatpush.bf16.msra.mxu0 0
        %303 = vmatpush.bf16.msra.mxu0 0
        %304 = vmatpush.bf16.msra.mxu0 0
        %305 = vmatpush.bf16.msra.mxu0 0
        %306 = vmatpush.bf16.msra.mxu0 0
        %307 = vmatpush.bf16.msra.mxu0 0
        %308 = vmatpush.bf16.msra.mxu0 0
        %309 = vmatpush.bf16.msra.mxu0 %v286
        %310 = vmatmul.bf16.gmra.mxu0 %v280
        %v311 = vpop.f32.mrf.mxu0
        %v312 = vadd.f32 0.0, %v311
        %v313 = vpop.f32.mrf.mxu0
        %v314 = vadd.f32 0.0, %v313
        %315 = vdwg.mxu0
        %v316 = vadd.f32 %v244, %v298
        %v317 = vadd.f32 %v258, %v312
        %v318 = vadd.f32 %v246, %v300
        %v319 = vadd.f32 %v260, %v314
        %s320 = scalar_lea.vmem %s1, 24
        %v321 = vld [vmem:[%s320] sm:$0xf]
        %v322 = vld [vmem:[%s320 + $0x4] sm:$0xf]
        %v325 = vunpack.c.l.b16 %v321
        %v326 = vunpack.c.l.b16 %v322
        %v327 = vpack.c.b16 %v326, %v325
        %328 = vrot.lane.b32.xlu0 %v169, 110
        %v329 = vpop.permute.xlu0 %328
        %330 = vrot.lane.b32.xlu0 %v170, 110
        %v331 = vpop.permute.xlu0 %330
        %332 = vrot.lane.b32.xlu0 %v171, 110
        %v333 = vpop.permute.xlu0 %332
        %vm334 = vcmask 900096
        %v335 = vsel %vm334, %v329, %v331
        %v336 = vsel %vm334, %v331, %v333
        %v338 = vsel %vm181, %v327, 0
        %v341 = vsel %vm185, %v335, 0
        %v344 = vsel %vm185, %v336, 0
        %346 = vmatpush.bf16.msra.mxu0 0
        %347 = vmatpush.bf16.msra.mxu0 0
        %348 = vmatpush.bf16.msra.mxu0 0
        %349 = vmatpush.bf16.msra.mxu0 0
        %350 = vmatpush.bf16.msra.mxu0 0
        %351 = vmatpush.bf16.msra.mxu0 0
        %352 = vmatpush.bf16.msra.mxu0 0
        %353 = vmatpush.bf16.msra.mxu0 %v341
        %354 = vmatmul.bf16.gmra.mxu0 %v338
        %v355 = vpop.f32.mrf.mxu0
        %v356 = vadd.f32 0.0, %v355
        %v357 = vpop.f32.mrf.mxu0
        %v358 = vadd.f32 0.0, %v357
        %359 = vdwg.mxu0
        %360 = vmatpush.bf16.msra.mxu0 0
        %361 = vmatpush.bf16.msra.mxu0 0
        %362 = vmatpush.bf16.msra.mxu0 0
        %363 = vmatpush.bf16.msra.mxu0 0
        %364 = vmatpush.bf16.msra.mxu0 0
        %365 = vmatpush.bf16.msra.mxu0 0
        %366 = vmatpush.bf16.msra.mxu0 0
        %367 = vmatpush.bf16.msra.mxu0 %v344
        %368 = vmatmul.bf16.gmra.mxu0 %v338
        %v369 = vpop.f32.mrf.mxu0
        %v370 = vadd.f32 0.0, %v369
        %v371 = vpop.f32.mrf.mxu0
        %v372 = vadd.f32 0.0, %v371
        %373 = vdwg.mxu0
        %v374 = vadd.f32 %v316, %v356
        %v375 = vadd.f32 %v317, %v370
        %v376 = vadd.f32 %v318, %v358
        %v377 = vadd.f32 %v319, %v372
        %s378 = scalar_lea.vmem %s1, 32
        %v379 = vld [vmem:[%s378] sm:$0xf]
        %v380 = vld [vmem:[%s378 + $0x4] sm:$0xf]
        %v383 = vunpack.c.l.b16 %v379
        %v384 = vunpack.c.l.b16 %v380
        %v385 = vpack.c.b16 %v384, %v383
        %386 = vrot.lane.b32.xlu0 %v169, 109
        %v387 = vpop.permute.xlu0 %386
        %388 = vrot.lane.b32.xlu0 %v170, 109
        %v389 = vpop.permute.xlu0 %388
        %390 = vrot.lane.b32.xlu0 %v171, 109
        %v391 = vpop.permute.xlu0 %390
        %vm392 = vcmask 891904
        %v393 = vsel %vm392, %v387, %v389
        %v394 = vsel %vm392, %v389, %v391
        %v396 = vsel %vm181, %v385, 0
        %v399 = vsel %vm185, %v393, 0
        %v402 = vsel %vm185, %v394, 0
        %404 = vmatpush.bf16.msra.mxu0 0
        %405 = vmatpush.bf16.msra.mxu0 0
        %406 = vmatpush.bf16.msra.mxu0 0
        %407 = vmatpush.bf16.msra.mxu0 0
        %408 = vmatpush.bf16.msra.mxu0 0
        %409 = vmatpush.bf16.msra.mxu0 0
        %410 = vmatpush.bf16.msra.mxu0 0
        %411 = vmatpush.bf16.msra.mxu0 %v399
        %412 = vmatmul.bf16.gmra.mxu0 %v396
        %v413 = vpop.f32.mrf.mxu0
        %v414 = vadd.f32 0.0, %v413
        %v415 = vpop.f32.mrf.mxu0
        %v416 = vadd.f32 0.0, %v415
        %417 = vdwg.mxu0
        %418 = vmatpush.bf16.msra.mxu0 0
        %419 = vmatpush.bf16.msra.mxu0 0
        %420 = vmatpush.bf16.msra.mxu0 0
        %421 = vmatpush.bf16.msra.mxu0 0
        %422 = vmatpush.bf16.msra.mxu0 0
        %423 = vmatpush.bf16.msra.mxu0 0
        %424 = vmatpush.bf16.msra.mxu0 0
        %425 = vmatpush.bf16.msra.mxu0 %v402
        %426 = vmatmul.bf16.gmra.mxu0 %v396
        %v427 = vpop.f32.mrf.mxu0
        %v428 = vadd.f32 0.0, %v427
        %v429 = vpop.f32.mrf.mxu0
        %v430 = vadd.f32 0.0, %v429
        %431 = vdwg.mxu0
        %v432 = vadd.f32 %v374, %v414
        %v433 = vadd.f32 %v375, %v428
        %v434 = vadd.f32 %v376, %v416
        %v435 = vadd.f32 %v377, %v430
        %s436 = scalar_lea.vmem %s1, 40
        %v437 = vld [vmem:[%s436] sm:$0xf]
        %v438 = vld [vmem:[%s436 + $0x4] sm:$0xf]
        %v441 = vunpack.c.l.b16 %v437
        %v442 = vunpack.c.l.b16 %v438
        %v443 = vpack.c.b16 %v442, %v441
        %444 = vrot.lane.b32.xlu0 %v169, 108
        %v445 = vpop.permute.xlu0 %444
        %446 = vrot.lane.b32.xlu0 %v170, 108
        %v447 = vpop.permute.xlu0 %446
        %448 = vrot.lane.b32.xlu0 %v171, 108
        %v449 = vpop.permute.xlu0 %448
        %vm450 = vcmask 883712
        %v451 = vsel %vm450, %v445, %v447
        %v452 = vsel %vm450, %v447, %v449
        %v454 = vsel %vm181, %v443, 0
        %v457 = vsel %vm185, %v451, 0
        %v460 = vsel %vm185, %v452, 0
        %462 = vmatpush.bf16.msra.mxu0 0
        %463 = vmatpush.bf16.msra.mxu0 0
        %464 = vmatpush.bf16.msra.mxu0 0
        %465 = vmatpush.bf16.msra.mxu0 0
        %466 = vmatpush.bf16.msra.mxu0 0
        %467 = vmatpush.bf16.msra.mxu0 0
        %468 = vmatpush.bf16.msra.mxu0 0
        %469 = vmatpush.bf16.msra.mxu0 %v457
        %470 = vmatmul.bf16.gmra.mxu0 %v454
        %v471 = vpop.f32.mrf.mxu0
        %v472 = vadd.f32 0.0, %v471
        %v473 = vpop.f32.mrf.mxu0
        %v474 = vadd.f32 0.0, %v473
        %475 = vdwg.mxu0
        %476 = vmatpush.bf16.msra.mxu0 0
        %477 = vmatpush.bf16.msra.mxu0 0
        %478 = vmatpush.bf16.msra.mxu0 0
        %479 = vmatpush.bf16.msra.mxu0 0
        %480 = vmatpush.bf16.msra.mxu0 0
        %481 = vmatpush.bf16.msra.mxu0 0
        %482 = vmatpush.bf16.msra.mxu0 0
        %483 = vmatpush.bf16.msra.mxu0 %v460
        %484 = vmatmul.bf16.gmra.mxu0 %v454
        %v485 = vpop.f32.mrf.mxu0
        %v486 = vadd.f32 0.0, %v485
        %v487 = vpop.f32.mrf.mxu0
        %v488 = vadd.f32 0.0, %v487
        %489 = vdwg.mxu0
        %v490 = vadd.f32 %v432, %v472
        %v491 = vadd.f32 %v433, %v486
        %v492 = vadd.f32 %v434, %v474
        %v493 = vadd.f32 %v435, %v488
        %s494 = scalar_lea.vmem %s1, 48
        %v495 = vld [vmem:[%s494] sm:$0xf]
        %v496 = vld [vmem:[%s494 + $0x4] sm:$0xf]
        %v499 = vunpack.c.l.b16 %v495
        %v500 = vunpack.c.l.b16 %v496
        %v501 = vpack.c.b16 %v500, %v499
        %502 = vrot.lane.b32.xlu0 %v169, 92
        %v503 = vpop.permute.xlu0 %502
        %504 = vrot.lane.b32.xlu0 %v170, 92
        %v505 = vpop.permute.xlu0 %504
        %506 = vrot.lane.b32.xlu0 %v171, 92
        %v507 = vpop.permute.xlu0 %506
        %vm508 = vcmask 752640
        %v509 = vsel %vm508, %v503, %v505
        %v510 = vsel %vm508, %v505, %v507
        %v512 = vsel %vm181, %v501, 0
        %v515 = vsel %vm185, %v509, 0
        %v518 = vsel %vm185, %v510, 0
        %520 = vmatpush.bf16.msra.mxu0 0
        %521 = vmatpush.bf16.msra.mxu0 0
        %522 = vmatpush.bf16.msra.mxu0 0
        %523 = vmatpush.bf16.msra.mxu0 0
        %524 = vmatpush.bf16.msra.mxu0 0
        %525 = vmatpush.bf16.msra.mxu0 0
        %526 = vmatpush.bf16.msra.mxu0 0
        %527 = vmatpush.bf16.msra.mxu0 %v515
        %528 = vmatmul.bf16.gmra.mxu0 %v512
        %v529 = vpop.f32.mrf.mxu0
        %v530 = vadd.f32 0.0, %v529
        %v531 = vpop.f32.mrf.mxu0
        %v532 = vadd.f32 0.0, %v531
        %533 = vdwg.mxu0
        %534 = vmatpush.bf16.msra.mxu0 0
        %535 = vmatpush.bf16.msra.mxu0 0
        %536 = vmatpush.bf16.msra.mxu0 0
        %537 = vmatpush.bf16.msra.mxu0 0
        %538 = vmatpush.bf16.msra.mxu0 0
        %539 = vmatpush.bf16.msra.mxu0 0
        %540 = vmatpush.bf16.msra.mxu0 0
        %541 = vmatpush.bf16.msra.mxu0 %v518
        %542 = vmatmul.bf16.gmra.mxu0 %v512
        %v543 = vpop.f32.mrf.mxu0
        %v544 = vadd.f32 0.0, %v543
        %v545 = vpop.f32.mrf.mxu0
        %v546 = vadd.f32 0.0, %v545
        %547 = vdwg.mxu0
        %v548 = vadd.f32 %v490, %v530
        %v549 = vadd.f32 %v491, %v544
        %v550 = vadd.f32 %v492, %v532
        %v551 = vadd.f32 %v493, %v546
        %s552 = scalar_lea.vmem %s1, 56
        %v553 = vld [vmem:[%s552] sm:$0xf]
        %v554 = vld [vmem:[%s552 + $0x4] sm:$0xf]
        %v557 = vunpack.c.l.b16 %v553
        %v558 = vunpack.c.l.b16 %v554
        %v559 = vpack.c.b16 %v558, %v557
        %560 = vrot.lane.b32.xlu0 %v169, 91
        %v561 = vpop.permute.xlu0 %560
        %562 = vrot.lane.b32.xlu0 %v170, 91
        %v563 = vpop.permute.xlu0 %562
        %564 = vrot.lane.b32.xlu0 %v171, 91
        %v565 = vpop.permute.xlu0 %564
        %vm566 = vcmask 744448
        %v567 = vsel %vm566, %v561, %v563
        %v568 = vsel %vm566, %v563, %v565
        %v570 = vsel %vm181, %v559, 0
        %v573 = vsel %vm185, %v567, 0
        %v576 = vsel %vm185, %v568, 0
        %578 = vmatpush.bf16.msra.mxu0 0
        %579 = vmatpush.bf16.msra.mxu0 0
        %580 = vmatpush.bf16.msra.mxu0 0
        %581 = vmatpush.bf16.msra.mxu0 0
        %582 = vmatpush.bf16.msra.mxu0 0
        %583 = vmatpush.bf16.msra.mxu0 0
        %584 = vmatpush.bf16.msra.mxu0 0
        %585 = vmatpush.bf16.msra.mxu0 %v573
        %586 = vmatmul.bf16.gmra.mxu0 %v570
        %v587 = vpop.f32.mrf.mxu0
        %v588 = vadd.f32 0.0, %v587
        %v589 = vpop.f32.mrf.mxu0
        %v590 = vadd.f32 0.0, %v589
        %591 = vdwg.mxu0
        %592 = vmatpush.bf16.msra.mxu0 0
        %593 = vmatpush.bf16.msra.mxu0 0
        %594 = vmatpush.bf16.msra.mxu0 0
        %595 = vmatpush.bf16.msra.mxu0 0
        %596 = vmatpush.bf16.msra.mxu0 0
        %597 = vmatpush.bf16.msra.mxu0 0
        %598 = vmatpush.bf16.msra.mxu0 0
        %599 = vmatpush.bf16.msra.mxu0 %v576
        %600 = vmatmul.bf16.gmra.mxu0 %v570
        %v601 = vpop.f32.mrf.mxu0
        %v602 = vadd.f32 0.0, %v601
        %v603 = vpop.f32.mrf.mxu0
        %v604 = vadd.f32 0.0, %v603
        %605 = vdwg.mxu0
        %v606 = vadd.f32 %v548, %v588
        %v607 = vadd.f32 %v549, %v602
        %v608 = vadd.f32 %v550, %v590
        %v609 = vadd.f32 %v551, %v604
        %s610 = scalar_lea.vmem %s1, 64
        %v611 = vld [vmem:[%s610] sm:$0xf]
        %v612 = vld [vmem:[%s610 + $0x4] sm:$0xf]
        %v615 = vunpack.c.l.b16 %v611
        %v616 = vunpack.c.l.b16 %v612
        %v617 = vpack.c.b16 %v616, %v615
        %618 = vrot.lane.b32.xlu0 %v169, 90
        %v619 = vpop.permute.xlu0 %618
        %620 = vrot.lane.b32.xlu0 %v170, 90
        %v621 = vpop.permute.xlu0 %620
        %622 = vrot.lane.b32.xlu0 %v171, 90
        %v623 = vpop.permute.xlu0 %622
        %vm624 = vcmask 736256
        %v625 = vsel %vm624, %v619, %v621
        %v626 = vsel %vm624, %v621, %v623
        %v628 = vsel %vm181, %v617, 0
        %v631 = vsel %vm185, %v625, 0
        %v634 = vsel %vm185, %v626, 0
        %636 = vmatpush.bf16.msra.mxu0 0
        %637 = vmatpush.bf16.msra.mxu0 0
        %638 = vmatpush.bf16.msra.mxu0 0
        %639 = vmatpush.bf16.msra.mxu0 0
        %640 = vmatpush.bf16.msra.mxu0 0
        %641 = vmatpush.bf16.msra.mxu0 0
        %642 = vmatpush.bf16.msra.mxu0 0
        %643 = vmatpush.bf16.msra.mxu0 %v631
        %644 = vmatmul.bf16.gmra.mxu0 %v628
        %v645 = vpop.f32.mrf.mxu0
        %v646 = vadd.f32 0.0, %v645
        %v647 = vpop.f32.mrf.mxu0
        %v648 = vadd.f32 0.0, %v647
        %649 = vdwg.mxu0
        %650 = vmatpush.bf16.msra.mxu0 0
        %651 = vmatpush.bf16.msra.mxu0 0
        %652 = vmatpush.bf16.msra.mxu0 0
        %653 = vmatpush.bf16.msra.mxu0 0
        %654 = vmatpush.bf16.msra.mxu0 0
        %655 = vmatpush.bf16.msra.mxu0 0
        %656 = vmatpush.bf16.msra.mxu0 0
        %657 = vmatpush.bf16.msra.mxu0 %v634
        %658 = vmatmul.bf16.gmra.mxu0 %v628
        %v659 = vpop.f32.mrf.mxu0
        %v660 = vadd.f32 0.0, %v659
        %v661 = vpop.f32.mrf.mxu0
        %v662 = vadd.f32 0.0, %v661
        %663 = vdwg.mxu0
        %v664 = vadd.f32 %v606, %v646
        %v665 = vadd.f32 %v607, %v660
        %v666 = vadd.f32 %v608, %v648
        %v667 = vadd.f32 %v609, %v662
        %v668 = vld [vmem:[%s2] sm:$0xff]
        %v669 = vld [vmem:[%s2 + $0x8] sm:$0xff]
        %671 = vset.pattern.permute.xlu0 0
        %672 = vperm.xlu0 %671, %v668
        %v673 = vpop.permute.xlu0 %672
        %676 = vset.pattern.permute.xlu0 0
        %677 = vperm.xlu0 %676, %v669
        %v678 = vpop.permute.xlu0 %677
        %v680 = vadd.f32 %v664, %v673
        %v681 = vadd.f32 %v665, %v673
        %v682 = vadd.f32 %v666, %v678
        %v683 = vadd.f32 %v667, %v678
        %v684 = vmax.f32 %v680, 0.0
        %v685 = vmax.f32 %v681, 0.0
        %v686 = vmax.f32 %v682, 0.0
        %v687 = vmax.f32 %v683, 0.0
        %688 = vst [vmem:[%s144] sm:$0xff] %v684
        %689 = vst [vmem:[%s144 + $0x8] sm:$0xff] %v685
        %690 = vst [vmem:[%s144 + $0x10] sm:$0xff] %v686
        %691 = vst [vmem:[%s144 + $0x18] sm:$0xff] %v687
        %s692 = sand.u32 %s85, 1
        %s693 = sand.u32 %s85, 1
        %s694 = smul.addr %s693, 32
        %s695 = scalar_lea.vmem [#allocation2], %s694
        // Predicated region
        $region33: #{conv_autoencoder_forward.8} parent=31 // pred_check
          %p696 = pneg %p95
        $region34: #{conv_autoencoder_forward.8} parent=31 // pred_check_branch
          %698 = sbr.rel (%p696) target = $region36
        $region35: #{conv_autoencoder_forward.8} parent=31 // pred_region
          %s699 = smul.u32 2, %s14
          %s700 = smul.addr %s699, 8
          %s701 = scalar_lea.vmem %s3, %s700
          // Predicated region
          $region37: #{conv_autoencoder_forward.8} parent=35 // pred_check
            _
          $region38: #{conv_autoencoder_forward.8} parent=35 // pred_check_branch
            %703 = sbr.rel (0) target = $region40
          $region39: #{conv_autoencoder_forward.8} parent=35 // pred_region
            // Predicated region
            $region41: #{conv_autoencoder_forward.8} parent=39 // pred_check
              _
            $region42: #{conv_autoencoder_forward.8} parent=39 // pred_check_branch
              %705 = sbr.rel (0) target = $region44
            $region43: #{conv_autoencoder_forward.8} parent=39 // pred_region
              loop: start=0, step=1, limit=1
              $region45: #{conv_autoencoder_forward.8} parent=43 // loop_pre_header
                _
              $region46: #{conv_autoencoder_forward.8} parent=43 // loop_header
                %s707 = sphi 0, %s711
                %p708 = scmp.ge.s32.totalorder %s707, 1
                %s712 = sphi %s695, %s695
                %s713 = sphi %s701, %s701
              $region47: #{conv_autoencoder_forward.8} parent=43 // loop_header_branch
                %710 = sbr.rel (%p708) target = $region51
              $region48: #{conv_autoencoder_forward.8} parent=43 // loop_body
                %v714 = vld [vmem:[%s712] sm:$0xff]
                %715 = vst [vmem:[%s713] sm:$0xff] %v714
                %v716 = vld [vmem:[%s712 + $0x8] sm:$0xff]
                %717 = vst [vmem:[%s713 + $0x8] sm:$0xff] %v716
                %v718 = vld [vmem:[%s712 + $0x10] sm:$0xff]
                %719 = vst [vmem:[%s713 + $0x30] sm:$0xff] %v718
                %v720 = vld [vmem:[%s712 + $0x18] sm:$0xff]
                %721 = vst [vmem:[%s713 + $0x38] sm:$0xff] %v720
              $region49: #{conv_autoencoder_forward.8} parent=43 // loop_footer
                %s711 = sadd.s32 1, %s707
              $region50: #{conv_autoencoder_forward.8} parent=43 // loop_footer_branch
                %706 = sbr.rel target = $region46
              $region51: #{conv_autoencoder_forward.8} parent=43 // loop_exit
                _
            $region44: #{conv_autoencoder_forward.8} parent=39 // pred_fallthru
              _
            // Predicated region
            $region52: #{conv_autoencoder_forward.8} parent=39 // pred_check
              _
            $region53: #{conv_autoencoder_forward.8} parent=39 // pred_check_branch
              %723 = sbr.rel target = $region55
            $region54: #{conv_autoencoder_forward.8} parent=39 // pred_region
              _
            $region55: #{conv_autoencoder_forward.8} parent=39 // pred_fallthru
              _
          $region40: #{conv_autoencoder_forward.8} parent=35 // pred_fallthru
            _
          %724 = vnop
        $region36: #{conv_autoencoder_forward.8} parent=31 // pred_fallthru
          _
      $region32: #{conv_autoencoder_forward.8} parent=5 // pred_fallthru
        _
      %p725 = scmp.le.s32.totalorder 2, %s9
      // Predicated region
      $region56: #{conv_autoencoder_forward.8} parent=5 // pred_check
        %p726 = pneg %p725
      $region57: #{conv_autoencoder_forward.8} parent=5 // pred_check_branch
        %728 = sbr.rel (%p726) target = $region59
      $region58: #{conv_autoencoder_forward.8} parent=5 // pred_region
        %s729 = ssub.s32 %s9, 2
        // Predicated region
        $region60: #{conv_autoencoder_forward.8} parent=58 // pred_check
          %p730 = pneg %p101
        $region61: #{conv_autoencoder_forward.8} parent=58 // pred_check_branch
          %732 = sbr.rel (%p730) target = $region63
        $region62: #{conv_autoencoder_forward.8} parent=58 // pred_region
          %s733 = sand.u32 %s86, 1
          %s734 = sand.u32 %s86, 1
          %s735 = smul.addr %s734, 32
          %s736 = scalar_lea.vmem [#allocation2], %s735
        $region63: #{conv_autoencoder_forward.8} parent=58 // pred_fallthru
          _
      $region59: #{conv_autoencoder_forward.8} parent=5 // pred_fallthru
        _
    $region6: #{conv_autoencoder_forward.8} parent=1 // loop_footer
      %s13 = sadd.s32 1, %s9
    $region7: #{conv_autoencoder_forward.8} parent=1 // loop_footer_branch
      %8 = sbr.rel target = $region3
    $region8: #{conv_autoencoder_forward.8} parent=1 // loop_exit
      _

// kernel: conv_autoencoder_forward.9
$region0: #{conv_autoencoder_forward.9}
  #allocation0 [shape = 'u32[]', space=smem, size = 0x4, offset = 0x4, fixed_abs, tag = 'smem constant byte address 0x4 - core index']
  #allocation1 [shape = 'u32[72,128]{1,0:T(1,128)}', space=vmem, size = 0x9000, scoped, tag = 'internal scratch']
  %s0 = inlined_call_operand.vmem [shape: bf16[2,1024], index: 0, kind: input, shape index: {}]
  %s1 = inlined_call_operand.vmem [shape: bf16[1024,32], index: 1, kind: input, shape index: {}]
  %s2 = inlined_call_operand.vmem [shape: f32[1,32], index: 2, kind: input, shape index: {}]
  %s3 = inlined_call_operand.vmem [shape: bf16[32,1024], index: 3, kind: input, shape index: {}]
  %s4 = inlined_call_operand.vmem [shape: f32[1,1024], index: 4, kind: input, shape index: {}]
  %s5 = inlined_call_operand.hbm [shape: f32[2,32], index: 5, kind: output, shape index: {0}]
  %s6 = inlined_call_operand.vmem [shape: f32[2,1024], index: 6, kind: output, shape index: {1}]
  %7 = xla_tuple %s5, %s6
  %s8 = sld [smem:[#allocation0]]
  $region38: #{conv_autoencoder_forward.9} parent=0
    _
  %s10 = ssub.s32 1, %s8
  %s11 = scalar_select 0, %s10, %s8
  $region1: #{conv_autoencoder_forward.9} parent=0
    #allocation2 [shape = 'u8[1024]{0}', space=vmem, size = 0x400, scoped, tag = 'output window, operand 0, single buffered']
    #allocation3 [shape = 's32[1]{0}', space=sflag, size = 0x4, scoped, tag = 'scoped memory for conv_autoencoder_forward.9']
    %12 = vsyncpa [#allocation3], 0
    // Predicated region
    $region2: #{conv_autoencoder_forward.9} parent=1 // pred_check
      _
    $region3: #{conv_autoencoder_forward.9} parent=1 // pred_check_branch
      %14 = sbr.rel (0) target = $region5
    $region4: #{conv_autoencoder_forward.9} parent=1 // pred_region
      _
    $region5: #{conv_autoencoder_forward.9} parent=1 // pred_fallthru
      _
    // Predicated region
    $region6: #{conv_autoencoder_forward.9} parent=1 // pred_check
      _
    $region7: #{conv_autoencoder_forward.9} parent=1 // pred_check_branch
      %16 = sbr.rel (0) target = $region9
    $region8: #{conv_autoencoder_forward.9} parent=1 // pred_region
      _
    $region9: #{conv_autoencoder_forward.9} parent=1 // pred_fallthru
      _
    // Predicated region
    $region10: #{conv_autoencoder_forward.9} parent=1 // pred_check
      _
    $region11: #{conv_autoencoder_forward.9} parent=1 // pred_check_branch
      %18 = sbr.rel (0) target = $region13
    $region12: #{conv_autoencoder_forward.9} parent=1 // pred_region
      _
    $region13: #{conv_autoencoder_forward.9} parent=1 // pred_fallthru
      _
    // Predicated region
    $region14: #{conv_autoencoder_forward.9} parent=1 // pred_check
      _
    $region15: #{conv_autoencoder_forward.9} parent=1 // pred_check_branch
      %20 = sbr.rel (0) target = $region17
    $region16: #{conv_autoencoder_forward.9} parent=1 // pred_region
      _
    $region17: #{conv_autoencoder_forward.9} parent=1 // pred_fallthru
      _
    // Predicated region
    $region18: #{conv_autoencoder_forward.9} parent=1 // pred_check
      _
    $region19: #{conv_autoencoder_forward.9} parent=1 // pred_check_branch
      %22 = sbr.rel (0) target = $region21
    $region20: #{conv_autoencoder_forward.9} parent=1 // pred_region
      _
    $region21: #{conv_autoencoder_forward.9} parent=1 // pred_fallthru
      _
    %v24 = vld [vmem:[%s0] sm:$0xff]
    %v25 = vld [vmem:[%s1] sm:$0xf]
    %v26 = vld [vmem:[%s1 + $0x4] sm:$0xf]
    %v27 = vld [vmem:[%s1 + $0x8] sm:$0xf]
    %v28 = vld [vmem:[%s1 + $0xc] sm:$0xf]
    %v29 = vld [vmem:[%s1 + $0x10] sm:$0xf]
    %v30 = vld [vmem:[%s1 + $0x14] sm:$0xf]
    %v31 = vld [vmem:[%s1 + $0x18] sm:$0xf]
    %v32 = vld [vmem:[%s1 + $0x1c] sm:$0xf]
    %v33 = vld [vmem:[%s1 + $0x20] sm:$0xf]
    %v34 = vld [vmem:[%s1 + $0x24] sm:$0xf]
    %v35 = vld [vmem:[%s1 + $0x28] sm:$0xf]
    %v36 = vld [vmem:[%s1 + $0x2c] sm:$0xf]
    %v37 = vld [vmem:[%s1 + $0x30] sm:$0xf]
    %v38 = vld [vmem:[%s1 + $0x34] sm:$0xf]
    %v39 = vld [vmem:[%s1 + $0x38] sm:$0xf]
    %v40 = vld [vmem:[%s1 + $0x3c] sm:$0xf]
    %v41 = vld [vmem:[%s1 + $0x40] sm:$0xf]
    %v42 = vld [vmem:[%s1 + $0x44] sm:$0xf]
    %v43 = vld [vmem:[%s1 + $0x48] sm:$0xf]
    %v44 = vld [vmem:[%s1 + $0x4c] sm:$0xf]
    %v45 = vld [vmem:[%s1 + $0x50] sm:$0xf]
    %v46 = vld [vmem:[%s1 + $0x54] sm:$0xf]
    %v47 = vld [vmem:[%s1 + $0x58] sm:$0xf]
    %v48 = vld [vmem:[%s1 + $0x5c] sm:$0xf]
    %v49 = vld [vmem:[%s1 + $0x60] sm:$0xf]
    %v50 = vld [vmem:[%s1 + $0x64] sm:$0xf]
    %v51 = vld [vmem:[%s1 + $0x68] sm:$0xf]
    %v52 = vld [vmem:[%s1 + $0x6c] sm:$0xf]
    %v53 = vld [vmem:[%s1 + $0x70] sm:$0xf]
    %v54 = vld [vmem:[%s1 + $0x74] sm:$0xf]
    %v55 = vld [vmem:[%s1 + $0x78] sm:$0xf]
    %v56 = vld [vmem:[%s1 + $0x7c] sm:$0xf]
    %v57 = vld [vmem:[%s1 + $0x80] sm:$0xf]
    %v58 = vld [vmem:[%s1 + $0x84] sm:$0xf]
    %v59 = vld [vmem:[%s1 + $0x88] sm:$0xf]
    %v60 = vld [vmem:[%s1 + $0x8c] sm:$0xf]
    %v61 = vld [vmem:[%s1 + $0x90] sm:$0xf]
    %v62 = vld [vmem:[%s1 + $0x94] sm:$0xf]
    %v63 = vld [vmem:[%s1 + $0x98] sm:$0xf]
    %v64 = vld [vmem:[%s1 + $0x9c] sm:$0xf]
    %v65 = vld [vmem:[%s1 + $0xa0] sm:$0xf]
    %v66 = vld [vmem:[%s1 + $0xa4] sm:$0xf]
    %v67 = vld [vmem:[%s1 + $0xa8] sm:$0xf]
    %v68 = vld [vmem:[%s1 + $0xac] sm:$0xf]
    %v69 = vld [vmem:[%s1 + $0xb0] sm:$0xf]
    %v70 = vld [vmem:[%s1 + $0xb4] sm:$0xf]
    %v71 = vld [vmem:[%s1 + $0xb8] sm:$0xf]
    %v72 = vld [vmem:[%s1 + $0xbc] sm:$0xf]
    %v73 = vld [vmem:[%s1 + $0xc0] sm:$0xf]
    %v74 = vld [vmem:[%s1 + $0xc4] sm:$0xf]
    %v75 = vld [vmem:[%s1 + $0xc8] sm:$0xf]
    %v76 = vld [vmem:[%s1 + $0xcc] sm:$0xf]
    %v77 = vld [vmem:[%s1 + $0xd0] sm:$0xf]
    %v78 = vld [vmem:[%s1 + $0xd4] sm:$0xf]
    %v79 = vld [vmem:[%s1 + $0xd8] sm:$0xf]
    %v80 = vld [vmem:[%s1 + $0xdc] sm:$0xf]
    %v81 = vld [vmem:[%s1 + $0xe0] sm:$0xf]
    %v82 = vld [vmem:[%s1 + $0xe4] sm:$0xf]
    %v83 = vld [vmem:[%s1 + $0xe8] sm:$0xf]
    %v84 = vld [vmem:[%s1 + $0xec] sm:$0xf]
    %v85 = vld [vmem:[%s1 + $0xf0] sm:$0xf]
    %v86 = vld [vmem:[%s1 + $0xf4] sm:$0xf]
    %v87 = vld [vmem:[%s1 + $0xf8] sm:$0xf]
    %v88 = vld [vmem:[%s1 + $0xfc] sm:$0xf]
    %v89 = vld [vmem:[%s1 + $0x100] sm:$0xf]
    %v90 = vld [vmem:[%s1 + $0x104] sm:$0xf]
    %v91 = vld [vmem:[%s1 + $0x108] sm:$0xf]
    %v92 = vld [vmem:[%s1 + $0x10c] sm:$0xf]
    %v93 = vld [vmem:[%s1 + $0x110] sm:$0xf]
    %v94 = vld [vmem:[%s1 + $0x114] sm:$0xf]
    %v95 = vld [vmem:[%s1 + $0x118] sm:$0xf]
    %v96 = vld [vmem:[%s1 + $0x11c] sm:$0xf]
    %v97 = vld [vmem:[%s1 + $0x120] sm:$0xf]
    %v98 = vld [vmem:[%s1 + $0x124] sm:$0xf]
    %v99 = vld [vmem:[%s1 + $0x128] sm:$0xf]
    %v100 = vld [vmem:[%s1 + $0x12c] sm:$0xf]
    %v101 = vld [vmem:[%s1 + $0x130] sm:$0xf]
    %v102 = vld [vmem:[%s1 + $0x134] sm:$0xf]
    %v103 = vld [vmem:[%s1 + $0x138] sm:$0xf]
    %v104 = vld [vmem:[%s1 + $0x13c] sm:$0xf]
    %v105 = vld [vmem:[%s1 + $0x140] sm:$0xf]
    %v106 = vld [vmem:[%s1 + $0x144] sm:$0xf]
    %v107 = vld [vmem:[%s1 + $0x148] sm:$0xf]
    %v108 = vld [vmem:[%s1 + $0x14c] sm:$0xf]
    %v109 = vld [vmem:[%s1 + $0x150] sm:$0xf]
    %v110 = vld [vmem:[%s1 + $0x154] sm:$0xf]
    %v111 = vld [vmem:[%s1 + $0x158] sm:$0xf]
    %v112 = vld [vmem:[%s1 + $0x15c] sm:$0xf]
    %v113 = vld [vmem:[%s1 + $0x160] sm:$0xf]
    %v114 = vld [vmem:[%s1 + $0x164] sm:$0xf]
    %v115 = vld [vmem:[%s1 + $0x168] sm:$0xf]
    %v116 = vld [vmem:[%s1 + $0x16c] sm:$0xf]
    %v117 = vld [vmem:[%s1 + $0x170] sm:$0xf]
    %v118 = vld [vmem:[%s1 + $0x174] sm:$0xf]
    %v119 = vld [vmem:[%s1 + $0x178] sm:$0xf]
    %v120 = vld [vmem:[%s1 + $0x17c] sm:$0xf]
    %v121 = vld [vmem:[%s1 + $0x180] sm:$0xf]
    %v122 = vld [vmem:[%s1 + $0x184] sm:$0xf]
    %v123 = vld [vmem:[%s1 + $0x188] sm:$0xf]
    %v124 = vld [vmem:[%s1 + $0x18c] sm:$0xf]
    %v125 = vld [vmem:[%s1 + $0x190] sm:$0xf]
    %v126 = vld [vmem:[%s1 + $0x194] sm:$0xf]
    %v127 = vld [vmem:[%s1 + $0x198] sm:$0xf]
    %v128 = vld [vmem:[%s1 + $0x19c] sm:$0xf]
    %v129 = vld [vmem:[%s1 + $0x1a0] sm:$0xf]
    %v130 = vld [vmem:[%s1 + $0x1a4] sm:$0xf]
    %v131 = vld [vmem:[%s1 + $0x1a8] sm:$0xf]
    %v132 = vld [vmem:[%s1 + $0x1ac] sm:$0xf]
    %v133 = vld [vmem:[%s1 + $0x1b0] sm:$0xf]
    %v134 = vld [vmem:[%s1 + $0x1b4] sm:$0xf]
    %v135 = vld [vmem:[%s1 + $0x1b8] sm:$0xf]
    %v136 = vld [vmem:[%s1 + $0x1bc] sm:$0xf]
    %v137 = vld [vmem:[%s1 + $0x1c0] sm:$0xf]
    %v138 = vld [vmem:[%s1 + $0x1c4] sm:$0xf]
    %v139 = vld [vmem:[%s1 + $0x1c8] sm:$0xf]
    %v140 = vld [vmem:[%s1 + $0x1cc] sm:$0xf]
    %v141 = vld [vmem:[%s1 + $0x1d0] sm:$0xf]
    %v142 = vld [vmem:[%s1 + $0x1d4] sm:$0xf]
    %v143 = vld [vmem:[%s1 + $0x1d8] sm:$0xf]
    %v144 = vld [vmem:[%s1 + $0x1dc] sm:$0xf]
    %v145 = vld [vmem:[%s1 + $0x1e0] sm:$0xf]
    %v146 = vld [vmem:[%s1 + $0x1e4] sm:$0xf]
    %v147 = vld [vmem:[%s1 + $0x1e8] sm:$0xf]
    %v148 = vld [vmem:[%s1 + $0x1ec] sm:$0xf]
    %v149 = vld [vmem:[%s1 + $0x1f0] sm:$0xf]
    %v150 = vld [vmem:[%s1 + $0x1f4] sm:$0xf]
    %v151 = vld [vmem:[%s1 + $0x1f8] sm:$0xf]
    %v152 = vld [vmem:[%s1 + $0x1fc] sm:$0xf]
    %v153 = vld [vmem:[%s2] sm:$0x1]
    %v155 = vperm.slane %v153, 0
    %158 = vst [vmem:[#allocation1] ss:$9 sm:$0xff] %v24
    %v159 = vld [vmem:[#allocation1] sm:$0xff]
    %v160 = vld [vmem:[#allocation1 + $0x9] sm:$0xff]
    %v161 = vld [vmem:[#allocation1 + $0x12] sm:$0xff]
    %v162 = vld [vmem:[#allocation1 + $0x1b] sm:$0xff]
    %v163 = vld [vmem:[#allocation1 + $0x24] sm:$0xff]
    %v164 = vld [vmem:[#allocation1 + $0x2d] sm:$0xff]
    %v165 = vld [vmem:[#allocation1 + $0x36] sm:$0xff]
    %v166 = vld [vmem:[#allocation1 + $0x3f] sm:$0xff]
    %v303 = vunpack.c.l.b16 %v25
    %v304 = vunpack.c.l.b16 %v26
    %v305 = vunpack.c.l.b16 %v27
    %v306 = vunpack.c.l.b16 %v28
    %v307 = vunpack.c.l.b16 %v29
    %v308 = vunpack.c.l.b16 %v30
    %v309 = vunpack.c.l.b16 %v31
    %v310 = vunpack.c.l.b16 %v32
    %v311 = vunpack.c.l.b16 %v33
    %v312 = vunpack.c.l.b16 %v34
    %v313 = vunpack.c.l.b16 %v35
    %v314 = vunpack.c.l.b16 %v36
    %v315 = vunpack.c.l.b16 %v37
    %v316 = vunpack.c.l.b16 %v38
    %v317 = vunpack.c.l.b16 %v39
    %v318 = vunpack.c.l.b16 %v40
    %v319 = vunpack.c.l.b16 %v41
    %v320 = vunpack.c.l.b16 %v42
    %v321 = vunpack.c.l.b16 %v43
    %v322 = vunpack.c.l.b16 %v44
    %v323 = vunpack.c.l.b16 %v45
    %v324 = vunpack.c.l.b16 %v46
    %v325 = vunpack.c.l.b16 %v47
    %v326 = vunpack.c.l.b16 %v48
    %v327 = vunpack.c.l.b16 %v49
    %v328 = vunpack.c.l.b16 %v50
    %v329 = vunpack.c.l.b16 %v51
    %v330 = vunpack.c.l.b16 %v52
    %v331 = vunpack.c.l.b16 %v53
    %v332 = vunpack.c.l.b16 %v54
    %v333 = vunpack.c.l.b16 %v55
    %v334 = vunpack.c.l.b16 %v56
    %v335 = vunpack.c.l.b16 %v57
    %v336 = vunpack.c.l.b16 %v58
    %v337 = vunpack.c.l.b16 %v59
    %v338 = vunpack.c.l.b16 %v60
    %v339 = vunpack.c.l.b16 %v61
    %v340 = vunpack.c.l.b16 %v62
    %v341 = vunpack.c.l.b16 %v63
    %v342 = vunpack.c.l.b16 %v64
    %v343 = vunpack.c.l.b16 %v65
    %v344 = vunpack.c.l.b16 %v66
    %v345 = vunpack.c.l.b16 %v67
    %v346 = vunpack.c.l.b16 %v68
    %v347 = vunpack.c.l.b16 %v69
    %v348 = vunpack.c.l.b16 %v70
    %v349 = vunpack.c.l.b16 %v71
    %v350 = vunpack.c.l.b16 %v72
    %v351 = vunpack.c.l.b16 %v73
    %v352 = vunpack.c.l.b16 %v74
    %v353 = vunpack.c.l.b16 %v75
    %v354 = vunpack.c.l.b16 %v76
    %v355 = vunpack.c.l.b16 %v77
    %v356 = vunpack.c.l.b16 %v78
    %v357 = vunpack.c.l.b16 %v79
    %v358 = vunpack.c.l.b16 %v80
    %v359 = vunpack.c.l.b16 %v81
    %v360 = vunpack.c.l.b16 %v82
    %v361 = vunpack.c.l.b16 %v83
    %v362 = vunpack.c.l.b16 %v84
    %v363 = vunpack.c.l.b16 %v85
    %v364 = vunpack.c.l.b16 %v86
    %v365 = vunpack.c.l.b16 %v87
    %v366 = vunpack.c.l.b16 %v88
    %v367 = vunpack.c.l.b16 %v89
    %v368 = vunpack.c.l.b16 %v90
    %v369 = vunpack.c.l.b16 %v91
    %v370 = vunpack.c.l.b16 %v92
    %v371 = vunpack.c.l.b16 %v93
    %v372 = vunpack.c.l.b16 %v94
    %v373 = vunpack.c.l.b16 %v95
    %v374 = vunpack.c.l.b16 %v96
    %v375 = vunpack.c.l.b16 %v97
    %v376 = vunpack.c.l.b16 %v98
    %v377 = vunpack.c.l.b16 %v99
    %v378 = vunpack.c.l.b16 %v100
    %v379 = vunpack.c.l.b16 %v101
    %v380 = vunpack.c.l.b16 %v102
    %v381 = vunpack.c.l.b16 %v103
    %v382 = vunpack.c.l.b16 %v104
    %v383 = vunpack.c.l.b16 %v105
    %v384 = vunpack.c.l.b16 %v106
    %v385 = vunpack.c.l.b16 %v107
    %v386 = vunpack.c.l.b16 %v108
    %v387 = vunpack.c.l.b16 %v109
    %v388 = vunpack.c.l.b16 %v110
    %v389 = vunpack.c.l.b16 %v111
    %v390 = vunpack.c.l.b16 %v112
    %v391 = vunpack.c.l.b16 %v113
    %v392 = vunpack.c.l.b16 %v114
    %v393 = vunpack.c.l.b16 %v115
    %v394 = vunpack.c.l.b16 %v116
    %v395 = vunpack.c.l.b16 %v117
    %v396 = vunpack.c.l.b16 %v118
    %v397 = vunpack.c.l.b16 %v119
    %v398 = vunpack.c.l.b16 %v120
    %v399 = vunpack.c.l.b16 %v121
    %v400 = vunpack.c.l.b16 %v122
    %v401 = vunpack.c.l.b16 %v123
    %v402 = vunpack.c.l.b16 %v124
    %v403 = vunpack.c.l.b16 %v125
    %v404 = vunpack.c.l.b16 %v126
    %v405 = vunpack.c.l.b16 %v127
    %v406 = vunpack.c.l.b16 %v128
    %v407 = vunpack.c.l.b16 %v129
    %v408 = vunpack.c.l.b16 %v130
    %v409 = vunpack.c.l.b16 %v131
    %v410 = vunpack.c.l.b16 %v132
    %v411 = vunpack.c.l.b16 %v133
    %v412 = vunpack.c.l.b16 %v134
    %v413 = vunpack.c.l.b16 %v135
    %v414 = vunpack.c.l.b16 %v136
    %v415 = vunpack.c.l.b16 %v137
    %v416 = vunpack.c.l.b16 %v138
    %v417 = vunpack.c.l.b16 %v139
    %v418 = vunpack.c.l.b16 %v140
    %v419 = vunpack.c.l.b16 %v141
    %v420 = vunpack.c.l.b16 %v142
    %v421 = vunpack.c.l.b16 %v143
    %v422 = vunpack.c.l.b16 %v144
    %v423 = vunpack.c.l.b16 %v145
    %v424 = vunpack.c.l.b16 %v146
    %v425 = vunpack.c.l.b16 %v147
    %v426 = vunpack.c.l.b16 %v148
    %v427 = vunpack.c.l.b16 %v149
    %v428 = vunpack.c.l.b16 %v150
    %v429 = vunpack.c.l.b16 %v151
    %v430 = vunpack.c.l.b16 %v152
    %v431 = vpack.c.b16 %v304, %v303
    %v432 = vpack.c.b16 %v306, %v305
    %v433 = vpack.c.b16 %v308, %v307
    %v434 = vpack.c.b16 %v310, %v309
    %v435 = vpack.c.b16 %v312, %v311
    %v436 = vpack.c.b16 %v314, %v313
    %v437 = vpack.c.b16 %v316, %v315
    %v438 = vpack.c.b16 %v318, %v317
    %v439 = vpack.c.b16 %v320, %v319
    %v440 = vpack.c.b16 %v322, %v321
    %v441 = vpack.c.b16 %v324, %v323
    %v442 = vpack.c.b16 %v326, %v325
    %v443 = vpack.c.b16 %v328, %v327
    %v444 = vpack.c.b16 %v330, %v329
    %v445 = vpack.c.b16 %v332, %v331
    %v446 = vpack.c.b16 %v334, %v333
    %v447 = vpack.c.b16 %v336, %v335
    %v448 = vpack.c.b16 %v338, %v337
    %v449 = vpack.c.b16 %v340, %v339
    %v450 = vpack.c.b16 %v342, %v341
    %v451 = vpack.c.b16 %v344, %v343
    %v452 = vpack.c.b16 %v346, %v345
    %v453 = vpack.c.b16 %v348, %v347
    %v454 = vpack.c.b16 %v350, %v349
    %v455 = vpack.c.b16 %v352, %v351
    %v456 = vpack.c.b16 %v354, %v353
    %v457 = vpack.c.b16 %v356, %v355
    %v458 = vpack.c.b16 %v358, %v357
    %v459 = vpack.c.b16 %v360, %v359
    %v460 = vpack.c.b16 %v362, %v361
    %v461 = vpack.c.b16 %v364, %v363
    %v462 = vpack.c.b16 %v366, %v365
    %v463 = vpack.c.b16 %v368, %v367
    %v464 = vpack.c.b16 %v370, %v369
    %v465 = vpack.c.b16 %v372, %v371
    %v466 = vpack.c.b16 %v374, %v373
    %v467 = vpack.c.b16 %v376, %v375
    %v468 = vpack.c.b16 %v378, %v377
    %v469 = vpack.c.b16 %v380, %v379
    %v470 = vpack.c.b16 %v382, %v381
    %v471 = vpack.c.b16 %v384, %v383
    %v472 = vpack.c.b16 %v386, %v385
    %v473 = vpack.c.b16 %v388, %v387
    %v474 = vpack.c.b16 %v390, %v389
    %v475 = vpack.c.b16 %v392, %v391
    %v476 = vpack.c.b16 %v394, %v393
    %v477 = vpack.c.b16 %v396, %v395
    %v478 = vpack.c.b16 %v398, %v397
    %v479 = vpack.c.b16 %v400, %v399
    %v480 = vpack.c.b16 %v402, %v401
    %v481 = vpack.c.b16 %v404, %v403
    %v482 = vpack.c.b16 %v406, %v405
    %v483 = vpack.c.b16 %v408, %v407
    %v484 = vpack.c.b16 %v410, %v409
    %v485 = vpack.c.b16 %v412, %v411
    %v486 = vpack.c.b16 %v414, %v413
    %v487 = vpack.c.b16 %v416, %v415
    %v488 = vpack.c.b16 %v418, %v417
    %v489 = vpack.c.b16 %v420, %v419
    %v490 = vpack.c.b16 %v422, %v421
    %v491 = vpack.c.b16 %v424, %v423
    %v492 = vpack.c.b16 %v426, %v425
    %v493 = vpack.c.b16 %v428, %v427
    %v494 = vpack.c.b16 %v430, %v429
    %559 = vmatpush.bf16.msra.mxu0 %v438
    %560 = vmatpush.bf16.msra.mxu0 %v437
    %561 = vmatpush.bf16.msra.mxu0 %v436
    %562 = vmatpush.bf16.msra.mxu0 %v435
    %563 = vmatpush.bf16.msra.mxu0 %v434
    %564 = vmatpush.bf16.msra.mxu0 %v433
    %565 = vmatpush.bf16.msra.mxu0 %v432
    %566 = vmatpush.bf16.msra.mxu0 %v431
    %567 = vmatmul.bf16.gmra.mxu0 %v159
    %v568 = vpop.f32.mrf.mxu0
    %v569 = vadd.f32 %v155, %v568
    %v570 = vpop.f32.mrf.mxu0
    %571 = vdwg.mxu0
    %572 = vmatpush.bf16.msra.mxu0 %v446
    %573 = vmatpush.bf16.msra.mxu0 %v445
    %574 = vmatpush.bf16.msra.mxu0 %v444
    %575 = vmatpush.bf16.msra.mxu0 %v443
    %576 = vmatpush.bf16.msra.mxu0 %v442
    %577 = vmatpush.bf16.msra.mxu0 %v441
    %578 = vmatpush.bf16.msra.mxu0 %v440
    %579 = vmatpush.bf16.msra.mxu0 %v439
    %580 = vmatmul.bf16.gmra.mxu0 %v160
    %v581 = vpop.f32.mrf.mxu0
    %v582 = vadd.f32 %v569, %v581
    %v583 = vpop.f32.mrf.mxu0
    %584 = vdwg.mxu0
    %585 = vmatpush.bf16.msra.mxu0 %v454
    %586 = vmatpush.bf16.msra.mxu0 %v453
    %587 = vmatpush.bf16.msra.mxu0 %v452
    %588 = vmatpush.bf16.msra.mxu0 %v451
    %589 = vmatpush.bf16.msra.mxu0 %v450
    %590 = vmatpush.bf16.msra.mxu0 %v449
    %591 = vmatpush.bf16.msra.mxu0 %v448
    %592 = vmatpush.bf16.msra.mxu0 %v447
    %593 = vmatmul.bf16.gmra.mxu0 %v161
    %v594 = vpop.f32.mrf.mxu0
    %v595 = vadd.f32 %v582, %v594
    %v596 = vpop.f32.mrf.mxu0
    %597 = vdwg.mxu0
    %598 = vmatpush.bf16.msra.mxu0 %v462
    %599 = vmatpush.bf16.msra.mxu0 %v461
    %600 = vmatpush.bf16.msra.mxu0 %v460
    %601 = vmatpush.bf16.msra.mxu0 %v459
    %602 = vmatpush.bf16.msra.mxu0 %v458
    %603 = vmatpush.bf16.msra.mxu0 %v457
    %604 = vmatpush.bf16.msra.mxu0 %v456
    %605 = vmatpush.bf16.msra.mxu0 %v455
    %606 = vmatmul.bf16.gmra.mxu0 %v162
    %v607 = vpop.f32.mrf.mxu0
    %v608 = vadd.f32 %v595, %v607
    %v609 = vpop.f32.mrf.mxu0
    %610 = vdwg.mxu0
    %611 = vmatpush.bf16.msra.mxu0 %v470
    %612 = vmatpush.bf16.msra.mxu0 %v469
    %613 = vmatpush.bf16.msra.mxu0 %v468
    %614 = vmatpush.bf16.msra.mxu0 %v467
    %615 = vmatpush.bf16.msra.mxu0 %v466
    %616 = vmatpush.bf16.msra.mxu0 %v465
    %617 = vmatpush.bf16.msra.mxu0 %v464
    %618 = vmatpush.bf16.msra.mxu0 %v463
    %619 = vmatmul.bf16.gmra.mxu0 %v163
    %v620 = vpop.f32.mrf.mxu0
    %v621 = vadd.f32 %v608, %v620
    %v622 = vpop.f32.mrf.mxu0
    %623 = vdwg.mxu0
    %624 = vmatpush.bf16.msra.mxu0 %v478
    %625 = vmatpush.bf16.msra.mxu0 %v477
    %626 = vmatpush.bf16.msra.mxu0 %v476
    %627 = vmatpush.bf16.msra.mxu0 %v475
    %628 = vmatpush.bf16.msra.mxu0 %v474
    %629 = vmatpush.bf16.msra.mxu0 %v473
    %630 = vmatpush.bf16.msra.mxu0 %v472
    %631 = vmatpush.bf16.msra.mxu0 %v471
    %632 = vmatmul.bf16.gmra.mxu0 %v164
    %v633 = vpop.f32.mrf.mxu0
    %v634 = vadd.f32 %v621, %v633
    %v635 = vpop.f32.mrf.mxu0
    %636 = vdwg.mxu0
    %637 = vmatpush.bf16.msra.mxu0 %v486
    %638 = vmatpush.bf16.msra.mxu0 %v485
    %639 = vmatpush.bf16.msra.mxu0 %v484
    %640 = vmatpush.bf16.msra.mxu0 %v483
    %641 = vmatpush.bf16.msra.mxu0 %v482
    %642 = vmatpush.bf16.msra.mxu0 %v481
    %643 = vmatpush.bf16.msra.mxu0 %v480
    %644 = vmatpush.bf16.msra.mxu0 %v479
    %645 = vmatmul.bf16.gmra.mxu0 %v165
    %v646 = vpop.f32.mrf.mxu0
    %v647 = vadd.f32 %v634, %v646
    %v648 = vpop.f32.mrf.mxu0
    %649 = vdwg.mxu0
    %650 = vmatpush.bf16.msra.mxu0 %v494
    %651 = vmatpush.bf16.msra.mxu0 %v493
    %652 = vmatpush.bf16.msra.mxu0 %v492
    %653 = vmatpush.bf16.msra.mxu0 %v491
    %654 = vmatpush.bf16.msra.mxu0 %v490
    %655 = vmatpush.bf16.msra.mxu0 %v489
    %656 = vmatpush.bf16.msra.mxu0 %v488
    %657 = vmatpush.bf16.msra.mxu0 %v487
    %658 = vmatmul.bf16.gmra.mxu0 %v166
    %v659 = vpop.f32.mrf.mxu0
    %v660 = vadd.f32 %v647, %v659
    %v661 = vpop.f32.mrf.mxu0
    %662 = vdwg.mxu0
    %v663 = vmax.f32 %v660, 0.0
    %vm664 = vcmask 254976
    %665 = vst.msk [vmem:[#allocation2] sm:$0x3] %vm664, %v663
    %v666 = vpack.c.bf16 %v663, %v663
    %v667 = vld [vmem:[%s3] sm:$0xff]
    %v668 = vld [vmem:[%s3 + $0x8] sm:$0xff]
    %v669 = vld [vmem:[%s3 + $0x10] sm:$0xff]
    %v670 = vld [vmem:[%s3 + $0x18] sm:$0xff]
    %v671 = vld [vmem:[%s3 + $0x20] sm:$0xff]
    %v672 = vld [vmem:[%s3 + $0x28] sm:$0xff]
    %v673 = vld [vmem:[%s3 + $0x30] sm:$0xff]
    %v674 = vld [vmem:[%s3 + $0x38] sm:$0xff]
    %v675 = vld [vmem:[%s3 + $0x40] sm:$0xff]
    %v676 = vld [vmem:[%s3 + $0x48] sm:$0xff]
    %v677 = vld [vmem:[%s3 + $0x50] sm:$0xff]
    %v678 = vld [vmem:[%s3 + $0x58] sm:$0xff]
    %v679 = vld [vmem:[%s3 + $0x60] sm:$0xff]
    %v680 = vld [vmem:[%s3 + $0x68] sm:$0xff]
    %v681 = vld [vmem:[%s3 + $0x70] sm:$0xff]
    %v682 = vld [vmem:[%s3 + $0x78] sm:$0xff]
    %v683 = vld [vmem:[%s4] sm:$0xff]
    %v685 = vperm.slane %v683, 0
    %v686 = vperm.slane %v683, 1
    %v687 = vperm.slane %v683, 2
    %v688 = vperm.slane %v683, 3
    %v689 = vperm.slane %v683, 4
    %v690 = vperm.slane %v683, 5
    %v691 = vperm.slane %v683, 6
    %v692 = vperm.slane %v683, 7
    %v717 = vunpack.c.l.b16 %v667
    %v718 = vunpack.c.h.b16 %v667
    %v719 = vunpack.c.l.b16 %v668
    %v720 = vunpack.c.h.b16 %v668
    %v721 = vunpack.c.l.b16 %v669
    %v722 = vunpack.c.h.b16 %v669
    %v723 = vunpack.c.l.b16 %v670
    %v724 = vunpack.c.h.b16 %v670
    %v725 = vunpack.c.l.b16 %v671
    %v726 = vunpack.c.h.b16 %v671
    %v727 = vunpack.c.l.b16 %v672
    %v728 = vunpack.c.h.b16 %v672
    %v729 = vunpack.c.l.b16 %v673
    %v730 = vunpack.c.h.b16 %v673
    %v731 = vunpack.c.l.b16 %v674
    %v732 = vunpack.c.h.b16 %v674
    %v733 = vunpack.c.l.b16 %v675
    %v734 = vunpack.c.h.b16 %v675
    %v735 = vunpack.c.l.b16 %v676
    %v736 = vunpack.c.h.b16 %v676
    %v737 = vunpack.c.l.b16 %v677
    %v738 = vunpack.c.h.b16 %v677
    %v739 = vunpack.c.l.b16 %v678
    %v740 = vunpack.c.h.b16 %v678
    %v741 = vunpack.c.l.b16 %v679
    %v742 = vunpack.c.h.b16 %v679
    %v743 = vunpack.c.l.b16 %v680
    %v744 = vunpack.c.h.b16 %v680
    %v745 = vunpack.c.l.b16 %v681
    %v746 = vunpack.c.h.b16 %v681
    %v747 = vunpack.c.l.b16 %v682
    %v748 = vunpack.c.h.b16 %v682
    %v749 = vpack.c.b16 %v725, %v717
    %v750 = vpack.c.b16 %v726, %v718
    %v751 = vpack.c.b16 %v727, %v719
    %v752 = vpack.c.b16 %v728, %v720
    %v753 = vpack.c.b16 %v729, %v721
    %v754 = vpack.c.b16 %v730, %v722
    %v755 = vpack.c.b16 %v731, %v723
    %v756 = vpack.c.b16 %v732, %v724
    %v757 = vpack.c.b16 %v741, %v733
    %v758 = vpack.c.b16 %v742, %v734
    %v759 = vpack.c.b16 %v743, %v735
    %v760 = vpack.c.b16 %v744, %v736
    %v761 = vpack.c.b16 %v745, %v737
    %v762 = vpack.c.b16 %v746, %v738
    %v763 = vpack.c.b16 %v747, %v739
    %v764 = vpack.c.b16 %v748, %v740
    %vm781 = vcmask 261120
    %v783 = vsel %vm781, %v666, 0
    %785 = vmatpush.bf16.msra.mxu0 0
    %786 = vmatpush.bf16.msra.mxu0 0
    %787 = vmatpush.bf16.msra.mxu0 0
    %788 = vmatpush.bf16.msra.mxu0 0
    %789 = vmatpush.bf16.msra.mxu0 0
    %790 = vmatpush.bf16.msra.mxu0 0
    %791 = vmatpush.bf16.msra.mxu0 %v757
    %792 = vmatpush.bf16.msra.mxu0 %v749
    %793 = vmatmul.bf16.gmra.mxu0 %v783
    %v794 = vpop.f32.mrf.mxu0
    %v795 = vadd.f32 %v685, %v794
    %v796 = vpop.f32.mrf.mxu0
    %797 = vdwg.mxu0
    %798 = vmatpush.bf16.msra.mxu0 0
    %799 = vmatpush.bf16.msra.mxu0 0
    %800 = vmatpush.bf16.msra.mxu0 0
    %801 = vmatpush.bf16.msra.mxu0 0
    %802 = vmatpush.bf16.msra.mxu0 0
    %803 = vmatpush.bf16.msra.mxu0 0
    %804 = vmatpush.bf16.msra.mxu0 %v758
    %805 = vmatpush.bf16.msra.mxu0 %v750
    %806 = vmatmul.bf16.gmra.mxu0 %v783
    %v807 = vpop.f32.mrf.mxu0
    %v808 = vadd.f32 %v686, %v807
    %v809 = vpop.f32.mrf.mxu0
    %810 = vdwg.mxu0
    %811 = vmatpush.bf16.msra.mxu0 0
    %812 = vmatpush.bf16.msra.mxu0 0
    %813 = vmatpush.bf16.msra.mxu0 0
    %814 = vmatpush.bf16.msra.mxu0 0
    %815 = vmatpush.bf16.msra.mxu0 0
    %816 = vmatpush.bf16.msra.mxu0 0
    %817 = vmatpush.bf16.msra.mxu0 %v759
    %818 = vmatpush.bf16.msra.mxu0 %v751
    %819 = vmatmul.bf16.gmra.mxu0 %v783
    %v820 = vpop.f32.mrf.mxu0
    %v821 = vadd.f32 %v687, %v820
    %v822 = vpop.f32.mrf.mxu0
    %823 = vdwg.mxu0
    %824 = vmatpush.bf16.msra.mxu0 0
    %825 = vmatpush.bf16.msra.mxu0 0
    %826 = vmatpush.bf16.msra.mxu0 0
    %827 = vmatpush.bf16.msra.mxu0 0
    %828 = vmatpush.bf16.msra.mxu0 0
    %829 = vmatpush.bf16.msra.mxu0 0
    %830 = vmatpush.bf16.msra.mxu0 %v760
    %831 = vmatpush.bf16.msra.mxu0 %v752
    %832 = vmatmul.bf16.gmra.mxu0 %v783
    %v833 = vpop.f32.mrf.mxu0
    %v834 = vadd.f32 %v688, %v833
    %v835 = vpop.f32.mrf.mxu0
    %836 = vdwg.mxu0
    %837 = vmatpush.bf16.msra.mxu0 0
    %838 = vmatpush.bf16.msra.mxu0 0
    %839 = vmatpush.bf16.msra.mxu0 0
    %840 = vmatpush.bf16.msra.mxu0 0
    %841 = vmatpush.bf16.msra.mxu0 0
    %842 = vmatpush.bf16.msra.mxu0 0
    %843 = vmatpush.bf16.msra.mxu0 %v761
    %844 = vmatpush.bf16.msra.mxu0 %v753
    %845 = vmatmul.bf16.gmra.mxu0 %v783
    %v846 = vpop.f32.mrf.mxu0
    %v847 = vadd.f32 %v689, %v846
    %v848 = vpop.f32.mrf.mxu0
    %849 = vdwg.mxu0
    %850 = vmatpush.bf16.msra.mxu0 0
    %851 = vmatpush.bf16.msra.mxu0 0
    %852 = vmatpush.bf16.msra.mxu0 0
    %853 = vmatpush.bf16.msra.mxu0 0
    %854 = vmatpush.bf16.msra.mxu0 0
    %855 = vmatpush.bf16.msra.mxu0 0
    %856 = vmatpush.bf16.msra.mxu0 %v762
    %857 = vmatpush.bf16.msra.mxu0 %v754
    %858 = vmatmul.bf16.gmra.mxu0 %v783
    %v859 = vpop.f32.mrf.mxu0
    %v860 = vadd.f32 %v690, %v859
    %v861 = vpop.f32.mrf.mxu0
    %862 = vdwg.mxu0
    %863 = vmatpush.bf16.msra.mxu0 0
    %864 = vmatpush.bf16.msra.mxu0 0
    %865 = vmatpush.bf16.msra.mxu0 0
    %866 = vmatpush.bf16.msra.mxu0 0
    %867 = vmatpush.bf16.msra.mxu0 0
    %868 = vmatpush.bf16.msra.mxu0 0
    %869 = vmatpush.bf16.msra.mxu0 %v763
    %870 = vmatpush.bf16.msra.mxu0 %v755
    %871 = vmatmul.bf16.gmra.mxu0 %v783
    %v872 = vpop.f32.mrf.mxu0
    %v873 = vadd.f32 %v691, %v872
    %v874 = vpop.f32.mrf.mxu0
    %875 = vdwg.mxu0
    %876 = vmatpush.bf16.msra.mxu0 0
    %877 = vmatpush.bf16.msra.mxu0 0
    %878 = vmatpush.bf16.msra.mxu0 0
    %879 = vmatpush.bf16.msra.mxu0 0
    %880 = vmatpush.bf16.msra.mxu0 0
    %881 = vmatpush.bf16.msra.mxu0 0
    %882 = vmatpush.bf16.msra.mxu0 %v764
    %883 = vmatpush.bf16.msra.mxu0 %v756
    %884 = vmatmul.bf16.gmra.mxu0 %v783
    %v885 = vpop.f32.mrf.mxu0
    %v886 = vadd.f32 %v692, %v885
    %v887 = vpop.f32.mrf.mxu0
    %888 = vdwg.mxu0
    %v897 = vrot.slane %v808, 6
    %v898 = vrot.slane %v821, 4
    %v899 = vrot.slane %v834, 2
    %v900 = vrot.slane %v860, 6
    %v901 = vrot.slane %v873, 4
    %v902 = vrot.slane %v886, 2
    %vm903 = vcmask 1041408
    %v904 = vsel %vm903, %v795, %v897
    %vm905 = vcmask 1045508
    %v906 = vsel %vm905, %v898, %v899
    %vm907 = vcmask 1043456
    %v908 = vsel %vm907, %v904, %v906
    %v909 = vsel %vm903, %v847, %v900
    %v910 = vsel %vm905, %v901, %v902
    %v911 = vsel %vm907, %v909, %v910
    %914 = vst [vmem:[%s6] sm:$0xff] %v908
    %915 = vst [vmem:[%s6 + $0x8] sm:$0xff] %v911
    // Predicated region
    $region22: #{conv_autoencoder_forward.9} parent=1 // pred_check
      _
    $region23: #{conv_autoencoder_forward.9} parent=1 // pred_check_branch
      %917 = sbr.rel (0) target = $region25
    $region24: #{conv_autoencoder_forward.9} parent=1 // pred_region
      %919 = vsyncadd [#allocation3], 0
      %s921 = sshll.u32 [#allocation2], 4
      %s922 = int_to_ptr.vmem [resolvable:$true] %s921
      %s923 = sshll.u32 %s5, 4
      %s924 = int_to_ptr.hbm [resolvable:$true] %s923
      %926 = dma.vmem_to_hbm [thread:$0]  %s922, 32, %s924, [#allocation3]
    $region25: #{conv_autoencoder_forward.9} parent=1 // pred_fallthru
      _
    // Predicated region
    $region26: #{conv_autoencoder_forward.9} parent=1 // pred_check
      _
    $region27: #{conv_autoencoder_forward.9} parent=1 // pred_check_branch
      %928 = sbr.rel (0) target = $region29
    $region28: #{conv_autoencoder_forward.9} parent=1 // pred_region
      _
    $region29: #{conv_autoencoder_forward.9} parent=1 // pred_fallthru
      _
    // Predicated region
    $region30: #{conv_autoencoder_forward.9} parent=1 // pred_check
      _
    $region31: #{conv_autoencoder_forward.9} parent=1 // pred_check_branch
      %930 = sbr.rel (0) target = $region33
    $region32: #{conv_autoencoder_forward.9} parent=1 // pred_region
      %932 = dma.done [#allocation3], 32
    $region33: #{conv_autoencoder_forward.9} parent=1 // pred_fallthru
      _
    // Predicated region
    $region34: #{conv_autoencoder_forward.9} parent=1 // pred_check
      _
    $region35: #{conv_autoencoder_forward.9} parent=1 // pred_check_branch
      %934 = sbr.rel (0) target = $region37
    $region36: #{conv_autoencoder_forward.9} parent=1 // pred_region
      _
    $region37: #{conv_autoencoder_forward.9} parent=1 // pred_fallthru
      _
    %935 = vsyncpa [#allocation3], 1

// kernel: conv_autoencoder_forward.10
$region0: #{conv_autoencoder_forward.10}
  #allocation0 [shape = 'u32[]', space=smem, size = 0x4, offset = 0x4, fixed_abs, tag = 'smem constant byte address 0x4 - core index']
  #allocation1 [shape = 'u32[72,128]{1,0:T(1,128)}', space=vmem, size = 0x9000, scoped, tag = 'internal scratch']
  %s0 = inlined_call_operand.vmem [shape: bf16[32,64], index: 0, kind: input, shape index: {}]
  %s1 = inlined_call_operand.vmem [shape: bf16[64,256], index: 1, kind: input, shape index: {}]
  %s2 = inlined_call_operand.vmem [shape: f32[32,256], index: 2, kind: output, shape index: {}]
  %s3 = sld [smem:[#allocation0]]
  $region41: #{conv_autoencoder_forward.10} parent=0
    _
  %s5 = ssub.s32 1, %s3
  %s6 = scalar_select 0, %s5, %s3
  loop: start=0, step=1, limit=4
  $region2: #{conv_autoencoder_forward.10} parent=0 // loop_pre_header
    _
  $region3: #{conv_autoencoder_forward.10} parent=0 // loop_header
    %s8 = sphi 0, %s12
    %p9 = scmp.ge.s32.totalorder %s8, 4
    %s18 = sphi 0, %s20
    %s21 = sphi 0, %s18
    %s22 = sphi 0, %s21
    %s38 = sphi 0, %s22
    %s42 = sphi 0, %s42
    %s44 = sphi 0, %s42
    %s45 = sphi 0, %s44
    %s59 = sphi 0, %s45
    %s65 = sphi 0, %s67
    %s68 = sphi 0, %s65
    %s69 = sphi 0, %s68
    %s85 = sphi 0, %s69
  $region4: #{conv_autoencoder_forward.10} parent=0 // loop_header_branch
    %11 = sbr.rel (%p9) target = $region8
  $region5: #{conv_autoencoder_forward.10} parent=0 // loop_body
    %s13 = ssub.s32 %s8, 1
    %s14 = ssub.s32 %s8, 2
    %s15 = sadd.s32 %s8, 1
    %s16 = ssub.s32 %s8, %s15
    %p17 = scmp.eq.s32.totalorder %s16, 0
    %s19 = sadd.s32 %s18, 1
    %s20 = scalar_select %p17, %s18, %s19
    %p23 = pneg %p17
    %p24 = scmp.eq.s32.totalorder %s8, 1
    %p25 = por %p23, %p24
    %p26 = scmp.ne.s32.totalorder %s18, %s21
    %p27 = scmp.eq.s32.totalorder %s8, 0
    %p28 = por %p26, %p27
    %p29 = scmp.ne.s32.totalorder %s18, %s21
    %p30 = scmp.eq.s32.totalorder %s13, 1
    %p31 = por %p29, %p30
    %p32 = scmp.ne.s32.totalorder %s21, %s22
    %p33 = scmp.eq.s32.totalorder %s13, 0
    %p34 = por %p32, %p33
    %p35 = scmp.ne.s32.totalorder %s21, %s22
    %p36 = scmp.eq.s32.totalorder %s14, 1
    %p37 = por %p35, %p36
    %p39 = scmp.ne.s32.totalorder %s22, %s38
    %p40 = scmp.eq.s32.totalorder %s14, 0
    %p41 = por %p39, %p40
    %s43 = sadd.s32 %s42, 1
    %p46 = scmp.eq.s32.totalorder %s8, 1
    %p47 = scmp.ne.s32.totalorder %s42, %s44
    %p48 = scmp.eq.s32.totalorder %s8, 0
    %p49 = por %p47, %p48
    %p50 = scmp.ne.s32.totalorder %s42, %s44
    %p51 = scmp.eq.s32.totalorder %s13, 1
    %p52 = por %p50, %p51
    %p53 = scmp.ne.s32.totalorder %s44, %s45
    %p54 = scmp.eq.s32.totalorder %s13, 0
    %p55 = por %p53, %p54
    %p56 = scmp.ne.s32.totalorder %s44, %s45
    %p57 = scmp.eq.s32.totalorder %s14, 1
    %p58 = por %p56, %p57
    %p60 = scmp.ne.s32.totalorder %s45, %s59
    %p61 = scmp.eq.s32.totalorder %s14, 0
    %p62 = por %p60, %p61
    %s63 = ssub.s32 %s8, %s15
    %p64 = scmp.eq.s32.totalorder %s63, 0
    %s66 = sadd.s32 %s65, 1
    %s67 = scalar_select %p64, %s65, %s66
    %p70 = pneg %p64
    %p71 = scmp.eq.s32.totalorder %s8, 1
    %p72 = por %p70, %p71
    %p73 = scmp.ne.s32.totalorder %s65, %s68
    %p74 = scmp.eq.s32.totalorder %s8, 0
    %p75 = por %p73, %p74
    %p76 = scmp.ne.s32.totalorder %s65, %s68
    %p77 = scmp.eq.s32.totalorder %s13, 1
    %p78 = por %p76, %p77
    %p79 = scmp.ne.s32.totalorder %s68, %s69
    %p80 = scmp.eq.s32.totalorder %s13, 0
    %p81 = por %p79, %p80
    %p82 = scmp.ne.s32.totalorder %s68, %s69
    %p83 = scmp.eq.s32.totalorder %s14, 1
    %p84 = por %p82, %p83
    %p86 = scmp.ne.s32.totalorder %s69, %s85
    %p87 = scmp.eq.s32.totalorder %s14, 0
    %p88 = por %p86, %p87
    %p89 = scmp.le.s32.totalorder 1, %s8
    %p90 = scmp.lt.s32.totalorder %s8, 3
    %p91 = pnand %p89, %p90
    %p92 = pneg %p91
    // Predicated region
    $region9: #{conv_autoencoder_forward.10} parent=5 // pred_check
      _
    $region10: #{conv_autoencoder_forward.10} parent=5 // pred_check_branch
      %94 = sbr.rel (%p91) target = $region12
    $region11: #{conv_autoencoder_forward.10} parent=5 // pred_region
      %s95 = ssub.s32 %s8, 1
      // Predicated region
      $region13: #{conv_autoencoder_forward.10} parent=11 // pred_check
        %p96 = pneg %p55
      $region14: #{conv_autoencoder_forward.10} parent=11 // pred_check_branch
        %98 = sbr.rel (%p96) target = $region16
      $region15: #{conv_autoencoder_forward.10} parent=11 // pred_region
        _
      $region16: #{conv_autoencoder_forward.10} parent=11 // pred_fallthru
        _
    $region12: #{conv_autoencoder_forward.10} parent=5 // pred_fallthru
      _
    %p99 = scmp.lt.s32.totalorder %s8, 2
    // Predicated region
    $region17: #{conv_autoencoder_forward.10} parent=5 // pred_check
      %p100 = pneg %p99
    $region18: #{conv_autoencoder_forward.10} parent=5 // pred_check_branch
      %102 = sbr.rel (%p100) target = $region20
    $region19: #{conv_autoencoder_forward.10} parent=5 // pred_region
      // Predicated region
      $region21: #{conv_autoencoder_forward.10} parent=19 // pred_check
        %p103 = pneg %p28
      $region22: #{conv_autoencoder_forward.10} parent=19 // pred_check_branch
        %105 = sbr.rel (%p103) target = $region24
      $region23: #{conv_autoencoder_forward.10} parent=19 // pred_region
        %s106 = smul.u32 2, %s8
        %p107 = scmp.lt.s32.totalorder %s106, 3
        %s108 = scalar_select %p107, %s106, 3
        %s109 = smul.addr %s108, 4
        %s110 = scalar_lea.vmem %s0, %s109
        %s111 = smul.u32 2, %s8
      $region24: #{conv_autoencoder_forward.10} parent=19 // pred_fallthru
        _
    $region20: #{conv_autoencoder_forward.10} parent=5 // pred_fallthru
      _
    %p112 = scmp.le.s32.totalorder 1, %s8
    %p113 = scmp.lt.s32.totalorder %s8, 3
    %p114 = pnand %p112, %p113
    %p115 = pneg %p114
    // Predicated region
    $region25: #{conv_autoencoder_forward.10} parent=5 // pred_check
      _
    $region26: #{conv_autoencoder_forward.10} parent=5 // pred_check_branch
      %117 = sbr.rel (%p114) target = $region28
    $region27: #{conv_autoencoder_forward.10} parent=5 // pred_region
      %s118 = ssub.s32 %s8, 1
      %s119 = smul.u32 2, %s13
      %p120 = scmp.lt.s32.totalorder %s119, 3
      %s121 = scalar_select %p120, %s119, 3
      %s122 = smul.addr %s121, 4
      %s123 = scalar_lea.vmem %s0, %s122
      %p124 = pneg %p34
      %p125 = pneg %p31
      %p126 = pneg %p55
      %p127 = pneg %p52
      %p128 = pneg %p81
      %p129 = pneg %p78
      %s130 = smul.u32 2, %s13
      %p131 = scmp.lt.s32.totalorder %s130, 3
      %s132 = scalar_select %p131, %s130, 3
      %s133 = smul.addr %s132, 2
      %s134 = smul.addr %s133, 8
      %s135 = scalar_lea.vmem %s2, %s134
      %s136 = smul.u32 2, %s13
      %p137 = scmp.lt.s32.totalorder %s136, 3
      %s138 = scalar_select %p137, %s136, 3
      %s139 = smul.addr %s138, 4
      %s140 = scalar_lea.vmem %s0, %s139
      %s141 = smul.u32 2, %s13
      %s142 = smul.u32 2, %s13
      %p143 = scmp.lt.s32.totalorder %s142, 3
      %s144 = scalar_select %p143, %s142, 3
      %s145 = smul.addr %s144, 2
      %s146 = smul.addr %s145, 8
      %s147 = scalar_lea.vmem %s2, %s146
      %s148 = smul.u32 2, %s13
      %v150 = vld [vmem:[%s140] sm:$0xf]
      %v151 = vld [vmem:[%s140 + $0x4] sm:$0xf]
      %v152 = vld [vmem:[%s1] sm:$0xff]
      %v153 = vld [vmem:[%s1 + $0x8] sm:$0xff]
      %v154 = vld [vmem:[%s1 + $0x10] sm:$0xff]
      %v155 = vld [vmem:[%s1 + $0x18] sm:$0xff]
      %v156 = vld [vmem:[%s1 + $0x20] sm:$0xff]
      %v157 = vld [vmem:[%s1 + $0x28] sm:$0xff]
      %v158 = vld [vmem:[%s1 + $0x30] sm:$0xff]
      %v159 = vld [vmem:[%s1 + $0x38] sm:$0xff]
      %v162 = vunpack.c.l.b16 %v150
      %v163 = vunpack.c.l.b16 %v151
      %v164 = vpack.c.b16 %v163, %v162
      %v173 = vunpack.c.l.b16 %v152
      %v174 = vunpack.c.h.b16 %v152
      %v175 = vunpack.c.l.b16 %v153
      %v176 = vunpack.c.h.b16 %v153
      %v177 = vunpack.c.l.b16 %v154
      %v178 = vunpack.c.h.b16 %v154
      %v179 = vunpack.c.l.b16 %v155
      %v180 = vunpack.c.h.b16 %v155
      %v181 = vunpack.c.l.b16 %v156
      %v182 = vunpack.c.h.b16 %v156
      %v183 = vunpack.c.l.b16 %v157
      %v184 = vunpack.c.h.b16 %v157
      %v185 = vunpack.c.l.b16 %v158
      %v186 = vunpack.c.h.b16 %v158
      %v187 = vunpack.c.l.b16 %v159
      %v188 = vunpack.c.h.b16 %v159
      %v189 = vpack.c.b16 %v175, %v173
      %v190 = vpack.c.b16 %v176, %v174
      %v191 = vpack.c.b16 %v179, %v177
      %v192 = vpack.c.b16 %v180, %v178
      %v193 = vpack.c.b16 %v183, %v181
      %v194 = vpack.c.b16 %v184, %v182
      %v195 = vpack.c.b16 %v187, %v185
      %v196 = vpack.c.b16 %v188, %v186
      %vm205 = vcmask 523264
      %v207 = vsel %vm205, %v164, 0
      %209 = vmatpush.bf16.msra.mxu0 0
      %210 = vmatpush.bf16.msra.mxu0 0
      %211 = vmatpush.bf16.msra.mxu0 0
      %212 = vmatpush.bf16.msra.mxu0 0
      %213 = vmatpush.bf16.msra.mxu0 %v195
      %214 = vmatpush.bf16.msra.mxu0 %v193
      %215 = vmatpush.bf16.msra.mxu0 %v191
      %216 = vmatpush.bf16.msra.mxu0 %v189
      %217 = vmatmul.bf16.gmra.mxu0 %v207
      %v218 = vpop.f32.mrf.mxu0
      %v219 = vadd.f32 0.0, %v218
      %v220 = vpop.f32.mrf.mxu0
      %v221 = vadd.f32 0.0, %v220
      %222 = vdwg.mxu0
      %223 = vmatpush.bf16.msra.mxu0 0
      %224 = vmatpush.bf16.msra.mxu0 0
      %225 = vmatpush.bf16.msra.mxu0 0
      %226 = vmatpush.bf16.msra.mxu0 0
      %227 = vmatpush.bf16.msra.mxu0 %v196
      %228 = vmatpush.bf16.msra.mxu0 %v194
      %229 = vmatpush.bf16.msra.mxu0 %v192
      %230 = vmatpush.bf16.msra.mxu0 %v190
      %231 = vmatmul.bf16.gmra.mxu0 %v207
      %v232 = vpop.f32.mrf.mxu0
      %v233 = vadd.f32 0.0, %v232
      %v234 = vpop.f32.mrf.mxu0
      %v235 = vadd.f32 0.0, %v234
      %236 = vdwg.mxu0
      %237 = vst [vmem:[%s147] sm:$0xff] %v219
      %238 = vst [vmem:[%s147 + $0x8] sm:$0xff] %v233
      %239 = vst [vmem:[%s147 + $0x10] sm:$0xff] %v221
      %240 = vst [vmem:[%s147 + $0x18] sm:$0xff] %v235
      %s241 = smul.u32 2, %s13
      %p242 = scmp.lt.s32.totalorder %s241, 3
      %s243 = scalar_select %p242, %s241, 3
      %s244 = smul.addr %s243, 2
      %s245 = smul.addr %s244, 8
      %s246 = scalar_lea.vmem %s2, %s245
      // Predicated region
      $region29: #{conv_autoencoder_forward.10} parent=27 // pred_check
        %p247 = pneg %p78
      $region30: #{conv_autoencoder_forward.10} parent=27 // pred_check_branch
        %249 = sbr.rel (%p247) target = $region32
      $region31: #{conv_autoencoder_forward.10} parent=27 // pred_region
        %s250 = smul.u32 2, %s13
      $region32: #{conv_autoencoder_forward.10} parent=27 // pred_fallthru
        _
    $region28: #{conv_autoencoder_forward.10} parent=5 // pred_fallthru
      _
    %p251 = scmp.le.s32.totalorder 2, %s8
    // Predicated region
    $region33: #{conv_autoencoder_forward.10} parent=5 // pred_check
      %p252 = pneg %p251
    $region34: #{conv_autoencoder_forward.10} parent=5 // pred_check_branch
      %254 = sbr.rel (%p252) target = $region36
    $region35: #{conv_autoencoder_forward.10} parent=5 // pred_region
      %s255 = ssub.s32 %s8, 2
      // Predicated region
      $region37: #{conv_autoencoder_forward.10} parent=35 // pred_check
        %p256 = pneg %p84
      $region38: #{conv_autoencoder_forward.10} parent=35 // pred_check_branch
        %258 = sbr.rel (%p256) target = $region40
      $region39: #{conv_autoencoder_forward.10} parent=35 // pred_region
        %s259 = smul.u32 2, %s14
        %p260 = scmp.lt.s32.totalorder %s259, 3
        %s261 = scalar_select %p260, %s259, 3
        %s262 = smul.addr %s261, 2
        %s263 = smul.addr %s262, 8
        %s264 = scalar_lea.vmem %s2, %s263
      $region40: #{conv_autoencoder_forward.10} parent=35 // pred_fallthru
        _
    $region36: #{conv_autoencoder_forward.10} parent=5 // pred_fallthru
      _
  $region6: #{conv_autoencoder_forward.10} parent=0 // loop_footer
    %s12 = sadd.s32 1, %s8
  $region7: #{conv_autoencoder_forward.10} parent=0 // loop_footer_branch
    %7 = sbr.rel target = $region3
  $region8: #{conv_autoencoder_forward.10} parent=0 // loop_exit
    _

// kernel: conv_autoencoder_forward.11
$region0: #{conv_autoencoder_forward.11}
  #allocation0 [shape = 'u32[]', space=smem, size = 0x4, offset = 0x4, fixed_abs, tag = 'smem constant byte address 0x4 - core index']
  #allocation1 [shape = 'u32[72,128]{1,0:T(1,128)}', space=vmem, size = 0x9000, scoped, tag = 'internal scratch']
  %s0 = inlined_call_operand.vmem [shape: bf16[16,896], index: 0, kind: input, shape index: {}]
  %s1 = inlined_call_operand.vmem [shape: bf16[9,8,16], index: 1, kind: input, shape index: {}]
  %s2 = inlined_call_operand.vmem [shape: f32[8,1], index: 2, kind: input, shape index: {}]
  %s3 = inlined_call_operand.vmem [shape: f32[8,768], index: 3, kind: output, shape index: {}]
  %s4 = sld [smem:[#allocation0]]
  $region45: #{conv_autoencoder_forward.11} parent=0
    _
  %s6 = ssub.s32 1, %s4
  %s7 = scalar_select 0, %s6, %s4
  loop: start=0, step=1, limit=5
  $region2: #{conv_autoencoder_forward.11} parent=0 // loop_pre_header
    _
  $region3: #{conv_autoencoder_forward.11} parent=0 // loop_header
    %s9 = sphi 0, %s13
    %p10 = scmp.ge.s32.totalorder %s9, 5
    %s17 = sphi 0, %s17
    %s19 = sphi 0, %s17
    %s20 = sphi 0, %s19
    %s34 = sphi 0, %s20
    %s38 = sphi 0, %s38
    %s40 = sphi 0, %s38
    %s41 = sphi 0, %s40
    %s55 = sphi 0, %s41
    %s59 = sphi 0, %s59
    %s61 = sphi 0, %s59
    %s62 = sphi 0, %s61
    %s76 = sphi 0, %s62
    %s82 = sphi 0, %s84
    %s85 = sphi 0, %s82
    %s86 = sphi 0, %s85
    %s102 = sphi 0, %s86
  $region4: #{conv_autoencoder_forward.11} parent=0 // loop_header_branch
    %12 = sbr.rel (%p10) target = $region8
  $region5: #{conv_autoencoder_forward.11} parent=0 // loop_body
    %s14 = ssub.s32 %s9, 1
    %s15 = ssub.s32 %s9, 2
    %s16 = sadd.s32 %s9, 1
    %s18 = sadd.s32 %s17, 1
    %p21 = scmp.eq.s32.totalorder %s9, 2
    %p22 = scmp.ne.s32.totalorder %s17, %s19
    %p23 = scmp.eq.s32.totalorder %s9, 0
    %p24 = por %p22, %p23
    %p25 = scmp.ne.s32.totalorder %s17, %s19
    %p26 = scmp.eq.s32.totalorder %s14, 2
    %p27 = por %p25, %p26
    %p28 = scmp.ne.s32.totalorder %s19, %s20
    %p29 = scmp.eq.s32.totalorder %s14, 0
    %p30 = por %p28, %p29
    %p31 = scmp.ne.s32.totalorder %s19, %s20
    %p32 = scmp.eq.s32.totalorder %s15, 2
    %p33 = por %p31, %p32
    %p35 = scmp.ne.s32.totalorder %s20, %s34
    %p36 = scmp.eq.s32.totalorder %s15, 0
    %p37 = por %p35, %p36
    %s39 = sadd.s32 %s38, 1
    %p42 = scmp.eq.s32.totalorder %s9, 2
    %p43 = scmp.ne.s32.totalorder %s38, %s40
    %p44 = scmp.eq.s32.totalorder %s9, 0
    %p45 = por %p43, %p44
    %p46 = scmp.ne.s32.totalorder %s38, %s40
    %p47 = scmp.eq.s32.totalorder %s14, 2
    %p48 = por %p46, %p47
    %p49 = scmp.ne.s32.totalorder %s40, %s41
    %p50 = scmp.eq.s32.totalorder %s14, 0
    %p51 = por %p49, %p50
    %p52 = scmp.ne.s32.totalorder %s40, %s41
    %p53 = scmp.eq.s32.totalorder %s15, 2
    %p54 = por %p52, %p53
    %p56 = scmp.ne.s32.totalorder %s41, %s55
    %p57 = scmp.eq.s32.totalorder %s15, 0
    %p58 = por %p56, %p57
    %s60 = sadd.s32 %s59, 1
    %p63 = scmp.eq.s32.totalorder %s9, 2
    %p64 = scmp.ne.s32.totalorder %s59, %s61
    %p65 = scmp.eq.s32.totalorder %s9, 0
    %p66 = por %p64, %p65
    %p67 = scmp.ne.s32.totalorder %s59, %s61
    %p68 = scmp.eq.s32.totalorder %s14, 2
    %p69 = por %p67, %p68
    %p70 = scmp.ne.s32.totalorder %s61, %s62
    %p71 = scmp.eq.s32.totalorder %s14, 0
    %p72 = por %p70, %p71
    %p73 = scmp.ne.s32.totalorder %s61, %s62
    %p74 = scmp.eq.s32.totalorder %s15, 2
    %p75 = por %p73, %p74
    %p77 = scmp.ne.s32.totalorder %s62, %s76
    %p78 = scmp.eq.s32.totalorder %s15, 0
    %p79 = por %p77, %p78
    %s80 = ssub.s32 %s9, %s16
    %p81 = scmp.eq.s32.totalorder %s80, 0
    %s83 = sadd.s32 %s82, 1
    %s84 = scalar_select %p81, %s82, %s83
    %p87 = pneg %p81
    %p88 = scmp.eq.s32.totalorder %s9, 2
    %p89 = por %p87, %p88
    %p90 = scmp.ne.s32.totalorder %s82, %s85
    %p91 = scmp.eq.s32.totalorder %s9, 0
    %p92 = por %p90, %p91
    %p93 = scmp.ne.s32.totalorder %s82, %s85
    %p94 = scmp.eq.s32.totalorder %s14, 2
    %p95 = por %p93, %p94
    %p96 = scmp.ne.s32.totalorder %s85, %s86
    %p97 = scmp.eq.s32.totalorder %s14, 0
    %p98 = por %p96, %p97
    %p99 = scmp.ne.s32.totalorder %s85, %s86
    %p100 = scmp.eq.s32.totalorder %s15, 2
    %p101 = por %p99, %p100
    %p103 = scmp.ne.s32.totalorder %s86, %s102
    %p104 = scmp.eq.s32.totalorder %s15, 0
    %p105 = por %p103, %p104
    %p106 = scmp.le.s32.totalorder 1, %s9
    %p107 = scmp.lt.s32.totalorder %s9, 4
    %p108 = pnand %p106, %p107
    %p109 = pneg %p108
    // Predicated region
    $region9: #{conv_autoencoder_forward.11} parent=5 // pred_check
      _
    $region10: #{conv_autoencoder_forward.11} parent=5 // pred_check_branch
      %111 = sbr.rel (%p108) target = $region12
    $region11: #{conv_autoencoder_forward.11} parent=5 // pred_region
      %s112 = ssub.s32 %s9, 1
      // Predicated region
      $region13: #{conv_autoencoder_forward.11} parent=11 // pred_check
        %p113 = pneg %p30
      $region14: #{conv_autoencoder_forward.11} parent=11 // pred_check_branch
        %115 = sbr.rel (%p113) target = $region16
      $region15: #{conv_autoencoder_forward.11} parent=11 // pred_region
        _
      $region16: #{conv_autoencoder_forward.11} parent=11 // pred_fallthru
        _
      // Predicated region
      $region17: #{conv_autoencoder_forward.11} parent=11 // pred_check
        %p116 = pneg %p51
      $region18: #{conv_autoencoder_forward.11} parent=11 // pred_check_branch
        %118 = sbr.rel (%p116) target = $region20
      $region19: #{conv_autoencoder_forward.11} parent=11 // pred_region
        _
      $region20: #{conv_autoencoder_forward.11} parent=11 // pred_fallthru
        _
      // Predicated region
      $region21: #{conv_autoencoder_forward.11} parent=11 // pred_check
        %p119 = pneg %p72
      $region22: #{conv_autoencoder_forward.11} parent=11 // pred_check_branch
        %121 = sbr.rel (%p119) target = $region24
      $region23: #{conv_autoencoder_forward.11} parent=11 // pred_region
        _
      $region24: #{conv_autoencoder_forward.11} parent=11 // pred_fallthru
        _
    $region12: #{conv_autoencoder_forward.11} parent=5 // pred_fallthru
      _
    %p122 = scmp.lt.s32.totalorder %s9, 3
    // Predicated region
    $region25: #{conv_autoencoder_forward.11} parent=5 // pred_check
      %p123 = pneg %p122
    $region26: #{conv_autoencoder_forward.11} parent=5 // pred_check_branch
      %125 = sbr.rel (%p123) target = $region28
    $region27: #{conv_autoencoder_forward.11} parent=5 // pred_region
      _
    $region28: #{conv_autoencoder_forward.11} parent=5 // pred_fallthru
      _
    %p126 = scmp.le.s32.totalorder 1, %s9
    %p127 = scmp.lt.s32.totalorder %s9, 4
    %p128 = pnand %p126, %p127
    %p129 = pneg %p128
    // Predicated region
    $region29: #{conv_autoencoder_forward.11} parent=5 // pred_check
      _
    $region30: #{conv_autoencoder_forward.11} parent=5 // pred_check_branch
      %131 = sbr.rel (%p128) target = $region32
    $region31: #{conv_autoencoder_forward.11} parent=5 // pred_region
      %s132 = ssub.s32 %s9, 1
      %p133 = pneg %p30
      %p134 = pneg %p27
      %p135 = pneg %p51
      %p136 = pneg %p48
      %p137 = pneg %p72
      %p138 = pneg %p69
      %p139 = pneg %p98
      %p140 = pneg %p95
      %s141 = smul.u32 2, %s14
      %p142 = scmp.lt.s32.totalorder %s141, 5
      %s143 = scalar_select %p142, %s141, 5
      %s144 = smul.addr %s143, 8
      %s145 = scalar_lea.vmem %s3, %s144
      %s146 = smul.u32 2, %s14
      %p147 = scmp.lt.s32.totalorder %s146, 5
      %s148 = scalar_select %p147, %s146, 5
      %s149 = smul.addr %s148, 8
      %s150 = scalar_lea.vmem %s3, %s149
      %s151 = smul.u32 2, %s14
      %s153 = smul.u32 %s14, 256
      %s154 = sshra.s32 %s153, 7
      %s155 = sand.u32 %s153, 127
      %s156 = smul.addr %s154, 4
      %s157 = scalar_lea.vmem %s0, %s156
      %v158 = vld [vmem:[%s157] sm:$0xff]
      %v159 = vld [vmem:[%s157 + $0x8] sm:$0xf]
      %v160 = vld [vmem:[%s157 + $0x1c] sm:$0xff]
      %v161 = vld [vmem:[%s157 + $0x24] sm:$0xf]
      %v162 = vld [vmem:[%s1] sm:$0xf]
      %s163 = scalar_lea.vmem %s1, 4
      %v164 = vld [vmem:[%s163] sm:$0xf]
      %v169 = vunpack.c.l.b16 %v158
      %v170 = vunpack.c.h.b16 %v158
      %v171 = vunpack.c.l.b16 %v159
      %v172 = vunpack.c.l.b16 %v160
      %v173 = vunpack.c.h.b16 %v160
      %v174 = vunpack.c.l.b16 %v161
      %v175 = vpack.c.b16 %v172, %v169
      %v176 = vpack.c.b16 %v173, %v170
      %v177 = vpack.c.b16 %v174, %v171
      %178 = vrot.lane.b32.xlu0 %v175, 127
      %v179 = vpop.permute.xlu0 %178
      %180 = vrot.lane.b32.xlu0 %v176, 127
      %v181 = vpop.permute.xlu0 %180
      %182 = vrot.lane.b32.xlu0 %v177, 127
      %v183 = vpop.permute.xlu0 %182
      %vm184 = vcmask 1039360
      %v185 = vsel %vm184, %v179, %v181
      %v186 = vsel %vm184, %v181, %v183
      %vm189 = vcmask 130048
      %v191 = vsel %vm189, %v164, 0
      %193 = vmatpush.bf16.msra.mxu0 0
      %194 = vmatpush.bf16.msra.mxu0 0
      %195 = vmatpush.bf16.msra.mxu0 0
      %196 = vmatpush.bf16.msra.mxu0 0
      %197 = vmatpush.bf16.msra.mxu0 0
      %198 = vmatpush.bf16.msra.mxu0 0
      %199 = vmatpush.bf16.msra.mxu0 0
      %200 = vmatpush.bf16.msra.mxu0 %v185
      %201 = vmatmul.bf16.gmra.mxu0 %v191
      %v202 = vpop.f32.mrf.mxu0
      %v203 = vadd.f32 0.0, %v202
      %v204 = vpop.f32.mrf.mxu0
      %205 = vdwg.mxu0
      %206 = vmatpush.bf16.msra.mxu0 0
      %207 = vmatpush.bf16.msra.mxu0 0
      %208 = vmatpush.bf16.msra.mxu0 0
      %209 = vmatpush.bf16.msra.mxu0 0
      %210 = vmatpush.bf16.msra.mxu0 0
      %211 = vmatpush.bf16.msra.mxu0 0
      %212 = vmatpush.bf16.msra.mxu0 0
      %213 = vmatpush.bf16.msra.mxu0 %v186
      %214 = vmatmul.bf16.gmra.mxu0 %v191
      %v215 = vpop.f32.mrf.mxu0
      %v216 = vadd.f32 0.0, %v215
      %v217 = vpop.f32.mrf.mxu0
      %218 = vdwg.mxu0
      %v222 = vsel %vm189, %v162, 0
      %224 = vmatpush.bf16.msra.mxu0 0
      %225 = vmatpush.bf16.msra.mxu0 0
      %226 = vmatpush.bf16.msra.mxu0 0
      %227 = vmatpush.bf16.msra.mxu0 0
      %228 = vmatpush.bf16.msra.mxu0 0
      %229 = vmatpush.bf16.msra.mxu0 0
      %230 = vmatpush.bf16.msra.mxu0 0
      %231 = vmatpush.bf16.msra.mxu0 %v175
      %232 = vmatmul.bf16.gmra.mxu0 %v222
      %v233 = vpop.f32.mrf.mxu0
      %v234 = vadd.f32 %v203, %v233
      %v235 = vpop.f32.mrf.mxu0
      %236 = vdwg.mxu0
      %237 = vmatpush.bf16.msra.mxu0 0
      %238 = vmatpush.bf16.msra.mxu0 0
      %239 = vmatpush.bf16.msra.mxu0 0
      %240 = vmatpush.bf16.msra.mxu0 0
      %241 = vmatpush.bf16.msra.mxu0 0
      %242 = vmatpush.bf16.msra.mxu0 0
      %243 = vmatpush.bf16.msra.mxu0 0
      %244 = vmatpush.bf16.msra.mxu0 %v176
      %245 = vmatmul.bf16.gmra.mxu0 %v222
      %v246 = vpop.f32.mrf.mxu0
      %v247 = vadd.f32 %v216, %v246
      %v248 = vpop.f32.mrf.mxu0
      %249 = vdwg.mxu0
      %s250 = scalar_lea.vmem %s1, 8
      %v251 = vld [vmem:[%s250] sm:$0xf]
      %252 = vrot.lane.b32.xlu0 %v175, 126
      %v253 = vpop.permute.xlu0 %252
      %254 = vrot.lane.b32.xlu0 %v176, 126
      %v255 = vpop.permute.xlu0 %254
      %256 = vrot.lane.b32.xlu0 %v177, 126
      %v257 = vpop.permute.xlu0 %256
      %vm258 = vcmask 1031168
      %v259 = vsel %vm258, %v253, %v255
      %v260 = vsel %vm258, %v255, %v257
      %v264 = vsel %vm189, %v251, 0
      %266 = vmatpush.bf16.msra.mxu0 0
      %267 = vmatpush.bf16.msra.mxu0 0
      %268 = vmatpush.bf16.msra.mxu0 0
      %269 = vmatpush.bf16.msra.mxu0 0
      %270 = vmatpush.bf16.msra.mxu0 0
      %271 = vmatpush.bf16.msra.mxu0 0
      %272 = vmatpush.bf16.msra.mxu0 0
      %273 = vmatpush.bf16.msra.mxu0 %v259
      %274 = vmatmul.bf16.gmra.mxu0 %v264
      %v275 = vpop.f32.mrf.mxu0
      %v276 = vadd.f32 0.0, %v275
      %v277 = vpop.f32.mrf.mxu0
      %278 = vdwg.mxu0
      %279 = vmatpush.bf16.msra.mxu0 0
      %280 = vmatpush.bf16.msra.mxu0 0
      %281 = vmatpush.bf16.msra.mxu0 0
      %282 = vmatpush.bf16.msra.mxu0 0
      %283 = vmatpush.bf16.msra.mxu0 0
      %284 = vmatpush.bf16.msra.mxu0 0
      %285 = vmatpush.bf16.msra.mxu0 0
      %286 = vmatpush.bf16.msra.mxu0 %v260
      %287 = vmatmul.bf16.gmra.mxu0 %v264
      %v288 = vpop.f32.mrf.mxu0
      %v289 = vadd.f32 0.0, %v288
      %v290 = vpop.f32.mrf.mxu0
      %291 = vdwg.mxu0
      %v292 = vadd.f32 %v234, %v276
      %v293 = vadd.f32 %v247, %v289
      %s294 = scalar_lea.vmem %s1, 12
      %v295 = vld [vmem:[%s294] sm:$0xf]
      %296 = vrot.lane.b32.xlu0 %v175, 110
      %v297 = vpop.permute.xlu0 %296
      %298 = vrot.lane.b32.xlu0 %v176, 110
      %v299 = vpop.permute.xlu0 %298
      %300 = vrot.lane.b32.xlu0 %v177, 110
      %v301 = vpop.permute.xlu0 %300
      %vm302 = vcmask 900096
      %v303 = vsel %vm302, %v297, %v299
      %v304 = vsel %vm302, %v299, %v301
      %v308 = vsel %vm189, %v295, 0
      %310 = vmatpush.bf16.msra.mxu0 0
      %311 = vmatpush.bf16.msra.mxu0 0
      %312 = vmatpush.bf16.msra.mxu0 0
      %313 = vmatpush.bf16.msra.mxu0 0
      %314 = vmatpush.bf16.msra.mxu0 0
      %315 = vmatpush.bf16.msra.mxu0 0
      %316 = vmatpush.bf16.msra.mxu0 0
      %317 = vmatpush.bf16.msra.mxu0 %v303
      %318 = vmatmul.bf16.gmra.mxu0 %v308
      %v319 = vpop.f32.mrf.mxu0
      %v320 = vadd.f32 0.0, %v319
      %v321 = vpop.f32.mrf.mxu0
      %322 = vdwg.mxu0
      %323 = vmatpush.bf16.msra.mxu0 0
      %324 = vmatpush.bf16.msra.mxu0 0
      %325 = vmatpush.bf16.msra.mxu0 0
      %326 = vmatpush.bf16.msra.mxu0 0
      %327 = vmatpush.bf16.msra.mxu0 0
      %328 = vmatpush.bf16.msra.mxu0 0
      %329 = vmatpush.bf16.msra.mxu0 0
      %330 = vmatpush.bf16.msra.mxu0 %v304
      %331 = vmatmul.bf16.gmra.mxu0 %v308
      %v332 = vpop.f32.mrf.mxu0
      %v333 = vadd.f32 0.0, %v332
      %v334 = vpop.f32.mrf.mxu0
      %335 = vdwg.mxu0
      %v336 = vadd.f32 %v292, %v320
      %v337 = vadd.f32 %v293, %v333
      %s338 = scalar_lea.vmem %s1, 16
      %v339 = vld [vmem:[%s338] sm:$0xf]
      %340 = vrot.lane.b32.xlu0 %v175, 109
      %v341 = vpop.permute.xlu0 %340
      %342 = vrot.lane.b32.xlu0 %v176, 109
      %v343 = vpop.permute.xlu0 %342
      %344 = vrot.lane.b32.xlu0 %v177, 109
      %v345 = vpop.permute.xlu0 %344
      %vm346 = vcmask 891904
      %v347 = vsel %vm346, %v341, %v343
      %v348 = vsel %vm346, %v343, %v345
      %v352 = vsel %vm189, %v339, 0
      %354 = vmatpush.bf16.msra.mxu0 0
      %355 = vmatpush.bf16.msra.mxu0 0
      %356 = vmatpush.bf16.msra.mxu0 0
      %357 = vmatpush.bf16.msra.mxu0 0
      %358 = vmatpush.bf16.msra.mxu0 0
      %359 = vmatpush.bf16.msra.mxu0 0
      %360 = vmatpush.bf16.msra.mxu0 0
      %361 = vmatpush.bf16.msra.mxu0 %v347
      %362 = vmatmul.bf16.gmra.mxu0 %v352
      %v363 = vpop.f32.mrf.mxu0
      %v364 = vadd.f32 0.0, %v363
      %v365 = vpop.f32.mrf.mxu0
      %366 = vdwg.mxu0
      %367 = vmatpush.bf16.msra.mxu0 0
      %368 = vmatpush.bf16.msra.mxu0 0
      %369 = vmatpush.bf16.msra.mxu0 0
      %370 = vmatpush.bf16.msra.mxu0 0
      %371 = vmatpush.bf16.msra.mxu0 0
      %372 = vmatpush.bf16.msra.mxu0 0
      %373 = vmatpush.bf16.msra.mxu0 0
      %374 = vmatpush.bf16.msra.mxu0 %v348
      %375 = vmatmul.bf16.gmra.mxu0 %v352
      %v376 = vpop.f32.mrf.mxu0
      %v377 = vadd.f32 0.0, %v376
      %v378 = vpop.f32.mrf.mxu0
      %379 = vdwg.mxu0
      %v380 = vadd.f32 %v336, %v364
      %v381 = vadd.f32 %v337, %v377
      %s382 = scalar_lea.vmem %s1, 20
      %v383 = vld [vmem:[%s382] sm:$0xf]
      %384 = vrot.lane.b32.xlu0 %v175, 108
      %v385 = vpop.permute.xlu0 %384
      %386 = vrot.lane.b32.xlu0 %v176, 108
      %v387 = vpop.permute.xlu0 %386
      %388 = vrot.lane.b32.xlu0 %v177, 108
      %v389 = vpop.permute.xlu0 %388
      %vm390 = vcmask 883712
      %v391 = vsel %vm390, %v385, %v387
      %v392 = vsel %vm390, %v387, %v389
      %v396 = vsel %vm189, %v383, 0
      %398 = vmatpush.bf16.msra.mxu0 0
      %399 = vmatpush.bf16.msra.mxu0 0
      %400 = vmatpush.bf16.msra.mxu0 0
      %401 = vmatpush.bf16.msra.mxu0 0
      %402 = vmatpush.bf16.msra.mxu0 0
      %403 = vmatpush.bf16.msra.mxu0 0
      %404 = vmatpush.bf16.msra.mxu0 0
      %405 = vmatpush.bf16.msra.mxu0 %v391
      %406 = vmatmul.bf16.gmra.mxu0 %v396
      %v407 = vpop.f32.mrf.mxu0
      %v408 = vadd.f32 0.0, %v407
      %v409 = vpop.f32.mrf.mxu0
      %410 = vdwg.mxu0
      %411 = vmatpush.bf16.msra.mxu0 0
      %412 = vmatpush.bf16.msra.mxu0 0
      %413 = vmatpush.bf16.msra.mxu0 0
      %414 = vmatpush.bf16.msra.mxu0 0
      %415 = vmatpush.bf16.msra.mxu0 0
      %416 = vmatpush.bf16.msra.mxu0 0
      %417 = vmatpush.bf16.msra.mxu0 0
      %418 = vmatpush.bf16.msra.mxu0 %v392
      %419 = vmatmul.bf16.gmra.mxu0 %v396
      %v420 = vpop.f32.mrf.mxu0
      %v421 = vadd.f32 0.0, %v420
      %v422 = vpop.f32.mrf.mxu0
      %423 = vdwg.mxu0
      %v424 = vadd.f32 %v380, %v408
      %v425 = vadd.f32 %v381, %v421
      %s426 = scalar_lea.vmem %s1, 24
      %v427 = vld [vmem:[%s426] sm:$0xf]
      %428 = vrot.lane.b32.xlu0 %v175, 92
      %v429 = vpop.permute.xlu0 %428
      %430 = vrot.lane.b32.xlu0 %v176, 92
      %v431 = vpop.permute.xlu0 %430
      %432 = vrot.lane.b32.xlu0 %v177, 92
      %v433 = vpop.permute.xlu0 %432
      %vm434 = vcmask 752640
      %v435 = vsel %vm434, %v429, %v431
      %v436 = vsel %vm434, %v431, %v433
      %v440 = vsel %vm189, %v427, 0
      %442 = vmatpush.bf16.msra.mxu0 0
      %443 = vmatpush.bf16.msra.mxu0 0
      %444 = vmatpush.bf16.msra.mxu0 0
      %445 = vmatpush.bf16.msra.mxu0 0
      %446 = vmatpush.bf16.msra.mxu0 0
      %447 = vmatpush.bf16.msra.mxu0 0
      %448 = vmatpush.bf16.msra.mxu0 0
      %449 = vmatpush.bf16.msra.mxu0 %v435
      %450 = vmatmul.bf16.gmra.mxu0 %v440
      %v451 = vpop.f32.mrf.mxu0
      %v452 = vadd.f32 0.0, %v451
      %v453 = vpop.f32.mrf.mxu0
      %454 = vdwg.mxu0
      %455 = vmatpush.bf16.msra.mxu0 0
      %456 = vmatpush.bf16.msra.mxu0 0
      %457 = vmatpush.bf16.msra.mxu0 0
      %458 = vmatpush.bf16.msra.mxu0 0
      %459 = vmatpush.bf16.msra.mxu0 0
      %460 = vmatpush.bf16.msra.mxu0 0
      %461 = vmatpush.bf16.msra.mxu0 0
      %462 = vmatpush.bf16.msra.mxu0 %v436
      %463 = vmatmul.bf16.gmra.mxu0 %v440
      %v464 = vpop.f32.mrf.mxu0
      %v465 = vadd.f32 0.0, %v464
      %v466 = vpop.f32.mrf.mxu0
      %467 = vdwg.mxu0
      %v468 = vadd.f32 %v424, %v452
      %v469 = vadd.f32 %v425, %v465
      %s470 = scalar_lea.vmem %s1, 28
      %v471 = vld [vmem:[%s470] sm:$0xf]
      %472 = vrot.lane.b32.xlu0 %v175, 91
      %v473 = vpop.permute.xlu0 %472
      %474 = vrot.lane.b32.xlu0 %v176, 91
      %v475 = vpop.permute.xlu0 %474
      %476 = vrot.lane.b32.xlu0 %v177, 91
      %v477 = vpop.permute.xlu0 %476
      %vm478 = vcmask 744448
      %v479 = vsel %vm478, %v473, %v475
      %v480 = vsel %vm478, %v475, %v477
      %v484 = vsel %vm189, %v471, 0
      %486 = vmatpush.bf16.msra.mxu0 0
      %487 = vmatpush.bf16.msra.mxu0 0
      %488 = vmatpush.bf16.msra.mxu0 0
      %489 = vmatpush.bf16.msra.mxu0 0
      %490 = vmatpush.bf16.msra.mxu0 0
      %491 = vmatpush.bf16.msra.mxu0 0
      %492 = vmatpush.bf16.msra.mxu0 0
      %493 = vmatpush.bf16.msra.mxu0 %v479
      %494 = vmatmul.bf16.gmra.mxu0 %v484
      %v495 = vpop.f32.mrf.mxu0
      %v496 = vadd.f32 0.0, %v495
      %v497 = vpop.f32.mrf.mxu0
      %498 = vdwg.mxu0
      %499 = vmatpush.bf16.msra.mxu0 0
      %500 = vmatpush.bf16.msra.mxu0 0
      %501 = vmatpush.bf16.msra.mxu0 0
      %502 = vmatpush.bf16.msra.mxu0 0
      %503 = vmatpush.bf16.msra.mxu0 0
      %504 = vmatpush.bf16.msra.mxu0 0
      %505 = vmatpush.bf16.msra.mxu0 0
      %506 = vmatpush.bf16.msra.mxu0 %v480
      %507 = vmatmul.bf16.gmra.mxu0 %v484
      %v508 = vpop.f32.mrf.mxu0
      %v509 = vadd.f32 0.0, %v508
      %v510 = vpop.f32.mrf.mxu0
      %511 = vdwg.mxu0
      %v512 = vadd.f32 %v468, %v496
      %v513 = vadd.f32 %v469, %v509
      %s514 = scalar_lea.vmem %s1, 32
      %v515 = vld [vmem:[%s514] sm:$0xf]
      %516 = vrot.lane.b32.xlu0 %v175, 90
      %v517 = vpop.permute.xlu0 %516
      %518 = vrot.lane.b32.xlu0 %v176, 90
      %v519 = vpop.permute.xlu0 %518
      %520 = vrot.lane.b32.xlu0 %v177, 90
      %v521 = vpop.permute.xlu0 %520
      %vm522 = vcmask 736256
      %v523 = vsel %vm522, %v517, %v519
      %v524 = vsel %vm522, %v519, %v521
      %v528 = vsel %vm189, %v515, 0
      %530 = vmatpush.bf16.msra.mxu0 0
      %531 = vmatpush.bf16.msra.mxu0 0
      %532 = vmatpush.bf16.msra.mxu0 0
      %533 = vmatpush.bf16.msra.mxu0 0
      %534 = vmatpush.bf16.msra.mxu0 0
      %535 = vmatpush.bf16.msra.mxu0 0
      %536 = vmatpush.bf16.msra.mxu0 0
      %537 = vmatpush.bf16.msra.mxu0 %v523
      %538 = vmatmul.bf16.gmra.mxu0 %v528
      %v539 = vpop.f32.mrf.mxu0
      %v540 = vadd.f32 0.0, %v539
      %v541 = vpop.f32.mrf.mxu0
      %542 = vdwg.mxu0
      %543 = vmatpush.bf16.msra.mxu0 0
      %544 = vmatpush.bf16.msra.mxu0 0
      %545 = vmatpush.bf16.msra.mxu0 0
      %546 = vmatpush.bf16.msra.mxu0 0
      %547 = vmatpush.bf16.msra.mxu0 0
      %548 = vmatpush.bf16.msra.mxu0 0
      %549 = vmatpush.bf16.msra.mxu0 0
      %550 = vmatpush.bf16.msra.mxu0 %v524
      %551 = vmatmul.bf16.gmra.mxu0 %v528
      %v552 = vpop.f32.mrf.mxu0
      %v553 = vadd.f32 0.0, %v552
      %v554 = vpop.f32.mrf.mxu0
      %555 = vdwg.mxu0
      %v556 = vadd.f32 %v512, %v540
      %v557 = vadd.f32 %v513, %v553
      %v558 = vld [vmem:[%s2] sm:$0xff]
      %560 = vset.pattern.permute.xlu0 0
      %561 = vperm.xlu0 %560, %v558
      %v562 = vpop.permute.xlu0 %561
      %v564 = vadd.f32 %v556, %v562
      %v565 = vadd.f32 %v557, %v562
      %v566 = vmax.f32 %v564, 0.0
      %v567 = vmax.f32 %v565, 0.0
      %568 = vst [vmem:[%s150] sm:$0xff] %v566
      %569 = vst [vmem:[%s150 + $0x8] sm:$0xff] %v567
      %s570 = smul.u32 2, %s14
      %p571 = scmp.lt.s32.totalorder %s570, 5
      %s572 = scalar_select %p571, %s570, 5
      %s573 = smul.addr %s572, 8
      %s574 = scalar_lea.vmem %s3, %s573
      // Predicated region
      $region33: #{conv_autoencoder_forward.11} parent=31 // pred_check
        %p575 = pneg %p95
      $region34: #{conv_autoencoder_forward.11} parent=31 // pred_check_branch
        %577 = sbr.rel (%p575) target = $region36
      $region35: #{conv_autoencoder_forward.11} parent=31 // pred_region
        %s578 = smul.u32 2, %s14
      $region36: #{conv_autoencoder_forward.11} parent=31 // pred_fallthru
        _
    $region32: #{conv_autoencoder_forward.11} parent=5 // pred_fallthru
      _
    %p579 = scmp.le.s32.totalorder 2, %s9
    // Predicated region
    $region37: #{conv_autoencoder_forward.11} parent=5 // pred_check
      %p580 = pneg %p579
    $region38: #{conv_autoencoder_forward.11} parent=5 // pred_check_branch
      %582 = sbr.rel (%p580) target = $region40
    $region39: #{conv_autoencoder_forward.11} parent=5 // pred_region
      %s583 = ssub.s32 %s9, 2
      // Predicated region
      $region41: #{conv_autoencoder_forward.11} parent=39 // pred_check
        %p584 = pneg %p101
      $region42: #{conv_autoencoder_forward.11} parent=39 // pred_check_branch
        %586 = sbr.rel (%p584) target = $region44
      $region43: #{conv_autoencoder_forward.11} parent=39 // pred_region
        %s587 = smul.u32 2, %s15
        %p588 = scmp.lt.s32.totalorder %s587, 5
        %s589 = scalar_select %p588, %s587, 5
        %s590 = smul.addr %s589, 8
        %s591 = scalar_lea.vmem %s3, %s590
      $region44: #{conv_autoencoder_forward.11} parent=39 // pred_fallthru
        _
    $region40: #{conv_autoencoder_forward.11} parent=5 // pred_fallthru
      _
  $region6: #{conv_autoencoder_forward.11} parent=0 // loop_footer
    %s13 = sadd.s32 1, %s9
  $region7: #{conv_autoencoder_forward.11} parent=0 // loop_footer_branch
    %8 = sbr.rel target = $region3
  $region8: #{conv_autoencoder_forward.11} parent=0 // loop_exit
    _

// kernel: conv_autoencoder_forward.12
$region0: #{conv_autoencoder_forward.12}
  #allocation0 [shape = 'u32[]', space=smem, size = 0x4, offset = 0x4, fixed_abs, tag = 'smem constant byte address 0x4 - core index']
  #allocation1 [shape = 'u32[72,128]{1,0:T(1,128)}', space=vmem, size = 0x9000, scoped, tag = 'internal scratch']
  %s0 = inlined_call_operand.vmem [shape: bf16[16,256], index: 0, kind: input, shape index: {}]
  %s1 = inlined_call_operand.vmem [shape: bf16[256,1024], index: 1, kind: input, shape index: {}]
  %s2 = inlined_call_operand.vmem [shape: f32[16,1024], index: 2, kind: output, shape index: {}]
  %s3 = sld [smem:[#allocation0]]
  $region41: #{conv_autoencoder_forward.12} parent=0
    _
  %s5 = ssub.s32 1, %s3
  %s6 = scalar_select 0, %s5, %s3
  loop: start=0, step=1, limit=4
  $region2: #{conv_autoencoder_forward.12} parent=0 // loop_pre_header
    _
  $region3: #{conv_autoencoder_forward.12} parent=0 // loop_header
    %s8 = sphi 0, %s12
    %p9 = scmp.ge.s32.totalorder %s8, 4
    %s18 = sphi 0, %s20
    %s21 = sphi 0, %s18
    %s22 = sphi 0, %s21
    %s38 = sphi 0, %s22
    %s42 = sphi 0, %s42
    %s44 = sphi 0, %s42
    %s45 = sphi 0, %s44
    %s59 = sphi 0, %s45
    %s65 = sphi 0, %s67
    %s68 = sphi 0, %s65
    %s69 = sphi 0, %s68
    %s85 = sphi 0, %s69
  $region4: #{conv_autoencoder_forward.12} parent=0 // loop_header_branch
    %11 = sbr.rel (%p9) target = $region8
  $region5: #{conv_autoencoder_forward.12} parent=0 // loop_body
    %s13 = ssub.s32 %s8, 1
    %s14 = ssub.s32 %s8, 2
    %s15 = sadd.s32 %s8, 1
    %s16 = ssub.s32 %s8, %s15
    %p17 = scmp.eq.s32.totalorder %s16, 0
    %s19 = sadd.s32 %s18, 1
    %s20 = scalar_select %p17, %s18, %s19
    %p23 = pneg %p17
    %p24 = scmp.eq.s32.totalorder %s8, 1
    %p25 = por %p23, %p24
    %p26 = scmp.ne.s32.totalorder %s18, %s21
    %p27 = scmp.eq.s32.totalorder %s8, 0
    %p28 = por %p26, %p27
    %p29 = scmp.ne.s32.totalorder %s18, %s21
    %p30 = scmp.eq.s32.totalorder %s13, 1
    %p31 = por %p29, %p30
    %p32 = scmp.ne.s32.totalorder %s21, %s22
    %p33 = scmp.eq.s32.totalorder %s13, 0
    %p34 = por %p32, %p33
    %p35 = scmp.ne.s32.totalorder %s21, %s22
    %p36 = scmp.eq.s32.totalorder %s14, 1
    %p37 = por %p35, %p36
    %p39 = scmp.ne.s32.totalorder %s22, %s38
    %p40 = scmp.eq.s32.totalorder %s14, 0
    %p41 = por %p39, %p40
    %s43 = sadd.s32 %s42, 1
    %p46 = scmp.eq.s32.totalorder %s8, 1
    %p47 = scmp.ne.s32.totalorder %s42, %s44
    %p48 = scmp.eq.s32.totalorder %s8, 0
    %p49 = por %p47, %p48
    %p50 = scmp.ne.s32.totalorder %s42, %s44
    %p51 = scmp.eq.s32.totalorder %s13, 1
    %p52 = por %p50, %p51
    %p53 = scmp.ne.s32.totalorder %s44, %s45
    %p54 = scmp.eq.s32.totalorder %s13, 0
    %p55 = por %p53, %p54
    %p56 = scmp.ne.s32.totalorder %s44, %s45
    %p57 = scmp.eq.s32.totalorder %s14, 1
    %p58 = por %p56, %p57
    %p60 = scmp.ne.s32.totalorder %s45, %s59
    %p61 = scmp.eq.s32.totalorder %s14, 0
    %p62 = por %p60, %p61
    %s63 = ssub.s32 %s8, %s15
    %p64 = scmp.eq.s32.totalorder %s63, 0
    %s66 = sadd.s32 %s65, 1
    %s67 = scalar_select %p64, %s65, %s66
    %p70 = pneg %p64
    %p71 = scmp.eq.s32.totalorder %s8, 1
    %p72 = por %p70, %p71
    %p73 = scmp.ne.s32.totalorder %s65, %s68
    %p74 = scmp.eq.s32.totalorder %s8, 0
    %p75 = por %p73, %p74
    %p76 = scmp.ne.s32.totalorder %s65, %s68
    %p77 = scmp.eq.s32.totalorder %s13, 1
    %p78 = por %p76, %p77
    %p79 = scmp.ne.s32.totalorder %s68, %s69
    %p80 = scmp.eq.s32.totalorder %s13, 0
    %p81 = por %p79, %p80
    %p82 = scmp.ne.s32.totalorder %s68, %s69
    %p83 = scmp.eq.s32.totalorder %s14, 1
    %p84 = por %p82, %p83
    %p86 = scmp.ne.s32.totalorder %s69, %s85
    %p87 = scmp.eq.s32.totalorder %s14, 0
    %p88 = por %p86, %p87
    %p89 = scmp.le.s32.totalorder 1, %s8
    %p90 = scmp.lt.s32.totalorder %s8, 3
    %p91 = pnand %p89, %p90
    %p92 = pneg %p91
    // Predicated region
    $region9: #{conv_autoencoder_forward.12} parent=5 // pred_check
      _
    $region10: #{conv_autoencoder_forward.12} parent=5 // pred_check_branch
      %94 = sbr.rel (%p91) target = $region12
    $region11: #{conv_autoencoder_forward.12} parent=5 // pred_region
      %s95 = ssub.s32 %s8, 1
      // Predicated region
      $region13: #{conv_autoencoder_forward.12} parent=11 // pred_check
        %p96 = pneg %p55
      $region14: #{conv_autoencoder_forward.12} parent=11 // pred_check_branch
        %98 = sbr.rel (%p96) target = $region16
      $region15: #{conv_autoencoder_forward.12} parent=11 // pred_region
        _
      $region16: #{conv_autoencoder_forward.12} parent=11 // pred_fallthru
        _
    $region12: #{conv_autoencoder_forward.12} parent=5 // pred_fallthru
      _
    %p99 = scmp.lt.s32.totalorder %s8, 2
    // Predicated region
    $region17: #{conv_autoencoder_forward.12} parent=5 // pred_check
      %p100 = pneg %p99
    $region18: #{conv_autoencoder_forward.12} parent=5 // pred_check_branch
      %102 = sbr.rel (%p100) target = $region20
    $region19: #{conv_autoencoder_forward.12} parent=5 // pred_region
      // Predicated region
      $region21: #{conv_autoencoder_forward.12} parent=19 // pred_check
        %p103 = pneg %p28
      $region22: #{conv_autoencoder_forward.12} parent=19 // pred_check_branch
        %105 = sbr.rel (%p103) target = $region24
      $region23: #{conv_autoencoder_forward.12} parent=19 // pred_region
        %p106 = scmp.lt.s32.totalorder %s8, 1
        %s107 = scalar_select %p106, %s8, 1
        %s108 = smul.addr %s107, 2
        %s109 = smul.addr %s108, 4
        %s110 = scalar_lea.vmem %s0, %s109
      $region24: #{conv_autoencoder_forward.12} parent=19 // pred_fallthru
        _
    $region20: #{conv_autoencoder_forward.12} parent=5 // pred_fallthru
      _
    %p111 = scmp.le.s32.totalorder 1, %s8
    %p112 = scmp.lt.s32.totalorder %s8, 3
    %p113 = pnand %p111, %p112
    %p114 = pneg %p113
    // Predicated region
    $region25: #{conv_autoencoder_forward.12} parent=5 // pred_check
      _
    $region26: #{conv_autoencoder_forward.12} parent=5 // pred_check_branch
      %116 = sbr.rel (%p113) target = $region28
    $region27: #{conv_autoencoder_forward.12} parent=5 // pred_region
      %s117 = ssub.s32 %s8, 1
      %p118 = scmp.lt.s32.totalorder %s13, 1
      %s119 = scalar_select %p118, %s13, 1
      %s120 = smul.addr %s119, 2
      %s121 = smul.addr %s120, 4
      %s122 = scalar_lea.vmem %s0, %s121
      %p123 = pneg %p34
      %p124 = pneg %p31
      %p125 = pneg %p55
      %p126 = pneg %p52
      %p127 = pneg %p81
      %p128 = pneg %p78
      %p129 = scmp.lt.s32.totalorder %s13, 1
      %s130 = scalar_select %p129, %s13, 1
      %s131 = smul.addr %s130, 8
      %s132 = smul.addr %s131, 8
      %s133 = scalar_lea.vmem %s2, %s132
      %p134 = scmp.lt.s32.totalorder %s13, 1
      %s135 = scalar_select %p134, %s13, 1
      %s136 = smul.addr %s135, 2
      %s137 = smul.addr %s136, 4
      %s138 = scalar_lea.vmem %s0, %s137
      %p139 = scmp.lt.s32.totalorder %s13, 1
      %s140 = scalar_select %p139, %s13, 1
      %s141 = smul.addr %s140, 8
      %s142 = smul.addr %s141, 8
      %s143 = scalar_lea.vmem %s2, %s142
      %v144 = vld [vmem:[%s138] sm:$0xff]
      %v145 = vld [vmem:[%s1] sm:$0xff]
      %v146 = vld [vmem:[%s1 + $0x8] sm:$0xff]
      %v147 = vld [vmem:[%s1 + $0x10] sm:$0xff]
      %v148 = vld [vmem:[%s1 + $0x18] sm:$0xff]
      %v149 = vld [vmem:[%s1 + $0x20] sm:$0xff]
      %v150 = vld [vmem:[%s1 + $0x28] sm:$0xff]
      %v151 = vld [vmem:[%s1 + $0x30] sm:$0xff]
      %v152 = vld [vmem:[%s1 + $0x38] sm:$0xff]
      %v153 = vld [vmem:[%s1 + $0x40] sm:$0xff]
      %v154 = vld [vmem:[%s1 + $0x48] sm:$0xff]
      %v155 = vld [vmem:[%s1 + $0x50] sm:$0xff]
      %v156 = vld [vmem:[%s1 + $0x58] sm:$0xff]
      %v157 = vld [vmem:[%s1 + $0x60] sm:$0xff]
      %v158 = vld [vmem:[%s1 + $0x68] sm:$0xff]
      %v159 = vld [vmem:[%s1 + $0x70] sm:$0xff]
      %v160 = vld [vmem:[%s1 + $0x78] sm:$0xff]
      %v161 = vld [vmem:[%s1 + $0x80] sm:$0xff]
      %v162 = vld [vmem:[%s1 + $0x88] sm:$0xff]
      %v163 = vld [vmem:[%s1 + $0x90] sm:$0xff]
      %v164 = vld [vmem:[%s1 + $0x98] sm:$0xff]
      %v165 = vld [vmem:[%s1 + $0xa0] sm:$0xff]
      %v166 = vld [vmem:[%s1 + $0xa8] sm:$0xff]
      %v167 = vld [vmem:[%s1 + $0xb0] sm:$0xff]
      %v168 = vld [vmem:[%s1 + $0xb8] sm:$0xff]
      %v169 = vld [vmem:[%s1 + $0xc0] sm:$0xff]
      %v170 = vld [vmem:[%s1 + $0xc8] sm:$0xff]
      %v171 = vld [vmem:[%s1 + $0xd0] sm:$0xff]
      %v172 = vld [vmem:[%s1 + $0xd8] sm:$0xff]
      %v173 = vld [vmem:[%s1 + $0xe0] sm:$0xff]
      %v174 = vld [vmem:[%s1 + $0xe8] sm:$0xff]
      %v175 = vld [vmem:[%s1 + $0xf0] sm:$0xff]
      %v176 = vld [vmem:[%s1 + $0xf8] sm:$0xff]
      %v177 = vld [vmem:[%s1 + $0x100] sm:$0xff]
      %v178 = vld [vmem:[%s1 + $0x108] sm:$0xff]
      %v179 = vld [vmem:[%s1 + $0x110] sm:$0xff]
      %v180 = vld [vmem:[%s1 + $0x118] sm:$0xff]
      %v181 = vld [vmem:[%s1 + $0x120] sm:$0xff]
      %v182 = vld [vmem:[%s1 + $0x128] sm:$0xff]
      %v183 = vld [vmem:[%s1 + $0x130] sm:$0xff]
      %v184 = vld [vmem:[%s1 + $0x138] sm:$0xff]
      %v185 = vld [vmem:[%s1 + $0x140] sm:$0xff]
      %v186 = vld [vmem:[%s1 + $0x148] sm:$0xff]
      %v187 = vld [vmem:[%s1 + $0x150] sm:$0xff]
      %v188 = vld [vmem:[%s1 + $0x158] sm:$0xff]
      %v189 = vld [vmem:[%s1 + $0x160] sm:$0xff]
      %v190 = vld [vmem:[%s1 + $0x168] sm:$0xff]
      %v191 = vld [vmem:[%s1 + $0x170] sm:$0xff]
      %v192 = vld [vmem:[%s1 + $0x178] sm:$0xff]
      %v193 = vld [vmem:[%s1 + $0x180] sm:$0xff]
      %v194 = vld [vmem:[%s1 + $0x188] sm:$0xff]
      %v195 = vld [vmem:[%s1 + $0x190] sm:$0xff]
      %v196 = vld [vmem:[%s1 + $0x198] sm:$0xff]
      %v197 = vld [vmem:[%s1 + $0x1a0] sm:$0xff]
      %v198 = vld [vmem:[%s1 + $0x1a8] sm:$0xff]
      %v199 = vld [vmem:[%s1 + $0x1b0] sm:$0xff]
      %v200 = vld [vmem:[%s1 + $0x1b8] sm:$0xff]
      %v201 = vld [vmem:[%s1 + $0x1c0] sm:$0xff]
      %v202 = vld [vmem:[%s1 + $0x1c8] sm:$0xff]
      %v203 = vld [vmem:[%s1 + $0x1d0] sm:$0xff]
      %v204 = vld [vmem:[%s1 + $0x1d8] sm:$0xff]
      %v205 = vld [vmem:[%s1 + $0x1e0] sm:$0xff]
      %v206 = vld [vmem:[%s1 + $0x1e8] sm:$0xff]
      %v207 = vld [vmem:[%s1 + $0x1f0] sm:$0xff]
      %v208 = vld [vmem:[%s1 + $0x1f8] sm:$0xff]
      %v209 = vld [vmem:[%s1 + $0x200] sm:$0xff]
      %v210 = vld [vmem:[%s1 + $0x208] sm:$0xff]
      %v211 = vld [vmem:[%s1 + $0x210] sm:$0xff]
      %v212 = vld [vmem:[%s1 + $0x218] sm:$0xff]
      %v213 = vld [vmem:[%s1 + $0x220] sm:$0xff]
      %v214 = vld [vmem:[%s1 + $0x228] sm:$0xff]
      %v215 = vld [vmem:[%s1 + $0x230] sm:$0xff]
      %v216 = vld [vmem:[%s1 + $0x238] sm:$0xff]
      %v217 = vld [vmem:[%s1 + $0x240] sm:$0xff]
      %v218 = vld [vmem:[%s1 + $0x248] sm:$0xff]
      %v219 = vld [vmem:[%s1 + $0x250] sm:$0xff]
      %v220 = vld [vmem:[%s1 + $0x258] sm:$0xff]
      %v221 = vld [vmem:[%s1 + $0x260] sm:$0xff]
      %v222 = vld [vmem:[%s1 + $0x268] sm:$0xff]
      %v223 = vld [vmem:[%s1 + $0x270] sm:$0xff]
      %v224 = vld [vmem:[%s1 + $0x278] sm:$0xff]
      %v225 = vld [vmem:[%s1 + $0x280] sm:$0xff]
      %v226 = vld [vmem:[%s1 + $0x288] sm:$0xff]
      %v227 = vld [vmem:[%s1 + $0x290] sm:$0xff]
      %v228 = vld [vmem:[%s1 + $0x298] sm:$0xff]
      %v229 = vld [vmem:[%s1 + $0x2a0] sm:$0xff]
      %v230 = vld [vmem:[%s1 + $0x2a8] sm:$0xff]
      %v231 = vld [vmem:[%s1 + $0x2b0] sm:$0xff]
      %v232 = vld [vmem:[%s1 + $0x2b8] sm:$0xff]
      %v233 = vld [vmem:[%s1 + $0x2c0] sm:$0xff]
      %v234 = vld [vmem:[%s1 + $0x2c8] sm:$0xff]
      %v235 = vld [vmem:[%s1 + $0x2d0] sm:$0xff]
      %v236 = vld [vmem:[%s1 + $0x2d8] sm:$0xff]
      %v237 = vld [vmem:[%s1 + $0x2e0] sm:$0xff]
      %v238 = vld [vmem:[%s1 + $0x2e8] sm:$0xff]
      %v239 = vld [vmem:[%s1 + $0x2f0] sm:$0xff]
      %v240 = vld [vmem:[%s1 + $0x2f8] sm:$0xff]
      %v241 = vld [vmem:[%s1 + $0x300] sm:$0xff]
      %v242 = vld [vmem:[%s1 + $0x308] sm:$0xff]
      %v243 = vld [vmem:[%s1 + $0x310] sm:$0xff]
      %v244 = vld [vmem:[%s1 + $0x318] sm:$0xff]
      %v245 = vld [vmem:[%s1 + $0x320] sm:$0xff]
      %v246 = vld [vmem:[%s1 + $0x328] sm:$0xff]
      %v247 = vld [vmem:[%s1 + $0x330] sm:$0xff]
      %v248 = vld [vmem:[%s1 + $0x338] sm:$0xff]
      %v249 = vld [vmem:[%s1 + $0x340] sm:$0xff]
      %v250 = vld [vmem:[%s1 + $0x348] sm:$0xff]
      %v251 = vld [vmem:[%s1 + $0x350] sm:$0xff]
      %v252 = vld [vmem:[%s1 + $0x358] sm:$0xff]
      %v253 = vld [vmem:[%s1 + $0x360] sm:$0xff]
      %v254 = vld [vmem:[%s1 + $0x368] sm:$0xff]
      %v255 = vld [vmem:[%s1 + $0x370] sm:$0xff]
      %v256 = vld [vmem:[%s1 + $0x378] sm:$0xff]
      %v257 = vld [vmem:[%s1 + $0x380] sm:$0xff]
      %v258 = vld [vmem:[%s1 + $0x388] sm:$0xff]
      %v259 = vld [vmem:[%s1 + $0x390] sm:$0xff]
      %v260 = vld [vmem:[%s1 + $0x398] sm:$0xff]
      %v261 = vld [vmem:[%s1 + $0x3a0] sm:$0xff]
      %v262 = vld [vmem:[%s1 + $0x3a8] sm:$0xff]
      %v263 = vld [vmem:[%s1 + $0x3b0] sm:$0xff]
      %v264 = vld [vmem:[%s1 + $0x3b8] sm:$0xff]
      %v265 = vld [vmem:[%s1 + $0x3c0] sm:$0xff]
      %v266 = vld [vmem:[%s1 + $0x3c8] sm:$0xff]
      %v267 = vld [vmem:[%s1 + $0x3d0] sm:$0xff]
      %v268 = vld [vmem:[%s1 + $0x3d8] sm:$0xff]
      %v269 = vld [vmem:[%s1 + $0x3e0] sm:$0xff]
      %v270 = vld [vmem:[%s1 + $0x3e8] sm:$0xff]
      %v271 = vld [vmem:[%s1 + $0x3f0] sm:$0xff]
      %v272 = vld [vmem:[%s1 + $0x3f8] sm:$0xff]
      %v274 = vunpack.c.l.b16 %v144
      %v275 = vunpack.c.h.b16 %v144
      %v276 = vpack.c.b16 %v274, %v274
      %v277 = vpack.c.b16 %v275, %v275
      %v408 = vunpack.c.l.b16 %v145
      %v409 = vunpack.c.h.b16 %v145
      %v410 = vunpack.c.l.b16 %v146
      %v411 = vunpack.c.h.b16 %v146
      %v412 = vunpack.c.l.b16 %v147
      %v413 = vunpack.c.h.b16 %v147
      %v414 = vunpack.c.l.b16 %v148
      %v415 = vunpack.c.h.b16 %v148
      %v416 = vunpack.c.l.b16 %v149
      %v417 = vunpack.c.h.b16 %v149
      %v418 = vunpack.c.l.b16 %v150
      %v419 = vunpack.c.h.b16 %v150
      %v420 = vunpack.c.l.b16 %v151
      %v421 = vunpack.c.h.b16 %v151
      %v422 = vunpack.c.l.b16 %v152
      %v423 = vunpack.c.h.b16 %v152
      %v424 = vunpack.c.l.b16 %v153
      %v425 = vunpack.c.h.b16 %v153
      %v426 = vunpack.c.l.b16 %v154
      %v427 = vunpack.c.h.b16 %v154
      %v428 = vunpack.c.l.b16 %v155
      %v429 = vunpack.c.h.b16 %v155
      %v430 = vunpack.c.l.b16 %v156
      %v431 = vunpack.c.h.b16 %v156
      %v432 = vunpack.c.l.b16 %v157
      %v433 = vunpack.c.h.b16 %v157
      %v434 = vunpack.c.l.b16 %v158
      %v435 = vunpack.c.h.b16 %v158
      %v436 = vunpack.c.l.b16 %v159
      %v437 = vunpack.c.h.b16 %v159
      %v438 = vunpack.c.l.b16 %v160
      %v439 = vunpack.c.h.b16 %v160
      %v440 = vunpack.c.l.b16 %v161
      %v441 = vunpack.c.h.b16 %v161
      %v442 = vunpack.c.l.b16 %v162
      %v443 = vunpack.c.h.b16 %v162
      %v444 = vunpack.c.l.b16 %v163
      %v445 = vunpack.c.h.b16 %v163
      %v446 = vunpack.c.l.b16 %v164
      %v447 = vunpack.c.h.b16 %v164
      %v448 = vunpack.c.l.b16 %v165
      %v449 = vunpack.c.h.b16 %v165
      %v450 = vunpack.c.l.b16 %v166
      %v451 = vunpack.c.h.b16 %v166
      %v452 = vunpack.c.l.b16 %v167
      %v453 = vunpack.c.h.b16 %v167
      %v454 = vunpack.c.l.b16 %v168
      %v455 = vunpack.c.h.b16 %v168
      %v456 = vunpack.c.l.b16 %v169
      %v457 = vunpack.c.h.b16 %v169
      %v458 = vunpack.c.l.b16 %v170
      %v459 = vunpack.c.h.b16 %v170
      %v460 = vunpack.c.l.b16 %v171
      %v461 = vunpack.c.h.b16 %v171
      %v462 = vunpack.c.l.b16 %v172
      %v463 = vunpack.c.h.b16 %v172
      %v464 = vunpack.c.l.b16 %v173
      %v465 = vunpack.c.h.b16 %v173
      %v466 = vunpack.c.l.b16 %v174
      %v467 = vunpack.c.h.b16 %v174
      %v468 = vunpack.c.l.b16 %v175
      %v469 = vunpack.c.h.b16 %v175
      %v470 = vunpack.c.l.b16 %v176
      %v471 = vunpack.c.h.b16 %v176
      %v472 = vunpack.c.l.b16 %v177
      %v473 = vunpack.c.h.b16 %v177
      %v474 = vunpack.c.l.b16 %v178
      %v475 = vunpack.c.h.b16 %v178
      %v476 = vunpack.c.l.b16 %v179
      %v477 = vunpack.c.h.b16 %v179
      %v478 = vunpack.c.l.b16 %v180
      %v479 = vunpack.c.h.b16 %v180
      %v480 = vunpack.c.l.b16 %v181
      %v481 = vunpack.c.h.b16 %v181
      %v482 = vunpack.c.l.b16 %v182
      %v483 = vunpack.c.h.b16 %v182
      %v484 = vunpack.c.l.b16 %v183
      %v485 = vunpack.c.h.b16 %v183
      %v486 = vunpack.c.l.b16 %v184
      %v487 = vunpack.c.h.b16 %v184
      %v488 = vunpack.c.l.b16 %v185
      %v489 = vunpack.c.h.b16 %v185
      %v490 = vunpack.c.l.b16 %v186
      %v491 = vunpack.c.h.b16 %v186
      %v492 = vunpack.c.l.b16 %v187
      %v493 = vunpack.c.h.b16 %v187
      %v494 = vunpack.c.l.b16 %v188
      %v495 = vunpack.c.h.b16 %v188
      %v496 = vunpack.c.l.b16 %v189
      %v497 = vunpack.c.h.b16 %v189
      %v498 = vunpack.c.l.b16 %v190
      %v499 = vunpack.c.h.b16 %v190
      %v500 = vunpack.c.l.b16 %v191
      %v501 = vunpack.c.h.b16 %v191
      %v502 = vunpack.c.l.b16 %v192
      %v503 = vunpack.c.h.b16 %v192
      %v504 = vunpack.c.l.b16 %v193
      %v505 = vunpack.c.h.b16 %v193
      %v506 = vunpack.c.l.b16 %v194
      %v507 = vunpack.c.h.b16 %v194
      %v508 = vunpack.c.l.b16 %v195
      %v509 = vunpack.c.h.b16 %v195
      %v510 = vunpack.c.l.b16 %v196
      %v511 = vunpack.c.h.b16 %v196
      %v512 = vunpack.c.l.b16 %v197
      %v513 = vunpack.c.h.b16 %v197
      %v514 = vunpack.c.l.b16 %v198
      %v515 = vunpack.c.h.b16 %v198
      %v516 = vunpack.c.l.b16 %v199
      %v517 = vunpack.c.h.b16 %v199
      %v518 = vunpack.c.l.b16 %v200
      %v519 = vunpack.c.h.b16 %v200
      %v520 = vunpack.c.l.b16 %v201
      %v521 = vunpack.c.h.b16 %v201
      %v522 = vunpack.c.l.b16 %v202
      %v523 = vunpack.c.h.b16 %v202
      %v524 = vunpack.c.l.b16 %v203
      %v525 = vunpack.c.h.b16 %v203
      %v526 = vunpack.c.l.b16 %v204
      %v527 = vunpack.c.h.b16 %v204
      %v528 = vunpack.c.l.b16 %v205
      %v529 = vunpack.c.h.b16 %v205
      %v530 = vunpack.c.l.b16 %v206
      %v531 = vunpack.c.h.b16 %v206
      %v532 = vunpack.c.l.b16 %v207
      %v533 = vunpack.c.h.b16 %v207
      %v534 = vunpack.c.l.b16 %v208
      %v535 = vunpack.c.h.b16 %v208
      %v536 = vunpack.c.l.b16 %v209
      %v537 = vunpack.c.h.b16 %v209
      %v538 = vunpack.c.l.b16 %v210
      %v539 = vunpack.c.h.b16 %v210
      %v540 = vunpack.c.l.b16 %v211
      %v541 = vunpack.c.h.b16 %v211
      %v542 = vunpack.c.l.b16 %v212
      %v543 = vunpack.c.h.b16 %v212
      %v544 = vunpack.c.l.b16 %v213
      %v545 = vunpack.c.h.b16 %v213
      %v546 = vunpack.c.l.b16 %v214
      %v547 = vunpack.c.h.b16 %v214
      %v548 = vunpack.c.l.b16 %v215
      %v549 = vunpack.c.h.b16 %v215
      %v550 = vunpack.c.l.b16 %v216
      %v551 = vunpack.c.h.b16 %v216
      %v552 = vunpack.c.l.b16 %v217
      %v553 = vunpack.c.h.b16 %v217
      %v554 = vunpack.c.l.b16 %v218
      %v555 = vunpack.c.h.b16 %v218
      %v556 = vunpack.c.l.b16 %v219
      %v557 = vunpack.c.h.b16 %v219
      %v558 = vunpack.c.l.b16 %v220
      %v559 = vunpack.c.h.b16 %v220
      %v560 = vunpack.c.l.b16 %v221
      %v561 = vunpack.c.h.b16 %v221
      %v562 = vunpack.c.l.b16 %v222
      %v563 = vunpack.c.h.b16 %v222
      %v564 = vunpack.c.l.b16 %v223
      %v565 = vunpack.c.h.b16 %v223
      %v566 = vunpack.c.l.b16 %v224
      %v567 = vunpack.c.h.b16 %v224
      %v568 = vunpack.c.l.b16 %v225
      %v569 = vunpack.c.h.b16 %v225
      %v570 = vunpack.c.l.b16 %v226
      %v571 = vunpack.c.h.b16 %v226
      %v572 = vunpack.c.l.b16 %v227
      %v573 = vunpack.c.h.b16 %v227
      %v574 = vunpack.c.l.b16 %v228
      %v575 = vunpack.c.h.b16 %v228
      %v576 = vunpack.c.l.b16 %v229
      %v577 = vunpack.c.h.b16 %v229
      %v578 = vunpack.c.l.b16 %v230
      %v579 = vunpack.c.h.b16 %v230
      %v580 = vunpack.c.l.b16 %v231
      %v581 = vunpack.c.h.b16 %v231
      %v582 = vunpack.c.l.b16 %v232
      %v583 = vunpack.c.h.b16 %v232
      %v584 = vunpack.c.l.b16 %v233
      %v585 = vunpack.c.h.b16 %v233
      %v586 = vunpack.c.l.b16 %v234
      %v587 = vunpack.c.h.b16 %v234
      %v588 = vunpack.c.l.b16 %v235
      %v589 = vunpack.c.h.b16 %v235
      %v590 = vunpack.c.l.b16 %v236
      %v591 = vunpack.c.h.b16 %v236
      %v592 = vunpack.c.l.b16 %v237
      %v593 = vunpack.c.h.b16 %v237
      %v594 = vunpack.c.l.b16 %v238
      %v595 = vunpack.c.h.b16 %v238
      %v596 = vunpack.c.l.b16 %v239
      %v597 = vunpack.c.h.b16 %v239
      %v598 = vunpack.c.l.b16 %v240
      %v599 = vunpack.c.h.b16 %v240
      %v600 = vunpack.c.l.b16 %v241
      %v601 = vunpack.c.h.b16 %v241
      %v602 = vunpack.c.l.b16 %v242
      %v603 = vunpack.c.h.b16 %v242
      %v604 = vunpack.c.l.b16 %v243
      %v605 = vunpack.c.h.b16 %v243
      %v606 = vunpack.c.l.b16 %v244
      %v607 = vunpack.c.h.b16 %v244
      %v608 = vunpack.c.l.b16 %v245
      %v609 = vunpack.c.h.b16 %v245
      %v610 = vunpack.c.l.b16 %v246
      %v611 = vunpack.c.h.b16 %v246
      %v612 = vunpack.c.l.b16 %v247
      %v613 = vunpack.c.h.b16 %v247
      %v614 = vunpack.c.l.b16 %v248
      %v615 = vunpack.c.h.b16 %v248
      %v616 = vunpack.c.l.b16 %v249
      %v617 = vunpack.c.h.b16 %v249
      %v618 = vunpack.c.l.b16 %v250
      %v619 = vunpack.c.h.b16 %v250
      %v620 = vunpack.c.l.b16 %v251
      %v621 = vunpack.c.h.b16 %v251
      %v622 = vunpack.c.l.b16 %v252
      %v623 = vunpack.c.h.b16 %v252
      %v624 = vunpack.c.l.b16 %v253
      %v625 = vunpack.c.h.b16 %v253
      %v626 = vunpack.c.l.b16 %v254
      %v627 = vunpack.c.h.b16 %v254
      %v628 = vunpack.c.l.b16 %v255
      %v629 = vunpack.c.h.b16 %v255
      %v630 = vunpack.c.l.b16 %v256
      %v631 = vunpack.c.h.b16 %v256
      %v632 = vunpack.c.l.b16 %v257
      %v633 = vunpack.c.h.b16 %v257
      %v634 = vunpack.c.l.b16 %v258
      %v635 = vunpack.c.h.b16 %v258
      %v636 = vunpack.c.l.b16 %v259
      %v637 = vunpack.c.h.b16 %v259
      %v638 = vunpack.c.l.b16 %v260
      %v639 = vunpack.c.h.b16 %v260
      %v640 = vunpack.c.l.b16 %v261
      %v641 = vunpack.c.h.b16 %v261
      %v642 = vunpack.c.l.b16 %v262
      %v643 = vunpack.c.h.b16 %v262
      %v644 = vunpack.c.l.b16 %v263
      %v645 = vunpack.c.h.b16 %v263
      %v646 = vunpack.c.l.b16 %v264
      %v647 = vunpack.c.h.b16 %v264
      %v648 = vunpack.c.l.b16 %v265
      %v649 = vunpack.c.h.b16 %v265
      %v650 = vunpack.c.l.b16 %v266
      %v651 = vunpack.c.h.b16 %v266
      %v652 = vunpack.c.l.b16 %v267
      %v653 = vunpack.c.h.b16 %v267
      %v654 = vunpack.c.l.b16 %v268
      %v655 = vunpack.c.h.b16 %v268
      %v656 = vunpack.c.l.b16 %v269
      %v657 = vunpack.c.h.b16 %v269
      %v658 = vunpack.c.l.b16 %v270
      %v659 = vunpack.c.h.b16 %v270
      %v660 = vunpack.c.l.b16 %v271
      %v661 = vunpack.c.h.b16 %v271
      %v662 = vunpack.c.l.b16 %v272
      %v663 = vunpack.c.h.b16 %v272
      %v664 = vpack.c.b16 %v416, %v408
      %v665 = vpack.c.b16 %v417, %v409
      %v666 = vpack.c.b16 %v418, %v410
      %v667 = vpack.c.b16 %v419, %v411
      %v668 = vpack.c.b16 %v420, %v412
      %v669 = vpack.c.b16 %v421, %v413
      %v670 = vpack.c.b16 %v422, %v414
      %v671 = vpack.c.b16 %v423, %v415
      %v672 = vpack.c.b16 %v432, %v424
      %v673 = vpack.c.b16 %v433, %v425
      %v674 = vpack.c.b16 %v434, %v426
      %v675 = vpack.c.b16 %v435, %v427
      %v676 = vpack.c.b16 %v436, %v428
      %v677 = vpack.c.b16 %v437, %v429
      %v678 = vpack.c.b16 %v438, %v430
      %v679 = vpack.c.b16 %v439, %v431
      %v680 = vpack.c.b16 %v448, %v440
      %v681 = vpack.c.b16 %v449, %v441
      %v682 = vpack.c.b16 %v450, %v442
      %v683 = vpack.c.b16 %v451, %v443
      %v684 = vpack.c.b16 %v452, %v444
      %v685 = vpack.c.b16 %v453, %v445
      %v686 = vpack.c.b16 %v454, %v446
      %v687 = vpack.c.b16 %v455, %v447
      %v688 = vpack.c.b16 %v464, %v456
      %v689 = vpack.c.b16 %v465, %v457
      %v690 = vpack.c.b16 %v466, %v458
      %v691 = vpack.c.b16 %v467, %v459
      %v692 = vpack.c.b16 %v468, %v460
      %v693 = vpack.c.b16 %v469, %v461
      %v694 = vpack.c.b16 %v470, %v462
      %v695 = vpack.c.b16 %v471, %v463
      %v696 = vpack.c.b16 %v480, %v472
      %v697 = vpack.c.b16 %v481, %v473
      %v698 = vpack.c.b16 %v482, %v474
      %v699 = vpack.c.b16 %v483, %v475
      %v700 = vpack.c.b16 %v484, %v476
      %v701 = vpack.c.b16 %v485, %v477
      %v702 = vpack.c.b16 %v486, %v478
      %v703 = vpack.c.b16 %v487, %v479
      %v704 = vpack.c.b16 %v496, %v488
      %v705 = vpack.c.b16 %v497, %v489
      %v706 = vpack.c.b16 %v498, %v490
      %v707 = vpack.c.b16 %v499, %v491
      %v708 = vpack.c.b16 %v500, %v492
      %v709 = vpack.c.b16 %v501, %v493
      %v710 = vpack.c.b16 %v502, %v494
      %v711 = vpack.c.b16 %v503, %v495
      %v712 = vpack.c.b16 %v512, %v504
      %v713 = vpack.c.b16 %v513, %v505
      %v714 = vpack.c.b16 %v514, %v506
      %v715 = vpack.c.b16 %v515, %v507
      %v716 = vpack.c.b16 %v516, %v508
      %v717 = vpack.c.b16 %v517, %v509
      %v718 = vpack.c.b16 %v518, %v510
      %v719 = vpack.c.b16 %v519, %v511
      %v720 = vpack.c.b16 %v528, %v520
      %v721 = vpack.c.b16 %v529, %v521
      %v722 = vpack.c.b16 %v530, %v522
      %v723 = vpack.c.b16 %v531, %v523
      %v724 = vpack.c.b16 %v532, %v524
      %v725 = vpack.c.b16 %v533, %v525
      %v726 = vpack.c.b16 %v534, %v526
      %v727 = vpack.c.b16 %v535, %v527
      %v728 = vpack.c.b16 %v544, %v536
      %v729 = vpack.c.b16 %v545, %v537
      %v730 = vpack.c.b16 %v546, %v538
      %v731 = vpack.c.b16 %v547, %v539
      %v732 = vpack.c.b16 %v548, %v540
      %v733 = vpack.c.b16 %v549, %v541
      %v734 = vpack.c.b16 %v550, %v542
      %v735 = vpack.c.b16 %v551, %v543
      %v736 = vpack.c.b16 %v560, %v552
      %v737 = vpack.c.b16 %v561, %v553
      %v738 = vpack.c.b16 %v562, %v554
      %v739 = vpack.c.b16 %v563, %v555
      %v740 = vpack.c.b16 %v564, %v556
      %v741 = vpack.c.b16 %v565, %v557
      %v742 = vpack.c.b16 %v566, %v558
      %v743 = vpack.c.b16 %v567, %v559
      %v744 = vpack.c.b16 %v576, %v568
      %v745 = vpack.c.b16 %v577, %v569
      %v746 = vpack.c.b16 %v578, %v570
      %v747 = vpack.c.b16 %v579, %v571
      %v748 = vpack.c.b16 %v580, %v572
      %v749 = vpack.c.b16 %v581, %v573
      %v750 = vpack.c.b16 %v582, %v574
      %v751 = vpack.c.b16 %v583, %v575
      %v752 = vpack.c.b16 %v592, %v584
      %v753 = vpack.c.b16 %v593, %v585
      %v754 = vpack.c.b16 %v594, %v586
      %v755 = vpack.c.b16 %v595, %v587
      %v756 = vpack.c.b16 %v596, %v588
      %v757 = vpack.c.b16 %v597, %v589
      %v758 = vpack.c.b16 %v598, %v590
      %v759 = vpack.c.b16 %v599, %v591
      %v760 = vpack.c.b16 %v608, %v600
      %v761 = vpack.c.b16 %v609, %v601
      %v762 = vpack.c.b16 %v610, %v602
      %v763 = vpack.c.b16 %v611, %v603
      %v764 = vpack.c.b16 %v612, %v604
      %v765 = vpack.c.b16 %v613, %v605
      %v766 = vpack.c.b16 %v614, %v606
      %v767 = vpack.c.b16 %v615, %v607
      %v768 = vpack.c.b16 %v624, %v616
      %v769 = vpack.c.b16 %v625, %v617
      %v770 = vpack.c.b16 %v626, %v618
      %v771 = vpack.c.b16 %v627, %v619
      %v772 = vpack.c.b16 %v628, %v620
      %v773 = vpack.c.b16 %v629, %v621
      %v774 = vpack.c.b16 %v630, %v622
      %v775 = vpack.c.b16 %v631, %v623
      %v776 = vpack.c.b16 %v640, %v632
      %v777 = vpack.c.b16 %v641, %v633
      %v778 = vpack.c.b16 %v642, %v634
      %v779 = vpack.c.b16 %v643, %v635
      %v780 = vpack.c.b16 %v644, %v636
      %v781 = vpack.c.b16 %v645, %v637
      %v782 = vpack.c.b16 %v646, %v638
      %v783 = vpack.c.b16 %v647, %v639
      %v784 = vpack.c.b16 %v656, %v648
      %v785 = vpack.c.b16 %v657, %v649
      %v786 = vpack.c.b16 %v658, %v650
      %v787 = vpack.c.b16 %v659, %v651
      %v788 = vpack.c.b16 %v660, %v652
      %v789 = vpack.c.b16 %v661, %v653
      %v790 = vpack.c.b16 %v662, %v654
      %v791 = vpack.c.b16 %v663, %v655
      %920 = vmatpush.bf16.msra.mxu0 %v720
      %921 = vmatpush.bf16.msra.mxu0 %v712
      %922 = vmatpush.bf16.msra.mxu0 %v704
      %923 = vmatpush.bf16.msra.mxu0 %v696
      %924 = vmatpush.bf16.msra.mxu0 %v688
      %925 = vmatpush.bf16.msra.mxu0 %v680
      %926 = vmatpush.bf16.msra.mxu0 %v672
      %927 = vmatpush.bf16.msra.mxu0 %v664
      %928 = vmatmul.bf16.gmra.mxu0 %v276
      %v929 = vpop.f32.mrf.mxu0
      %v930 = vadd.f32 0.0, %v929
      %v931 = vpop.f32.mrf.mxu0
      %932 = vdwg.mxu0
      %933 = vmatpush.bf16.msra.mxu0 %v784
      %934 = vmatpush.bf16.msra.mxu0 %v776
      %935 = vmatpush.bf16.msra.mxu0 %v768
      %936 = vmatpush.bf16.msra.mxu0 %v760
      %937 = vmatpush.bf16.msra.mxu0 %v752
      %938 = vmatpush.bf16.msra.mxu0 %v744
      %939 = vmatpush.bf16.msra.mxu0 %v736
      %940 = vmatpush.bf16.msra.mxu0 %v728
      %941 = vmatmul.bf16.gmra.mxu0 %v277
      %v942 = vpop.f32.mrf.mxu0
      %v943 = vadd.f32 %v930, %v942
      %v944 = vpop.f32.mrf.mxu0
      %945 = vdwg.mxu0
      %946 = vmatpush.bf16.msra.mxu0 %v721
      %947 = vmatpush.bf16.msra.mxu0 %v713
      %948 = vmatpush.bf16.msra.mxu0 %v705
      %949 = vmatpush.bf16.msra.mxu0 %v697
      %950 = vmatpush.bf16.msra.mxu0 %v689
      %951 = vmatpush.bf16.msra.mxu0 %v681
      %952 = vmatpush.bf16.msra.mxu0 %v673
      %953 = vmatpush.bf16.msra.mxu0 %v665
      %954 = vmatmul.bf16.gmra.mxu0 %v276
      %v955 = vpop.f32.mrf.mxu0
      %v956 = vadd.f32 0.0, %v955
      %v957 = vpop.f32.mrf.mxu0
      %958 = vdwg.mxu0
      %959 = vmatpush.bf16.msra.mxu0 %v785
      %960 = vmatpush.bf16.msra.mxu0 %v777
      %961 = vmatpush.bf16.msra.mxu0 %v769
      %962 = vmatpush.bf16.msra.mxu0 %v761
      %963 = vmatpush.bf16.msra.mxu0 %v753
      %964 = vmatpush.bf16.msra.mxu0 %v745
      %965 = vmatpush.bf16.msra.mxu0 %v737
      %966 = vmatpush.bf16.msra.mxu0 %v729
      %967 = vmatmul.bf16.gmra.mxu0 %v277
      %v968 = vpop.f32.mrf.mxu0
      %v969 = vadd.f32 %v956, %v968
      %v970 = vpop.f32.mrf.mxu0
      %971 = vdwg.mxu0
      %972 = vmatpush.bf16.msra.mxu0 %v722
      %973 = vmatpush.bf16.msra.mxu0 %v714
      %974 = vmatpush.bf16.msra.mxu0 %v706
      %975 = vmatpush.bf16.msra.mxu0 %v698
      %976 = vmatpush.bf16.msra.mxu0 %v690
      %977 = vmatpush.bf16.msra.mxu0 %v682
      %978 = vmatpush.bf16.msra.mxu0 %v674
      %979 = vmatpush.bf16.msra.mxu0 %v666
      %980 = vmatmul.bf16.gmra.mxu0 %v276
      %v981 = vpop.f32.mrf.mxu0
      %v982 = vadd.f32 0.0, %v981
      %v983 = vpop.f32.mrf.mxu0
      %984 = vdwg.mxu0
      %985 = vmatpush.bf16.msra.mxu0 %v786
      %986 = vmatpush.bf16.msra.mxu0 %v778
      %987 = vmatpush.bf16.msra.mxu0 %v770
      %988 = vmatpush.bf16.msra.mxu0 %v762
      %989 = vmatpush.bf16.msra.mxu0 %v754
      %990 = vmatpush.bf16.msra.mxu0 %v746
      %991 = vmatpush.bf16.msra.mxu0 %v738
      %992 = vmatpush.bf16.msra.mxu0 %v730
      %993 = vmatmul.bf16.gmra.mxu0 %v277
      %v994 = vpop.f32.mrf.mxu0
      %v995 = vadd.f32 %v982, %v994
      %v996 = vpop.f32.mrf.mxu0
      %997 = vdwg.mxu0
      %998 = vmatpush.bf16.msra.mxu0 %v723
      %999 = vmatpush.bf16.msra.mxu0 %v715
      %1000 = vmatpush.bf16.msra.mxu0 %v707
      %1001 = vmatpush.bf16.msra.mxu0 %v699
      %1002 = vmatpush.bf16.msra.mxu0 %v691
      %1003 = vmatpush.bf16.msra.mxu0 %v683
      %1004 = vmatpush.bf16.msra.mxu0 %v675
      %1005 = vmatpush.bf16.msra.mxu0 %v667
      %1006 = vmatmul.bf16.gmra.mxu0 %v276
      %v1007 = vpop.f32.mrf.mxu0
      %v1008 = vadd.f32 0.0, %v1007
      %v1009 = vpop.f32.mrf.mxu0
      %1010 = vdwg.mxu0
      %1011 = vmatpush.bf16.msra.mxu0 %v787
      %1012 = vmatpush.bf16.msra.mxu0 %v779
      %1013 = vmatpush.bf16.msra.mxu0 %v771
      %1014 = vmatpush.bf16.msra.mxu0 %v763
      %1015 = vmatpush.bf16.msra.mxu0 %v755
      %1016 = vmatpush.bf16.msra.mxu0 %v747
      %1017 = vmatpush.bf16.msra.mxu0 %v739
      %1018 = vmatpush.bf16.msra.mxu0 %v731
      %1019 = vmatmul.bf16.gmra.mxu0 %v277
      %v1020 = vpop.f32.mrf.mxu0
      %v1021 = vadd.f32 %v1008, %v1020
      %v1022 = vpop.f32.mrf.mxu0
      %1023 = vdwg.mxu0
      %1024 = vmatpush.bf16.msra.mxu0 %v724
      %1025 = vmatpush.bf16.msra.mxu0 %v716
      %1026 = vmatpush.bf16.msra.mxu0 %v708
      %1027 = vmatpush.bf16.msra.mxu0 %v700
      %1028 = vmatpush.bf16.msra.mxu0 %v692
      %1029 = vmatpush.bf16.msra.mxu0 %v684
      %1030 = vmatpush.bf16.msra.mxu0 %v676
      %1031 = vmatpush.bf16.msra.mxu0 %v668
      %1032 = vmatmul.bf16.gmra.mxu0 %v276
      %v1033 = vpop.f32.mrf.mxu0
      %v1034 = vadd.f32 0.0, %v1033
      %v1035 = vpop.f32.mrf.mxu0
      %1036 = vdwg.mxu0
      %1037 = vmatpush.bf16.msra.mxu0 %v788
      %1038 = vmatpush.bf16.msra.mxu0 %v780
      %1039 = vmatpush.bf16.msra.mxu0 %v772
      %1040 = vmatpush.bf16.msra.mxu0 %v764
      %1041 = vmatpush.bf16.msra.mxu0 %v756
      %1042 = vmatpush.bf16.msra.mxu0 %v748
      %1043 = vmatpush.bf16.msra.mxu0 %v740
      %1044 = vmatpush.bf16.msra.mxu0 %v732
      %1045 = vmatmul.bf16.gmra.mxu0 %v277
      %v1046 = vpop.f32.mrf.mxu0
      %v1047 = vadd.f32 %v1034, %v1046
      %v1048 = vpop.f32.mrf.mxu0
      %1049 = vdwg.mxu0
      %1050 = vmatpush.bf16.msra.mxu0 %v725
      %1051 = vmatpush.bf16.msra.mxu0 %v717
      %1052 = vmatpush.bf16.msra.mxu0 %v709
      %1053 = vmatpush.bf16.msra.mxu0 %v701
      %1054 = vmatpush.bf16.msra.mxu0 %v693
      %1055 = vmatpush.bf16.msra.mxu0 %v685
      %1056 = vmatpush.bf16.msra.mxu0 %v677
      %1057 = vmatpush.bf16.msra.mxu0 %v669
      %1058 = vmatmul.bf16.gmra.mxu0 %v276
      %v1059 = vpop.f32.mrf.mxu0
      %v1060 = vadd.f32 0.0, %v1059
      %v1061 = vpop.f32.mrf.mxu0
      %1062 = vdwg.mxu0
      %1063 = vmatpush.bf16.msra.mxu0 %v789
      %1064 = vmatpush.bf16.msra.mxu0 %v781
      %1065 = vmatpush.bf16.msra.mxu0 %v773
      %1066 = vmatpush.bf16.msra.mxu0 %v765
      %1067 = vmatpush.bf16.msra.mxu0 %v757
      %1068 = vmatpush.bf16.msra.mxu0 %v749
      %1069 = vmatpush.bf16.msra.mxu0 %v741
      %1070 = vmatpush.bf16.msra.mxu0 %v733
      %1071 = vmatmul.bf16.gmra.mxu0 %v277
      %v1072 = vpop.f32.mrf.mxu0
      %v1073 = vadd.f32 %v1060, %v1072
      %v1074 = vpop.f32.mrf.mxu0
      %1075 = vdwg.mxu0
      %1076 = vmatpush.bf16.msra.mxu0 %v726
      %1077 = vmatpush.bf16.msra.mxu0 %v718
      %1078 = vmatpush.bf16.msra.mxu0 %v710
      %1079 = vmatpush.bf16.msra.mxu0 %v702
      %1080 = vmatpush.bf16.msra.mxu0 %v694
      %1081 = vmatpush.bf16.msra.mxu0 %v686
      %1082 = vmatpush.bf16.msra.mxu0 %v678
      %1083 = vmatpush.bf16.msra.mxu0 %v670
      %1084 = vmatmul.bf16.gmra.mxu0 %v276
      %v1085 = vpop.f32.mrf.mxu0
      %v1086 = vadd.f32 0.0, %v1085
      %v1087 = vpop.f32.mrf.mxu0
      %1088 = vdwg.mxu0
      %1089 = vmatpush.bf16.msra.mxu0 %v790
      %1090 = vmatpush.bf16.msra.mxu0 %v782
      %1091 = vmatpush.bf16.msra.mxu0 %v774
      %1092 = vmatpush.bf16.msra.mxu0 %v766
      %1093 = vmatpush.bf16.msra.mxu0 %v758
      %1094 = vmatpush.bf16.msra.mxu0 %v750
      %1095 = vmatpush.bf16.msra.mxu0 %v742
      %1096 = vmatpush.bf16.msra.mxu0 %v734
      %1097 = vmatmul.bf16.gmra.mxu0 %v277
      %v1098 = vpop.f32.mrf.mxu0
      %v1099 = vadd.f32 %v1086, %v1098
      %v1100 = vpop.f32.mrf.mxu0
      %1101 = vdwg.mxu0
      %1102 = vmatpush.bf16.msra.mxu0 %v727
      %1103 = vmatpush.bf16.msra.mxu0 %v719
      %1104 = vmatpush.bf16.msra.mxu0 %v711
      %1105 = vmatpush.bf16.msra.mxu0 %v703
      %1106 = vmatpush.bf16.msra.mxu0 %v695
      %1107 = vmatpush.bf16.msra.mxu0 %v687
      %1108 = vmatpush.bf16.msra.mxu0 %v679
      %1109 = vmatpush.bf16.msra.mxu0 %v671
      %1110 = vmatmul.bf16.gmra.mxu0 %v276
      %v1111 = vpop.f32.mrf.mxu0
      %v1112 = vadd.f32 0.0, %v1111
      %v1113 = vpop.f32.mrf.mxu0
      %1114 = vdwg.mxu0
      %1115 = vmatpush.bf16.msra.mxu0 %v791
      %1116 = vmatpush.bf16.msra.mxu0 %v783
      %1117 = vmatpush.bf16.msra.mxu0 %v775
      %1118 = vmatpush.bf16.msra.mxu0 %v767
      %1119 = vmatpush.bf16.msra.mxu0 %v759
      %1120 = vmatpush.bf16.msra.mxu0 %v751
      %1121 = vmatpush.bf16.msra.mxu0 %v743
      %1122 = vmatpush.bf16.msra.mxu0 %v735
      %1123 = vmatmul.bf16.gmra.mxu0 %v277
      %v1124 = vpop.f32.mrf.mxu0
      %v1125 = vadd.f32 %v1112, %v1124
      %v1126 = vpop.f32.mrf.mxu0
      %1127 = vdwg.mxu0
      %1128 = vst [vmem:[%s143] sm:$0xff] %v943
      %1129 = vst [vmem:[%s143 + $0x8] sm:$0xff] %v969
      %1130 = vst [vmem:[%s143 + $0x10] sm:$0xff] %v995
      %1131 = vst [vmem:[%s143 + $0x18] sm:$0xff] %v1021
      %1132 = vst [vmem:[%s143 + $0x20] sm:$0xff] %v1047
      %1133 = vst [vmem:[%s143 + $0x28] sm:$0xff] %v1073
      %1134 = vst [vmem:[%s143 + $0x30] sm:$0xff] %v1099
      %1135 = vst [vmem:[%s143 + $0x38] sm:$0xff] %v1125
      %p1136 = scmp.lt.s32.totalorder %s13, 1
      %s1137 = scalar_select %p1136, %s13, 1
      %s1138 = smul.addr %s1137, 8
      %s1139 = smul.addr %s1138, 8
      %s1140 = scalar_lea.vmem %s2, %s1139
      // Predicated region
      $region29: #{conv_autoencoder_forward.12} parent=27 // pred_check
        %p1141 = pneg %p78
      $region30: #{conv_autoencoder_forward.12} parent=27 // pred_check_branch
        %1143 = sbr.rel (%p1141) target = $region32
      $region31: #{conv_autoencoder_forward.12} parent=27 // pred_region
        _
      $region32: #{conv_autoencoder_forward.12} parent=27 // pred_fallthru
        _
    $region28: #{conv_autoencoder_forward.12} parent=5 // pred_fallthru
      _
    %p1144 = scmp.le.s32.totalorder 2, %s8
    // Predicated region
    $region33: #{conv_autoencoder_forward.12} parent=5 // pred_check
      %p1145 = pneg %p1144
    $region34: #{conv_autoencoder_forward.12} parent=5 // pred_check_branch
      %1147 = sbr.rel (%p1145) target = $region36
    $region35: #{conv_autoencoder_forward.12} parent=5 // pred_region
      %s1148 = ssub.s32 %s8, 2
      // Predicated region
      $region37: #{conv_autoencoder_forward.12} parent=35 // pred_check
        %p1149 = pneg %p84
      $region38: #{conv_autoencoder_forward.12} parent=35 // pred_check_branch
        %1151 = sbr.rel (%p1149) target = $region40
      $region39: #{conv_autoencoder_forward.12} parent=35 // pred_region
        %p1152 = scmp.lt.s32.totalorder %s14, 1
        %s1153 = scalar_select %p1152, %s14, 1
        %s1154 = smul.addr %s1153, 8
        %s1155 = smul.addr %s1154, 8
        %s1156 = scalar_lea.vmem %s2, %s1155
      $region40: #{conv_autoencoder_forward.12} parent=35 // pred_fallthru
        _
    $region36: #{conv_autoencoder_forward.12} parent=5 // pred_fallthru
      _
  $region6: #{conv_autoencoder_forward.12} parent=0 // loop_footer
    %s12 = sadd.s32 1, %s8
  $region7: #{conv_autoencoder_forward.12} parent=0 // loop_footer_branch
    %7 = sbr.rel target = $region3
  $region8: #{conv_autoencoder_forward.12} parent=0 // loop_exit
    _

// kernel: conv_autoencoder_forward.13
$region0: #{conv_autoencoder_forward.13}
  #allocation0 [shape = 'u32[]', space=smem, size = 0x4, offset = 0x4, fixed_abs, tag = 'smem constant byte address 0x4 - core index']
  #allocation1 [shape = 'u32[72,128]{1,0:T(1,128)}', space=vmem, size = 0x9000, scoped, tag = 'internal scratch']
  %s0 = inlined_call_operand.vmem [shape: bf16[8,2688], index: 0, kind: input, shape index: {}]
  %s1 = inlined_call_operand.vmem [shape: bf16[9,3,8], index: 1, kind: input, shape index: {}]
  %s2 = inlined_call_operand.vmem [shape: f32[3,1], index: 2, kind: input, shape index: {}]
  %s3 = inlined_call_operand.vmem [shape: f32[3,2560], index: 3, kind: output, shape index: {}]
  %s4 = sld [smem:[#allocation0]]
  $region45: #{conv_autoencoder_forward.13} parent=0
    _
  %s6 = ssub.s32 1, %s4
  %s7 = scalar_select 0, %s6, %s4
  loop: start=0, step=1, limit=6
  $region2: #{conv_autoencoder_forward.13} parent=0 // loop_pre_header
    _
  $region3: #{conv_autoencoder_forward.13} parent=0 // loop_header
    %s9 = sphi 0, %s13
    %p10 = scmp.ge.s32.totalorder %s9, 6
    %s17 = sphi 0, %s17
    %s19 = sphi 0, %s17
    %s20 = sphi 0, %s19
    %s34 = sphi 0, %s20
    %s38 = sphi 0, %s38
    %s40 = sphi 0, %s38
    %s41 = sphi 0, %s40
    %s55 = sphi 0, %s41
    %s59 = sphi 0, %s59
    %s61 = sphi 0, %s59
    %s62 = sphi 0, %s61
    %s76 = sphi 0, %s62
    %s82 = sphi 0, %s84
    %s85 = sphi 0, %s82
    %s86 = sphi 0, %s85
    %s102 = sphi 0, %s86
  $region4: #{conv_autoencoder_forward.13} parent=0 // loop_header_branch
    %12 = sbr.rel (%p10) target = $region8
  $region5: #{conv_autoencoder_forward.13} parent=0 // loop_body
    %s14 = ssub.s32 %s9, 1
    %s15 = ssub.s32 %s9, 2
    %s16 = sadd.s32 %s9, 1
    %s18 = sadd.s32 %s17, 1
    %p21 = scmp.eq.s32.totalorder %s9, 3
    %p22 = scmp.ne.s32.totalorder %s17, %s19
    %p23 = scmp.eq.s32.totalorder %s9, 0
    %p24 = por %p22, %p23
    %p25 = scmp.ne.s32.totalorder %s17, %s19
    %p26 = scmp.eq.s32.totalorder %s14, 3
    %p27 = por %p25, %p26
    %p28 = scmp.ne.s32.totalorder %s19, %s20
    %p29 = scmp.eq.s32.totalorder %s14, 0
    %p30 = por %p28, %p29
    %p31 = scmp.ne.s32.totalorder %s19, %s20
    %p32 = scmp.eq.s32.totalorder %s15, 3
    %p33 = por %p31, %p32
    %p35 = scmp.ne.s32.totalorder %s20, %s34
    %p36 = scmp.eq.s32.totalorder %s15, 0
    %p37 = por %p35, %p36
    %s39 = sadd.s32 %s38, 1
    %p42 = scmp.eq.s32.totalorder %s9, 3
    %p43 = scmp.ne.s32.totalorder %s38, %s40
    %p44 = scmp.eq.s32.totalorder %s9, 0
    %p45 = por %p43, %p44
    %p46 = scmp.ne.s32.totalorder %s38, %s40
    %p47 = scmp.eq.s32.totalorder %s14, 3
    %p48 = por %p46, %p47
    %p49 = scmp.ne.s32.totalorder %s40, %s41
    %p50 = scmp.eq.s32.totalorder %s14, 0
    %p51 = por %p49, %p50
    %p52 = scmp.ne.s32.totalorder %s40, %s41
    %p53 = scmp.eq.s32.totalorder %s15, 3
    %p54 = por %p52, %p53
    %p56 = scmp.ne.s32.totalorder %s41, %s55
    %p57 = scmp.eq.s32.totalorder %s15, 0
    %p58 = por %p56, %p57
    %s60 = sadd.s32 %s59, 1
    %p63 = scmp.eq.s32.totalorder %s9, 3
    %p64 = scmp.ne.s32.totalorder %s59, %s61
    %p65 = scmp.eq.s32.totalorder %s9, 0
    %p66 = por %p64, %p65
    %p67 = scmp.ne.s32.totalorder %s59, %s61
    %p68 = scmp.eq.s32.totalorder %s14, 3
    %p69 = por %p67, %p68
    %p70 = scmp.ne.s32.totalorder %s61, %s62
    %p71 = scmp.eq.s32.totalorder %s14, 0
    %p72 = por %p70, %p71
    %p73 = scmp.ne.s32.totalorder %s61, %s62
    %p74 = scmp.eq.s32.totalorder %s15, 3
    %p75 = por %p73, %p74
    %p77 = scmp.ne.s32.totalorder %s62, %s76
    %p78 = scmp.eq.s32.totalorder %s15, 0
    %p79 = por %p77, %p78
    %s80 = ssub.s32 %s9, %s16
    %p81 = scmp.eq.s32.totalorder %s80, 0
    %s83 = sadd.s32 %s82, 1
    %s84 = scalar_select %p81, %s82, %s83
    %p87 = pneg %p81
    %p88 = scmp.eq.s32.totalorder %s9, 3
    %p89 = por %p87, %p88
    %p90 = scmp.ne.s32.totalorder %s82, %s85
    %p91 = scmp.eq.s32.totalorder %s9, 0
    %p92 = por %p90, %p91
    %p93 = scmp.ne.s32.totalorder %s82, %s85
    %p94 = scmp.eq.s32.totalorder %s14, 3
    %p95 = por %p93, %p94
    %p96 = scmp.ne.s32.totalorder %s85, %s86
    %p97 = scmp.eq.s32.totalorder %s14, 0
    %p98 = por %p96, %p97
    %p99 = scmp.ne.s32.totalorder %s85, %s86
    %p100 = scmp.eq.s32.totalorder %s15, 3
    %p101 = por %p99, %p100
    %p103 = scmp.ne.s32.totalorder %s86, %s102
    %p104 = scmp.eq.s32.totalorder %s15, 0
    %p105 = por %p103, %p104
    %p106 = scmp.le.s32.totalorder 1, %s9
    %p107 = scmp.lt.s32.totalorder %s9, 5
    %p108 = pnand %p106, %p107
    %p109 = pneg %p108
    // Predicated region
    $region9: #{conv_autoencoder_forward.13} parent=5 // pred_check
      _
    $region10: #{conv_autoencoder_forward.13} parent=5 // pred_check_branch
      %111 = sbr.rel (%p108) target = $region12
    $region11: #{conv_autoencoder_forward.13} parent=5 // pred_region
      %s112 = ssub.s32 %s9, 1
      // Predicated region
      $region13: #{conv_autoencoder_forward.13} parent=11 // pred_check
        %p113 = pneg %p30
      $region14: #{conv_autoencoder_forward.13} parent=11 // pred_check_branch
        %115 = sbr.rel (%p113) target = $region16
      $region15: #{conv_autoencoder_forward.13} parent=11 // pred_region
        _
      $region16: #{conv_autoencoder_forward.13} parent=11 // pred_fallthru
        _
      // Predicated region
      $region17: #{conv_autoencoder_forward.13} parent=11 // pred_check
        %p116 = pneg %p51
      $region18: #{conv_autoencoder_forward.13} parent=11 // pred_check_branch
        %118 = sbr.rel (%p116) target = $region20
      $region19: #{conv_autoencoder_forward.13} parent=11 // pred_region
        _
      $region20: #{conv_autoencoder_forward.13} parent=11 // pred_fallthru
        _
      // Predicated region
      $region21: #{conv_autoencoder_forward.13} parent=11 // pred_check
        %p119 = pneg %p72
      $region22: #{conv_autoencoder_forward.13} parent=11 // pred_check_branch
        %121 = sbr.rel (%p119) target = $region24
      $region23: #{conv_autoencoder_forward.13} parent=11 // pred_region
        _
      $region24: #{conv_autoencoder_forward.13} parent=11 // pred_fallthru
        _
    $region12: #{conv_autoencoder_forward.13} parent=5 // pred_fallthru
      _
    %p122 = scmp.lt.s32.totalorder %s9, 4
    // Predicated region
    $region25: #{conv_autoencoder_forward.13} parent=5 // pred_check
      %p123 = pneg %p122
    $region26: #{conv_autoencoder_forward.13} parent=5 // pred_check_branch
      %125 = sbr.rel (%p123) target = $region28
    $region27: #{conv_autoencoder_forward.13} parent=5 // pred_region
      _
    $region28: #{conv_autoencoder_forward.13} parent=5 // pred_fallthru
      _
    %p126 = scmp.le.s32.totalorder 1, %s9
    %p127 = scmp.lt.s32.totalorder %s9, 5
    %p128 = pnand %p126, %p127
    %p129 = pneg %p128
    // Predicated region
    $region29: #{conv_autoencoder_forward.13} parent=5 // pred_check
      _
    $region30: #{conv_autoencoder_forward.13} parent=5 // pred_check_branch
      %131 = sbr.rel (%p128) target = $region32
    $region31: #{conv_autoencoder_forward.13} parent=5 // pred_region
      %s132 = ssub.s32 %s9, 1
      %p133 = pneg %p30
      %p134 = pneg %p27
      %p135 = pneg %p51
      %p136 = pneg %p48
      %p137 = pneg %p72
      %p138 = pneg %p69
      %p139 = pneg %p98
      %p140 = pneg %p95
      %s141 = smul.u32 5, %s14
      %p142 = scmp.lt.s32.totalorder %s141, 19
      %s143 = scalar_select %p142, %s141, 19
      %s144 = smul.addr %s143, 4
      %s145 = scalar_lea.vmem %s3, %s144
      %s146 = smul.u32 5, %s14
      %p147 = scmp.lt.s32.totalorder %s146, 19
      %s148 = scalar_select %p147, %s146, 19
      %s149 = smul.addr %s148, 4
      %s150 = scalar_lea.vmem %s3, %s149
      %s151 = smul.u32 5, %s14
      %s153 = smul.u32 %s14, 640
      %s154 = sshra.s32 %s153, 7
      %s155 = sand.u32 %s153, 127
      %s156 = smul.addr %s154, 4
      %s157 = scalar_lea.vmem %s0, %s156
      %v158 = vld [vmem:[%s157] sm:$0xff]
      %v159 = vld [vmem:[%s157 + $0x8] sm:$0xff]
      %v160 = vld [vmem:[%s157 + $0x10] sm:$0xff]
      %v161 = vld [vmem:[%s1] sm:$0x3]
      %s162 = scalar_lea.vmem %s1, 2
      %v163 = vld [vmem:[%s162] sm:$0x3]
      %v167 = vunpack.c.l.b16 %v158
      %v168 = vunpack.c.h.b16 %v158
      %v169 = vunpack.c.l.b16 %v159
      %v170 = vunpack.c.h.b16 %v159
      %v171 = vunpack.c.l.b16 %v160
      %v172 = vunpack.c.h.b16 %v160
      %v173 = vpack.c.b16 %v167, %v167
      %v174 = vpack.c.b16 %v168, %v168
      %v175 = vpack.c.b16 %v169, %v169
      %v176 = vpack.c.b16 %v170, %v170
      %v177 = vpack.c.b16 %v171, %v171
      %v178 = vpack.c.b16 %v172, %v172
      %179 = vrot.lane.b32.xlu0 %v173, 127
      %v180 = vpop.permute.xlu0 %179
      %181 = vrot.lane.b32.xlu0 %v174, 127
      %v182 = vpop.permute.xlu0 %181
      %183 = vrot.lane.b32.xlu0 %v175, 127
      %v184 = vpop.permute.xlu0 %183
      %185 = vrot.lane.b32.xlu0 %v176, 127
      %v186 = vpop.permute.xlu0 %185
      %187 = vrot.lane.b32.xlu0 %v177, 127
      %v188 = vpop.permute.xlu0 %187
      %189 = vrot.lane.b32.xlu0 %v178, 127
      %v190 = vpop.permute.xlu0 %189
      %vm191 = vcmask 1039360
      %v192 = vsel %vm191, %v180, %v182
      %v193 = vsel %vm191, %v182, %v184
      %v194 = vsel %vm191, %v184, %v186
      %v195 = vsel %vm191, %v186, %v188
      %v196 = vsel %vm191, %v188, %v190
      %vm197 = vcmask 64512
      %v199 = vsel %vm197, %v163, 0
      %vm201 = vcmask 1043456
      %v203 = vsel %vm201, %v192, 0
      %v206 = vsel %vm201, %v193, 0
      %v209 = vsel %vm201, %v194, 0
      %v212 = vsel %vm201, %v195, 0
      %v215 = vsel %vm201, %v196, 0
      %217 = vmatpush.bf16.msra.mxu0 0
      %218 = vmatpush.bf16.msra.mxu0 0
      %219 = vmatpush.bf16.msra.mxu0 0
      %220 = vmatpush.bf16.msra.mxu0 0
      %221 = vmatpush.bf16.msra.mxu0 0
      %222 = vmatpush.bf16.msra.mxu0 0
      %223 = vmatpush.bf16.msra.mxu0 0
      %224 = vmatpush.bf16.msra.mxu0 %v203
      %225 = vmatmul.bf16.gmra.mxu0 %v199
      %v226 = vpop.f32.mrf.mxu0
      %v227 = vadd.f32 0.0, %v226
      %v228 = vpop.f32.mrf.mxu0
      %229 = vdwg.mxu0
      %230 = vmatpush.bf16.msra.mxu0 0
      %231 = vmatpush.bf16.msra.mxu0 0
      %232 = vmatpush.bf16.msra.mxu0 0
      %233 = vmatpush.bf16.msra.mxu0 0
      %234 = vmatpush.bf16.msra.mxu0 0
      %235 = vmatpush.bf16.msra.mxu0 0
      %236 = vmatpush.bf16.msra.mxu0 0
      %237 = vmatpush.bf16.msra.mxu0 %v206
      %238 = vmatmul.bf16.gmra.mxu0 %v199
      %v239 = vpop.f32.mrf.mxu0
      %v240 = vadd.f32 0.0, %v239
      %v241 = vpop.f32.mrf.mxu0
      %242 = vdwg.mxu0
      %243 = vmatpush.bf16.msra.mxu0 0
      %244 = vmatpush.bf16.msra.mxu0 0
      %245 = vmatpush.bf16.msra.mxu0 0
      %246 = vmatpush.bf16.msra.mxu0 0
      %247 = vmatpush.bf16.msra.mxu0 0
      %248 = vmatpush.bf16.msra.mxu0 0
      %249 = vmatpush.bf16.msra.mxu0 0
      %250 = vmatpush.bf16.msra.mxu0 %v209
      %251 = vmatmul.bf16.gmra.mxu0 %v199
      %v252 = vpop.f32.mrf.mxu0
      %v253 = vadd.f32 0.0, %v252
      %v254 = vpop.f32.mrf.mxu0
      %255 = vdwg.mxu0
      %256 = vmatpush.bf16.msra.mxu0 0
      %257 = vmatpush.bf16.msra.mxu0 0
      %258 = vmatpush.bf16.msra.mxu0 0
      %259 = vmatpush.bf16.msra.mxu0 0
      %260 = vmatpush.bf16.msra.mxu0 0
      %261 = vmatpush.bf16.msra.mxu0 0
      %262 = vmatpush.bf16.msra.mxu0 0
      %263 = vmatpush.bf16.msra.mxu0 %v212
      %264 = vmatmul.bf16.gmra.mxu0 %v199
      %v265 = vpop.f32.mrf.mxu0
      %v266 = vadd.f32 0.0, %v265
      %v267 = vpop.f32.mrf.mxu0
      %268 = vdwg.mxu0
      %269 = vmatpush.bf16.msra.mxu0 0
      %270 = vmatpush.bf16.msra.mxu0 0
      %271 = vmatpush.bf16.msra.mxu0 0
      %272 = vmatpush.bf16.msra.mxu0 0
      %273 = vmatpush.bf16.msra.mxu0 0
      %274 = vmatpush.bf16.msra.mxu0 0
      %275 = vmatpush.bf16.msra.mxu0 0
      %276 = vmatpush.bf16.msra.mxu0 %v215
      %277 = vmatmul.bf16.gmra.mxu0 %v199
      %v278 = vpop.f32.mrf.mxu0
      %v279 = vadd.f32 0.0, %v278
      %v280 = vpop.f32.mrf.mxu0
      %281 = vdwg.mxu0
      %v283 = vsel %vm197, %v161, 0
      %v286 = vsel %vm201, %v173, 0
      %v289 = vsel %vm201, %v174, 0
      %v292 = vsel %vm201, %v175, 0
      %v295 = vsel %vm201, %v176, 0
      %v298 = vsel %vm201, %v177, 0
      %300 = vmatpush.bf16.msra.mxu0 0
      %301 = vmatpush.bf16.msra.mxu0 0
      %302 = vmatpush.bf16.msra.mxu0 0
      %303 = vmatpush.bf16.msra.mxu0 0
      %304 = vmatpush.bf16.msra.mxu0 0
      %305 = vmatpush.bf16.msra.mxu0 0
      %306 = vmatpush.bf16.msra.mxu0 0
      %307 = vmatpush.bf16.msra.mxu0 %v286
      %308 = vmatmul.bf16.gmra.mxu0 %v283
      %v309 = vpop.f32.mrf.mxu0
      %v310 = vadd.f32 %v227, %v309
      %v311 = vpop.f32.mrf.mxu0
      %312 = vdwg.mxu0
      %313 = vmatpush.bf16.msra.mxu0 0
      %314 = vmatpush.bf16.msra.mxu0 0
      %315 = vmatpush.bf16.msra.mxu0 0
      %316 = vmatpush.bf16.msra.mxu0 0
      %317 = vmatpush.bf16.msra.mxu0 0
      %318 = vmatpush.bf16.msra.mxu0 0
      %319 = vmatpush.bf16.msra.mxu0 0
      %320 = vmatpush.bf16.msra.mxu0 %v289
      %321 = vmatmul.bf16.gmra.mxu0 %v283
      %v322 = vpop.f32.mrf.mxu0
      %v323 = vadd.f32 %v240, %v322
      %v324 = vpop.f32.mrf.mxu0
      %325 = vdwg.mxu0
      %326 = vmatpush.bf16.msra.mxu0 0
      %327 = vmatpush.bf16.msra.mxu0 0
      %328 = vmatpush.bf16.msra.mxu0 0
      %329 = vmatpush.bf16.msra.mxu0 0
      %330 = vmatpush.bf16.msra.mxu0 0
      %331 = vmatpush.bf16.msra.mxu0 0
      %332 = vmatpush.bf16.msra.mxu0 0
      %333 = vmatpush.bf16.msra.mxu0 %v292
      %334 = vmatmul.bf16.gmra.mxu0 %v283
      %v335 = vpop.f32.mrf.mxu0
      %v336 = vadd.f32 %v253, %v335
      %v337 = vpop.f32.mrf.mxu0
      %338 = vdwg.mxu0
      %339 = vmatpush.bf16.msra.mxu0 0
      %340 = vmatpush.bf16.msra.mxu0 0
      %341 = vmatpush.bf16.msra.mxu0 0
      %342 = vmatpush.bf16.msra.mxu0 0
      %343 = vmatpush.bf16.msra.mxu0 0
      %344 = vmatpush.bf16.msra.mxu0 0
      %345 = vmatpush.bf16.msra.mxu0 0
      %346 = vmatpush.bf16.msra.mxu0 %v295
      %347 = vmatmul.bf16.gmra.mxu0 %v283
      %v348 = vpop.f32.mrf.mxu0
      %v349 = vadd.f32 %v266, %v348
      %v350 = vpop.f32.mrf.mxu0
      %351 = vdwg.mxu0
      %352 = vmatpush.bf16.msra.mxu0 0
      %353 = vmatpush.bf16.msra.mxu0 0
      %354 = vmatpush.bf16.msra.mxu0 0
      %355 = vmatpush.bf16.msra.mxu0 0
      %356 = vmatpush.bf16.msra.mxu0 0
      %357 = vmatpush.bf16.msra.mxu0 0
      %358 = vmatpush.bf16.msra.mxu0 0
      %359 = vmatpush.bf16.msra.mxu0 %v298
      %360 = vmatmul.bf16.gmra.mxu0 %v283
      %v361 = vpop.f32.mrf.mxu0
      %v362 = vadd.f32 %v279, %v361
      %v363 = vpop.f32.mrf.mxu0
      %364 = vdwg.mxu0
      %s365 = scalar_lea.vmem %s1, 4
      %v366 = vld [vmem:[%s365] sm:$0x3]
      %367 = vrot.lane.b32.xlu0 %v173, 126
      %v368 = vpop.permute.xlu0 %367
      %369 = vrot.lane.b32.xlu0 %v174, 126
      %v370 = vpop.permute.xlu0 %369
      %371 = vrot.lane.b32.xlu0 %v175, 126
      %v372 = vpop.permute.xlu0 %371
      %373 = vrot.lane.b32.xlu0 %v176, 126
      %v374 = vpop.permute.xlu0 %373
      %375 = vrot.lane.b32.xlu0 %v177, 126
      %v376 = vpop.permute.xlu0 %375
      %377 = vrot.lane.b32.xlu0 %v178, 126
      %v378 = vpop.permute.xlu0 %377
      %vm379 = vcmask 1031168
      %v380 = vsel %vm379, %v368, %v370
      %v381 = vsel %vm379, %v370, %v372
      %v382 = vsel %vm379, %v372, %v374
      %v383 = vsel %vm379, %v374, %v376
      %v384 = vsel %vm379, %v376, %v378
      %v386 = vsel %vm197, %v366, 0
      %v389 = vsel %vm201, %v380, 0
      %v392 = vsel %vm201, %v381, 0
      %v395 = vsel %vm201, %v382, 0
      %v398 = vsel %vm201, %v383, 0
      %v401 = vsel %vm201, %v384, 0
      %403 = vmatpush.bf16.msra.mxu0 0
      %404 = vmatpush.bf16.msra.mxu0 0
      %405 = vmatpush.bf16.msra.mxu0 0
      %406 = vmatpush.bf16.msra.mxu0 0
      %407 = vmatpush.bf16.msra.mxu0 0
      %408 = vmatpush.bf16.msra.mxu0 0
      %409 = vmatpush.bf16.msra.mxu0 0
      %410 = vmatpush.bf16.msra.mxu0 %v389
      %411 = vmatmul.bf16.gmra.mxu0 %v386
      %v412 = vpop.f32.mrf.mxu0
      %v413 = vadd.f32 0.0, %v412
      %v414 = vpop.f32.mrf.mxu0
      %415 = vdwg.mxu0
      %416 = vmatpush.bf16.msra.mxu0 0
      %417 = vmatpush.bf16.msra.mxu0 0
      %418 = vmatpush.bf16.msra.mxu0 0
      %419 = vmatpush.bf16.msra.mxu0 0
      %420 = vmatpush.bf16.msra.mxu0 0
      %421 = vmatpush.bf16.msra.mxu0 0
      %422 = vmatpush.bf16.msra.mxu0 0
      %423 = vmatpush.bf16.msra.mxu0 %v392
      %424 = vmatmul.bf16.gmra.mxu0 %v386
      %v425 = vpop.f32.mrf.mxu0
      %v426 = vadd.f32 0.0, %v425
      %v427 = vpop.f32.mrf.mxu0
      %428 = vdwg.mxu0
      %429 = vmatpush.bf16.msra.mxu0 0
      %430 = vmatpush.bf16.msra.mxu0 0
      %431 = vmatpush.bf16.msra.mxu0 0
      %432 = vmatpush.bf16.msra.mxu0 0
      %433 = vmatpush.bf16.msra.mxu0 0
      %434 = vmatpush.bf16.msra.mxu0 0
      %435 = vmatpush.bf16.msra.mxu0 0
      %436 = vmatpush.bf16.msra.mxu0 %v395
      %437 = vmatmul.bf16.gmra.mxu0 %v386
      %v438 = vpop.f32.mrf.mxu0
      %v439 = vadd.f32 0.0, %v438
      %v440 = vpop.f32.mrf.mxu0
      %441 = vdwg.mxu0
      %442 = vmatpush.bf16.msra.mxu0 0
      %443 = vmatpush.bf16.msra.mxu0 0
      %444 = vmatpush.bf16.msra.mxu0 0
      %445 = vmatpush.bf16.msra.mxu0 0
      %446 = vmatpush.bf16.msra.mxu0 0
      %447 = vmatpush.bf16.msra.mxu0 0
      %448 = vmatpush.bf16.msra.mxu0 0
      %449 = vmatpush.bf16.msra.mxu0 %v398
      %450 = vmatmul.bf16.gmra.mxu0 %v386
      %v451 = vpop.f32.mrf.mxu0
      %v452 = vadd.f32 0.0, %v451
      %v453 = vpop.f32.mrf.mxu0
      %454 = vdwg.mxu0
      %455 = vmatpush.bf16.msra.mxu0 0
      %456 = vmatpush.bf16.msra.mxu0 0
      %457 = vmatpush.bf16.msra.mxu0 0
      %458 = vmatpush.bf16.msra.mxu0 0
      %459 = vmatpush.bf16.msra.mxu0 0
      %460 = vmatpush.bf16.msra.mxu0 0
      %461 = vmatpush.bf16.msra.mxu0 0
      %462 = vmatpush.bf16.msra.mxu0 %v401
      %463 = vmatmul.bf16.gmra.mxu0 %v386
      %v464 = vpop.f32.mrf.mxu0
      %v465 = vadd.f32 0.0, %v464
      %v466 = vpop.f32.mrf.mxu0
      %467 = vdwg.mxu0
      %v468 = vadd.f32 %v310, %v413
      %v469 = vadd.f32 %v323, %v426
      %v470 = vadd.f32 %v336, %v439
      %v471 = vadd.f32 %v349, %v452
      %v472 = vadd.f32 %v362, %v465
      %s473 = scalar_lea.vmem %s1, 6
      %v474 = vld [vmem:[%s473] sm:$0x3]
      %475 = vrot.lane.b32.xlu0 %v173, 94
      %v476 = vpop.permute.xlu0 %475
      %477 = vrot.lane.b32.xlu0 %v174, 94
      %v478 = vpop.permute.xlu0 %477
      %479 = vrot.lane.b32.xlu0 %v175, 94
      %v480 = vpop.permute.xlu0 %479
      %481 = vrot.lane.b32.xlu0 %v176, 94
      %v482 = vpop.permute.xlu0 %481
      %483 = vrot.lane.b32.xlu0 %v177, 94
      %v484 = vpop.permute.xlu0 %483
      %485 = vrot.lane.b32.xlu0 %v178, 94
      %v486 = vpop.permute.xlu0 %485
      %vm487 = vcmask 769024
      %v488 = vsel %vm487, %v476, %v478
      %v489 = vsel %vm487, %v478, %v480
      %v490 = vsel %vm487, %v480, %v482
      %v491 = vsel %vm487, %v482, %v484
      %v492 = vsel %vm487, %v484, %v486
      %v494 = vsel %vm197, %v474, 0
      %v497 = vsel %vm201, %v488, 0
      %v500 = vsel %vm201, %v489, 0
      %v503 = vsel %vm201, %v490, 0
      %v506 = vsel %vm201, %v491, 0
      %v509 = vsel %vm201, %v492, 0
      %511 = vmatpush.bf16.msra.mxu0 0
      %512 = vmatpush.bf16.msra.mxu0 0
      %513 = vmatpush.bf16.msra.mxu0 0
      %514 = vmatpush.bf16.msra.mxu0 0
      %515 = vmatpush.bf16.msra.mxu0 0
      %516 = vmatpush.bf16.msra.mxu0 0
      %517 = vmatpush.bf16.msra.mxu0 0
      %518 = vmatpush.bf16.msra.mxu0 %v497
      %519 = vmatmul.bf16.gmra.mxu0 %v494
      %v520 = vpop.f32.mrf.mxu0
      %v521 = vadd.f32 0.0, %v520
      %v522 = vpop.f32.mrf.mxu0
      %523 = vdwg.mxu0
      %524 = vmatpush.bf16.msra.mxu0 0
      %525 = vmatpush.bf16.msra.mxu0 0
      %526 = vmatpush.bf16.msra.mxu0 0
      %527 = vmatpush.bf16.msra.mxu0 0
      %528 = vmatpush.bf16.msra.mxu0 0
      %529 = vmatpush.bf16.msra.mxu0 0
      %530 = vmatpush.bf16.msra.mxu0 0
      %531 = vmatpush.bf16.msra.mxu0 %v500
      %532 = vmatmul.bf16.gmra.mxu0 %v494
      %v533 = vpop.f32.mrf.mxu0
      %v534 = vadd.f32 0.0, %v533
      %v535 = vpop.f32.mrf.mxu0
      %536 = vdwg.mxu0
      %537 = vmatpush.bf16.msra.mxu0 0
      %538 = vmatpush.bf16.msra.mxu0 0
      %539 = vmatpush.bf16.msra.mxu0 0
      %540 = vmatpush.bf16.msra.mxu0 0
      %541 = vmatpush.bf16.msra.mxu0 0
      %542 = vmatpush.bf16.msra.mxu0 0
      %543 = vmatpush.bf16.msra.mxu0 0
      %544 = vmatpush.bf16.msra.mxu0 %v503
      %545 = vmatmul.bf16.gmra.mxu0 %v494
      %v546 = vpop.f32.mrf.mxu0
      %v547 = vadd.f32 0.0, %v546
      %v548 = vpop.f32.mrf.mxu0
      %549 = vdwg.mxu0
      %550 = vmatpush.bf16.msra.mxu0 0
      %551 = vmatpush.bf16.msra.mxu0 0
      %552 = vmatpush.bf16.msra.mxu0 0
      %553 = vmatpush.bf16.msra.mxu0 0
      %554 = vmatpush.bf16.msra.mxu0 0
      %555 = vmatpush.bf16.msra.mxu0 0
      %556 = vmatpush.bf16.msra.mxu0 0
      %557 = vmatpush.bf16.msra.mxu0 %v506
      %558 = vmatmul.bf16.gmra.mxu0 %v494
      %v559 = vpop.f32.mrf.mxu0
      %v560 = vadd.f32 0.0, %v559
      %v561 = vpop.f32.mrf.mxu0
      %562 = vdwg.mxu0
      %563 = vmatpush.bf16.msra.mxu0 0
      %564 = vmatpush.bf16.msra.mxu0 0
      %565 = vmatpush.bf16.msra.mxu0 0
      %566 = vmatpush.bf16.msra.mxu0 0
      %567 = vmatpush.bf16.msra.mxu0 0
      %568 = vmatpush.bf16.msra.mxu0 0
      %569 = vmatpush.bf16.msra.mxu0 0
      %570 = vmatpush.bf16.msra.mxu0 %v509
      %571 = vmatmul.bf16.gmra.mxu0 %v494
      %v572 = vpop.f32.mrf.mxu0
      %v573 = vadd.f32 0.0, %v572
      %v574 = vpop.f32.mrf.mxu0
      %575 = vdwg.mxu0
      %v576 = vadd.f32 %v468, %v521
      %v577 = vadd.f32 %v469, %v534
      %v578 = vadd.f32 %v470, %v547
      %v579 = vadd.f32 %v471, %v560
      %v580 = vadd.f32 %v472, %v573
      %s581 = scalar_lea.vmem %s1, 8
      %v582 = vld [vmem:[%s581] sm:$0x3]
      %583 = vrot.lane.b32.xlu0 %v173, 93
      %v584 = vpop.permute.xlu0 %583
      %585 = vrot.lane.b32.xlu0 %v174, 93
      %v586 = vpop.permute.xlu0 %585
      %587 = vrot.lane.b32.xlu0 %v175, 93
      %v588 = vpop.permute.xlu0 %587
      %589 = vrot.lane.b32.xlu0 %v176, 93
      %v590 = vpop.permute.xlu0 %589
      %591 = vrot.lane.b32.xlu0 %v177, 93
      %v592 = vpop.permute.xlu0 %591
      %593 = vrot.lane.b32.xlu0 %v178, 93
      %v594 = vpop.permute.xlu0 %593
      %vm595 = vcmask 760832
      %v596 = vsel %vm595, %v584, %v586
      %v597 = vsel %vm595, %v586, %v588
      %v598 = vsel %vm595, %v588, %v590
      %v599 = vsel %vm595, %v590, %v592
      %v600 = vsel %vm595, %v592, %v594
      %v602 = vsel %vm197, %v582, 0
      %v605 = vsel %vm201, %v596, 0
      %v608 = vsel %vm201, %v597, 0
      %v611 = vsel %vm201, %v598, 0
      %v614 = vsel %vm201, %v599, 0
      %v617 = vsel %vm201, %v600, 0
      %619 = vmatpush.bf16.msra.mxu0 0
      %620 = vmatpush.bf16.msra.mxu0 0
      %621 = vmatpush.bf16.msra.mxu0 0
      %622 = vmatpush.bf16.msra.mxu0 0
      %623 = vmatpush.bf16.msra.mxu0 0
      %624 = vmatpush.bf16.msra.mxu0 0
      %625 = vmatpush.bf16.msra.mxu0 0
      %626 = vmatpush.bf16.msra.mxu0 %v605
      %627 = vmatmul.bf16.gmra.mxu0 %v602
      %v628 = vpop.f32.mrf.mxu0
      %v629 = vadd.f32 0.0, %v628
      %v630 = vpop.f32.mrf.mxu0
      %631 = vdwg.mxu0
      %632 = vmatpush.bf16.msra.mxu0 0
      %633 = vmatpush.bf16.msra.mxu0 0
      %634 = vmatpush.bf16.msra.mxu0 0
      %635 = vmatpush.bf16.msra.mxu0 0
      %636 = vmatpush.bf16.msra.mxu0 0
      %637 = vmatpush.bf16.msra.mxu0 0
      %638 = vmatpush.bf16.msra.mxu0 0
      %639 = vmatpush.bf16.msra.mxu0 %v608
      %640 = vmatmul.bf16.gmra.mxu0 %v602
      %v641 = vpop.f32.mrf.mxu0
      %v642 = vadd.f32 0.0, %v641
      %v643 = vpop.f32.mrf.mxu0
      %644 = vdwg.mxu0
      %645 = vmatpush.bf16.msra.mxu0 0
      %646 = vmatpush.bf16.msra.mxu0 0
      %647 = vmatpush.bf16.msra.mxu0 0
      %648 = vmatpush.bf16.msra.mxu0 0
      %649 = vmatpush.bf16.msra.mxu0 0
      %650 = vmatpush.bf16.msra.mxu0 0
      %651 = vmatpush.bf16.msra.mxu0 0
      %652 = vmatpush.bf16.msra.mxu0 %v611
      %653 = vmatmul.bf16.gmra.mxu0 %v602
      %v654 = vpop.f32.mrf.mxu0
      %v655 = vadd.f32 0.0, %v654
      %v656 = vpop.f32.mrf.mxu0
      %657 = vdwg.mxu0
      %658 = vmatpush.bf16.msra.mxu0 0
      %659 = vmatpush.bf16.msra.mxu0 0
      %660 = vmatpush.bf16.msra.mxu0 0
      %661 = vmatpush.bf16.msra.mxu0 0
      %662 = vmatpush.bf16.msra.mxu0 0
      %663 = vmatpush.bf16.msra.mxu0 0
      %664 = vmatpush.bf16.msra.mxu0 0
      %665 = vmatpush.bf16.msra.mxu0 %v614
      %666 = vmatmul.bf16.gmra.mxu0 %v602
      %v667 = vpop.f32.mrf.mxu0
      %v668 = vadd.f32 0.0, %v667
      %v669 = vpop.f32.mrf.mxu0
      %670 = vdwg.mxu0
      %671 = vmatpush.bf16.msra.mxu0 0
      %672 = vmatpush.bf16.msra.mxu0 0
      %673 = vmatpush.bf16.msra.mxu0 0
      %674 = vmatpush.bf16.msra.mxu0 0
      %675 = vmatpush.bf16.msra.mxu0 0
      %676 = vmatpush.bf16.msra.mxu0 0
      %677 = vmatpush.bf16.msra.mxu0 0
      %678 = vmatpush.bf16.msra.mxu0 %v617
      %679 = vmatmul.bf16.gmra.mxu0 %v602
      %v680 = vpop.f32.mrf.mxu0
      %v681 = vadd.f32 0.0, %v680
      %v682 = vpop.f32.mrf.mxu0
      %683 = vdwg.mxu0
      %v684 = vadd.f32 %v576, %v629
      %v685 = vadd.f32 %v577, %v642
      %v686 = vadd.f32 %v578, %v655
      %v687 = vadd.f32 %v579, %v668
      %v688 = vadd.f32 %v580, %v681
      %s689 = scalar_lea.vmem %s1, 10
      %v690 = vld [vmem:[%s689] sm:$0x3]
      %691 = vrot.lane.b32.xlu0 %v173, 92
      %v692 = vpop.permute.xlu0 %691
      %693 = vrot.lane.b32.xlu0 %v174, 92
      %v694 = vpop.permute.xlu0 %693
      %695 = vrot.lane.b32.xlu0 %v175, 92
      %v696 = vpop.permute.xlu0 %695
      %697 = vrot.lane.b32.xlu0 %v176, 92
      %v698 = vpop.permute.xlu0 %697
      %699 = vrot.lane.b32.xlu0 %v177, 92
      %v700 = vpop.permute.xlu0 %699
      %701 = vrot.lane.b32.xlu0 %v178, 92
      %v702 = vpop.permute.xlu0 %701
      %vm703 = vcmask 752640
      %v704 = vsel %vm703, %v692, %v694
      %v705 = vsel %vm703, %v694, %v696
      %v706 = vsel %vm703, %v696, %v698
      %v707 = vsel %vm703, %v698, %v700
      %v708 = vsel %vm703, %v700, %v702
      %v710 = vsel %vm197, %v690, 0
      %v713 = vsel %vm201, %v704, 0
      %v716 = vsel %vm201, %v705, 0
      %v719 = vsel %vm201, %v706, 0
      %v722 = vsel %vm201, %v707, 0
      %v725 = vsel %vm201, %v708, 0
      %727 = vmatpush.bf16.msra.mxu0 0
      %728 = vmatpush.bf16.msra.mxu0 0
      %729 = vmatpush.bf16.msra.mxu0 0
      %730 = vmatpush.bf16.msra.mxu0 0
      %731 = vmatpush.bf16.msra.mxu0 0
      %732 = vmatpush.bf16.msra.mxu0 0
      %733 = vmatpush.bf16.msra.mxu0 0
      %734 = vmatpush.bf16.msra.mxu0 %v713
      %735 = vmatmul.bf16.gmra.mxu0 %v710
      %v736 = vpop.f32.mrf.mxu0
      %v737 = vadd.f32 0.0, %v736
      %v738 = vpop.f32.mrf.mxu0
      %739 = vdwg.mxu0
      %740 = vmatpush.bf16.msra.mxu0 0
      %741 = vmatpush.bf16.msra.mxu0 0
      %742 = vmatpush.bf16.msra.mxu0 0
      %743 = vmatpush.bf16.msra.mxu0 0
      %744 = vmatpush.bf16.msra.mxu0 0
      %745 = vmatpush.bf16.msra.mxu0 0
      %746 = vmatpush.bf16.msra.mxu0 0
      %747 = vmatpush.bf16.msra.mxu0 %v716
      %748 = vmatmul.bf16.gmra.mxu0 %v710
      %v749 = vpop.f32.mrf.mxu0
      %v750 = vadd.f32 0.0, %v749
      %v751 = vpop.f32.mrf.mxu0
      %752 = vdwg.mxu0
      %753 = vmatpush.bf16.msra.mxu0 0
      %754 = vmatpush.bf16.msra.mxu0 0
      %755 = vmatpush.bf16.msra.mxu0 0
      %756 = vmatpush.bf16.msra.mxu0 0
      %757 = vmatpush.bf16.msra.mxu0 0
      %758 = vmatpush.bf16.msra.mxu0 0
      %759 = vmatpush.bf16.msra.mxu0 0
      %760 = vmatpush.bf16.msra.mxu0 %v719
      %761 = vmatmul.bf16.gmra.mxu0 %v710
      %v762 = vpop.f32.mrf.mxu0
      %v763 = vadd.f32 0.0, %v762
      %v764 = vpop.f32.mrf.mxu0
      %765 = vdwg.mxu0
      %766 = vmatpush.bf16.msra.mxu0 0
      %767 = vmatpush.bf16.msra.mxu0 0
      %768 = vmatpush.bf16.msra.mxu0 0
      %769 = vmatpush.bf16.msra.mxu0 0
      %770 = vmatpush.bf16.msra.mxu0 0
      %771 = vmatpush.bf16.msra.mxu0 0
      %772 = vmatpush.bf16.msra.mxu0 0
      %773 = vmatpush.bf16.msra.mxu0 %v722
      %774 = vmatmul.bf16.gmra.mxu0 %v710
      %v775 = vpop.f32.mrf.mxu0
      %v776 = vadd.f32 0.0, %v775
      %v777 = vpop.f32.mrf.mxu0
      %778 = vdwg.mxu0
      %779 = vmatpush.bf16.msra.mxu0 0
      %780 = vmatpush.bf16.msra.mxu0 0
      %781 = vmatpush.bf16.msra.mxu0 0
      %782 = vmatpush.bf16.msra.mxu0 0
      %783 = vmatpush.bf16.msra.mxu0 0
      %784 = vmatpush.bf16.msra.mxu0 0
      %785 = vmatpush.bf16.msra.mxu0 0
      %786 = vmatpush.bf16.msra.mxu0 %v725
      %787 = vmatmul.bf16.gmra.mxu0 %v710
      %v788 = vpop.f32.mrf.mxu0
      %v789 = vadd.f32 0.0, %v788
      %v790 = vpop.f32.mrf.mxu0
      %791 = vdwg.mxu0
      %v792 = vadd.f32 %v684, %v737
      %v793 = vadd.f32 %v685, %v750
      %v794 = vadd.f32 %v686, %v763
      %v795 = vadd.f32 %v687, %v776
      %v796 = vadd.f32 %v688, %v789
      %s797 = scalar_lea.vmem %s1, 12
      %v798 = vld [vmem:[%s797] sm:$0x3]
      %799 = vrot.lane.b32.xlu0 %v173, 60
      %v800 = vpop.permute.xlu0 %799
      %801 = vrot.lane.b32.xlu0 %v174, 60
      %v802 = vpop.permute.xlu0 %801
      %803 = vrot.lane.b32.xlu0 %v175, 60
      %v804 = vpop.permute.xlu0 %803
      %805 = vrot.lane.b32.xlu0 %v176, 60
      %v806 = vpop.permute.xlu0 %805
      %807 = vrot.lane.b32.xlu0 %v177, 60
      %v808 = vpop.permute.xlu0 %807
      %809 = vrot.lane.b32.xlu0 %v178, 60
      %v810 = vpop.permute.xlu0 %809
      %vm811 = vcmask 490496
      %v812 = vsel %vm811, %v800, %v802
      %v813 = vsel %vm811, %v802, %v804
      %v814 = vsel %vm811, %v804, %v806
      %v815 = vsel %vm811, %v806, %v808
      %v816 = vsel %vm811, %v808, %v810
      %v818 = vsel %vm197, %v798, 0
      %v821 = vsel %vm201, %v812, 0
      %v824 = vsel %vm201, %v813, 0
      %v827 = vsel %vm201, %v814, 0
      %v830 = vsel %vm201, %v815, 0
      %v833 = vsel %vm201, %v816, 0
      %835 = vmatpush.bf16.msra.mxu0 0
      %836 = vmatpush.bf16.msra.mxu0 0
      %837 = vmatpush.bf16.msra.mxu0 0
      %838 = vmatpush.bf16.msra.mxu0 0
      %839 = vmatpush.bf16.msra.mxu0 0
      %840 = vmatpush.bf16.msra.mxu0 0
      %841 = vmatpush.bf16.msra.mxu0 0
      %842 = vmatpush.bf16.msra.mxu0 %v821
      %843 = vmatmul.bf16.gmra.mxu0 %v818
      %v844 = vpop.f32.mrf.mxu0
      %v845 = vadd.f32 0.0, %v844
      %v846 = vpop.f32.mrf.mxu0
      %847 = vdwg.mxu0
      %848 = vmatpush.bf16.msra.mxu0 0
      %849 = vmatpush.bf16.msra.mxu0 0
      %850 = vmatpush.bf16.msra.mxu0 0
      %851 = vmatpush.bf16.msra.mxu0 0
      %852 = vmatpush.bf16.msra.mxu0 0
      %853 = vmatpush.bf16.msra.mxu0 0
      %854 = vmatpush.bf16.msra.mxu0 0
      %855 = vmatpush.bf16.msra.mxu0 %v824
      %856 = vmatmul.bf16.gmra.mxu0 %v818
      %v857 = vpop.f32.mrf.mxu0
      %v858 = vadd.f32 0.0, %v857
      %v859 = vpop.f32.mrf.mxu0
      %860 = vdwg.mxu0
      %861 = vmatpush.bf16.msra.mxu0 0
      %862 = vmatpush.bf16.msra.mxu0 0
      %863 = vmatpush.bf16.msra.mxu0 0
      %864 = vmatpush.bf16.msra.mxu0 0
      %865 = vmatpush.bf16.msra.mxu0 0
      %866 = vmatpush.bf16.msra.mxu0 0
      %867 = vmatpush.bf16.msra.mxu0 0
      %868 = vmatpush.bf16.msra.mxu0 %v827
      %869 = vmatmul.bf16.gmra.mxu0 %v818
      %v870 = vpop.f32.mrf.mxu0
      %v871 = vadd.f32 0.0, %v870
      %v872 = vpop.f32.mrf.mxu0
      %873 = vdwg.mxu0
      %874 = vmatpush.bf16.msra.mxu0 0
      %875 = vmatpush.bf16.msra.mxu0 0
      %876 = vmatpush.bf16.msra.mxu0 0
      %877 = vmatpush.bf16.msra.mxu0 0
      %878 = vmatpush.bf16.msra.mxu0 0
      %879 = vmatpush.bf16.msra.mxu0 0
      %880 = vmatpush.bf16.msra.mxu0 0
      %881 = vmatpush.bf16.msra.mxu0 %v830
      %882 = vmatmul.bf16.gmra.mxu0 %v818
      %v883 = vpop.f32.mrf.mxu0
      %v884 = vadd.f32 0.0, %v883
      %v885 = vpop.f32.mrf.mxu0
      %886 = vdwg.mxu0
      %887 = vmatpush.bf16.msra.mxu0 0
      %888 = vmatpush.bf16.msra.mxu0 0
      %889 = vmatpush.bf16.msra.mxu0 0
      %890 = vmatpush.bf16.msra.mxu0 0
      %891 = vmatpush.bf16.msra.mxu0 0
      %892 = vmatpush.bf16.msra.mxu0 0
      %893 = vmatpush.bf16.msra.mxu0 0
      %894 = vmatpush.bf16.msra.mxu0 %v833
      %895 = vmatmul.bf16.gmra.mxu0 %v818
      %v896 = vpop.f32.mrf.mxu0
      %v897 = vadd.f32 0.0, %v896
      %v898 = vpop.f32.mrf.mxu0
      %899 = vdwg.mxu0
      %v900 = vadd.f32 %v792, %v845
      %v901 = vadd.f32 %v793, %v858
      %v902 = vadd.f32 %v794, %v871
      %v903 = vadd.f32 %v795, %v884
      %v904 = vadd.f32 %v796, %v897
      %s905 = scalar_lea.vmem %s1, 14
      %v906 = vld [vmem:[%s905] sm:$0x3]
      %907 = vrot.lane.b32.xlu0 %v173, 59
      %v908 = vpop.permute.xlu0 %907
      %909 = vrot.lane.b32.xlu0 %v174, 59
      %v910 = vpop.permute.xlu0 %909
      %911 = vrot.lane.b32.xlu0 %v175, 59
      %v912 = vpop.permute.xlu0 %911
      %913 = vrot.lane.b32.xlu0 %v176, 59
      %v914 = vpop.permute.xlu0 %913
      %915 = vrot.lane.b32.xlu0 %v177, 59
      %v916 = vpop.permute.xlu0 %915
      %917 = vrot.lane.b32.xlu0 %v178, 59
      %v918 = vpop.permute.xlu0 %917
      %vm919 = vcmask 482304
      %v920 = vsel %vm919, %v908, %v910
      %v921 = vsel %vm919, %v910, %v912
      %v922 = vsel %vm919, %v912, %v914
      %v923 = vsel %vm919, %v914, %v916
      %v924 = vsel %vm919, %v916, %v918
      %v926 = vsel %vm197, %v906, 0
      %v929 = vsel %vm201, %v920, 0
      %v932 = vsel %vm201, %v921, 0
      %v935 = vsel %vm201, %v922, 0
      %v938 = vsel %vm201, %v923, 0
      %v941 = vsel %vm201, %v924, 0
      %943 = vmatpush.bf16.msra.mxu0 0
      %944 = vmatpush.bf16.msra.mxu0 0
      %945 = vmatpush.bf16.msra.mxu0 0
      %946 = vmatpush.bf16.msra.mxu0 0
      %947 = vmatpush.bf16.msra.mxu0 0
      %948 = vmatpush.bf16.msra.mxu0 0
      %949 = vmatpush.bf16.msra.mxu0 0
      %950 = vmatpush.bf16.msra.mxu0 %v929
      %951 = vmatmul.bf16.gmra.mxu0 %v926
      %v952 = vpop.f32.mrf.mxu0
      %v953 = vadd.f32 0.0, %v952
      %v954 = vpop.f32.mrf.mxu0
      %955 = vdwg.mxu0
      %956 = vmatpush.bf16.msra.mxu0 0
      %957 = vmatpush.bf16.msra.mxu0 0
      %958 = vmatpush.bf16.msra.mxu0 0
      %959 = vmatpush.bf16.msra.mxu0 0
      %960 = vmatpush.bf16.msra.mxu0 0
      %961 = vmatpush.bf16.msra.mxu0 0
      %962 = vmatpush.bf16.msra.mxu0 0
      %963 = vmatpush.bf16.msra.mxu0 %v932
      %964 = vmatmul.bf16.gmra.mxu0 %v926
      %v965 = vpop.f32.mrf.mxu0
      %v966 = vadd.f32 0.0, %v965
      %v967 = vpop.f32.mrf.mxu0
      %968 = vdwg.mxu0
      %969 = vmatpush.bf16.msra.mxu0 0
      %970 = vmatpush.bf16.msra.mxu0 0
      %971 = vmatpush.bf16.msra.mxu0 0
      %972 = vmatpush.bf16.msra.mxu0 0
      %973 = vmatpush.bf16.msra.mxu0 0
      %974 = vmatpush.bf16.msra.mxu0 0
      %975 = vmatpush.bf16.msra.mxu0 0
      %976 = vmatpush.bf16.msra.mxu0 %v935
      %977 = vmatmul.bf16.gmra.mxu0 %v926
      %v978 = vpop.f32.mrf.mxu0
      %v979 = vadd.f32 0.0, %v978
      %v980 = vpop.f32.mrf.mxu0
      %981 = vdwg.mxu0
      %982 = vmatpush.bf16.msra.mxu0 0
      %983 = vmatpush.bf16.msra.mxu0 0
      %984 = vmatpush.bf16.msra.mxu0 0
      %985 = vmatpush.bf16.msra.mxu0 0
      %986 = vmatpush.bf16.msra.mxu0 0
      %987 = vmatpush.bf16.msra.mxu0 0
      %988 = vmatpush.bf16.msra.mxu0 0
      %989 = vmatpush.bf16.msra.mxu0 %v938
      %990 = vmatmul.bf16.gmra.mxu0 %v926
      %v991 = vpop.f32.mrf.mxu0
      %v992 = vadd.f32 0.0, %v991
      %v993 = vpop.f32.mrf.mxu0
      %994 = vdwg.mxu0
      %995 = vmatpush.bf16.msra.mxu0 0
      %996 = vmatpush.bf16.msra.mxu0 0
      %997 = vmatpush.bf16.msra.mxu0 0
      %998 = vmatpush.bf16.msra.mxu0 0
      %999 = vmatpush.bf16.msra.mxu0 0
      %1000 = vmatpush.bf16.msra.mxu0 0
      %1001 = vmatpush.bf16.msra.mxu0 0
      %1002 = vmatpush.bf16.msra.mxu0 %v941
      %1003 = vmatmul.bf16.gmra.mxu0 %v926
      %v1004 = vpop.f32.mrf.mxu0
      %v1005 = vadd.f32 0.0, %v1004
      %v1006 = vpop.f32.mrf.mxu0
      %1007 = vdwg.mxu0
      %v1008 = vadd.f32 %v900, %v953
      %v1009 = vadd.f32 %v901, %v966
      %v1010 = vadd.f32 %v902, %v979
      %v1011 = vadd.f32 %v903, %v992
      %v1012 = vadd.f32 %v904, %v1005
      %s1013 = scalar_lea.vmem %s1, 16
      %v1014 = vld [vmem:[%s1013] sm:$0x3]
      %1015 = vrot.lane.b32.xlu0 %v173, 58
      %v1016 = vpop.permute.xlu0 %1015
      %1017 = vrot.lane.b32.xlu0 %v174, 58
      %v1018 = vpop.permute.xlu0 %1017
      %1019 = vrot.lane.b32.xlu0 %v175, 58
      %v1020 = vpop.permute.xlu0 %1019
      %1021 = vrot.lane.b32.xlu0 %v176, 58
      %v1022 = vpop.permute.xlu0 %1021
      %1023 = vrot.lane.b32.xlu0 %v177, 58
      %v1024 = vpop.permute.xlu0 %1023
      %1025 = vrot.lane.b32.xlu0 %v178, 58
      %v1026 = vpop.permute.xlu0 %1025
      %vm1027 = vcmask 474112
      %v1028 = vsel %vm1027, %v1016, %v1018
      %v1029 = vsel %vm1027, %v1018, %v1020
      %v1030 = vsel %vm1027, %v1020, %v1022
      %v1031 = vsel %vm1027, %v1022, %v1024
      %v1032 = vsel %vm1027, %v1024, %v1026
      %v1034 = vsel %vm197, %v1014, 0
      %v1037 = vsel %vm201, %v1028, 0
      %v1040 = vsel %vm201, %v1029, 0
      %v1043 = vsel %vm201, %v1030, 0
      %v1046 = vsel %vm201, %v1031, 0
      %v1049 = vsel %vm201, %v1032, 0
      %1051 = vmatpush.bf16.msra.mxu0 0
      %1052 = vmatpush.bf16.msra.mxu0 0
      %1053 = vmatpush.bf16.msra.mxu0 0
      %1054 = vmatpush.bf16.msra.mxu0 0
      %1055 = vmatpush.bf16.msra.mxu0 0
      %1056 = vmatpush.bf16.msra.mxu0 0
      %1057 = vmatpush.bf16.msra.mxu0 0
      %1058 = vmatpush.bf16.msra.mxu0 %v1037
      %1059 = vmatmul.bf16.gmra.mxu0 %v1034
      %v1060 = vpop.f32.mrf.mxu0
      %v1061 = vadd.f32 0.0, %v1060
      %v1062 = vpop.f32.mrf.mxu0
      %1063 = vdwg.mxu0
      %1064 = vmatpush.bf16.msra.mxu0 0
      %1065 = vmatpush.bf16.msra.mxu0 0
      %1066 = vmatpush.bf16.msra.mxu0 0
      %1067 = vmatpush.bf16.msra.mxu0 0
      %1068 = vmatpush.bf16.msra.mxu0 0
      %1069 = vmatpush.bf16.msra.mxu0 0
      %1070 = vmatpush.bf16.msra.mxu0 0
      %1071 = vmatpush.bf16.msra.mxu0 %v1040
      %1072 = vmatmul.bf16.gmra.mxu0 %v1034
      %v1073 = vpop.f32.mrf.mxu0
      %v1074 = vadd.f32 0.0, %v1073
      %v1075 = vpop.f32.mrf.mxu0
      %1076 = vdwg.mxu0
      %1077 = vmatpush.bf16.msra.mxu0 0
      %1078 = vmatpush.bf16.msra.mxu0 0
      %1079 = vmatpush.bf16.msra.mxu0 0
      %1080 = vmatpush.bf16.msra.mxu0 0
      %1081 = vmatpush.bf16.msra.mxu0 0
      %1082 = vmatpush.bf16.msra.mxu0 0
      %1083 = vmatpush.bf16.msra.mxu0 0
      %1084 = vmatpush.bf16.msra.mxu0 %v1043
      %1085 = vmatmul.bf16.gmra.mxu0 %v1034
      %v1086 = vpop.f32.mrf.mxu0
      %v1087 = vadd.f32 0.0, %v1086
      %v1088 = vpop.f32.mrf.mxu0
      %1089 = vdwg.mxu0
      %1090 = vmatpush.bf16.msra.mxu0 0
      %1091 = vmatpush.bf16.msra.mxu0 0
      %1092 = vmatpush.bf16.msra.mxu0 0
      %1093 = vmatpush.bf16.msra.mxu0 0
      %1094 = vmatpush.bf16.msra.mxu0 0
      %1095 = vmatpush.bf16.msra.mxu0 0
      %1096 = vmatpush.bf16.msra.mxu0 0
      %1097 = vmatpush.bf16.msra.mxu0 %v1046
      %1098 = vmatmul.bf16.gmra.mxu0 %v1034
      %v1099 = vpop.f32.mrf.mxu0
      %v1100 = vadd.f32 0.0, %v1099
      %v1101 = vpop.f32.mrf.mxu0
      %1102 = vdwg.mxu0
      %1103 = vmatpush.bf16.msra.mxu0 0
      %1104 = vmatpush.bf16.msra.mxu0 0
      %1105 = vmatpush.bf16.msra.mxu0 0
      %1106 = vmatpush.bf16.msra.mxu0 0
      %1107 = vmatpush.bf16.msra.mxu0 0
      %1108 = vmatpush.bf16.msra.mxu0 0
      %1109 = vmatpush.bf16.msra.mxu0 0
      %1110 = vmatpush.bf16.msra.mxu0 %v1049
      %1111 = vmatmul.bf16.gmra.mxu0 %v1034
      %v1112 = vpop.f32.mrf.mxu0
      %v1113 = vadd.f32 0.0, %v1112
      %v1114 = vpop.f32.mrf.mxu0
      %1115 = vdwg.mxu0
      %v1116 = vadd.f32 %v1008, %v1061
      %v1117 = vadd.f32 %v1009, %v1074
      %v1118 = vadd.f32 %v1010, %v1087
      %v1119 = vadd.f32 %v1011, %v1100
      %v1120 = vadd.f32 %v1012, %v1113
      %v1121 = vld [vmem:[%s2] sm:$0x7]
      %1123 = vset.pattern.permute.xlu0 0
      %1124 = vperm.xlu0 %1123, %v1121
      %v1125 = vpop.permute.xlu0 %1124
      %v1127 = vadd.f32 %v1116, %v1125
      %v1128 = vadd.f32 %v1117, %v1125
      %v1129 = vadd.f32 %v1118, %v1125
      %v1130 = vadd.f32 %v1119, %v1125
      %v1131 = vadd.f32 %v1120, %v1125
      %v1132 = vtanh.pop %v1127
      %v1133 = vtanh.pop %v1128
      %v1134 = vtanh.pop %v1129
      %v1135 = vtanh.pop %v1130
      %v1136 = vtanh.pop %v1131
      %v1141 = vrot.slane %v1133, 4
      %v1142 = vrot.slane %v1135, 4
      %v1143 = vsel %vm201, %v1132, %v1141
      %v1144 = vsel %vm201, %v1134, %v1142
      %1147 = vst [vmem:[%s150] sm:$0x77] %v1143
      %1148 = vst [vmem:[%s150 + $0x8] sm:$0x77] %v1144
      %1149 = vst [vmem:[%s150 + $0x10] sm:$0x7] %v1136
      %s1150 = smul.u32 5, %s14
      %p1151 = scmp.lt.s32.totalorder %s1150, 19
      %s1152 = scalar_select %p1151, %s1150, 19
      %s1153 = smul.addr %s1152, 4
      %s1154 = scalar_lea.vmem %s3, %s1153
      // Predicated region
      $region33: #{conv_autoencoder_forward.13} parent=31 // pred_check
        %p1155 = pneg %p95
      $region34: #{conv_autoencoder_forward.13} parent=31 // pred_check_branch
        %1157 = sbr.rel (%p1155) target = $region36
      $region35: #{conv_autoencoder_forward.13} parent=31 // pred_region
        %s1158 = smul.u32 5, %s14
      $region36: #{conv_autoencoder_forward.13} parent=31 // pred_fallthru
        _
    $region32: #{conv_autoencoder_forward.13} parent=5 // pred_fallthru
      _
    %p1159 = scmp.le.s32.totalorder 2, %s9
    // Predicated region
    $region37: #{conv_autoencoder_forward.13} parent=5 // pred_check
      %p1160 = pneg %p1159
    $region38: #{conv_autoencoder_forward.13} parent=5 // pred_check_branch
      %1162 = sbr.rel (%p1160) target = $region40
    $region39: #{conv_autoencoder_forward.13} parent=5 // pred_region
      %s1163 = ssub.s32 %s9, 2
      // Predicated region
      $region41: #{conv_autoencoder_forward.13} parent=39 // pred_check
        %p1164 = pneg %p101
      $region42: #{conv_autoencoder_forward.13} parent=39 // pred_check_branch
        %1166 = sbr.rel (%p1164) target = $region44
      $region43: #{conv_autoencoder_forward.13} parent=39 // pred_region
        %s1167 = smul.u32 5, %s15
        %p1168 = scmp.lt.s32.totalorder %s1167, 19
        %s1169 = scalar_select %p1168, %s1167, 19
        %s1170 = smul.addr %s1169, 4
        %s1171 = scalar_lea.vmem %s3, %s1170
      $region44: #{conv_autoencoder_forward.13} parent=39 // pred_fallthru
        _
    $region40: #{conv_autoencoder_forward.13} parent=5 // pred_fallthru
      _
  $region6: #{conv_autoencoder_forward.13} parent=0 // loop_footer
    %s13 = sadd.s32 1, %s9
  $region7: #{conv_autoencoder_forward.13} parent=0 // loop_footer_branch
    %8 = sbr.rel target = $region3
  $region8: #{conv_autoencoder_forward.13} parent=0 // loop_exit
    _

</llo_original>
